<compile_context>
chip_gen: v7x
topology: tpu7x:2x2x1
jax: 0.10.0
libtpu: 0.0.40
codegen_flags: <defaults>
</compile_context>

<pallas_src>
import numpy as np
import jax
import jax.numpy as jnp
from jax.experimental import pallas as pl
from jax.experimental.pallas import tpu as pltpu

LRELU_SLOPE = 0.2     # nn.LeakyReLU(0.2)
BN_EPS = 1e-5         # nn.BatchNorm2d default eps

_LAYER_CFG = [
    # (kh, kw, cin, cout, stride, pad, use_bn, use_act)
    (4, 4, 4,   64,  2, 1, False, True),
    (4, 4, 64,  128, 2, 1, True,  True),
    (4, 4, 128, 256, 2, 1, True,  True),
    (4, 4, 256, 512, 2, 1, True,  True),
    (3, 3, 512, 1,   1, 1, False, False),
]


# ---------------------------------------------------------------------------
# Fused 5-layer kernel: everything stays in VMEM between layers.
# ---------------------------------------------------------------------------
def _disc_fused_kernel(
        p1_ref, w1_ref, b1_ref,                 # layer 1: conv(4->64)  + LReLU
        s2_ref, w2_ref, gm2_ref, bt2_ref,       # layer 2: conv(64->128)  BN LReLU
        s3_ref, w3_ref, gm3_ref, bt3_ref,       # layer 3: conv(128->256) BN LReLU
        s4_ref, w4_ref, gm4_ref, bt4_ref,       # layer 4: conv(256->512) BN LReLU
        s5_ref, w5_ref, b5_ref,                 # layer 5: conv(512->1)
        o_ref):
    f32, bf16 = jnp.float32, jnp.bfloat16

    def lrelu(y):
        return jnp.maximum(y, LRELU_SLOPE * y)

    def conv_taps(a_prev, s_ref, w_ref):
        """Conv as sum over kernel taps: (0/1 row-gather matmul) @ (tap weight)."""
        a_bf = a_prev.astype(bf16)
        m_out = s_ref.shape[1]
        c_out = w_ref.shape[2]
        acc = jnp.zeros((m_out, c_out), f32)
        for p in range(s_ref.shape[0]):                  # static unroll, kept taps
            gat = jnp.dot(s_ref[p], a_bf, preferred_element_type=f32)
            acc = acc + jnp.dot(gat.astype(bf16), w_ref[p],
                                preferred_element_type=f32)
        return acc

    def batchnorm(y, gm_ref, bt_ref):
        """Train-mode BatchNorm2d over all rows (= N*H*W), biased variance."""
        inv_m = 1.0 / y.shape[0]
        mu = jnp.sum(y, axis=0, keepdims=True) * inv_m
        d = y - mu
        var = jnp.sum(d * d, axis=0, keepdims=True) * inv_m
        yn = d * jax.lax.rsqrt(var + BN_EPS)
        return yn * gm_ref[...].astype(f32) + bt_ref[...].astype(f32)

    # ---- layer 1: (wrapper-prepared) im2col patches @ W1 + b1, LeakyReLU ----
    y = jnp.dot(p1_ref[...], w1_ref[...], preferred_element_type=f32)
    a = lrelu(y + b1_ref[...].astype(f32))

    # ---- layers 2-4: conv (bias dropped - cancelled by BN) + BN + LeakyReLU --
    a = lrelu(batchnorm(conv_taps(a, s2_ref, w2_ref), gm2_ref, bt2_ref))
    a = lrelu(batchnorm(conv_taps(a, s3_ref, w3_ref), gm3_ref, bt3_ref))
    a = lrelu(batchnorm(conv_taps(a, s4_ref, w4_ref), gm4_ref, bt4_ref))

    # ---- layer 5 (Cout=1): row gather, then VPU multiply + lane reduction ----
    a_bf = a.astype(bf16)
    m5 = s5_ref.shape[1]
    acc5 = jnp.zeros((m5, 1), f32)
    for p in range(s5_ref.shape[0]):
        gat = jnp.dot(s5_ref[p], a_bf, preferred_element_type=f32)   # (m5, 512)
        acc5 = acc5 + jnp.sum(gat * w5_ref[p].astype(f32), axis=-1, keepdims=True)
    o_ref[...] = acc5 + b5_ref[...].astype(f32)


# ---------------------------------------------------------------------------
# Wrapper-side (static) layout helpers
# ---------------------------------------------------------------------------
def _im2col(x, kh, kw, stride, pad):
    """x: (B,H,W,C) NHWC -> (B*OH*OW, kh*kw*C) patches (layer 1 only, tiny)."""
    B, H, W, C = x.shape
    xp = jnp.pad(x, ((0, 0), (pad, pad), (pad, pad), (0, 0)))
    OH = (H + 2 * pad - kh) // stride + 1
    OW = (W + 2 * pad - kw) // stride + 1
    cols = []
    for i in range(kh):
        for j in range(kw):
            cols.append(xp[:, i:i + stride * OH:stride,
                           j:j + stride * OW:stride, :])
    patches = jnp.concatenate(cols, axis=-1)
    return patches.reshape(B * OH * OW, kh * kw * C), (OH, OW)


def _selection_matrices(B, H, W, kh, kw, stride, pad):
    """Static 0/1 gather matrices S[p, m_out, m_in] for each kernel tap p
    (rows that would read padding are left all-zero)."""
    OH = (H + 2 * pad - kh) // stride + 1
    OW = (W + 2 * pad - kw) // stride + 1
    S = np.zeros((kh * kw, B * OH * OW, B * H * W), np.float32)
    for b in range(B):
        for oh in range(OH):
            for ow in range(OW):
                mo = (b * OH + oh) * OW + ow
                for i in range(kh):
                    for j in range(kw):
                        h = oh * stride - pad + i
                        w = ow * stride - pad + j
                        if 0 <= h < H and 0 <= w < W:
                            S[i * kw + j, mo, (b * H + h) * W + w] = 1.0
    return S, OH, OW


def _full_block_spec(shape):
    zeros = (0,) * len(shape)
    return pl.BlockSpec(tuple(shape), lambda i, _z=zeros: _z)


# ---------------------------------------------------------------------------
# Parameters (torch Conv2d / BatchNorm2d default init) and forward
# ---------------------------------------------------------------------------
def init_discriminator_params(key, in_channels=4):
    assert in_channels == _LAYER_CFG[0][2]
    params = []
    for (kh, kw, cin, cout, s, p, bn, act) in _LAYER_CFG:
        key, k_w, k_b = jax.random.split(key, 3)
        fan_in = kh * kw * cin
        bound = float(1.0 / (fan_in ** 0.5))
        w = jax.random.uniform(k_w, (kh, kw, cin, cout), jnp.float32,
                               minval=-bound, maxval=bound)
        # Note: conv bias of BN layers is mathematically cancelled by the
        # train-mode BatchNorm mean subtraction, so it is not fed to the kernel.
        b = jax.random.uniform(k_b, (cout,), jnp.float32,
                               minval=-bound, maxval=bound)
        gamma = jnp.ones((cout,), jnp.float32)
        beta = jnp.zeros((cout,), jnp.float32)
        params.append(dict(w=w, b=b, gamma=gamma, beta=beta))
    return params


def discriminator_forward(params, x_nchw):
    B = x_nchw.shape[0]
    x = jnp.transpose(x_nchw, (0, 2, 3, 1)).astype(jnp.float32)   # NCHW -> NHWC

    # ---- layer 1 operands: wrapper-side im2col of the HBM input (tiny) ----
    kh, kw, cin, cout, st, pd, _, _ = _LAYER_CFG[0]
    patches1, (h_cur, w_cur) = _im2col(x, kh, kw, st, pd)
    operands = [
        patches1.astype(jnp.bfloat16),
        params[0]["w"].reshape(kh * kw * cin, cout).astype(jnp.bfloat16),
        params[0]["b"].reshape(1, cout).astype(jnp.float32),
    ]

    # ---- layers 2-4: pruned tap selection matrices + per-tap weights ------
    for li in (1, 2, 3):
        kh, kw, cin, cout, st, pd, _, _ = _LAYER_CFG[li]
        S, oh, ow = _selection_matrices(B, h_cur, w_cur, kh, kw, st, pd)
        keep = np.asarray([p for p in range(kh * kw) if S[p].any()], np.int32)
        operands += [
            jnp.asarray(S[keep], jnp.bfloat16),
            params[li]["w"].reshape(kh * kw, cin, cout)[keep].astype(jnp.bfloat16),
            params[li]["gamma"].reshape(1, cout).astype(jnp.float32),
            params[li]["beta"].reshape(1, cout).astype(jnp.float32),
        ]
        h_cur, w_cur = oh, ow

    # ---- layer 5 -----------------------------------------------------------
    kh, kw, cin, cout, st, pd, _, _ = _LAYER_CFG[4]
    S5, oh5, ow5 = _selection_matrices(B, h_cur, w_cur, kh, kw, st, pd)
    keep5 = np.asarray([p for p in range(kh * kw) if S5[p].any()], np.int32)
    w5_taps = jnp.transpose(
        params[4]["w"].reshape(kh * kw, cin, cout)[keep5], (0, 2, 1))  # (P',1,cin)
    operands += [
        jnp.asarray(S5[keep5], jnp.bfloat16),
        w5_taps.astype(jnp.bfloat16),
        params[4]["b"].reshape(1, 1).astype(jnp.float32),
    ]

    m_out = B * oh5 * ow5
    out = pl.pallas_call(
        _disc_fused_kernel,
        grid=(1,),
        in_specs=[_full_block_spec(op.shape) for op in operands],
        out_specs=pl.BlockSpec((m_out, 1), lambda i: (0, 0)),
        out_shape=jax.ShapeDtypeStruct((m_out, 1), jnp.float32),
        compiler_params=pltpu.CompilerParams(
            dimension_semantics=("arbitrary",),
            vmem_limit_bytes=32 * 1024 * 1024,
        ),
    )(*operands)

    out = out.reshape(B, oh5, ow5, 1)
    return jnp.transpose(out, (0, 3, 1, 2))       # NHWC -> NCHW


if __name__ == "__main__":
    key = jax.random.PRNGKey(0)
    pkey, xkey = jax.random.split(key)

    params = init_discriminator_params(pkey, in_channels=4)
    x = jax.random.normal(xkey, (2, 4, 16, 16), jnp.float32)   # NCHW like PyTorch

    fwd = jax.jit(lambda inp: discriminator_forward(params, inp))
    out = jax.block_until_ready(fwd(x))

    assert out.shape == (2, 1, 1, 1), out.shape
    assert bool(jnp.all(jnp.isfinite(out)))
    print("KERNEL_OK")
</pallas_src>

<mosaic_0001>
module attributes {stable_mosaic.version = 11 : i64} {
  func.func @_disc_fused_kernel(%arg0: i32, %arg1: memref<128x64xbf16, #tpu.memory_space<vmem>>, %arg2: memref<64x64xbf16, #tpu.memory_space<vmem>>, %arg3: memref<1x64xf32, #tpu.memory_space<vmem>>, %arg4: memref<16x32x128xbf16, #tpu.memory_space<vmem>>, %arg5: memref<16x64x128xbf16, #tpu.memory_space<vmem>>, %arg6: memref<1x128xf32, #tpu.memory_space<vmem>>, %arg7: memref<1x128xf32, #tpu.memory_space<vmem>>, %arg8: memref<16x8x32xbf16, #tpu.memory_space<vmem>>, %arg9: memref<16x128x256xbf16, #tpu.memory_space<vmem>>, %arg10: memref<1x256xf32, #tpu.memory_space<vmem>>, %arg11: memref<1x256xf32, #tpu.memory_space<vmem>>, %arg12: memref<4x2x8xbf16, #tpu.memory_space<vmem>>, %arg13: memref<4x256x512xbf16, #tpu.memory_space<vmem>>, %arg14: memref<1x512xf32, #tpu.memory_space<vmem>>, %arg15: memref<1x512xf32, #tpu.memory_space<vmem>>, %arg16: memref<1x2x2xbf16, #tpu.memory_space<vmem>>, %arg17: memref<1x1x512xbf16, #tpu.memory_space<vmem>>, %arg18: memref<1x1xf32, #tpu.memory_space<vmem>>, %arg19: memref<2x1xf32, #tpu.memory_space<vmem>>) attributes {dimension_semantics = [#tpu.dimension_semantics<arbitrary>], iteration_bounds = array<i64: 1>, scalar_prefetch = 0 : i64, scratch_operands = 0 : i64, tpu.core_type = #tpu.core_type<tc>, window_params = [{pipeline_mode = #tpu.pipeline_mode<synchronous>, transform_indices = @transform_0, window_bounds = array<i64: 128, 64>}, {pipeline_mode = #tpu.pipeline_mode<synchronous>, transform_indices = @transform_1, window_bounds = array<i64: 64, 64>}, {pipeline_mode = #tpu.pipeline_mode<synchronous>, transform_indices = @transform_2, window_bounds = array<i64: 1, 64>}, {pipeline_mode = #tpu.pipeline_mode<synchronous>, transform_indices = @transform_3, window_bounds = array<i64: 16, 32, 128>}, {pipeline_mode = #tpu.pipeline_mode<synchronous>, transform_indices = @transform_4, window_bounds = array<i64: 16, 64, 128>}, {pipeline_mode = #tpu.pipeline_mode<synchronous>, transform_indices = @transform_5, window_bounds = array<i64: 1, 128>}, {pipeline_mode = #tpu.pipeline_mode<synchronous>, transform_indices = @transform_6, window_bounds = array<i64: 1, 128>}, {pipeline_mode = #tpu.pipeline_mode<synchronous>, transform_indices = @transform_7, window_bounds = array<i64: 16, 8, 32>}, {pipeline_mode = #tpu.pipeline_mode<synchronous>, transform_indices = @transform_8, window_bounds = array<i64: 16, 128, 256>}, {pipeline_mode = #tpu.pipeline_mode<synchronous>, transform_indices = @transform_9, window_bounds = array<i64: 1, 256>}, {pipeline_mode = #tpu.pipeline_mode<synchronous>, transform_indices = @transform_10, window_bounds = array<i64: 1, 256>}, {pipeline_mode = #tpu.pipeline_mode<synchronous>, transform_indices = @transform_11, window_bounds = array<i64: 4, 2, 8>}, {pipeline_mode = #tpu.pipeline_mode<synchronous>, transform_indices = @transform_12, window_bounds = array<i64: 4, 256, 512>}, {pipeline_mode = #tpu.pipeline_mode<synchronous>, transform_indices = @transform_13, window_bounds = array<i64: 1, 512>}, {pipeline_mode = #tpu.pipeline_mode<synchronous>, transform_indices = @transform_14, window_bounds = array<i64: 1, 512>}, {pipeline_mode = #tpu.pipeline_mode<synchronous>, transform_indices = @transform_15, window_bounds = array<i64: 1, 2, 2>}, {pipeline_mode = #tpu.pipeline_mode<synchronous>, transform_indices = @transform_16, window_bounds = array<i64: 1, 1, 512>}, {pipeline_mode = #tpu.pipeline_mode<synchronous>, transform_indices = @transform_17, window_bounds = array<i64: 1, 1>}, {pipeline_mode = #tpu.pipeline_mode<synchronous>, transform_indices = @transform_18, window_bounds = array<i64: 2, 1>}]} {
    %c0 = arith.constant 0 : index
    %c0_0 = arith.constant 0 : index
    %0 = vector.load %arg1[%c0, %c0_0] : memref<128x64xbf16, #tpu.memory_space<vmem>>, vector<128x64xbf16>
    %c0_1 = arith.constant 0 : index
    %c0_2 = arith.constant 0 : index
    %1 = vector.load %arg2[%c0_1, %c0_2] : memref<64x64xbf16, #tpu.memory_space<vmem>>, vector<64x64xbf16>
    %cst = arith.constant dense<0.000000e+00> : vector<128x64xf32>
    %2 = tpu.matmul %0, %1, %cst {dimension_numbers = #tpu.dot_dimension_numbers<[1], [0], [0], [1], [0, 0, 1, 1], [], []>} : vector<128x64xbf16>, vector<64x64xbf16>, vector<128x64xf32> -> vector<128x64xf32>
    %c0_3 = arith.constant 0 : index
    %c0_4 = arith.constant 0 : index
    %3 = vector.load %arg3[%c0_3, %c0_4] : memref<1x64xf32, #tpu.memory_space<vmem>>, vector<1x64xf32>
    %4 = vector.broadcast %3 : vector<1x64xf32> to vector<128x64xf32>
    %5 = arith.addf %2, %4 : vector<128x64xf32>
    %cst_5 = arith.constant 2.000000e-01 : f32
    %6 = vector.broadcast %cst_5 : f32 to vector<128x64xf32>
    %7 = arith.mulf %6, %5 : vector<128x64xf32>
    %8 = arith.maximumf %5, %7 : vector<128x64xf32>
    %9 = arith.truncf %8 : vector<128x64xf32> to vector<128x64xbf16>
    %cst_6 = arith.constant 0.000000e+00 : f32
    %10 = vector.broadcast %cst_6 : f32 to vector<32x128xf32>
    %c0_7 = arith.constant 0 : index
    %c0_8 = arith.constant 0 : index
    %c0_9 = arith.constant 0 : index
    %11 = vector.load %arg4[%c0_7, %c0_8, %c0_9] : memref<16x32x128xbf16, #tpu.memory_space<vmem>>, vector<1x32x128xbf16>
    %12 = vector.shape_cast %11 : vector<1x32x128xbf16> to vector<32x128xbf16>
    %cst_10 = arith.constant dense<0.000000e+00> : vector<32x64xf32>
    %13 = tpu.matmul %12, %9, %cst_10 {dimension_numbers = #tpu.dot_dimension_numbers<[1], [0], [0], [1], [0, 0, 1, 1], [], []>} : vector<32x128xbf16>, vector<128x64xbf16>, vector<32x64xf32> -> vector<32x64xf32>
    %14 = arith.truncf %13 : vector<32x64xf32> to vector<32x64xbf16>
    %c0_11 = arith.constant 0 : index
    %c0_12 = arith.constant 0 : index
    %c0_13 = arith.constant 0 : index
    %15 = vector.load %arg5[%c0_11, %c0_12, %c0_13] : memref<16x64x128xbf16, #tpu.memory_space<vmem>>, vector<1x64x128xbf16>
    %16 = vector.shape_cast %15 : vector<1x64x128xbf16> to vector<64x128xbf16>
    %cst_14 = arith.constant dense<0.000000e+00> : vector<32x128xf32>
    %17 = tpu.matmul %14, %16, %cst_14 {dimension_numbers = #tpu.dot_dimension_numbers<[1], [0], [0], [1], [0, 0, 1, 1], [], []>} : vector<32x64xbf16>, vector<64x128xbf16>, vector<32x128xf32> -> vector<32x128xf32>
    %18 = arith.addf %10, %17 : vector<32x128xf32>
    %c1 = arith.constant 1 : index
    %c0_15 = arith.constant 0 : index
    %c0_16 = arith.constant 0 : index
    %19 = vector.load %arg4[%c1, %c0_15, %c0_16] : memref<16x32x128xbf16, #tpu.memory_space<vmem>>, vector<1x32x128xbf16>
    %20 = vector.shape_cast %19 : vector<1x32x128xbf16> to vector<32x128xbf16>
    %cst_17 = arith.constant dense<0.000000e+00> : vector<32x64xf32>
    %21 = tpu.matmul %20, %9, %cst_17 {dimension_numbers = #tpu.dot_dimension_numbers<[1], [0], [0], [1], [0, 0, 1, 1], [], []>} : vector<32x128xbf16>, vector<128x64xbf16>, vector<32x64xf32> -> vector<32x64xf32>
    %22 = arith.truncf %21 : vector<32x64xf32> to vector<32x64xbf16>
    %c1_18 = arith.constant 1 : index
    %c0_19 = arith.constant 0 : index
    %c0_20 = arith.constant 0 : index
    %23 = vector.load %arg5[%c1_18, %c0_19, %c0_20] : memref<16x64x128xbf16, #tpu.memory_space<vmem>>, vector<1x64x128xbf16>
    %24 = vector.shape_cast %23 : vector<1x64x128xbf16> to vector<64x128xbf16>
    %cst_21 = arith.constant dense<0.000000e+00> : vector<32x128xf32>
    %25 = tpu.matmul %22, %24, %cst_21 {dimension_numbers = #tpu.dot_dimension_numbers<[1], [0], [0], [1], [0, 0, 1, 1], [], []>} : vector<32x64xbf16>, vector<64x128xbf16>, vector<32x128xf32> -> vector<32x128xf32>
    %26 = arith.addf %18, %25 : vector<32x128xf32>
    %c2 = arith.constant 2 : index
    %c0_22 = arith.constant 0 : index
    %c0_23 = arith.constant 0 : index
    %27 = vector.load %arg4[%c2, %c0_22, %c0_23] : memref<16x32x128xbf16, #tpu.memory_space<vmem>>, vector<1x32x128xbf16>
    %28 = vector.shape_cast %27 : vector<1x32x128xbf16> to vector<32x128xbf16>
    %cst_24 = arith.constant dense<0.000000e+00> : vector<32x64xf32>
    %29 = tpu.matmul %28, %9, %cst_24 {dimension_numbers = #tpu.dot_dimension_numbers<[1], [0], [0], [1], [0, 0, 1, 1], [], []>} : vector<32x128xbf16>, vector<128x64xbf16>, vector<32x64xf32> -> vector<32x64xf32>
    %30 = arith.truncf %29 : vector<32x64xf32> to vector<32x64xbf16>
    %c2_25 = arith.constant 2 : index
    %c0_26 = arith.constant 0 : index
    %c0_27 = arith.constant 0 : index
    %31 = vector.load %arg5[%c2_25, %c0_26, %c0_27] : memref<16x64x128xbf16, #tpu.memory_space<vmem>>, vector<1x64x128xbf16>
    %32 = vector.shape_cast %31 : vector<1x64x128xbf16> to vector<64x128xbf16>
    %cst_28 = arith.constant dense<0.000000e+00> : vector<32x128xf32>
    %33 = tpu.matmul %30, %32, %cst_28 {dimension_numbers = #tpu.dot_dimension_numbers<[1], [0], [0], [1], [0, 0, 1, 1], [], []>} : vector<32x64xbf16>, vector<64x128xbf16>, vector<32x128xf32> -> vector<32x128xf32>
    %34 = arith.addf %26, %33 : vector<32x128xf32>
    %c3 = arith.constant 3 : index
    %c0_29 = arith.constant 0 : index
    %c0_30 = arith.constant 0 : index
    %35 = vector.load %arg4[%c3, %c0_29, %c0_30] : memref<16x32x128xbf16, #tpu.memory_space<vmem>>, vector<1x32x128xbf16>
    %36 = vector.shape_cast %35 : vector<1x32x128xbf16> to vector<32x128xbf16>
    %cst_31 = arith.constant dense<0.000000e+00> : vector<32x64xf32>
    %37 = tpu.matmul %36, %9, %cst_31 {dimension_numbers = #tpu.dot_dimension_numbers<[1], [0], [0], [1], [0, 0, 1, 1], [], []>} : vector<32x128xbf16>, vector<128x64xbf16>, vector<32x64xf32> -> vector<32x64xf32>
    %38 = arith.truncf %37 : vector<32x64xf32> to vector<32x64xbf16>
    %c3_32 = arith.constant 3 : index
    %c0_33 = arith.constant 0 : index
    %c0_34 = arith.constant 0 : index
    %39 = vector.load %arg5[%c3_32, %c0_33, %c0_34] : memref<16x64x128xbf16, #tpu.memory_space<vmem>>, vector<1x64x128xbf16>
    %40 = vector.shape_cast %39 : vector<1x64x128xbf16> to vector<64x128xbf16>
    %cst_35 = arith.constant dense<0.000000e+00> : vector<32x128xf32>
    %41 = tpu.matmul %38, %40, %cst_35 {dimension_numbers = #tpu.dot_dimension_numbers<[1], [0], [0], [1], [0, 0, 1, 1], [], []>} : vector<32x64xbf16>, vector<64x128xbf16>, vector<32x128xf32> -> vector<32x128xf32>
    %42 = arith.addf %34, %41 : vector<32x128xf32>
    %c4 = arith.constant 4 : index
    %c0_36 = arith.constant 0 : index
    %c0_37 = arith.constant 0 : index
    %43 = vector.load %arg4[%c4, %c0_36, %c0_37] : memref<16x32x128xbf16, #tpu.memory_space<vmem>>, vector<1x32x128xbf16>
    %44 = vector.shape_cast %43 : vector<1x32x128xbf16> to vector<32x128xbf16>
    %cst_38 = arith.constant dense<0.000000e+00> : vector<32x64xf32>
    %45 = tpu.matmul %44, %9, %cst_38 {dimension_numbers = #tpu.dot_dimension_numbers<[1], [0], [0], [1], [0, 0, 1, 1], [], []>} : vector<32x128xbf16>, vector<128x64xbf16>, vector<32x64xf32> -> vector<32x64xf32>
    %46 = arith.truncf %45 : vector<32x64xf32> to vector<32x64xbf16>
    %c4_39 = arith.constant 4 : index
    %c0_40 = arith.constant 0 : index
    %c0_41 = arith.constant 0 : index
    %47 = vector.load %arg5[%c4_39, %c0_40, %c0_41] : memref<16x64x128xbf16, #tpu.memory_space<vmem>>, vector<1x64x128xbf16>
    %48 = vector.shape_cast %47 : vector<1x64x128xbf16> to vector<64x128xbf16>
    %cst_42 = arith.constant dense<0.000000e+00> : vector<32x128xf32>
    %49 = tpu.matmul %46, %48, %cst_42 {dimension_numbers = #tpu.dot_dimension_numbers<[1], [0], [0], [1], [0, 0, 1, 1], [], []>} : vector<32x64xbf16>, vector<64x128xbf16>, vector<32x128xf32> -> vector<32x128xf32>
    %50 = arith.addf %42, %49 : vector<32x128xf32>
    %c5 = arith.constant 5 : index
    %c0_43 = arith.constant 0 : index
    %c0_44 = arith.constant 0 : index
    %51 = vector.load %arg4[%c5, %c0_43, %c0_44] : memref<16x32x128xbf16, #tpu.memory_space<vmem>>, vector<1x32x128xbf16>
    %52 = vector.shape_cast %51 : vector<1x32x128xbf16> to vector<32x128xbf16>
    %cst_45 = arith.constant dense<0.000000e+00> : vector<32x64xf32>
    %53 = tpu.matmul %52, %9, %cst_45 {dimension_numbers = #tpu.dot_dimension_numbers<[1], [0], [0], [1], [0, 0, 1, 1], [], []>} : vector<32x128xbf16>, vector<128x64xbf16>, vector<32x64xf32> -> vector<32x64xf32>
    %54 = arith.truncf %53 : vector<32x64xf32> to vector<32x64xbf16>
    %c5_46 = arith.constant 5 : index
    %c0_47 = arith.constant 0 : index
    %c0_48 = arith.constant 0 : index
    %55 = vector.load %arg5[%c5_46, %c0_47, %c0_48] : memref<16x64x128xbf16, #tpu.memory_space<vmem>>, vector<1x64x128xbf16>
    %56 = vector.shape_cast %55 : vector<1x64x128xbf16> to vector<64x128xbf16>
    %cst_49 = arith.constant dense<0.000000e+00> : vector<32x128xf32>
    %57 = tpu.matmul %54, %56, %cst_49 {dimension_numbers = #tpu.dot_dimension_numbers<[1], [0], [0], [1], [0, 0, 1, 1], [], []>} : vector<32x64xbf16>, vector<64x128xbf16>, vector<32x128xf32> -> vector<32x128xf32>
    %58 = arith.addf %50, %57 : vector<32x128xf32>
    %c6 = arith.constant 6 : index
    %c0_50 = arith.constant 0 : index
    %c0_51 = arith.constant 0 : index
    %59 = vector.load %arg4[%c6, %c0_50, %c0_51] : memref<16x32x128xbf16, #tpu.memory_space<vmem>>, vector<1x32x128xbf16>
    %60 = vector.shape_cast %59 : vector<1x32x128xbf16> to vector<32x128xbf16>
    %cst_52 = arith.constant dense<0.000000e+00> : vector<32x64xf32>
    %61 = tpu.matmul %60, %9, %cst_52 {dimension_numbers = #tpu.dot_dimension_numbers<[1], [0], [0], [1], [0, 0, 1, 1], [], []>} : vector<32x128xbf16>, vector<128x64xbf16>, vector<32x64xf32> -> vector<32x64xf32>
    %62 = arith.truncf %61 : vector<32x64xf32> to vector<32x64xbf16>
    %c6_53 = arith.constant 6 : index
    %c0_54 = arith.constant 0 : index
    %c0_55 = arith.constant 0 : index
    %63 = vector.load %arg5[%c6_53, %c0_54, %c0_55] : memref<16x64x128xbf16, #tpu.memory_space<vmem>>, vector<1x64x128xbf16>
    %64 = vector.shape_cast %63 : vector<1x64x128xbf16> to vector<64x128xbf16>
    %cst_56 = arith.constant dense<0.000000e+00> : vector<32x128xf32>
    %65 = tpu.matmul %62, %64, %cst_56 {dimension_numbers = #tpu.dot_dimension_numbers<[1], [0], [0], [1], [0, 0, 1, 1], [], []>} : vector<32x64xbf16>, vector<64x128xbf16>, vector<32x128xf32> -> vector<32x128xf32>
    %66 = arith.addf %58, %65 : vector<32x128xf32>
    %c7 = arith.constant 7 : index
    %c0_57 = arith.constant 0 : index
    %c0_58 = arith.constant 0 : index
    %67 = vector.load %arg4[%c7, %c0_57, %c0_58] : memref<16x32x128xbf16, #tpu.memory_space<vmem>>, vector<1x32x128xbf16>
    %68 = vector.shape_cast %67 : vector<1x32x128xbf16> to vector<32x128xbf16>
    %cst_59 = arith.constant dense<0.000000e+00> : vector<32x64xf32>
    %69 = tpu.matmul %68, %9, %cst_59 {dimension_numbers = #tpu.dot_dimension_numbers<[1], [0], [0], [1], [0, 0, 1, 1], [], []>} : vector<32x128xbf16>, vector<128x64xbf16>, vector<32x64xf32> -> vector<32x64xf32>
    %70 = arith.truncf %69 : vector<32x64xf32> to vector<32x64xbf16>
    %c7_60 = arith.constant 7 : index
    %c0_61 = arith.constant 0 : index
    %c0_62 = arith.constant 0 : index
    %71 = vector.load %arg5[%c7_60, %c0_61, %c0_62] : memref<16x64x128xbf16, #tpu.memory_space<vmem>>, vector<1x64x128xbf16>
    %72 = vector.shape_cast %71 : vector<1x64x128xbf16> to vector<64x128xbf16>
    %cst_63 = arith.constant dense<0.000000e+00> : vector<32x128xf32>
    %73 = tpu.matmul %70, %72, %cst_63 {dimension_numbers = #tpu.dot_dimension_numbers<[1], [0], [0], [1], [0, 0, 1, 1], [], []>} : vector<32x64xbf16>, vector<64x128xbf16>, vector<32x128xf32> -> vector<32x128xf32>
    %74 = arith.addf %66, %73 : vector<32x128xf32>
    %c8 = arith.constant 8 : index
    %c0_64 = arith.constant 0 : index
    %c0_65 = arith.constant 0 : index
    %75 = vector.load %arg4[%c8, %c0_64, %c0_65] : memref<16x32x128xbf16, #tpu.memory_space<vmem>>, vector<1x32x128xbf16>
    %76 = vector.shape_cast %75 : vector<1x32x128xbf16> to vector<32x128xbf16>
    %cst_66 = arith.constant dense<0.000000e+00> : vector<32x64xf32>
    %77 = tpu.matmul %76, %9, %cst_66 {dimension_numbers = #tpu.dot_dimension_numbers<[1], [0], [0], [1], [0, 0, 1, 1], [], []>} : vector<32x128xbf16>, vector<128x64xbf16>, vector<32x64xf32> -> vector<32x64xf32>
    %78 = arith.truncf %77 : vector<32x64xf32> to vector<32x64xbf16>
    %c8_67 = arith.constant 8 : index
    %c0_68 = arith.constant 0 : index
    %c0_69 = arith.constant 0 : index
    %79 = vector.load %arg5[%c8_67, %c0_68, %c0_69] : memref<16x64x128xbf16, #tpu.memory_space<vmem>>, vector<1x64x128xbf16>
    %80 = vector.shape_cast %79 : vector<1x64x128xbf16> to vector<64x128xbf16>
    %cst_70 = arith.constant dense<0.000000e+00> : vector<32x128xf32>
    %81 = tpu.matmul %78, %80, %cst_70 {dimension_numbers = #tpu.dot_dimension_numbers<[1], [0], [0], [1], [0, 0, 1, 1], [], []>} : vector<32x64xbf16>, vector<64x128xbf16>, vector<32x128xf32> -> vector<32x128xf32>
    %82 = arith.addf %74, %81 : vector<32x128xf32>
    %c9 = arith.constant 9 : index
    %c0_71 = arith.constant 0 : index
    %c0_72 = arith.constant 0 : index
    %83 = vector.load %arg4[%c9, %c0_71, %c0_72] : memref<16x32x128xbf16, #tpu.memory_space<vmem>>, vector<1x32x128xbf16>
    %84 = vector.shape_cast %83 : vector<1x32x128xbf16> to vector<32x128xbf16>
    %cst_73 = arith.constant dense<0.000000e+00> : vector<32x64xf32>
    %85 = tpu.matmul %84, %9, %cst_73 {dimension_numbers = #tpu.dot_dimension_numbers<[1], [0], [0], [1], [0, 0, 1, 1], [], []>} : vector<32x128xbf16>, vector<128x64xbf16>, vector<32x64xf32> -> vector<32x64xf32>
    %86 = arith.truncf %85 : vector<32x64xf32> to vector<32x64xbf16>
    %c9_74 = arith.constant 9 : index
    %c0_75 = arith.constant 0 : index
    %c0_76 = arith.constant 0 : index
    %87 = vector.load %arg5[%c9_74, %c0_75, %c0_76] : memref<16x64x128xbf16, #tpu.memory_space<vmem>>, vector<1x64x128xbf16>
    %88 = vector.shape_cast %87 : vector<1x64x128xbf16> to vector<64x128xbf16>
    %cst_77 = arith.constant dense<0.000000e+00> : vector<32x128xf32>
    %89 = tpu.matmul %86, %88, %cst_77 {dimension_numbers = #tpu.dot_dimension_numbers<[1], [0], [0], [1], [0, 0, 1, 1], [], []>} : vector<32x64xbf16>, vector<64x128xbf16>, vector<32x128xf32> -> vector<32x128xf32>
    %90 = arith.addf %82, %89 : vector<32x128xf32>
    %c10 = arith.constant 10 : index
    %c0_78 = arith.constant 0 : index
    %c0_79 = arith.constant 0 : index
    %91 = vector.load %arg4[%c10, %c0_78, %c0_79] : memref<16x32x128xbf16, #tpu.memory_space<vmem>>, vector<1x32x128xbf16>
    %92 = vector.shape_cast %91 : vector<1x32x128xbf16> to vector<32x128xbf16>
    %cst_80 = arith.constant dense<0.000000e+00> : vector<32x64xf32>
    %93 = tpu.matmul %92, %9, %cst_80 {dimension_numbers = #tpu.dot_dimension_numbers<[1], [0], [0], [1], [0, 0, 1, 1], [], []>} : vector<32x128xbf16>, vector<128x64xbf16>, vector<32x64xf32> -> vector<32x64xf32>
    %94 = arith.truncf %93 : vector<32x64xf32> to vector<32x64xbf16>
    %c10_81 = arith.constant 10 : index
    %c0_82 = arith.constant 0 : index
    %c0_83 = arith.constant 0 : index
    %95 = vector.load %arg5[%c10_81, %c0_82, %c0_83] : memref<16x64x128xbf16, #tpu.memory_space<vmem>>, vector<1x64x128xbf16>
    %96 = vector.shape_cast %95 : vector<1x64x128xbf16> to vector<64x128xbf16>
    %cst_84 = arith.constant dense<0.000000e+00> : vector<32x128xf32>
    %97 = tpu.matmul %94, %96, %cst_84 {dimension_numbers = #tpu.dot_dimension_numbers<[1], [0], [0], [1], [0, 0, 1, 1], [], []>} : vector<32x64xbf16>, vector<64x128xbf16>, vector<32x128xf32> -> vector<32x128xf32>
    %98 = arith.addf %90, %97 : vector<32x128xf32>
    %c11 = arith.constant 11 : index
    %c0_85 = arith.constant 0 : index
    %c0_86 = arith.constant 0 : index
    %99 = vector.load %arg4[%c11, %c0_85, %c0_86] : memref<16x32x128xbf16, #tpu.memory_space<vmem>>, vector<1x32x128xbf16>
    %100 = vector.shape_cast %99 : vector<1x32x128xbf16> to vector<32x128xbf16>
    %cst_87 = arith.constant dense<0.000000e+00> : vector<32x64xf32>
    %101 = tpu.matmul %100, %9, %cst_87 {dimension_numbers = #tpu.dot_dimension_numbers<[1], [0], [0], [1], [0, 0, 1, 1], [], []>} : vector<32x128xbf16>, vector<128x64xbf16>, vector<32x64xf32> -> vector<32x64xf32>
    %102 = arith.truncf %101 : vector<32x64xf32> to vector<32x64xbf16>
    %c11_88 = arith.constant 11 : index
    %c0_89 = arith.constant 0 : index
    %c0_90 = arith.constant 0 : index
    %103 = vector.load %arg5[%c11_88, %c0_89, %c0_90] : memref<16x64x128xbf16, #tpu.memory_space<vmem>>, vector<1x64x128xbf16>
    %104 = vector.shape_cast %103 : vector<1x64x128xbf16> to vector<64x128xbf16>
    %cst_91 = arith.constant dense<0.000000e+00> : vector<32x128xf32>
    %105 = tpu.matmul %102, %104, %cst_91 {dimension_numbers = #tpu.dot_dimension_numbers<[1], [0], [0], [1], [0, 0, 1, 1], [], []>} : vector<32x64xbf16>, vector<64x128xbf16>, vector<32x128xf32> -> vector<32x128xf32>
    %106 = arith.addf %98, %105 : vector<32x128xf32>
    %c12 = arith.constant 12 : index
    %c0_92 = arith.constant 0 : index
    %c0_93 = arith.constant 0 : index
    %107 = vector.load %arg4[%c12, %c0_92, %c0_93] : memref<16x32x128xbf16, #tpu.memory_space<vmem>>, vector<1x32x128xbf16>
    %108 = vector.shape_cast %107 : vector<1x32x128xbf16> to vector<32x128xbf16>
    %cst_94 = arith.constant dense<0.000000e+00> : vector<32x64xf32>
    %109 = tpu.matmul %108, %9, %cst_94 {dimension_numbers = #tpu.dot_dimension_numbers<[1], [0], [0], [1], [0, 0, 1, 1], [], []>} : vector<32x128xbf16>, vector<128x64xbf16>, vector<32x64xf32> -> vector<32x64xf32>
    %110 = arith.truncf %109 : vector<32x64xf32> to vector<32x64xbf16>
    %c12_95 = arith.constant 12 : index
    %c0_96 = arith.constant 0 : index
    %c0_97 = arith.constant 0 : index
    %111 = vector.load %arg5[%c12_95, %c0_96, %c0_97] : memref<16x64x128xbf16, #tpu.memory_space<vmem>>, vector<1x64x128xbf16>
    %112 = vector.shape_cast %111 : vector<1x64x128xbf16> to vector<64x128xbf16>
    %cst_98 = arith.constant dense<0.000000e+00> : vector<32x128xf32>
    %113 = tpu.matmul %110, %112, %cst_98 {dimension_numbers = #tpu.dot_dimension_numbers<[1], [0], [0], [1], [0, 0, 1, 1], [], []>} : vector<32x64xbf16>, vector<64x128xbf16>, vector<32x128xf32> -> vector<32x128xf32>
    %114 = arith.addf %106, %113 : vector<32x128xf32>
    %c13 = arith.constant 13 : index
    %c0_99 = arith.constant 0 : index
    %c0_100 = arith.constant 0 : index
    %115 = vector.load %arg4[%c13, %c0_99, %c0_100] : memref<16x32x128xbf16, #tpu.memory_space<vmem>>, vector<1x32x128xbf16>
    %116 = vector.shape_cast %115 : vector<1x32x128xbf16> to vector<32x128xbf16>
    %cst_101 = arith.constant dense<0.000000e+00> : vector<32x64xf32>
    %117 = tpu.matmul %116, %9, %cst_101 {dimension_numbers = #tpu.dot_dimension_numbers<[1], [0], [0], [1], [0, 0, 1, 1], [], []>} : vector<32x128xbf16>, vector<128x64xbf16>, vector<32x64xf32> -> vector<32x64xf32>
    %118 = arith.truncf %117 : vector<32x64xf32> to vector<32x64xbf16>
    %c13_102 = arith.constant 13 : index
    %c0_103 = arith.constant 0 : index
    %c0_104 = arith.constant 0 : index
    %119 = vector.load %arg5[%c13_102, %c0_103, %c0_104] : memref<16x64x128xbf16, #tpu.memory_space<vmem>>, vector<1x64x128xbf16>
    %120 = vector.shape_cast %119 : vector<1x64x128xbf16> to vector<64x128xbf16>
    %cst_105 = arith.constant dense<0.000000e+00> : vector<32x128xf32>
    %121 = tpu.matmul %118, %120, %cst_105 {dimension_numbers = #tpu.dot_dimension_numbers<[1], [0], [0], [1], [0, 0, 1, 1], [], []>} : vector<32x64xbf16>, vector<64x128xbf16>, vector<32x128xf32> -> vector<32x128xf32>
    %122 = arith.addf %114, %121 : vector<32x128xf32>
    %c14 = arith.constant 14 : index
    %c0_106 = arith.constant 0 : index
    %c0_107 = arith.constant 0 : index
    %123 = vector.load %arg4[%c14, %c0_106, %c0_107] : memref<16x32x128xbf16, #tpu.memory_space<vmem>>, vector<1x32x128xbf16>
    %124 = vector.shape_cast %123 : vector<1x32x128xbf16> to vector<32x128xbf16>
    %cst_108 = arith.constant dense<0.000000e+00> : vector<32x64xf32>
    %125 = tpu.matmul %124, %9, %cst_108 {dimension_numbers = #tpu.dot_dimension_numbers<[1], [0], [0], [1], [0, 0, 1, 1], [], []>} : vector<32x128xbf16>, vector<128x64xbf16>, vector<32x64xf32> -> vector<32x64xf32>
    %126 = arith.truncf %125 : vector<32x64xf32> to vector<32x64xbf16>
    %c14_109 = arith.constant 14 : index
    %c0_110 = arith.constant 0 : index
    %c0_111 = arith.constant 0 : index
    %127 = vector.load %arg5[%c14_109, %c0_110, %c0_111] : memref<16x64x128xbf16, #tpu.memory_space<vmem>>, vector<1x64x128xbf16>
    %128 = vector.shape_cast %127 : vector<1x64x128xbf16> to vector<64x128xbf16>
    %cst_112 = arith.constant dense<0.000000e+00> : vector<32x128xf32>
    %129 = tpu.matmul %126, %128, %cst_112 {dimension_numbers = #tpu.dot_dimension_numbers<[1], [0], [0], [1], [0, 0, 1, 1], [], []>} : vector<32x64xbf16>, vector<64x128xbf16>, vector<32x128xf32> -> vector<32x128xf32>
    %130 = arith.addf %122, %129 : vector<32x128xf32>
    %c15 = arith.constant 15 : index
    %c0_113 = arith.constant 0 : index
    %c0_114 = arith.constant 0 : index
    %131 = vector.load %arg4[%c15, %c0_113, %c0_114] : memref<16x32x128xbf16, #tpu.memory_space<vmem>>, vector<1x32x128xbf16>
    %132 = vector.shape_cast %131 : vector<1x32x128xbf16> to vector<32x128xbf16>
    %cst_115 = arith.constant dense<0.000000e+00> : vector<32x64xf32>
    %133 = tpu.matmul %132, %9, %cst_115 {dimension_numbers = #tpu.dot_dimension_numbers<[1], [0], [0], [1], [0, 0, 1, 1], [], []>} : vector<32x128xbf16>, vector<128x64xbf16>, vector<32x64xf32> -> vector<32x64xf32>
    %134 = arith.truncf %133 : vector<32x64xf32> to vector<32x64xbf16>
    %c15_116 = arith.constant 15 : index
    %c0_117 = arith.constant 0 : index
    %c0_118 = arith.constant 0 : index
    %135 = vector.load %arg5[%c15_116, %c0_117, %c0_118] : memref<16x64x128xbf16, #tpu.memory_space<vmem>>, vector<1x64x128xbf16>
    %136 = vector.shape_cast %135 : vector<1x64x128xbf16> to vector<64x128xbf16>
    %cst_119 = arith.constant dense<0.000000e+00> : vector<32x128xf32>
    %137 = tpu.matmul %134, %136, %cst_119 {dimension_numbers = #tpu.dot_dimension_numbers<[1], [0], [0], [1], [0, 0, 1, 1], [], []>} : vector<32x64xbf16>, vector<64x128xbf16>, vector<32x128xf32> -> vector<32x128xf32>
    %138 = arith.addf %130, %137 : vector<32x128xf32>
    %cst_120 = arith.constant dense<0.000000e+00> : vector<128xf32>
    %139 = vector.multi_reduction <add>, %138, %cst_120 [0] : vector<32x128xf32> to vector<128xf32>
    %140 = vector.shape_cast %139 : vector<128xf32> to vector<1x128xf32>
    %cst_121 = arith.constant 3.125000e-02 : f32
    %141 = vector.broadcast %cst_121 : f32 to vector<1x128xf32>
    %142 = arith.mulf %140, %141 : vector<1x128xf32>
    %143 = vector.broadcast %142 : vector<1x128xf32> to vector<32x128xf32>
    %144 = arith.subf %138, %143 : vector<32x128xf32>
    %145 = arith.mulf %144, %144 : vector<32x128xf32>
    %cst_122 = arith.constant dense<0.000000e+00> : vector<128xf32>
    %146 = vector.multi_reduction <add>, %145, %cst_122 [0] : vector<32x128xf32> to vector<128xf32>
    %147 = vector.shape_cast %146 : vector<128xf32> to vector<1x128xf32>
    %cst_123 = arith.constant 3.125000e-02 : f32
    %148 = vector.broadcast %cst_123 : f32 to vector<1x128xf32>
    %149 = arith.mulf %147, %148 : vector<1x128xf32>
    %cst_124 = arith.constant 9.99999974E-6 : f32
    %150 = vector.broadcast %cst_124 : f32 to vector<1x128xf32>
    %151 = arith.addf %149, %150 : vector<1x128xf32>
    %152 = math.rsqrt %151 : vector<1x128xf32>
    %153 = vector.broadcast %152 : vector<1x128xf32> to vector<32x128xf32>
    %154 = arith.mulf %144, %153 : vector<32x128xf32>
    %c0_125 = arith.constant 0 : index
    %c0_126 = arith.constant 0 : index
    %155 = vector.load %arg6[%c0_125, %c0_126] : memref<1x128xf32, #tpu.memory_space<vmem>>, vector<1x128xf32>
    %156 = vector.broadcast %155 : vector<1x128xf32> to vector<32x128xf32>
    %157 = arith.mulf %154, %156 : vector<32x128xf32>
    %c0_127 = arith.constant 0 : index
    %c0_128 = arith.constant 0 : index
    %158 = vector.load %arg7[%c0_127, %c0_128] : memref<1x128xf32, #tpu.memory_space<vmem>>, vector<1x128xf32>
    %159 = vector.broadcast %158 : vector<1x128xf32> to vector<32x128xf32>
    %160 = arith.addf %157, %159 : vector<32x128xf32>
    %cst_129 = arith.constant 2.000000e-01 : f32
    %161 = vector.broadcast %cst_129 : f32 to vector<32x128xf32>
    %162 = arith.mulf %161, %160 : vector<32x128xf32>
    %163 = arith.maximumf %160, %162 : vector<32x128xf32>
    %164 = arith.truncf %163 : vector<32x128xf32> to vector<32x128xbf16>
    %cst_130 = arith.constant 0.000000e+00 : f32
    %165 = vector.broadcast %cst_130 : f32 to vector<8x256xf32>
    %c0_131 = arith.constant 0 : index
    %c0_132 = arith.constant 0 : index
    %c0_133 = arith.constant 0 : index
    %166 = vector.load %arg8[%c0_131, %c0_132, %c0_133] : memref<16x8x32xbf16, #tpu.memory_space<vmem>>, vector<1x8x32xbf16>
    %167 = vector.shape_cast %166 : vector<1x8x32xbf16> to vector<8x32xbf16>
    %cst_134 = arith.constant dense<0.000000e+00> : vector<8x128xf32>
    %168 = tpu.matmul %167, %164, %cst_134 {dimension_numbers = #tpu.dot_dimension_numbers<[1], [0], [0], [1], [0, 0, 1, 1], [], []>} : vector<8x32xbf16>, vector<32x128xbf16>, vector<8x128xf32> -> vector<8x128xf32>
    %169 = arith.truncf %168 : vector<8x128xf32> to vector<8x128xbf16>
    %c0_135 = arith.constant 0 : index
    %c0_136 = arith.constant 0 : index
    %c0_137 = arith.constant 0 : index
    %170 = vector.load %arg9[%c0_135, %c0_136, %c0_137] : memref<16x128x256xbf16, #tpu.memory_space<vmem>>, vector<1x128x256xbf16>
    %171 = vector.shape_cast %170 : vector<1x128x256xbf16> to vector<128x256xbf16>
    %cst_138 = arith.constant dense<0.000000e+00> : vector<8x256xf32>
    %172 = tpu.matmul %169, %171, %cst_138 {dimension_numbers = #tpu.dot_dimension_numbers<[1], [0], [0], [1], [0, 0, 1, 1], [], []>} : vector<8x128xbf16>, vector<128x256xbf16>, vector<8x256xf32> -> vector<8x256xf32>
    %173 = arith.addf %165, %172 : vector<8x256xf32>
    %c1_139 = arith.constant 1 : index
    %c0_140 = arith.constant 0 : index
    %c0_141 = arith.constant 0 : index
    %174 = vector.load %arg8[%c1_139, %c0_140, %c0_141] : memref<16x8x32xbf16, #tpu.memory_space<vmem>>, vector<1x8x32xbf16>
    %175 = vector.shape_cast %174 : vector<1x8x32xbf16> to vector<8x32xbf16>
    %cst_142 = arith.constant dense<0.000000e+00> : vector<8x128xf32>
    %176 = tpu.matmul %175, %164, %cst_142 {dimension_numbers = #tpu.dot_dimension_numbers<[1], [0], [0], [1], [0, 0, 1, 1], [], []>} : vector<8x32xbf16>, vector<32x128xbf16>, vector<8x128xf32> -> vector<8x128xf32>
    %177 = arith.truncf %176 : vector<8x128xf32> to vector<8x128xbf16>
    %c1_143 = arith.constant 1 : index
    %c0_144 = arith.constant 0 : index
    %c0_145 = arith.constant 0 : index
    %178 = vector.load %arg9[%c1_143, %c0_144, %c0_145] : memref<16x128x256xbf16, #tpu.memory_space<vmem>>, vector<1x128x256xbf16>
    %179 = vector.shape_cast %178 : vector<1x128x256xbf16> to vector<128x256xbf16>
    %cst_146 = arith.constant dense<0.000000e+00> : vector<8x256xf32>
    %180 = tpu.matmul %177, %179, %cst_146 {dimension_numbers = #tpu.dot_dimension_numbers<[1], [0], [0], [1], [0, 0, 1, 1], [], []>} : vector<8x128xbf16>, vector<128x256xbf16>, vector<8x256xf32> -> vector<8x256xf32>
    %181 = arith.addf %173, %180 : vector<8x256xf32>
    %c2_147 = arith.constant 2 : index
    %c0_148 = arith.constant 0 : index
    %c0_149 = arith.constant 0 : index
    %182 = vector.load %arg8[%c2_147, %c0_148, %c0_149] : memref<16x8x32xbf16, #tpu.memory_space<vmem>>, vector<1x8x32xbf16>
    %183 = vector.shape_cast %182 : vector<1x8x32xbf16> to vector<8x32xbf16>
    %cst_150 = arith.constant dense<0.000000e+00> : vector<8x128xf32>
    %184 = tpu.matmul %183, %164, %cst_150 {dimension_numbers = #tpu.dot_dimension_numbers<[1], [0], [0], [1], [0, 0, 1, 1], [], []>} : vector<8x32xbf16>, vector<32x128xbf16>, vector<8x128xf32> -> vector<8x128xf32>
    %185 = arith.truncf %184 : vector<8x128xf32> to vector<8x128xbf16>
    %c2_151 = arith.constant 2 : index
    %c0_152 = arith.constant 0 : index
    %c0_153 = arith.constant 0 : index
    %186 = vector.load %arg9[%c2_151, %c0_152, %c0_153] : memref<16x128x256xbf16, #tpu.memory_space<vmem>>, vector<1x128x256xbf16>
    %187 = vector.shape_cast %186 : vector<1x128x256xbf16> to vector<128x256xbf16>
    %cst_154 = arith.constant dense<0.000000e+00> : vector<8x256xf32>
    %188 = tpu.matmul %185, %187, %cst_154 {dimension_numbers = #tpu.dot_dimension_numbers<[1], [0], [0], [1], [0, 0, 1, 1], [], []>} : vector<8x128xbf16>, vector<128x256xbf16>, vector<8x256xf32> -> vector<8x256xf32>
    %189 = arith.addf %181, %188 : vector<8x256xf32>
    %c3_155 = arith.constant 3 : index
    %c0_156 = arith.constant 0 : index
    %c0_157 = arith.constant 0 : index
    %190 = vector.load %arg8[%c3_155, %c0_156, %c0_157] : memref<16x8x32xbf16, #tpu.memory_space<vmem>>, vector<1x8x32xbf16>
    %191 = vector.shape_cast %190 : vector<1x8x32xbf16> to vector<8x32xbf16>
    %cst_158 = arith.constant dense<0.000000e+00> : vector<8x128xf32>
    %192 = tpu.matmul %191, %164, %cst_158 {dimension_numbers = #tpu.dot_dimension_numbers<[1], [0], [0], [1], [0, 0, 1, 1], [], []>} : vector<8x32xbf16>, vector<32x128xbf16>, vector<8x128xf32> -> vector<8x128xf32>
    %193 = arith.truncf %192 : vector<8x128xf32> to vector<8x128xbf16>
    %c3_159 = arith.constant 3 : index
    %c0_160 = arith.constant 0 : index
    %c0_161 = arith.constant 0 : index
    %194 = vector.load %arg9[%c3_159, %c0_160, %c0_161] : memref<16x128x256xbf16, #tpu.memory_space<vmem>>, vector<1x128x256xbf16>
    %195 = vector.shape_cast %194 : vector<1x128x256xbf16> to vector<128x256xbf16>
    %cst_162 = arith.constant dense<0.000000e+00> : vector<8x256xf32>
    %196 = tpu.matmul %193, %195, %cst_162 {dimension_numbers = #tpu.dot_dimension_numbers<[1], [0], [0], [1], [0, 0, 1, 1], [], []>} : vector<8x128xbf16>, vector<128x256xbf16>, vector<8x256xf32> -> vector<8x256xf32>
    %197 = arith.addf %189, %196 : vector<8x256xf32>
    %c4_163 = arith.constant 4 : index
    %c0_164 = arith.constant 0 : index
    %c0_165 = arith.constant 0 : index
    %198 = vector.load %arg8[%c4_163, %c0_164, %c0_165] : memref<16x8x32xbf16, #tpu.memory_space<vmem>>, vector<1x8x32xbf16>
    %199 = vector.shape_cast %198 : vector<1x8x32xbf16> to vector<8x32xbf16>
    %cst_166 = arith.constant dense<0.000000e+00> : vector<8x128xf32>
    %200 = tpu.matmul %199, %164, %cst_166 {dimension_numbers = #tpu.dot_dimension_numbers<[1], [0], [0], [1], [0, 0, 1, 1], [], []>} : vector<8x32xbf16>, vector<32x128xbf16>, vector<8x128xf32> -> vector<8x128xf32>
    %201 = arith.truncf %200 : vector<8x128xf32> to vector<8x128xbf16>
    %c4_167 = arith.constant 4 : index
    %c0_168 = arith.constant 0 : index
    %c0_169 = arith.constant 0 : index
    %202 = vector.load %arg9[%c4_167, %c0_168, %c0_169] : memref<16x128x256xbf16, #tpu.memory_space<vmem>>, vector<1x128x256xbf16>
    %203 = vector.shape_cast %202 : vector<1x128x256xbf16> to vector<128x256xbf16>
    %cst_170 = arith.constant dense<0.000000e+00> : vector<8x256xf32>
    %204 = tpu.matmul %201, %203, %cst_170 {dimension_numbers = #tpu.dot_dimension_numbers<[1], [0], [0], [1], [0, 0, 1, 1], [], []>} : vector<8x128xbf16>, vector<128x256xbf16>, vector<8x256xf32> -> vector<8x256xf32>
    %205 = arith.addf %197, %204 : vector<8x256xf32>
    %c5_171 = arith.constant 5 : index
    %c0_172 = arith.constant 0 : index
    %c0_173 = arith.constant 0 : index
    %206 = vector.load %arg8[%c5_171, %c0_172, %c0_173] : memref<16x8x32xbf16, #tpu.memory_space<vmem>>, vector<1x8x32xbf16>
    %207 = vector.shape_cast %206 : vector<1x8x32xbf16> to vector<8x32xbf16>
    %cst_174 = arith.constant dense<0.000000e+00> : vector<8x128xf32>
    %208 = tpu.matmul %207, %164, %cst_174 {dimension_numbers = #tpu.dot_dimension_numbers<[1], [0], [0], [1], [0, 0, 1, 1], [], []>} : vector<8x32xbf16>, vector<32x128xbf16>, vector<8x128xf32> -> vector<8x128xf32>
    %209 = arith.truncf %208 : vector<8x128xf32> to vector<8x128xbf16>
    %c5_175 = arith.constant 5 : index
    %c0_176 = arith.constant 0 : index
    %c0_177 = arith.constant 0 : index
    %210 = vector.load %arg9[%c5_175, %c0_176, %c0_177] : memref<16x128x256xbf16, #tpu.memory_space<vmem>>, vector<1x128x256xbf16>
    %211 = vector.shape_cast %210 : vector<1x128x256xbf16> to vector<128x256xbf16>
    %cst_178 = arith.constant dense<0.000000e+00> : vector<8x256xf32>
    %212 = tpu.matmul %209, %211, %cst_178 {dimension_numbers = #tpu.dot_dimension_numbers<[1], [0], [0], [1], [0, 0, 1, 1], [], []>} : vector<8x128xbf16>, vector<128x256xbf16>, vector<8x256xf32> -> vector<8x256xf32>
    %213 = arith.addf %205, %212 : vector<8x256xf32>
    %c6_179 = arith.constant 6 : index
    %c0_180 = arith.constant 0 : index
    %c0_181 = arith.constant 0 : index
    %214 = vector.load %arg8[%c6_179, %c0_180, %c0_181] : memref<16x8x32xbf16, #tpu.memory_space<vmem>>, vector<1x8x32xbf16>
    %215 = vector.shape_cast %214 : vector<1x8x32xbf16> to vector<8x32xbf16>
    %cst_182 = arith.constant dense<0.000000e+00> : vector<8x128xf32>
    %216 = tpu.matmul %215, %164, %cst_182 {dimension_numbers = #tpu.dot_dimension_numbers<[1], [0], [0], [1], [0, 0, 1, 1], [], []>} : vector<8x32xbf16>, vector<32x128xbf16>, vector<8x128xf32> -> vector<8x128xf32>
    %217 = arith.truncf %216 : vector<8x128xf32> to vector<8x128xbf16>
    %c6_183 = arith.constant 6 : index
    %c0_184 = arith.constant 0 : index
    %c0_185 = arith.constant 0 : index
    %218 = vector.load %arg9[%c6_183, %c0_184, %c0_185] : memref<16x128x256xbf16, #tpu.memory_space<vmem>>, vector<1x128x256xbf16>
    %219 = vector.shape_cast %218 : vector<1x128x256xbf16> to vector<128x256xbf16>
    %cst_186 = arith.constant dense<0.000000e+00> : vector<8x256xf32>
    %220 = tpu.matmul %217, %219, %cst_186 {dimension_numbers = #tpu.dot_dimension_numbers<[1], [0], [0], [1], [0, 0, 1, 1], [], []>} : vector<8x128xbf16>, vector<128x256xbf16>, vector<8x256xf32> -> vector<8x256xf32>
    %221 = arith.addf %213, %220 : vector<8x256xf32>
    %c7_187 = arith.constant 7 : index
    %c0_188 = arith.constant 0 : index
    %c0_189 = arith.constant 0 : index
    %222 = vector.load %arg8[%c7_187, %c0_188, %c0_189] : memref<16x8x32xbf16, #tpu.memory_space<vmem>>, vector<1x8x32xbf16>
    %223 = vector.shape_cast %222 : vector<1x8x32xbf16> to vector<8x32xbf16>
    %cst_190 = arith.constant dense<0.000000e+00> : vector<8x128xf32>
    %224 = tpu.matmul %223, %164, %cst_190 {dimension_numbers = #tpu.dot_dimension_numbers<[1], [0], [0], [1], [0, 0, 1, 1], [], []>} : vector<8x32xbf16>, vector<32x128xbf16>, vector<8x128xf32> -> vector<8x128xf32>
    %225 = arith.truncf %224 : vector<8x128xf32> to vector<8x128xbf16>
    %c7_191 = arith.constant 7 : index
    %c0_192 = arith.constant 0 : index
    %c0_193 = arith.constant 0 : index
    %226 = vector.load %arg9[%c7_191, %c0_192, %c0_193] : memref<16x128x256xbf16, #tpu.memory_space<vmem>>, vector<1x128x256xbf16>
    %227 = vector.shape_cast %226 : vector<1x128x256xbf16> to vector<128x256xbf16>
    %cst_194 = arith.constant dense<0.000000e+00> : vector<8x256xf32>
    %228 = tpu.matmul %225, %227, %cst_194 {dimension_numbers = #tpu.dot_dimension_numbers<[1], [0], [0], [1], [0, 0, 1, 1], [], []>} : vector<8x128xbf16>, vector<128x256xbf16>, vector<8x256xf32> -> vector<8x256xf32>
    %229 = arith.addf %221, %228 : vector<8x256xf32>
    %c8_195 = arith.constant 8 : index
    %c0_196 = arith.constant 0 : index
    %c0_197 = arith.constant 0 : index
    %230 = vector.load %arg8[%c8_195, %c0_196, %c0_197] : memref<16x8x32xbf16, #tpu.memory_space<vmem>>, vector<1x8x32xbf16>
    %231 = vector.shape_cast %230 : vector<1x8x32xbf16> to vector<8x32xbf16>
    %cst_198 = arith.constant dense<0.000000e+00> : vector<8x128xf32>
    %232 = tpu.matmul %231, %164, %cst_198 {dimension_numbers = #tpu.dot_dimension_numbers<[1], [0], [0], [1], [0, 0, 1, 1], [], []>} : vector<8x32xbf16>, vector<32x128xbf16>, vector<8x128xf32> -> vector<8x128xf32>
    %233 = arith.truncf %232 : vector<8x128xf32> to vector<8x128xbf16>
    %c8_199 = arith.constant 8 : index
    %c0_200 = arith.constant 0 : index
    %c0_201 = arith.constant 0 : index
    %234 = vector.load %arg9[%c8_199, %c0_200, %c0_201] : memref<16x128x256xbf16, #tpu.memory_space<vmem>>, vector<1x128x256xbf16>
    %235 = vector.shape_cast %234 : vector<1x128x256xbf16> to vector<128x256xbf16>
    %cst_202 = arith.constant dense<0.000000e+00> : vector<8x256xf32>
    %236 = tpu.matmul %233, %235, %cst_202 {dimension_numbers = #tpu.dot_dimension_numbers<[1], [0], [0], [1], [0, 0, 1, 1], [], []>} : vector<8x128xbf16>, vector<128x256xbf16>, vector<8x256xf32> -> vector<8x256xf32>
    %237 = arith.addf %229, %236 : vector<8x256xf32>
    %c9_203 = arith.constant 9 : index
    %c0_204 = arith.constant 0 : index
    %c0_205 = arith.constant 0 : index
    %238 = vector.load %arg8[%c9_203, %c0_204, %c0_205] : memref<16x8x32xbf16, #tpu.memory_space<vmem>>, vector<1x8x32xbf16>
    %239 = vector.shape_cast %238 : vector<1x8x32xbf16> to vector<8x32xbf16>
    %cst_206 = arith.constant dense<0.000000e+00> : vector<8x128xf32>
    %240 = tpu.matmul %239, %164, %cst_206 {dimension_numbers = #tpu.dot_dimension_numbers<[1], [0], [0], [1], [0, 0, 1, 1], [], []>} : vector<8x32xbf16>, vector<32x128xbf16>, vector<8x128xf32> -> vector<8x128xf32>
    %241 = arith.truncf %240 : vector<8x128xf32> to vector<8x128xbf16>
    %c9_207 = arith.constant 9 : index
    %c0_208 = arith.constant 0 : index
    %c0_209 = arith.constant 0 : index
    %242 = vector.load %arg9[%c9_207, %c0_208, %c0_209] : memref<16x128x256xbf16, #tpu.memory_space<vmem>>, vector<1x128x256xbf16>
    %243 = vector.shape_cast %242 : vector<1x128x256xbf16> to vector<128x256xbf16>
    %cst_210 = arith.constant dense<0.000000e+00> : vector<8x256xf32>
    %244 = tpu.matmul %241, %243, %cst_210 {dimension_numbers = #tpu.dot_dimension_numbers<[1], [0], [0], [1], [0, 0, 1, 1], [], []>} : vector<8x128xbf16>, vector<128x256xbf16>, vector<8x256xf32> -> vector<8x256xf32>
    %245 = arith.addf %237, %244 : vector<8x256xf32>
    %c10_211 = arith.constant 10 : index
    %c0_212 = arith.constant 0 : index
    %c0_213 = arith.constant 0 : index
    %246 = vector.load %arg8[%c10_211, %c0_212, %c0_213] : memref<16x8x32xbf16, #tpu.memory_space<vmem>>, vector<1x8x32xbf16>
    %247 = vector.shape_cast %246 : vector<1x8x32xbf16> to vector<8x32xbf16>
    %cst_214 = arith.constant dense<0.000000e+00> : vector<8x128xf32>
    %248 = tpu.matmul %247, %164, %cst_214 {dimension_numbers = #tpu.dot_dimension_numbers<[1], [0], [0], [1], [0, 0, 1, 1], [], []>} : vector<8x32xbf16>, vector<32x128xbf16>, vector<8x128xf32> -> vector<8x128xf32>
    %249 = arith.truncf %248 : vector<8x128xf32> to vector<8x128xbf16>
    %c10_215 = arith.constant 10 : index
    %c0_216 = arith.constant 0 : index
    %c0_217 = arith.constant 0 : index
    %250 = vector.load %arg9[%c10_215, %c0_216, %c0_217] : memref<16x128x256xbf16, #tpu.memory_space<vmem>>, vector<1x128x256xbf16>
    %251 = vector.shape_cast %250 : vector<1x128x256xbf16> to vector<128x256xbf16>
    %cst_218 = arith.constant dense<0.000000e+00> : vector<8x256xf32>
    %252 = tpu.matmul %249, %251, %cst_218 {dimension_numbers = #tpu.dot_dimension_numbers<[1], [0], [0], [1], [0, 0, 1, 1], [], []>} : vector<8x128xbf16>, vector<128x256xbf16>, vector<8x256xf32> -> vector<8x256xf32>
    %253 = arith.addf %245, %252 : vector<8x256xf32>
    %c11_219 = arith.constant 11 : index
    %c0_220 = arith.constant 0 : index
    %c0_221 = arith.constant 0 : index
    %254 = vector.load %arg8[%c11_219, %c0_220, %c0_221] : memref<16x8x32xbf16, #tpu.memory_space<vmem>>, vector<1x8x32xbf16>
    %255 = vector.shape_cast %254 : vector<1x8x32xbf16> to vector<8x32xbf16>
    %cst_222 = arith.constant dense<0.000000e+00> : vector<8x128xf32>
    %256 = tpu.matmul %255, %164, %cst_222 {dimension_numbers = #tpu.dot_dimension_numbers<[1], [0], [0], [1], [0, 0, 1, 1], [], []>} : vector<8x32xbf16>, vector<32x128xbf16>, vector<8x128xf32> -> vector<8x128xf32>
    %257 = arith.truncf %256 : vector<8x128xf32> to vector<8x128xbf16>
    %c11_223 = arith.constant 11 : index
    %c0_224 = arith.constant 0 : index
    %c0_225 = arith.constant 0 : index
    %258 = vector.load %arg9[%c11_223, %c0_224, %c0_225] : memref<16x128x256xbf16, #tpu.memory_space<vmem>>, vector<1x128x256xbf16>
    %259 = vector.shape_cast %258 : vector<1x128x256xbf16> to vector<128x256xbf16>
    %cst_226 = arith.constant dense<0.000000e+00> : vector<8x256xf32>
    %260 = tpu.matmul %257, %259, %cst_226 {dimension_numbers = #tpu.dot_dimension_numbers<[1], [0], [0], [1], [0, 0, 1, 1], [], []>} : vector<8x128xbf16>, vector<128x256xbf16>, vector<8x256xf32> -> vector<8x256xf32>
    %261 = arith.addf %253, %260 : vector<8x256xf32>
    %c12_227 = arith.constant 12 : index
    %c0_228 = arith.constant 0 : index
    %c0_229 = arith.constant 0 : index
    %262 = vector.load %arg8[%c12_227, %c0_228, %c0_229] : memref<16x8x32xbf16, #tpu.memory_space<vmem>>, vector<1x8x32xbf16>
    %263 = vector.shape_cast %262 : vector<1x8x32xbf16> to vector<8x32xbf16>
    %cst_230 = arith.constant dense<0.000000e+00> : vector<8x128xf32>
    %264 = tpu.matmul %263, %164, %cst_230 {dimension_numbers = #tpu.dot_dimension_numbers<[1], [0], [0], [1], [0, 0, 1, 1], [], []>} : vector<8x32xbf16>, vector<32x128xbf16>, vector<8x128xf32> -> vector<8x128xf32>
    %265 = arith.truncf %264 : vector<8x128xf32> to vector<8x128xbf16>
    %c12_231 = arith.constant 12 : index
    %c0_232 = arith.constant 0 : index
    %c0_233 = arith.constant 0 : index
    %266 = vector.load %arg9[%c12_231, %c0_232, %c0_233] : memref<16x128x256xbf16, #tpu.memory_space<vmem>>, vector<1x128x256xbf16>
    %267 = vector.shape_cast %266 : vector<1x128x256xbf16> to vector<128x256xbf16>
    %cst_234 = arith.constant dense<0.000000e+00> : vector<8x256xf32>
    %268 = tpu.matmul %265, %267, %cst_234 {dimension_numbers = #tpu.dot_dimension_numbers<[1], [0], [0], [1], [0, 0, 1, 1], [], []>} : vector<8x128xbf16>, vector<128x256xbf16>, vector<8x256xf32> -> vector<8x256xf32>
    %269 = arith.addf %261, %268 : vector<8x256xf32>
    %c13_235 = arith.constant 13 : index
    %c0_236 = arith.constant 0 : index
    %c0_237 = arith.constant 0 : index
    %270 = vector.load %arg8[%c13_235, %c0_236, %c0_237] : memref<16x8x32xbf16, #tpu.memory_space<vmem>>, vector<1x8x32xbf16>
    %271 = vector.shape_cast %270 : vector<1x8x32xbf16> to vector<8x32xbf16>
    %cst_238 = arith.constant dense<0.000000e+00> : vector<8x128xf32>
    %272 = tpu.matmul %271, %164, %cst_238 {dimension_numbers = #tpu.dot_dimension_numbers<[1], [0], [0], [1], [0, 0, 1, 1], [], []>} : vector<8x32xbf16>, vector<32x128xbf16>, vector<8x128xf32> -> vector<8x128xf32>
    %273 = arith.truncf %272 : vector<8x128xf32> to vector<8x128xbf16>
    %c13_239 = arith.constant 13 : index
    %c0_240 = arith.constant 0 : index
    %c0_241 = arith.constant 0 : index
    %274 = vector.load %arg9[%c13_239, %c0_240, %c0_241] : memref<16x128x256xbf16, #tpu.memory_space<vmem>>, vector<1x128x256xbf16>
    %275 = vector.shape_cast %274 : vector<1x128x256xbf16> to vector<128x256xbf16>
    %cst_242 = arith.constant dense<0.000000e+00> : vector<8x256xf32>
    %276 = tpu.matmul %273, %275, %cst_242 {dimension_numbers = #tpu.dot_dimension_numbers<[1], [0], [0], [1], [0, 0, 1, 1], [], []>} : vector<8x128xbf16>, vector<128x256xbf16>, vector<8x256xf32> -> vector<8x256xf32>
    %277 = arith.addf %269, %276 : vector<8x256xf32>
    %c14_243 = arith.constant 14 : index
    %c0_244 = arith.constant 0 : index
    %c0_245 = arith.constant 0 : index
    %278 = vector.load %arg8[%c14_243, %c0_244, %c0_245] : memref<16x8x32xbf16, #tpu.memory_space<vmem>>, vector<1x8x32xbf16>
    %279 = vector.shape_cast %278 : vector<1x8x32xbf16> to vector<8x32xbf16>
    %cst_246 = arith.constant dense<0.000000e+00> : vector<8x128xf32>
    %280 = tpu.matmul %279, %164, %cst_246 {dimension_numbers = #tpu.dot_dimension_numbers<[1], [0], [0], [1], [0, 0, 1, 1], [], []>} : vector<8x32xbf16>, vector<32x128xbf16>, vector<8x128xf32> -> vector<8x128xf32>
    %281 = arith.truncf %280 : vector<8x128xf32> to vector<8x128xbf16>
    %c14_247 = arith.constant 14 : index
    %c0_248 = arith.constant 0 : index
    %c0_249 = arith.constant 0 : index
    %282 = vector.load %arg9[%c14_247, %c0_248, %c0_249] : memref<16x128x256xbf16, #tpu.memory_space<vmem>>, vector<1x128x256xbf16>
    %283 = vector.shape_cast %282 : vector<1x128x256xbf16> to vector<128x256xbf16>
    %cst_250 = arith.constant dense<0.000000e+00> : vector<8x256xf32>
    %284 = tpu.matmul %281, %283, %cst_250 {dimension_numbers = #tpu.dot_dimension_numbers<[1], [0], [0], [1], [0, 0, 1, 1], [], []>} : vector<8x128xbf16>, vector<128x256xbf16>, vector<8x256xf32> -> vector<8x256xf32>
    %285 = arith.addf %277, %284 : vector<8x256xf32>
    %c15_251 = arith.constant 15 : index
    %c0_252 = arith.constant 0 : index
    %c0_253 = arith.constant 0 : index
    %286 = vector.load %arg8[%c15_251, %c0_252, %c0_253] : memref<16x8x32xbf16, #tpu.memory_space<vmem>>, vector<1x8x32xbf16>
    %287 = vector.shape_cast %286 : vector<1x8x32xbf16> to vector<8x32xbf16>
    %cst_254 = arith.constant dense<0.000000e+00> : vector<8x128xf32>
    %288 = tpu.matmul %287, %164, %cst_254 {dimension_numbers = #tpu.dot_dimension_numbers<[1], [0], [0], [1], [0, 0, 1, 1], [], []>} : vector<8x32xbf16>, vector<32x128xbf16>, vector<8x128xf32> -> vector<8x128xf32>
    %289 = arith.truncf %288 : vector<8x128xf32> to vector<8x128xbf16>
    %c15_255 = arith.constant 15 : index
    %c0_256 = arith.constant 0 : index
    %c0_257 = arith.constant 0 : index
    %290 = vector.load %arg9[%c15_255, %c0_256, %c0_257] : memref<16x128x256xbf16, #tpu.memory_space<vmem>>, vector<1x128x256xbf16>
    %291 = vector.shape_cast %290 : vector<1x128x256xbf16> to vector<128x256xbf16>
    %cst_258 = arith.constant dense<0.000000e+00> : vector<8x256xf32>
    %292 = tpu.matmul %289, %291, %cst_258 {dimension_numbers = #tpu.dot_dimension_numbers<[1], [0], [0], [1], [0, 0, 1, 1], [], []>} : vector<8x128xbf16>, vector<128x256xbf16>, vector<8x256xf32> -> vector<8x256xf32>
    %293 = arith.addf %285, %292 : vector<8x256xf32>
    %cst_259 = arith.constant dense<0.000000e+00> : vector<256xf32>
    %294 = vector.multi_reduction <add>, %293, %cst_259 [0] : vector<8x256xf32> to vector<256xf32>
    %295 = vector.shape_cast %294 : vector<256xf32> to vector<1x256xf32>
    %cst_260 = arith.constant 1.250000e-01 : f32
    %296 = vector.broadcast %cst_260 : f32 to vector<1x256xf32>
    %297 = arith.mulf %295, %296 : vector<1x256xf32>
    %298 = vector.broadcast %297 : vector<1x256xf32> to vector<8x256xf32>
    %299 = arith.subf %293, %298 : vector<8x256xf32>
    %300 = arith.mulf %299, %299 : vector<8x256xf32>
    %cst_261 = arith.constant dense<0.000000e+00> : vector<256xf32>
    %301 = vector.multi_reduction <add>, %300, %cst_261 [0] : vector<8x256xf32> to vector<256xf32>
    %302 = vector.shape_cast %301 : vector<256xf32> to vector<1x256xf32>
    %cst_262 = arith.constant 1.250000e-01 : f32
    %303 = vector.broadcast %cst_262 : f32 to vector<1x256xf32>
    %304 = arith.mulf %302, %303 : vector<1x256xf32>
    %cst_263 = arith.constant 9.99999974E-6 : f32
    %305 = vector.broadcast %cst_263 : f32 to vector<1x256xf32>
    %306 = arith.addf %304, %305 : vector<1x256xf32>
    %307 = math.rsqrt %306 : vector<1x256xf32>
    %308 = vector.broadcast %307 : vector<1x256xf32> to vector<8x256xf32>
    %309 = arith.mulf %299, %308 : vector<8x256xf32>
    %c0_264 = arith.constant 0 : index
    %c0_265 = arith.constant 0 : index
    %310 = vector.load %arg10[%c0_264, %c0_265] : memref<1x256xf32, #tpu.memory_space<vmem>>, vector<1x256xf32>
    %311 = vector.broadcast %310 : vector<1x256xf32> to vector<8x256xf32>
    %312 = arith.mulf %309, %311 : vector<8x256xf32>
    %c0_266 = arith.constant 0 : index
    %c0_267 = arith.constant 0 : index
    %313 = vector.load %arg11[%c0_266, %c0_267] : memref<1x256xf32, #tpu.memory_space<vmem>>, vector<1x256xf32>
    %314 = vector.broadcast %313 : vector<1x256xf32> to vector<8x256xf32>
    %315 = arith.addf %312, %314 : vector<8x256xf32>
    %cst_268 = arith.constant 2.000000e-01 : f32
    %316 = vector.broadcast %cst_268 : f32 to vector<8x256xf32>
    %317 = arith.mulf %316, %315 : vector<8x256xf32>
    %318 = arith.maximumf %315, %317 : vector<8x256xf32>
    %319 = arith.truncf %318 : vector<8x256xf32> to vector<8x256xbf16>
    %cst_269 = arith.constant 0.000000e+00 : f32
    %320 = vector.broadcast %cst_269 : f32 to vector<2x512xf32>
    %c0_270 = arith.constant 0 : index
    %c0_271 = arith.constant 0 : index
    %c0_272 = arith.constant 0 : index
    %321 = vector.load %arg12[%c0_270, %c0_271, %c0_272] : memref<4x2x8xbf16, #tpu.memory_space<vmem>>, vector<1x2x8xbf16>
    %322 = vector.shape_cast %321 : vector<1x2x8xbf16> to vector<2x8xbf16>
    %cst_273 = arith.constant dense<0.000000e+00> : vector<2x256xf32>
    %323 = tpu.matmul %322, %319, %cst_273 {dimension_numbers = #tpu.dot_dimension_numbers<[1], [0], [0], [1], [0, 0, 1, 1], [], []>} : vector<2x8xbf16>, vector<8x256xbf16>, vector<2x256xf32> -> vector<2x256xf32>
    %324 = arith.truncf %323 : vector<2x256xf32> to vector<2x256xbf16>
    %c0_274 = arith.constant 0 : index
    %c0_275 = arith.constant 0 : index
    %c0_276 = arith.constant 0 : index
    %325 = vector.load %arg13[%c0_274, %c0_275, %c0_276] : memref<4x256x512xbf16, #tpu.memory_space<vmem>>, vector<1x256x512xbf16>
    %326 = vector.shape_cast %325 : vector<1x256x512xbf16> to vector<256x512xbf16>
    %cst_277 = arith.constant dense<0.000000e+00> : vector<2x512xf32>
    %327 = tpu.matmul %324, %326, %cst_277 {dimension_numbers = #tpu.dot_dimension_numbers<[1], [0], [0], [1], [0, 0, 1, 1], [], []>} : vector<2x256xbf16>, vector<256x512xbf16>, vector<2x512xf32> -> vector<2x512xf32>
    %328 = arith.addf %320, %327 : vector<2x512xf32>
    %c1_278 = arith.constant 1 : index
    %c0_279 = arith.constant 0 : index
    %c0_280 = arith.constant 0 : index
    %329 = vector.load %arg12[%c1_278, %c0_279, %c0_280] : memref<4x2x8xbf16, #tpu.memory_space<vmem>>, vector<1x2x8xbf16>
    %330 = vector.shape_cast %329 : vector<1x2x8xbf16> to vector<2x8xbf16>
    %cst_281 = arith.constant dense<0.000000e+00> : vector<2x256xf32>
    %331 = tpu.matmul %330, %319, %cst_281 {dimension_numbers = #tpu.dot_dimension_numbers<[1], [0], [0], [1], [0, 0, 1, 1], [], []>} : vector<2x8xbf16>, vector<8x256xbf16>, vector<2x256xf32> -> vector<2x256xf32>
    %332 = arith.truncf %331 : vector<2x256xf32> to vector<2x256xbf16>
    %c1_282 = arith.constant 1 : index
    %c0_283 = arith.constant 0 : index
    %c0_284 = arith.constant 0 : index
    %333 = vector.load %arg13[%c1_282, %c0_283, %c0_284] : memref<4x256x512xbf16, #tpu.memory_space<vmem>>, vector<1x256x512xbf16>
    %334 = vector.shape_cast %333 : vector<1x256x512xbf16> to vector<256x512xbf16>
    %cst_285 = arith.constant dense<0.000000e+00> : vector<2x512xf32>
    %335 = tpu.matmul %332, %334, %cst_285 {dimension_numbers = #tpu.dot_dimension_numbers<[1], [0], [0], [1], [0, 0, 1, 1], [], []>} : vector<2x256xbf16>, vector<256x512xbf16>, vector<2x512xf32> -> vector<2x512xf32>
    %336 = arith.addf %328, %335 : vector<2x512xf32>
    %c2_286 = arith.constant 2 : index
    %c0_287 = arith.constant 0 : index
    %c0_288 = arith.constant 0 : index
    %337 = vector.load %arg12[%c2_286, %c0_287, %c0_288] : memref<4x2x8xbf16, #tpu.memory_space<vmem>>, vector<1x2x8xbf16>
    %338 = vector.shape_cast %337 : vector<1x2x8xbf16> to vector<2x8xbf16>
    %cst_289 = arith.constant dense<0.000000e+00> : vector<2x256xf32>
    %339 = tpu.matmul %338, %319, %cst_289 {dimension_numbers = #tpu.dot_dimension_numbers<[1], [0], [0], [1], [0, 0, 1, 1], [], []>} : vector<2x8xbf16>, vector<8x256xbf16>, vector<2x256xf32> -> vector<2x256xf32>
    %340 = arith.truncf %339 : vector<2x256xf32> to vector<2x256xbf16>
    %c2_290 = arith.constant 2 : index
    %c0_291 = arith.constant 0 : index
    %c0_292 = arith.constant 0 : index
    %341 = vector.load %arg13[%c2_290, %c0_291, %c0_292] : memref<4x256x512xbf16, #tpu.memory_space<vmem>>, vector<1x256x512xbf16>
    %342 = vector.shape_cast %341 : vector<1x256x512xbf16> to vector<256x512xbf16>
    %cst_293 = arith.constant dense<0.000000e+00> : vector<2x512xf32>
    %343 = tpu.matmul %340, %342, %cst_293 {dimension_numbers = #tpu.dot_dimension_numbers<[1], [0], [0], [1], [0, 0, 1, 1], [], []>} : vector<2x256xbf16>, vector<256x512xbf16>, vector<2x512xf32> -> vector<2x512xf32>
    %344 = arith.addf %336, %343 : vector<2x512xf32>
    %c3_294 = arith.constant 3 : index
    %c0_295 = arith.constant 0 : index
    %c0_296 = arith.constant 0 : index
    %345 = vector.load %arg12[%c3_294, %c0_295, %c0_296] : memref<4x2x8xbf16, #tpu.memory_space<vmem>>, vector<1x2x8xbf16>
    %346 = vector.shape_cast %345 : vector<1x2x8xbf16> to vector<2x8xbf16>
    %cst_297 = arith.constant dense<0.000000e+00> : vector<2x256xf32>
    %347 = tpu.matmul %346, %319, %cst_297 {dimension_numbers = #tpu.dot_dimension_numbers<[1], [0], [0], [1], [0, 0, 1, 1], [], []>} : vector<2x8xbf16>, vector<8x256xbf16>, vector<2x256xf32> -> vector<2x256xf32>
    %348 = arith.truncf %347 : vector<2x256xf32> to vector<2x256xbf16>
    %c3_298 = arith.constant 3 : index
    %c0_299 = arith.constant 0 : index
    %c0_300 = arith.constant 0 : index
    %349 = vector.load %arg13[%c3_298, %c0_299, %c0_300] : memref<4x256x512xbf16, #tpu.memory_space<vmem>>, vector<1x256x512xbf16>
    %350 = vector.shape_cast %349 : vector<1x256x512xbf16> to vector<256x512xbf16>
    %cst_301 = arith.constant dense<0.000000e+00> : vector<2x512xf32>
    %351 = tpu.matmul %348, %350, %cst_301 {dimension_numbers = #tpu.dot_dimension_numbers<[1], [0], [0], [1], [0, 0, 1, 1], [], []>} : vector<2x256xbf16>, vector<256x512xbf16>, vector<2x512xf32> -> vector<2x512xf32>
    %352 = arith.addf %344, %351 : vector<2x512xf32>
    %cst_302 = arith.constant dense<0.000000e+00> : vector<512xf32>
    %353 = vector.multi_reduction <add>, %352, %cst_302 [0] : vector<2x512xf32> to vector<512xf32>
    %354 = vector.shape_cast %353 : vector<512xf32> to vector<1x512xf32>
    %cst_303 = arith.constant 5.000000e-01 : f32
    %355 = vector.broadcast %cst_303 : f32 to vector<1x512xf32>
    %356 = arith.mulf %354, %355 : vector<1x512xf32>
    %357 = vector.broadcast %356 : vector<1x512xf32> to vector<2x512xf32>
    %358 = arith.subf %352, %357 : vector<2x512xf32>
    %359 = arith.mulf %358, %358 : vector<2x512xf32>
    %cst_304 = arith.constant dense<0.000000e+00> : vector<512xf32>
    %360 = vector.multi_reduction <add>, %359, %cst_304 [0] : vector<2x512xf32> to vector<512xf32>
    %361 = vector.shape_cast %360 : vector<512xf32> to vector<1x512xf32>
    %cst_305 = arith.constant 5.000000e-01 : f32
    %362 = vector.broadcast %cst_305 : f32 to vector<1x512xf32>
    %363 = arith.mulf %361, %362 : vector<1x512xf32>
    %cst_306 = arith.constant 9.99999974E-6 : f32
    %364 = vector.broadcast %cst_306 : f32 to vector<1x512xf32>
    %365 = arith.addf %363, %364 : vector<1x512xf32>
    %366 = math.rsqrt %365 : vector<1x512xf32>
    %367 = vector.broadcast %366 : vector<1x512xf32> to vector<2x512xf32>
    %368 = arith.mulf %358, %367 : vector<2x512xf32>
    %c0_307 = arith.constant 0 : index
    %c0_308 = arith.constant 0 : index
    %369 = vector.load %arg14[%c0_307, %c0_308] : memref<1x512xf32, #tpu.memory_space<vmem>>, vector<1x512xf32>
    %370 = vector.broadcast %369 : vector<1x512xf32> to vector<2x512xf32>
    %371 = arith.mulf %368, %370 : vector<2x512xf32>
    %c0_309 = arith.constant 0 : index
    %c0_310 = arith.constant 0 : index
    %372 = vector.load %arg15[%c0_309, %c0_310] : memref<1x512xf32, #tpu.memory_space<vmem>>, vector<1x512xf32>
    %373 = vector.broadcast %372 : vector<1x512xf32> to vector<2x512xf32>
    %374 = arith.addf %371, %373 : vector<2x512xf32>
    %cst_311 = arith.constant 2.000000e-01 : f32
    %375 = vector.broadcast %cst_311 : f32 to vector<2x512xf32>
    %376 = arith.mulf %375, %374 : vector<2x512xf32>
    %377 = arith.maximumf %374, %376 : vector<2x512xf32>
    %378 = arith.truncf %377 : vector<2x512xf32> to vector<2x512xbf16>
    %cst_312 = arith.constant 0.000000e+00 : f32
    %379 = vector.broadcast %cst_312 : f32 to vector<2x1xf32>
    %c0_313 = arith.constant 0 : index
    %c0_314 = arith.constant 0 : index
    %c0_315 = arith.constant 0 : index
    %380 = vector.load %arg16[%c0_313, %c0_314, %c0_315] : memref<1x2x2xbf16, #tpu.memory_space<vmem>>, vector<1x2x2xbf16>
    %381 = vector.shape_cast %380 : vector<1x2x2xbf16> to vector<2x2xbf16>
    %cst_316 = arith.constant dense<0.000000e+00> : vector<2x512xf32>
    %382 = tpu.matmul %381, %378, %cst_316 {dimension_numbers = #tpu.dot_dimension_numbers<[1], [0], [0], [1], [0, 0, 1, 1], [], []>} : vector<2x2xbf16>, vector<2x512xbf16>, vector<2x512xf32> -> vector<2x512xf32>
    %c0_317 = arith.constant 0 : index
    %c0_318 = arith.constant 0 : index
    %c0_319 = arith.constant 0 : index
    %383 = vector.load %arg17[%c0_317, %c0_318, %c0_319] : memref<1x1x512xbf16, #tpu.memory_space<vmem>>, vector<1x1x512xbf16>
    %384 = vector.shape_cast %383 : vector<1x1x512xbf16> to vector<1x512xbf16>
    %385 = arith.extf %384 : vector<1x512xbf16> to vector<1x512xf32>
    %386 = vector.broadcast %385 : vector<1x512xf32> to vector<2x512xf32>
    %387 = arith.mulf %382, %386 : vector<2x512xf32>
    %cst_320 = arith.constant dense<0.000000e+00> : vector<2xf32>
    %388 = vector.multi_reduction <add>, %387, %cst_320 [1] : vector<2x512xf32> to vector<2xf32>
    %389 = vector.shape_cast %388 : vector<2xf32> to vector<2x1xf32>
    %390 = arith.addf %379, %389 : vector<2x1xf32>
    %c0_321 = arith.constant 0 : index
    %c0_322 = arith.constant 0 : index
    %391 = vector.load %arg18[%c0_321, %c0_322] : memref<1x1xf32, #tpu.memory_space<vmem>>, vector<1x1xf32>
    %392 = vector.broadcast %391 : vector<1x1xf32> to vector<2x1xf32>
    %393 = arith.addf %390, %392 : vector<2x1xf32>
    %c0_323 = arith.constant 0 : index
    %c0_324 = arith.constant 0 : index
    %394 = vector.load %arg19[%c0_323, %c0_324] : memref<2x1xf32, #tpu.memory_space<vmem>>, vector<2x1xf32>
    tpu.vector_store %arg19[%c0_323, %c0_324], %393 {strides = array<i32>} : memref<2x1xf32, #tpu.memory_space<vmem>>, vector<2x1xf32>,
    return
  }
  func.func @transform_0(%arg0: i32) -> (i32, i32) {
    %c0_i32 = arith.constant 0 : i32
    %c0_i32_0 = arith.constant 0 : i32
    %c0_i32_1 = arith.constant 0 : i32
    return %c0_i32, %c0_i32_0 : i32, i32
  }
  func.func @transform_1(%arg0: i32) -> (i32, i32) {
    %c0_i32 = arith.constant 0 : i32
    %c0_i32_0 = arith.constant 0 : i32
    %c0_i32_1 = arith.constant 0 : i32
    return %c0_i32, %c0_i32_0 : i32, i32
  }
  func.func @transform_2(%arg0: i32) -> (i32, i32) {
    %c0_i32 = arith.constant 0 : i32
    %c0_i32_0 = arith.constant 0 : i32
    %c0_i32_1 = arith.constant 0 : i32
    return %c0_i32, %c0_i32_0 : i32, i32
  }
  func.func @transform_3(%arg0: i32) -> (i32, i32, i32) {
    %c0_i32 = arith.constant 0 : i32
    %c0_i32_0 = arith.constant 0 : i32
    %c0_i32_1 = arith.constant 0 : i32
    %c0_i32_2 = arith.constant 0 : i32
    return %c0_i32, %c0_i32_0, %c0_i32_1 : i32, i32, i32
  }
  func.func @transform_4(%arg0: i32) -> (i32, i32, i32) {
    %c0_i32 = arith.constant 0 : i32
    %c0_i32_0 = arith.constant 0 : i32
    %c0_i32_1 = arith.constant 0 : i32
    %c0_i32_2 = arith.constant 0 : i32
    return %c0_i32, %c0_i32_0, %c0_i32_1 : i32, i32, i32
  }
  func.func @transform_5(%arg0: i32) -> (i32, i32) {
    %c0_i32 = arith.constant 0 : i32
    %c0_i32_0 = arith.constant 0 : i32
    %c0_i32_1 = arith.constant 0 : i32
    return %c0_i32, %c0_i32_0 : i32, i32
  }
  func.func @transform_6(%arg0: i32) -> (i32, i32) {
    %c0_i32 = arith.constant 0 : i32
    %c0_i32_0 = arith.constant 0 : i32
    %c0_i32_1 = arith.constant 0 : i32
    return %c0_i32, %c0_i32_0 : i32, i32
  }
  func.func @transform_7(%arg0: i32) -> (i32, i32, i32) {
    %c0_i32 = arith.constant 0 : i32
    %c0_i32_0 = arith.constant 0 : i32
    %c0_i32_1 = arith.constant 0 : i32
    %c0_i32_2 = arith.constant 0 : i32
    return %c0_i32, %c0_i32_0, %c0_i32_1 : i32, i32, i32
  }
  func.func @transform_8(%arg0: i32) -> (i32, i32, i32) {
    %c0_i32 = arith.constant 0 : i32
    %c0_i32_0 = arith.constant 0 : i32
    %c0_i32_1 = arith.constant 0 : i32
    %c0_i32_2 = arith.constant 0 : i32
    return %c0_i32, %c0_i32_0, %c0_i32_1 : i32, i32, i32
  }
  func.func @transform_9(%arg0: i32) -> (i32, i32) {
    %c0_i32 = arith.constant 0 : i32
    %c0_i32_0 = arith.constant 0 : i32
    %c0_i32_1 = arith.constant 0 : i32
    return %c0_i32, %c0_i32_0 : i32, i32
  }
  func.func @transform_10(%arg0: i32) -> (i32, i32) {
    %c0_i32 = arith.constant 0 : i32
    %c0_i32_0 = arith.constant 0 : i32
    %c0_i32_1 = arith.constant 0 : i32
    return %c0_i32, %c0_i32_0 : i32, i32
  }
  func.func @transform_11(%arg0: i32) -> (i32, i32, i32) {
    %c0_i32 = arith.constant 0 : i32
    %c0_i32_0 = arith.constant 0 : i32
    %c0_i32_1 = arith.constant 0 : i32
    %c0_i32_2 = arith.constant 0 : i32
    return %c0_i32, %c0_i32_0, %c0_i32_1 : i32, i32, i32
  }
  func.func @transform_12(%arg0: i32) -> (i32, i32, i32) {
    %c0_i32 = arith.constant 0 : i32
    %c0_i32_0 = arith.constant 0 : i32
    %c0_i32_1 = arith.constant 0 : i32
    %c0_i32_2 = arith.constant 0 : i32
    return %c0_i32, %c0_i32_0, %c0_i32_1 : i32, i32, i32
  }
  func.func @transform_13(%arg0: i32) -> (i32, i32) {
    %c0_i32 = arith.constant 0 : i32
    %c0_i32_0 = arith.constant 0 : i32
    %c0_i32_1 = arith.constant 0 : i32
    return %c0_i32, %c0_i32_0 : i32, i32
  }
  func.func @transform_14(%arg0: i32) -> (i32, i32) {
    %c0_i32 = arith.constant 0 : i32
    %c0_i32_0 = arith.constant 0 : i32
    %c0_i32_1 = arith.constant 0 : i32
    return %c0_i32, %c0_i32_0 : i32, i32
  }
  func.func @transform_15(%arg0: i32) -> (i32, i32, i32) {
    %c0_i32 = arith.constant 0 : i32
    %c0_i32_0 = arith.constant 0 : i32
    %c0_i32_1 = arith.constant 0 : i32
    %c0_i32_2 = arith.constant 0 : i32
    return %c0_i32, %c0_i32_0, %c0_i32_1 : i32, i32, i32
  }
  func.func @transform_16(%arg0: i32) -> (i32, i32, i32) {
    %c0_i32 = arith.constant 0 : i32
    %c0_i32_0 = arith.constant 0 : i32
    %c0_i32_1 = arith.constant 0 : i32
    %c0_i32_2 = arith.constant 0 : i32
    return %c0_i32, %c0_i32_0, %c0_i32_1 : i32, i32, i32
  }
  func.func @transform_17(%arg0: i32) -> (i32, i32) {
    %c0_i32 = arith.constant 0 : i32
    %c0_i32_0 = arith.constant 0 : i32
    %c0_i32_1 = arith.constant 0 : i32
    return %c0_i32, %c0_i32_0 : i32, i32
  }
  func.func @transform_18(%arg0: i32) -> (i32, i32) {
    %c0_i32 = arith.constant 0 : i32
    %c0_i32_0 = arith.constant 0 : i32
    %c0_i32_1 = arith.constant 0 : i32
    return %c0_i32, %c0_i32_0 : i32, i32
  }
}

</mosaic_0001>

<llo_original>
// kernel: _lambda_.1
$region0: #{_lambda_.1}
  #allocation0 [shape = 'u32[]', space=smem, size = 0x4, offset = 0x4, fixed_abs, tag = 'smem constant byte address 0x4 - core index']
  #allocation1 [shape = 'u32[144,128]{1,0:T(1,128)}', space=vmem, size = 0x12000, scoped, tag = 'internal scratch']
  #allocation2 [shape = 'f32[1,1]{1,0:T(1,128)S(1)}', space=vmem, size = 0x200, scoped, tag = 'scoped memory for _lambda_.1']
  %s0 = inlined_call_operand.vmem [shape: bf16[128,64], index: 0, kind: input, shape index: {}]
  %s1 = inlined_call_operand.vmem [shape: bf16[64,64], index: 1, kind: input, shape index: {}]
  %s2 = inlined_call_operand.vmem [shape: f32[1,64], index: 2, kind: input, shape index: {}]
  %s3 = inlined_call_operand.vmem [shape: bf16[16,32,128], index: 3, kind: input, shape index: {}]
  %s4 = inlined_call_operand.vmem [shape: bf16[16,64,128], index: 4, kind: input, shape index: {}]
  %s5 = inlined_call_operand.vmem [shape: f32[1,128], index: 5, kind: input, shape index: {}]
  %s6 = inlined_call_operand.vmem [shape: f32[1,128], index: 6, kind: input, shape index: {}]
  %s7 = inlined_call_operand.vmem [shape: bf16[16,8,32], index: 7, kind: input, shape index: {}]
  %s8 = inlined_call_operand.vmem [shape: bf16[16,128,256], index: 8, kind: input, shape index: {}]
  %s9 = inlined_call_operand.vmem [shape: f32[1,256], index: 9, kind: input, shape index: {}]
  %s10 = inlined_call_operand.vmem [shape: f32[1,256], index: 10, kind: input, shape index: {}]
  %s11 = inlined_call_operand.vmem [shape: bf16[4,2,8], index: 11, kind: input, shape index: {}]
  %s12 = inlined_call_operand.vmem [shape: bf16[4,256,512], index: 12, kind: input, shape index: {}]
  %s13 = inlined_call_operand.vmem [shape: f32[1,512], index: 13, kind: input, shape index: {}]
  %s14 = inlined_call_operand.vmem [shape: f32[1,512], index: 14, kind: input, shape index: {}]
  %s15 = inlined_call_operand.vmem [shape: bf16[1,2,2], index: 15, kind: input, shape index: {}]
  %s16 = inlined_call_operand.vmem [shape: bf16[1,1,512], index: 16, kind: input, shape index: {}]
  %s17 = inlined_call_operand.<no memory space> [shape: f32[1,1], index: 17, kind: input, shape index: {}]
  %s18 = inlined_call_operand.vmem [shape: f32[2,1], index: 18, kind: output, shape index: {}]
  %s19 = sld [smem:[#allocation0]]
  $region82: #{_lambda_.1} parent=0
    _
  %s21 = ssub.s32 1, %s19
  %s22 = scalar_select 0, %s21, %s19
  %v23 = vstv %s17
  %24 = vst [vmem:[#allocation2] sm:$0x1] %v23
  // Predicated region
  $region2: #{_lambda_.1} parent=0 // pred_check
    _
  $region3: #{_lambda_.1} parent=0 // pred_check_branch
    %26 = sbr.rel (0) target = $region5
  $region4: #{_lambda_.1} parent=0 // pred_region
    _
  $region5: #{_lambda_.1} parent=0 // pred_fallthru
    _
  // Predicated region
  $region6: #{_lambda_.1} parent=0 // pred_check
    _
  $region7: #{_lambda_.1} parent=0 // pred_check_branch
    %28 = sbr.rel (0) target = $region9
  $region8: #{_lambda_.1} parent=0 // pred_region
    _
  $region9: #{_lambda_.1} parent=0 // pred_fallthru
    _
  // Predicated region
  $region10: #{_lambda_.1} parent=0 // pred_check
    _
  $region11: #{_lambda_.1} parent=0 // pred_check_branch
    %30 = sbr.rel (0) target = $region13
  $region12: #{_lambda_.1} parent=0 // pred_region
    _
  $region13: #{_lambda_.1} parent=0 // pred_fallthru
    _
  // Predicated region
  $region14: #{_lambda_.1} parent=0 // pred_check
    _
  $region15: #{_lambda_.1} parent=0 // pred_check_branch
    %32 = sbr.rel (0) target = $region17
  $region16: #{_lambda_.1} parent=0 // pred_region
    _
  $region17: #{_lambda_.1} parent=0 // pred_fallthru
    _
  // Predicated region
  $region18: #{_lambda_.1} parent=0 // pred_check
    _
  $region19: #{_lambda_.1} parent=0 // pred_check_branch
    %34 = sbr.rel (0) target = $region21
  $region20: #{_lambda_.1} parent=0 // pred_region
    _
  $region21: #{_lambda_.1} parent=0 // pred_fallthru
    _
  // Predicated region
  $region22: #{_lambda_.1} parent=0 // pred_check
    _
  $region23: #{_lambda_.1} parent=0 // pred_check_branch
    %36 = sbr.rel (0) target = $region25
  $region24: #{_lambda_.1} parent=0 // pred_region
    _
  $region25: #{_lambda_.1} parent=0 // pred_fallthru
    _
  // Predicated region
  $region26: #{_lambda_.1} parent=0 // pred_check
    _
  $region27: #{_lambda_.1} parent=0 // pred_check_branch
    %38 = sbr.rel (0) target = $region29
  $region28: #{_lambda_.1} parent=0 // pred_region
    _
  $region29: #{_lambda_.1} parent=0 // pred_fallthru
    _
  // Predicated region
  $region30: #{_lambda_.1} parent=0 // pred_check
    _
  $region31: #{_lambda_.1} parent=0 // pred_check_branch
    %40 = sbr.rel (0) target = $region33
  $region32: #{_lambda_.1} parent=0 // pred_region
    _
  $region33: #{_lambda_.1} parent=0 // pred_fallthru
    _
  // Predicated region
  $region34: #{_lambda_.1} parent=0 // pred_check
    _
  $region35: #{_lambda_.1} parent=0 // pred_check_branch
    %42 = sbr.rel (0) target = $region37
  $region36: #{_lambda_.1} parent=0 // pred_region
    _
  $region37: #{_lambda_.1} parent=0 // pred_fallthru
    _
  // Predicated region
  $region38: #{_lambda_.1} parent=0 // pred_check
    _
  $region39: #{_lambda_.1} parent=0 // pred_check_branch
    %44 = sbr.rel (0) target = $region41
  $region40: #{_lambda_.1} parent=0 // pred_region
    _
  $region41: #{_lambda_.1} parent=0 // pred_fallthru
    _
  // Predicated region
  $region42: #{_lambda_.1} parent=0 // pred_check
    _
  $region43: #{_lambda_.1} parent=0 // pred_check_branch
    %46 = sbr.rel (0) target = $region45
  $region44: #{_lambda_.1} parent=0 // pred_region
    _
  $region45: #{_lambda_.1} parent=0 // pred_fallthru
    _
  // Predicated region
  $region46: #{_lambda_.1} parent=0 // pred_check
    _
  $region47: #{_lambda_.1} parent=0 // pred_check_branch
    %48 = sbr.rel (0) target = $region49
  $region48: #{_lambda_.1} parent=0 // pred_region
    _
  $region49: #{_lambda_.1} parent=0 // pred_fallthru
    _
  // Predicated region
  $region50: #{_lambda_.1} parent=0 // pred_check
    _
  $region51: #{_lambda_.1} parent=0 // pred_check_branch
    %50 = sbr.rel (0) target = $region53
  $region52: #{_lambda_.1} parent=0 // pred_region
    _
  $region53: #{_lambda_.1} parent=0 // pred_fallthru
    _
  // Predicated region
  $region54: #{_lambda_.1} parent=0 // pred_check
    _
  $region55: #{_lambda_.1} parent=0 // pred_check_branch
    %52 = sbr.rel (0) target = $region57
  $region56: #{_lambda_.1} parent=0 // pred_region
    _
  $region57: #{_lambda_.1} parent=0 // pred_fallthru
    _
  // Predicated region
  $region58: #{_lambda_.1} parent=0 // pred_check
    _
  $region59: #{_lambda_.1} parent=0 // pred_check_branch
    %54 = sbr.rel (0) target = $region61
  $region60: #{_lambda_.1} parent=0 // pred_region
    _
  $region61: #{_lambda_.1} parent=0 // pred_fallthru
    _
  // Predicated region
  $region62: #{_lambda_.1} parent=0 // pred_check
    _
  $region63: #{_lambda_.1} parent=0 // pred_check_branch
    %56 = sbr.rel (0) target = $region65
  $region64: #{_lambda_.1} parent=0 // pred_region
    _
  $region65: #{_lambda_.1} parent=0 // pred_fallthru
    _
  // Predicated region
  $region66: #{_lambda_.1} parent=0 // pred_check
    _
  $region67: #{_lambda_.1} parent=0 // pred_check_branch
    %58 = sbr.rel (0) target = $region69
  $region68: #{_lambda_.1} parent=0 // pred_region
    _
  $region69: #{_lambda_.1} parent=0 // pred_fallthru
    _
  // Predicated region
  $region70: #{_lambda_.1} parent=0 // pred_check
    _
  $region71: #{_lambda_.1} parent=0 // pred_check_branch
    %60 = sbr.rel (0) target = $region73
  $region72: #{_lambda_.1} parent=0 // pred_region
    _
  $region73: #{_lambda_.1} parent=0 // pred_fallthru
    _
  %v62 = vld [vmem:[%s0] sm:$0xf]
  %v63 = vld [vmem:[%s0 + $0x4] sm:$0xf]
  %v64 = vld [vmem:[%s0 + $0x8] sm:$0xf]
  %v65 = vld [vmem:[%s0 + $0xc] sm:$0xf]
  %v66 = vld [vmem:[%s0 + $0x10] sm:$0xf]
  %v67 = vld [vmem:[%s0 + $0x14] sm:$0xf]
  %v68 = vld [vmem:[%s0 + $0x18] sm:$0xf]
  %v69 = vld [vmem:[%s0 + $0x1c] sm:$0xf]
  %v70 = vld [vmem:[%s0 + $0x20] sm:$0xf]
  %v71 = vld [vmem:[%s0 + $0x24] sm:$0xf]
  %v72 = vld [vmem:[%s0 + $0x28] sm:$0xf]
  %v73 = vld [vmem:[%s0 + $0x2c] sm:$0xf]
  %v74 = vld [vmem:[%s0 + $0x30] sm:$0xf]
  %v75 = vld [vmem:[%s0 + $0x34] sm:$0xf]
  %v76 = vld [vmem:[%s0 + $0x38] sm:$0xf]
  %v77 = vld [vmem:[%s0 + $0x3c] sm:$0xf]
  %v78 = vld [vmem:[%s1] sm:$0xf]
  %v79 = vld [vmem:[%s1 + $0x4] sm:$0xf]
  %v80 = vld [vmem:[%s1 + $0x8] sm:$0xf]
  %v81 = vld [vmem:[%s1 + $0xc] sm:$0xf]
  %v82 = vld [vmem:[%s1 + $0x10] sm:$0xf]
  %v83 = vld [vmem:[%s1 + $0x14] sm:$0xf]
  %v84 = vld [vmem:[%s1 + $0x18] sm:$0xf]
  %v85 = vld [vmem:[%s1 + $0x1c] sm:$0xf]
  %v86 = vld [vmem:[%s2] sm:$0x1]
  %v88 = vlaneseq
  %v89 = vshrl.u32 %v88, 7
  %v90 = vsub.s32 0, %v89
  %v91 = vrot.slane %v86, %v90
  %v109 = vunpack.c.l.b16 %v62
  %v110 = vunpack.c.l.b16 %v63
  %v111 = vunpack.c.l.b16 %v64
  %v112 = vunpack.c.l.b16 %v65
  %v113 = vunpack.c.l.b16 %v66
  %v114 = vunpack.c.l.b16 %v67
  %v115 = vunpack.c.l.b16 %v68
  %v116 = vunpack.c.l.b16 %v69
  %v117 = vunpack.c.l.b16 %v70
  %v118 = vunpack.c.l.b16 %v71
  %v119 = vunpack.c.l.b16 %v72
  %v120 = vunpack.c.l.b16 %v73
  %v121 = vunpack.c.l.b16 %v74
  %v122 = vunpack.c.l.b16 %v75
  %v123 = vunpack.c.l.b16 %v76
  %v124 = vunpack.c.l.b16 %v77
  %v125 = vpack.c.b16 %v110, %v109
  %v126 = vpack.c.b16 %v112, %v111
  %v127 = vpack.c.b16 %v114, %v113
  %v128 = vpack.c.b16 %v116, %v115
  %v129 = vpack.c.b16 %v118, %v117
  %v130 = vpack.c.b16 %v120, %v119
  %v131 = vpack.c.b16 %v122, %v121
  %v132 = vpack.c.b16 %v124, %v123
  %v141 = vunpack.c.l.b16 %v78
  %v142 = vunpack.c.l.b16 %v79
  %v143 = vunpack.c.l.b16 %v80
  %v144 = vunpack.c.l.b16 %v81
  %v145 = vunpack.c.l.b16 %v82
  %v146 = vunpack.c.l.b16 %v83
  %v147 = vunpack.c.l.b16 %v84
  %v148 = vunpack.c.l.b16 %v85
  %v149 = vpack.c.b16 %v142, %v141
  %v150 = vpack.c.b16 %v144, %v143
  %v151 = vpack.c.b16 %v146, %v145
  %v152 = vpack.c.b16 %v148, %v147
  %vm157 = vcmask 523264
  %v159 = vsel %vm157, %v125, 0
  %v162 = vsel %vm157, %v126, 0
  %v165 = vsel %vm157, %v127, 0
  %v168 = vsel %vm157, %v128, 0
  %v171 = vsel %vm157, %v129, 0
  %v174 = vsel %vm157, %v130, 0
  %v177 = vsel %vm157, %v131, 0
  %v180 = vsel %vm157, %v132, 0
  %182 = vmatprep.subr.bf16.mxu0 0
  %183 = vmatpush1.bf16.msra.mxu0 %v149
  %184 = vmatprep.subr.bf16.mxu0 0
  %185 = vmatpush1.bf16.msra.mxu0 %v150
  %186 = vmatprep.subr.bf16.mxu0 0
  %187 = vmatpush1.bf16.msra.mxu0 %v151
  %188 = vmatprep.subr.bf16.mxu0 0
  %189 = vmatpush1.bf16.msra.mxu0 %v152
  %190 = vmatprep.subr.bf16.mxu0 0
  %191 = vmatpush1.bf16.msra.mxu0 0
  %192 = vmatprep.subr.bf16.mxu0 0
  %193 = vmatpush1.bf16.msra.mxu0 0
  %194 = vmatprep.subr.bf16.mxu0 0
  %195 = vmatpush1.bf16.msra.mxu0 0
  %196 = vmatprep.subr.bf16.mxu0 0
  %197 = vmatpush1.bf16.msra.mxu0 0
  %198 = vmatprep.subr.bf16.mxu0 0
  %199 = vmatpush1.bf16.msra.mxu0 0
  %200 = vmatprep.subr.bf16.mxu0 0
  %201 = vmatpush1.bf16.msra.mxu0 0
  %202 = vmatprep.subr.bf16.mxu0 0
  %203 = vmatpush1.bf16.msra.mxu0 0
  %204 = vmatprep.subr.bf16.mxu0 0
  %205 = vmatpush1.bf16.msra.mxu0 0
  %206 = vmatprep.subr.bf16.mxu0 0
  %207 = vmatpush1.bf16.msra.mxu0 0
  %208 = vmatprep.subr.bf16.mxu0 0
  %209 = vmatpush1.bf16.msra.mxu0 0
  %210 = vmatprep.subr.bf16.mxu0 0
  %211 = vmatpush1.bf16.msra.mxu0 0
  %212 = vmatprep.subr.bf16.mxu0 0
  %213 = vmatpush1.bf16.msra.mxu0 0
  %214 = vmatprep.mubr.bf16.mxu0 0
  %215 = vmatmul.mubr.bf16.gmra.mrb[0].mxu0 %v159
  %v216 = vpop.f32.mrb[0].mxu0
  %v217 = vadd.f32 %v91, %v216
  %v218 = vpop.f32.mrb[0].mxu0
  %v219 = vpop.f32.mrb[0].mxu0
  %v220 = vadd.f32 %v91, %v219
  %v221 = vpop.f32.mrb[0].mxu0
  %222 = vmatprep.mubr.bf16.mxu0 0
  %223 = vmatmul.mubr.bf16.gmra.mrb[0].mxu0 %v162
  %v224 = vpop.f32.mrb[0].mxu0
  %v225 = vadd.f32 %v91, %v224
  %v226 = vpop.f32.mrb[0].mxu0
  %v227 = vpop.f32.mrb[0].mxu0
  %v228 = vadd.f32 %v91, %v227
  %v229 = vpop.f32.mrb[0].mxu0
  %230 = vmatprep.mubr.bf16.mxu0 0
  %231 = vmatmul.mubr.bf16.gmra.mrb[0].mxu0 %v165
  %v232 = vpop.f32.mrb[0].mxu0
  %v233 = vadd.f32 %v91, %v232
  %v234 = vpop.f32.mrb[0].mxu0
  %v235 = vpop.f32.mrb[0].mxu0
  %v236 = vadd.f32 %v91, %v235
  %v237 = vpop.f32.mrb[0].mxu0
  %238 = vmatprep.mubr.bf16.mxu0 0
  %239 = vmatmul.mubr.bf16.gmra.mrb[0].mxu0 %v168
  %v240 = vpop.f32.mrb[0].mxu0
  %v241 = vadd.f32 %v91, %v240
  %v242 = vpop.f32.mrb[0].mxu0
  %v243 = vpop.f32.mrb[0].mxu0
  %v244 = vadd.f32 %v91, %v243
  %v245 = vpop.f32.mrb[0].mxu0
  %246 = vmatprep.mubr.bf16.mxu0 0
  %247 = vmatmul.mubr.bf16.gmra.mrb[0].mxu0 %v171
  %v248 = vpop.f32.mrb[0].mxu0
  %v249 = vadd.f32 %v91, %v248
  %v250 = vpop.f32.mrb[0].mxu0
  %v251 = vpop.f32.mrb[0].mxu0
  %v252 = vadd.f32 %v91, %v251
  %v253 = vpop.f32.mrb[0].mxu0
  %254 = vmatprep.mubr.bf16.mxu0 0
  %255 = vmatmul.mubr.bf16.gmra.mrb[0].mxu0 %v174
  %v256 = vpop.f32.mrb[0].mxu0
  %v257 = vadd.f32 %v91, %v256
  %v258 = vpop.f32.mrb[0].mxu0
  %v259 = vpop.f32.mrb[0].mxu0
  %v260 = vadd.f32 %v91, %v259
  %v261 = vpop.f32.mrb[0].mxu0
  %262 = vmatprep.mubr.bf16.mxu0 0
  %263 = vmatmul.mubr.bf16.gmra.mrb[0].mxu0 %v177
  %v264 = vpop.f32.mrb[0].mxu0
  %v265 = vadd.f32 %v91, %v264
  %v266 = vpop.f32.mrb[0].mxu0
  %v267 = vpop.f32.mrb[0].mxu0
  %v268 = vadd.f32 %v91, %v267
  %v269 = vpop.f32.mrb[0].mxu0
  %270 = vmatprep.mubr.bf16.mxu0 0
  %271 = vmatmul.mubr.bf16.gmra.mrb[0].mxu0 %v180
  %v272 = vpop.f32.mrb[0].mxu0
  %v273 = vadd.f32 %v91, %v272
  %v274 = vpop.f32.mrb[0].mxu0
  %v275 = vpop.f32.mrb[0].mxu0
  %v276 = vadd.f32 %v91, %v275
  %v277 = vpop.f32.mrb[0].mxu0
  %278 = vdwg.mxu0
  %v279 = vmul.f32 %v217, 0.2
  %v280 = vmul.f32 %v220, 0.2
  %v281 = vmul.f32 %v225, 0.2
  %v282 = vmul.f32 %v228, 0.2
  %v283 = vmul.f32 %v233, 0.2
  %v284 = vmul.f32 %v236, 0.2
  %v285 = vmul.f32 %v241, 0.2
  %v286 = vmul.f32 %v244, 0.2
  %v287 = vmul.f32 %v249, 0.2
  %v288 = vmul.f32 %v252, 0.2
  %v289 = vmul.f32 %v257, 0.2
  %v290 = vmul.f32 %v260, 0.2
  %v291 = vmul.f32 %v265, 0.2
  %v292 = vmul.f32 %v268, 0.2
  %v293 = vmul.f32 %v273, 0.2
  %v294 = vmul.f32 %v276, 0.2
  %v295 = vmax.f32 %v217, %v279
  %v296 = vmax.f32 %v220, %v280
  %v297 = vmax.f32 %v225, %v281
  %v298 = vmax.f32 %v228, %v282
  %v299 = vmax.f32 %v233, %v283
  %v300 = vmax.f32 %v236, %v284
  %v301 = vmax.f32 %v241, %v285
  %v302 = vmax.f32 %v244, %v286
  %v303 = vmax.f32 %v249, %v287
  %v304 = vmax.f32 %v252, %v288
  %v305 = vmax.f32 %v257, %v289
  %v306 = vmax.f32 %v260, %v290
  %v307 = vmax.f32 %v265, %v291
  %v308 = vmax.f32 %v268, %v292
  %v309 = vmax.f32 %v273, %v293
  %v310 = vmax.f32 %v276, %v294
  %v311 = vpack.c.bf16 %v296, %v295
  %v312 = vpack.c.bf16 %v298, %v297
  %v313 = vpack.c.bf16 %v300, %v299
  %v314 = vpack.c.bf16 %v302, %v301
  %v315 = vpack.c.bf16 %v304, %v303
  %v316 = vpack.c.bf16 %v306, %v305
  %v317 = vpack.c.bf16 %v308, %v307
  %v318 = vpack.c.bf16 %v310, %v309
  %v319 = vld [vmem:[%s3] sm:$0xf]
  %v320 = vld [vmem:[%s3 + $0x4] sm:$0xf]
  %v321 = vld [vmem:[%s3 + $0x8] sm:$0xf]
  %v322 = vld [vmem:[%s3 + $0xc] sm:$0xf]
  %v327 = vunpack.c.l.b16 %v319
  %v328 = vunpack.c.l.b16 %v320
  %v329 = vunpack.c.l.b16 %v321
  %v330 = vunpack.c.l.b16 %v322
  %v331 = vpack.c.b16 %v328, %v327
  %v332 = vpack.c.b16 %v330, %v329
  %335 = vmatprep.subr.bf16.mxu0 0
  %336 = vmatpush1.bf16.msra.mxu0 %v311
  %337 = vmatprep.subr.bf16.mxu0 0
  %338 = vmatpush1.bf16.msra.mxu0 %v312
  %339 = vmatprep.subr.bf16.mxu0 0
  %340 = vmatpush1.bf16.msra.mxu0 %v313
  %341 = vmatprep.subr.bf16.mxu0 0
  %342 = vmatpush1.bf16.msra.mxu0 %v314
  %343 = vmatprep.subr.bf16.mxu0 0
  %344 = vmatpush1.bf16.msra.mxu0 %v315
  %345 = vmatprep.subr.bf16.mxu0 0
  %346 = vmatpush1.bf16.msra.mxu0 %v316
  %347 = vmatprep.subr.bf16.mxu0 0
  %348 = vmatpush1.bf16.msra.mxu0 %v317
  %349 = vmatprep.subr.bf16.mxu0 0
  %350 = vmatpush1.bf16.msra.mxu0 %v318
  %351 = vmatprep.subr.bf16.mxu0 0
  %352 = vmatpush1.bf16.msra.mxu0 0
  %353 = vmatprep.subr.bf16.mxu0 0
  %354 = vmatpush1.bf16.msra.mxu0 0
  %355 = vmatprep.subr.bf16.mxu0 0
  %356 = vmatpush1.bf16.msra.mxu0 0
  %357 = vmatprep.subr.bf16.mxu0 0
  %358 = vmatpush1.bf16.msra.mxu0 0
  %359 = vmatprep.subr.bf16.mxu0 0
  %360 = vmatpush1.bf16.msra.mxu0 0
  %361 = vmatprep.subr.bf16.mxu0 0
  %362 = vmatpush1.bf16.msra.mxu0 0
  %363 = vmatprep.subr.bf16.mxu0 0
  %364 = vmatpush1.bf16.msra.mxu0 0
  %365 = vmatprep.subr.bf16.mxu0 0
  %366 = vmatpush1.bf16.msra.mxu0 0
  %367 = vmatprep.mubr.bf16.mxu0 0
  %368 = vmatmul.mubr.bf16.gmra.mrb[0].mxu0 %v331
  %v369 = vpop.f32.mrb[0].mxu0
  %v370 = vadd.f32 0.0, %v369
  %v371 = vpop.f32.mrb[0].mxu0
  %v372 = vpop.f32.mrb[0].mxu0
  %v373 = vadd.f32 0.0, %v372
  %v374 = vpop.f32.mrb[0].mxu0
  %375 = vmatprep.mubr.bf16.mxu0 0
  %376 = vmatmul.mubr.bf16.gmra.mrb[0].mxu0 %v332
  %v377 = vpop.f32.mrb[0].mxu0
  %v378 = vadd.f32 0.0, %v377
  %v379 = vpop.f32.mrb[0].mxu0
  %v380 = vpop.f32.mrb[0].mxu0
  %v381 = vadd.f32 0.0, %v380
  %v382 = vpop.f32.mrb[0].mxu0
  %383 = vdwg.mxu0
  %v384 = vpack.c.bf16 %v373, %v370
  %v385 = vpack.c.bf16 %v381, %v378
  %v386 = vld [vmem:[%s4] sm:$0xf]
  %v387 = vld [vmem:[%s4 + $0x4] sm:$0xf]
  %v388 = vld [vmem:[%s4 + $0x8] sm:$0xf]
  %v389 = vld [vmem:[%s4 + $0xc] sm:$0xf]
  %v390 = vld [vmem:[%s4 + $0x10] sm:$0xf]
  %v391 = vld [vmem:[%s4 + $0x14] sm:$0xf]
  %v392 = vld [vmem:[%s4 + $0x18] sm:$0xf]
  %v393 = vld [vmem:[%s4 + $0x1c] sm:$0xf]
  %s394 = scalar_lea.vmem %s3, 16
  %v395 = vld [vmem:[%s394] sm:$0xf]
  %v396 = vld [vmem:[%s394 + $0x4] sm:$0xf]
  %v397 = vld [vmem:[%s394 + $0x8] sm:$0xf]
  %v398 = vld [vmem:[%s394 + $0xc] sm:$0xf]
  %v403 = vunpack.c.l.b16 %v395
  %v404 = vunpack.c.l.b16 %v396
  %v405 = vunpack.c.l.b16 %v397
  %v406 = vunpack.c.l.b16 %v398
  %v407 = vpack.c.b16 %v404, %v403
  %v408 = vpack.c.b16 %v406, %v405
  %411 = vmatprep.subr.bf16.mxu0 0
  %412 = vmatpush1.bf16.msra.mxu0 %v311
  %413 = vmatprep.subr.bf16.mxu0 0
  %414 = vmatpush1.bf16.msra.mxu0 %v312
  %415 = vmatprep.subr.bf16.mxu0 0
  %416 = vmatpush1.bf16.msra.mxu0 %v313
  %417 = vmatprep.subr.bf16.mxu0 0
  %418 = vmatpush1.bf16.msra.mxu0 %v314
  %419 = vmatprep.subr.bf16.mxu0 0
  %420 = vmatpush1.bf16.msra.mxu0 %v315
  %421 = vmatprep.subr.bf16.mxu0 0
  %422 = vmatpush1.bf16.msra.mxu0 %v316
  %423 = vmatprep.subr.bf16.mxu0 0
  %424 = vmatpush1.bf16.msra.mxu0 %v317
  %425 = vmatprep.subr.bf16.mxu0 0
  %426 = vmatpush1.bf16.msra.mxu0 %v318
  %427 = vmatprep.subr.bf16.mxu0 0
  %428 = vmatpush1.bf16.msra.mxu0 0
  %429 = vmatprep.subr.bf16.mxu0 0
  %430 = vmatpush1.bf16.msra.mxu0 0
  %431 = vmatprep.subr.bf16.mxu0 0
  %432 = vmatpush1.bf16.msra.mxu0 0
  %433 = vmatprep.subr.bf16.mxu0 0
  %434 = vmatpush1.bf16.msra.mxu0 0
  %435 = vmatprep.subr.bf16.mxu0 0
  %436 = vmatpush1.bf16.msra.mxu0 0
  %437 = vmatprep.subr.bf16.mxu0 0
  %438 = vmatpush1.bf16.msra.mxu0 0
  %439 = vmatprep.subr.bf16.mxu0 0
  %440 = vmatpush1.bf16.msra.mxu0 0
  %441 = vmatprep.subr.bf16.mxu0 0
  %442 = vmatpush1.bf16.msra.mxu0 0
  %443 = vmatprep.mubr.bf16.mxu0 0
  %444 = vmatmul.mubr.bf16.gmra.mrb[0].mxu0 %v407
  %v445 = vpop.f32.mrb[0].mxu0
  %v446 = vadd.f32 0.0, %v445
  %v447 = vpop.f32.mrb[0].mxu0
  %v448 = vpop.f32.mrb[0].mxu0
  %v449 = vadd.f32 0.0, %v448
  %v450 = vpop.f32.mrb[0].mxu0
  %451 = vmatprep.mubr.bf16.mxu0 0
  %452 = vmatmul.mubr.bf16.gmra.mrb[0].mxu0 %v408
  %v453 = vpop.f32.mrb[0].mxu0
  %v454 = vadd.f32 0.0, %v453
  %v455 = vpop.f32.mrb[0].mxu0
  %v456 = vpop.f32.mrb[0].mxu0
  %v457 = vadd.f32 0.0, %v456
  %v458 = vpop.f32.mrb[0].mxu0
  %459 = vdwg.mxu0
  %v460 = vpack.c.bf16 %v449, %v446
  %v461 = vpack.c.bf16 %v457, %v454
  %s462 = scalar_lea.vmem %s4, 32
  %v463 = vld [vmem:[%s462] sm:$0xf]
  %v464 = vld [vmem:[%s462 + $0x4] sm:$0xf]
  %v465 = vld [vmem:[%s462 + $0x8] sm:$0xf]
  %v466 = vld [vmem:[%s462 + $0xc] sm:$0xf]
  %v467 = vld [vmem:[%s462 + $0x10] sm:$0xf]
  %v468 = vld [vmem:[%s462 + $0x14] sm:$0xf]
  %v469 = vld [vmem:[%s462 + $0x18] sm:$0xf]
  %v470 = vld [vmem:[%s462 + $0x1c] sm:$0xf]
  %v479 = vunpack.c.l.b16 %v463
  %v480 = vunpack.c.l.b16 %v464
  %v481 = vunpack.c.l.b16 %v465
  %v482 = vunpack.c.l.b16 %v466
  %v483 = vunpack.c.l.b16 %v467
  %v484 = vunpack.c.l.b16 %v468
  %v485 = vunpack.c.l.b16 %v469
  %v486 = vunpack.c.l.b16 %v470
  %v487 = vpack.c.b16 %v480, %v479
  %v488 = vpack.c.b16 %v482, %v481
  %v489 = vpack.c.b16 %v484, %v483
  %v490 = vpack.c.b16 %v486, %v485
  %v496 = vsel %vm157, %v460, 0
  %v499 = vsel %vm157, %v461, 0
  %501 = vmatprep.subr.bf16.mxu0 0
  %502 = vmatpush1.bf16.msra.mxu0 %v487
  %503 = vmatprep.subr.bf16.mxu0 0
  %504 = vmatpush1.bf16.msra.mxu0 %v488
  %505 = vmatprep.subr.bf16.mxu0 0
  %506 = vmatpush1.bf16.msra.mxu0 %v489
  %507 = vmatprep.subr.bf16.mxu0 0
  %508 = vmatpush1.bf16.msra.mxu0 %v490
  %509 = vmatprep.subr.bf16.mxu0 0
  %510 = vmatpush1.bf16.msra.mxu0 0
  %511 = vmatprep.subr.bf16.mxu0 0
  %512 = vmatpush1.bf16.msra.mxu0 0
  %513 = vmatprep.subr.bf16.mxu0 0
  %514 = vmatpush1.bf16.msra.mxu0 0
  %515 = vmatprep.subr.bf16.mxu0 0
  %516 = vmatpush1.bf16.msra.mxu0 0
  %517 = vmatprep.subr.bf16.mxu0 0
  %518 = vmatpush1.bf16.msra.mxu0 0
  %519 = vmatprep.subr.bf16.mxu0 0
  %520 = vmatpush1.bf16.msra.mxu0 0
  %521 = vmatprep.subr.bf16.mxu0 0
  %522 = vmatpush1.bf16.msra.mxu0 0
  %523 = vmatprep.subr.bf16.mxu0 0
  %524 = vmatpush1.bf16.msra.mxu0 0
  %525 = vmatprep.subr.bf16.mxu0 0
  %526 = vmatpush1.bf16.msra.mxu0 0
  %527 = vmatprep.subr.bf16.mxu0 0
  %528 = vmatpush1.bf16.msra.mxu0 0
  %529 = vmatprep.subr.bf16.mxu0 0
  %530 = vmatpush1.bf16.msra.mxu0 0
  %531 = vmatprep.subr.bf16.mxu0 0
  %532 = vmatpush1.bf16.msra.mxu0 0
  %533 = vmatprep.mubr.bf16.mxu0 0
  %534 = vmatmul.mubr.bf16.gmra.mrb[0].mxu0 %v496
  %v535 = vpop.f32.mrb[0].mxu0
  %v536 = vadd.f32 0.0, %v535
  %v537 = vpop.f32.mrb[0].mxu0
  %v538 = vpop.f32.mrb[0].mxu0
  %v539 = vadd.f32 0.0, %v538
  %v540 = vpop.f32.mrb[0].mxu0
  %541 = vmatprep.mubr.bf16.mxu0 0
  %542 = vmatmul.mubr.bf16.gmra.mrb[0].mxu0 %v499
  %v543 = vpop.f32.mrb[0].mxu0
  %v544 = vadd.f32 0.0, %v543
  %v545 = vpop.f32.mrb[0].mxu0
  %v546 = vpop.f32.mrb[0].mxu0
  %v547 = vadd.f32 0.0, %v546
  %v548 = vpop.f32.mrb[0].mxu0
  %549 = vdwg.mxu0
  %v558 = vunpack.c.l.b16 %v386
  %v559 = vunpack.c.l.b16 %v387
  %v560 = vunpack.c.l.b16 %v388
  %v561 = vunpack.c.l.b16 %v389
  %v562 = vunpack.c.l.b16 %v390
  %v563 = vunpack.c.l.b16 %v391
  %v564 = vunpack.c.l.b16 %v392
  %v565 = vunpack.c.l.b16 %v393
  %v566 = vpack.c.b16 %v559, %v558
  %v567 = vpack.c.b16 %v561, %v560
  %v568 = vpack.c.b16 %v563, %v562
  %v569 = vpack.c.b16 %v565, %v564
  %v575 = vsel %vm157, %v384, 0
  %v578 = vsel %vm157, %v385, 0
  %580 = vmatprep.subr.bf16.mxu0 0
  %581 = vmatpush1.bf16.msra.mxu0 %v566
  %582 = vmatprep.subr.bf16.mxu0 0
  %583 = vmatpush1.bf16.msra.mxu0 %v567
  %584 = vmatprep.subr.bf16.mxu0 0
  %585 = vmatpush1.bf16.msra.mxu0 %v568
  %586 = vmatprep.subr.bf16.mxu0 0
  %587 = vmatpush1.bf16.msra.mxu0 %v569
  %588 = vmatprep.subr.bf16.mxu0 0
  %589 = vmatpush1.bf16.msra.mxu0 0
  %590 = vmatprep.subr.bf16.mxu0 0
  %591 = vmatpush1.bf16.msra.mxu0 0
  %592 = vmatprep.subr.bf16.mxu0 0
  %593 = vmatpush1.bf16.msra.mxu0 0
  %594 = vmatprep.subr.bf16.mxu0 0
  %595 = vmatpush1.bf16.msra.mxu0 0
  %596 = vmatprep.subr.bf16.mxu0 0
  %597 = vmatpush1.bf16.msra.mxu0 0
  %598 = vmatprep.subr.bf16.mxu0 0
  %599 = vmatpush1.bf16.msra.mxu0 0
  %600 = vmatprep.subr.bf16.mxu0 0
  %601 = vmatpush1.bf16.msra.mxu0 0
  %602 = vmatprep.subr.bf16.mxu0 0
  %603 = vmatpush1.bf16.msra.mxu0 0
  %604 = vmatprep.subr.bf16.mxu0 0
  %605 = vmatpush1.bf16.msra.mxu0 0
  %606 = vmatprep.subr.bf16.mxu0 0
  %607 = vmatpush1.bf16.msra.mxu0 0
  %608 = vmatprep.subr.bf16.mxu0 0
  %609 = vmatpush1.bf16.msra.mxu0 0
  %610 = vmatprep.subr.bf16.mxu0 0
  %611 = vmatpush1.bf16.msra.mxu0 0
  %612 = vmatprep.mubr.bf16.mxu0 0
  %613 = vmatmul.mubr.bf16.gmra.mrb[0].mxu0 %v575
  %v614 = vpop.f32.mrb[0].mxu0
  %v615 = vadd.f32 %v536, %v614
  %v616 = vpop.f32.mrb[0].mxu0
  %v617 = vpop.f32.mrb[0].mxu0
  %v618 = vadd.f32 %v539, %v617
  %v619 = vpop.f32.mrb[0].mxu0
  %620 = vmatprep.mubr.bf16.mxu0 0
  %621 = vmatmul.mubr.bf16.gmra.mrb[0].mxu0 %v578
  %v622 = vpop.f32.mrb[0].mxu0
  %v623 = vadd.f32 %v544, %v622
  %v624 = vpop.f32.mrb[0].mxu0
  %v625 = vpop.f32.mrb[0].mxu0
  %v626 = vadd.f32 %v547, %v625
  %v627 = vpop.f32.mrb[0].mxu0
  %628 = vdwg.mxu0
  %s629 = scalar_lea.vmem %s3, 32
  %v630 = vld [vmem:[%s629] sm:$0xf]
  %v631 = vld [vmem:[%s629 + $0x4] sm:$0xf]
  %v632 = vld [vmem:[%s629 + $0x8] sm:$0xf]
  %v633 = vld [vmem:[%s629 + $0xc] sm:$0xf]
  %v638 = vunpack.c.l.b16 %v630
  %v639 = vunpack.c.l.b16 %v631
  %v640 = vunpack.c.l.b16 %v632
  %v641 = vunpack.c.l.b16 %v633
  %v642 = vpack.c.b16 %v639, %v638
  %v643 = vpack.c.b16 %v641, %v640
  %646 = vmatprep.subr.bf16.mxu0 0
  %647 = vmatpush1.bf16.msra.mxu0 %v311
  %648 = vmatprep.subr.bf16.mxu0 0
  %649 = vmatpush1.bf16.msra.mxu0 %v312
  %650 = vmatprep.subr.bf16.mxu0 0
  %651 = vmatpush1.bf16.msra.mxu0 %v313
  %652 = vmatprep.subr.bf16.mxu0 0
  %653 = vmatpush1.bf16.msra.mxu0 %v314
  %654 = vmatprep.subr.bf16.mxu0 0
  %655 = vmatpush1.bf16.msra.mxu0 %v315
  %656 = vmatprep.subr.bf16.mxu0 0
  %657 = vmatpush1.bf16.msra.mxu0 %v316
  %658 = vmatprep.subr.bf16.mxu0 0
  %659 = vmatpush1.bf16.msra.mxu0 %v317
  %660 = vmatprep.subr.bf16.mxu0 0
  %661 = vmatpush1.bf16.msra.mxu0 %v318
  %662 = vmatprep.subr.bf16.mxu0 0
  %663 = vmatpush1.bf16.msra.mxu0 0
  %664 = vmatprep.subr.bf16.mxu0 0
  %665 = vmatpush1.bf16.msra.mxu0 0
  %666 = vmatprep.subr.bf16.mxu0 0
  %667 = vmatpush1.bf16.msra.mxu0 0
  %668 = vmatprep.subr.bf16.mxu0 0
  %669 = vmatpush1.bf16.msra.mxu0 0
  %670 = vmatprep.subr.bf16.mxu0 0
  %671 = vmatpush1.bf16.msra.mxu0 0
  %672 = vmatprep.subr.bf16.mxu0 0
  %673 = vmatpush1.bf16.msra.mxu0 0
  %674 = vmatprep.subr.bf16.mxu0 0
  %675 = vmatpush1.bf16.msra.mxu0 0
  %676 = vmatprep.subr.bf16.mxu0 0
  %677 = vmatpush1.bf16.msra.mxu0 0
  %678 = vmatprep.mubr.bf16.mxu0 0
  %679 = vmatmul.mubr.bf16.gmra.mrb[0].mxu0 %v642
  %v680 = vpop.f32.mrb[0].mxu0
  %v681 = vadd.f32 0.0, %v680
  %v682 = vpop.f32.mrb[0].mxu0
  %v683 = vpop.f32.mrb[0].mxu0
  %v684 = vadd.f32 0.0, %v683
  %v685 = vpop.f32.mrb[0].mxu0
  %686 = vmatprep.mubr.bf16.mxu0 0
  %687 = vmatmul.mubr.bf16.gmra.mrb[0].mxu0 %v643
  %v688 = vpop.f32.mrb[0].mxu0
  %v689 = vadd.f32 0.0, %v688
  %v690 = vpop.f32.mrb[0].mxu0
  %v691 = vpop.f32.mrb[0].mxu0
  %v692 = vadd.f32 0.0, %v691
  %v693 = vpop.f32.mrb[0].mxu0
  %694 = vdwg.mxu0
  %v695 = vpack.c.bf16 %v684, %v681
  %v696 = vpack.c.bf16 %v692, %v689
  %s697 = scalar_lea.vmem %s4, 64
  %v698 = vld [vmem:[%s697] sm:$0xf]
  %v699 = vld [vmem:[%s697 + $0x4] sm:$0xf]
  %v700 = vld [vmem:[%s697 + $0x8] sm:$0xf]
  %v701 = vld [vmem:[%s697 + $0xc] sm:$0xf]
  %v702 = vld [vmem:[%s697 + $0x10] sm:$0xf]
  %v703 = vld [vmem:[%s697 + $0x14] sm:$0xf]
  %v704 = vld [vmem:[%s697 + $0x18] sm:$0xf]
  %v705 = vld [vmem:[%s697 + $0x1c] sm:$0xf]
  %v714 = vunpack.c.l.b16 %v698
  %v715 = vunpack.c.l.b16 %v699
  %v716 = vunpack.c.l.b16 %v700
  %v717 = vunpack.c.l.b16 %v701
  %v718 = vunpack.c.l.b16 %v702
  %v719 = vunpack.c.l.b16 %v703
  %v720 = vunpack.c.l.b16 %v704
  %v721 = vunpack.c.l.b16 %v705
  %v722 = vpack.c.b16 %v715, %v714
  %v723 = vpack.c.b16 %v717, %v716
  %v724 = vpack.c.b16 %v719, %v718
  %v725 = vpack.c.b16 %v721, %v720
  %v731 = vsel %vm157, %v695, 0
  %v734 = vsel %vm157, %v696, 0
  %736 = vmatprep.subr.bf16.mxu0 0
  %737 = vmatpush1.bf16.msra.mxu0 %v722
  %738 = vmatprep.subr.bf16.mxu0 0
  %739 = vmatpush1.bf16.msra.mxu0 %v723
  %740 = vmatprep.subr.bf16.mxu0 0
  %741 = vmatpush1.bf16.msra.mxu0 %v724
  %742 = vmatprep.subr.bf16.mxu0 0
  %743 = vmatpush1.bf16.msra.mxu0 %v725
  %744 = vmatprep.subr.bf16.mxu0 0
  %745 = vmatpush1.bf16.msra.mxu0 0
  %746 = vmatprep.subr.bf16.mxu0 0
  %747 = vmatpush1.bf16.msra.mxu0 0
  %748 = vmatprep.subr.bf16.mxu0 0
  %749 = vmatpush1.bf16.msra.mxu0 0
  %750 = vmatprep.subr.bf16.mxu0 0
  %751 = vmatpush1.bf16.msra.mxu0 0
  %752 = vmatprep.subr.bf16.mxu0 0
  %753 = vmatpush1.bf16.msra.mxu0 0
  %754 = vmatprep.subr.bf16.mxu0 0
  %755 = vmatpush1.bf16.msra.mxu0 0
  %756 = vmatprep.subr.bf16.mxu0 0
  %757 = vmatpush1.bf16.msra.mxu0 0
  %758 = vmatprep.subr.bf16.mxu0 0
  %759 = vmatpush1.bf16.msra.mxu0 0
  %760 = vmatprep.subr.bf16.mxu0 0
  %761 = vmatpush1.bf16.msra.mxu0 0
  %762 = vmatprep.subr.bf16.mxu0 0
  %763 = vmatpush1.bf16.msra.mxu0 0
  %764 = vmatprep.subr.bf16.mxu0 0
  %765 = vmatpush1.bf16.msra.mxu0 0
  %766 = vmatprep.subr.bf16.mxu0 0
  %767 = vmatpush1.bf16.msra.mxu0 0
  %768 = vmatprep.mubr.bf16.mxu0 0
  %769 = vmatmul.mubr.bf16.gmra.mrb[0].mxu0 %v731
  %v770 = vpop.f32.mrb[0].mxu0
  %v771 = vadd.f32 0.0, %v770
  %v772 = vpop.f32.mrb[0].mxu0
  %v773 = vpop.f32.mrb[0].mxu0
  %v774 = vadd.f32 0.0, %v773
  %v775 = vpop.f32.mrb[0].mxu0
  %776 = vmatprep.mubr.bf16.mxu0 0
  %777 = vmatmul.mubr.bf16.gmra.mrb[0].mxu0 %v734
  %v778 = vpop.f32.mrb[0].mxu0
  %v779 = vadd.f32 0.0, %v778
  %v780 = vpop.f32.mrb[0].mxu0
  %v781 = vpop.f32.mrb[0].mxu0
  %v782 = vadd.f32 0.0, %v781
  %v783 = vpop.f32.mrb[0].mxu0
  %784 = vdwg.mxu0
  %v785 = vadd.f32 %v615, %v771
  %v786 = vadd.f32 %v618, %v774
  %v787 = vadd.f32 %v623, %v779
  %v788 = vadd.f32 %v626, %v782
  %s789 = scalar_lea.vmem %s3, 48
  %v790 = vld [vmem:[%s789] sm:$0xf]
  %v791 = vld [vmem:[%s789 + $0x4] sm:$0xf]
  %v792 = vld [vmem:[%s789 + $0x8] sm:$0xf]
  %v793 = vld [vmem:[%s789 + $0xc] sm:$0xf]
  %v798 = vunpack.c.l.b16 %v790
  %v799 = vunpack.c.l.b16 %v791
  %v800 = vunpack.c.l.b16 %v792
  %v801 = vunpack.c.l.b16 %v793
  %v802 = vpack.c.b16 %v799, %v798
  %v803 = vpack.c.b16 %v801, %v800
  %806 = vmatprep.subr.bf16.mxu0 0
  %807 = vmatpush1.bf16.msra.mxu0 %v311
  %808 = vmatprep.subr.bf16.mxu0 0
  %809 = vmatpush1.bf16.msra.mxu0 %v312
  %810 = vmatprep.subr.bf16.mxu0 0
  %811 = vmatpush1.bf16.msra.mxu0 %v313
  %812 = vmatprep.subr.bf16.mxu0 0
  %813 = vmatpush1.bf16.msra.mxu0 %v314
  %814 = vmatprep.subr.bf16.mxu0 0
  %815 = vmatpush1.bf16.msra.mxu0 %v315
  %816 = vmatprep.subr.bf16.mxu0 0
  %817 = vmatpush1.bf16.msra.mxu0 %v316
  %818 = vmatprep.subr.bf16.mxu0 0
  %819 = vmatpush1.bf16.msra.mxu0 %v317
  %820 = vmatprep.subr.bf16.mxu0 0
  %821 = vmatpush1.bf16.msra.mxu0 %v318
  %822 = vmatprep.subr.bf16.mxu0 0
  %823 = vmatpush1.bf16.msra.mxu0 0
  %824 = vmatprep.subr.bf16.mxu0 0
  %825 = vmatpush1.bf16.msra.mxu0 0
  %826 = vmatprep.subr.bf16.mxu0 0
  %827 = vmatpush1.bf16.msra.mxu0 0
  %828 = vmatprep.subr.bf16.mxu0 0
  %829 = vmatpush1.bf16.msra.mxu0 0
  %830 = vmatprep.subr.bf16.mxu0 0
  %831 = vmatpush1.bf16.msra.mxu0 0
  %832 = vmatprep.subr.bf16.mxu0 0
  %833 = vmatpush1.bf16.msra.mxu0 0
  %834 = vmatprep.subr.bf16.mxu0 0
  %835 = vmatpush1.bf16.msra.mxu0 0
  %836 = vmatprep.subr.bf16.mxu0 0
  %837 = vmatpush1.bf16.msra.mxu0 0
  %838 = vmatprep.mubr.bf16.mxu0 0
  %839 = vmatmul.mubr.bf16.gmra.mrb[0].mxu0 %v802
  %v840 = vpop.f32.mrb[0].mxu0
  %v841 = vadd.f32 0.0, %v840
  %v842 = vpop.f32.mrb[0].mxu0
  %v843 = vpop.f32.mrb[0].mxu0
  %v844 = vadd.f32 0.0, %v843
  %v845 = vpop.f32.mrb[0].mxu0
  %846 = vmatprep.mubr.bf16.mxu0 0
  %847 = vmatmul.mubr.bf16.gmra.mrb[0].mxu0 %v803
  %v848 = vpop.f32.mrb[0].mxu0
  %v849 = vadd.f32 0.0, %v848
  %v850 = vpop.f32.mrb[0].mxu0
  %v851 = vpop.f32.mrb[0].mxu0
  %v852 = vadd.f32 0.0, %v851
  %v853 = vpop.f32.mrb[0].mxu0
  %854 = vdwg.mxu0
  %v855 = vpack.c.bf16 %v844, %v841
  %v856 = vpack.c.bf16 %v852, %v849
  %s857 = scalar_lea.vmem %s4, 96
  %v858 = vld [vmem:[%s857] sm:$0xf]
  %v859 = vld [vmem:[%s857 + $0x4] sm:$0xf]
  %v860 = vld [vmem:[%s857 + $0x8] sm:$0xf]
  %v861 = vld [vmem:[%s857 + $0xc] sm:$0xf]
  %v862 = vld [vmem:[%s857 + $0x10] sm:$0xf]
  %v863 = vld [vmem:[%s857 + $0x14] sm:$0xf]
  %v864 = vld [vmem:[%s857 + $0x18] sm:$0xf]
  %v865 = vld [vmem:[%s857 + $0x1c] sm:$0xf]
  %v874 = vunpack.c.l.b16 %v858
  %v875 = vunpack.c.l.b16 %v859
  %v876 = vunpack.c.l.b16 %v860
  %v877 = vunpack.c.l.b16 %v861
  %v878 = vunpack.c.l.b16 %v862
  %v879 = vunpack.c.l.b16 %v863
  %v880 = vunpack.c.l.b16 %v864
  %v881 = vunpack.c.l.b16 %v865
  %v882 = vpack.c.b16 %v875, %v874
  %v883 = vpack.c.b16 %v877, %v876
  %v884 = vpack.c.b16 %v879, %v878
  %v885 = vpack.c.b16 %v881, %v880
  %v891 = vsel %vm157, %v855, 0
  %v894 = vsel %vm157, %v856, 0
  %896 = vmatprep.subr.bf16.mxu0 0
  %897 = vmatpush1.bf16.msra.mxu0 %v882
  %898 = vmatprep.subr.bf16.mxu0 0
  %899 = vmatpush1.bf16.msra.mxu0 %v883
  %900 = vmatprep.subr.bf16.mxu0 0
  %901 = vmatpush1.bf16.msra.mxu0 %v884
  %902 = vmatprep.subr.bf16.mxu0 0
  %903 = vmatpush1.bf16.msra.mxu0 %v885
  %904 = vmatprep.subr.bf16.mxu0 0
  %905 = vmatpush1.bf16.msra.mxu0 0
  %906 = vmatprep.subr.bf16.mxu0 0
  %907 = vmatpush1.bf16.msra.mxu0 0
  %908 = vmatprep.subr.bf16.mxu0 0
  %909 = vmatpush1.bf16.msra.mxu0 0
  %910 = vmatprep.subr.bf16.mxu0 0
  %911 = vmatpush1.bf16.msra.mxu0 0
  %912 = vmatprep.subr.bf16.mxu0 0
  %913 = vmatpush1.bf16.msra.mxu0 0
  %914 = vmatprep.subr.bf16.mxu0 0
  %915 = vmatpush1.bf16.msra.mxu0 0
  %916 = vmatprep.subr.bf16.mxu0 0
  %917 = vmatpush1.bf16.msra.mxu0 0
  %918 = vmatprep.subr.bf16.mxu0 0
  %919 = vmatpush1.bf16.msra.mxu0 0
  %920 = vmatprep.subr.bf16.mxu0 0
  %921 = vmatpush1.bf16.msra.mxu0 0
  %922 = vmatprep.subr.bf16.mxu0 0
  %923 = vmatpush1.bf16.msra.mxu0 0
  %924 = vmatprep.subr.bf16.mxu0 0
  %925 = vmatpush1.bf16.msra.mxu0 0
  %926 = vmatprep.subr.bf16.mxu0 0
  %927 = vmatpush1.bf16.msra.mxu0 0
  %928 = vmatprep.mubr.bf16.mxu0 0
  %929 = vmatmul.mubr.bf16.gmra.mrb[0].mxu0 %v891
  %v930 = vpop.f32.mrb[0].mxu0
  %v931 = vadd.f32 0.0, %v930
  %v932 = vpop.f32.mrb[0].mxu0
  %v933 = vpop.f32.mrb[0].mxu0
  %v934 = vadd.f32 0.0, %v933
  %v935 = vpop.f32.mrb[0].mxu0
  %936 = vmatprep.mubr.bf16.mxu0 0
  %937 = vmatmul.mubr.bf16.gmra.mrb[0].mxu0 %v894
  %v938 = vpop.f32.mrb[0].mxu0
  %v939 = vadd.f32 0.0, %v938
  %v940 = vpop.f32.mrb[0].mxu0
  %v941 = vpop.f32.mrb[0].mxu0
  %v942 = vadd.f32 0.0, %v941
  %v943 = vpop.f32.mrb[0].mxu0
  %944 = vdwg.mxu0
  %v945 = vadd.f32 %v785, %v931
  %v946 = vadd.f32 %v786, %v934
  %v947 = vadd.f32 %v787, %v939
  %v948 = vadd.f32 %v788, %v942
  %s949 = scalar_lea.vmem %s3, 64
  %v950 = vld [vmem:[%s949] sm:$0xf]
  %v951 = vld [vmem:[%s949 + $0x4] sm:$0xf]
  %v952 = vld [vmem:[%s949 + $0x8] sm:$0xf]
  %v953 = vld [vmem:[%s949 + $0xc] sm:$0xf]
  %v958 = vunpack.c.l.b16 %v950
  %v959 = vunpack.c.l.b16 %v951
  %v960 = vunpack.c.l.b16 %v952
  %v961 = vunpack.c.l.b16 %v953
  %v962 = vpack.c.b16 %v959, %v958
  %v963 = vpack.c.b16 %v961, %v960
  %966 = vmatprep.subr.bf16.mxu0 0
  %967 = vmatpush1.bf16.msra.mxu0 %v311
  %968 = vmatprep.subr.bf16.mxu0 0
  %969 = vmatpush1.bf16.msra.mxu0 %v312
  %970 = vmatprep.subr.bf16.mxu0 0
  %971 = vmatpush1.bf16.msra.mxu0 %v313
  %972 = vmatprep.subr.bf16.mxu0 0
  %973 = vmatpush1.bf16.msra.mxu0 %v314
  %974 = vmatprep.subr.bf16.mxu0 0
  %975 = vmatpush1.bf16.msra.mxu0 %v315
  %976 = vmatprep.subr.bf16.mxu0 0
  %977 = vmatpush1.bf16.msra.mxu0 %v316
  %978 = vmatprep.subr.bf16.mxu0 0
  %979 = vmatpush1.bf16.msra.mxu0 %v317
  %980 = vmatprep.subr.bf16.mxu0 0
  %981 = vmatpush1.bf16.msra.mxu0 %v318
  %982 = vmatprep.subr.bf16.mxu0 0
  %983 = vmatpush1.bf16.msra.mxu0 0
  %984 = vmatprep.subr.bf16.mxu0 0
  %985 = vmatpush1.bf16.msra.mxu0 0
  %986 = vmatprep.subr.bf16.mxu0 0
  %987 = vmatpush1.bf16.msra.mxu0 0
  %988 = vmatprep.subr.bf16.mxu0 0
  %989 = vmatpush1.bf16.msra.mxu0 0
  %990 = vmatprep.subr.bf16.mxu0 0
  %991 = vmatpush1.bf16.msra.mxu0 0
  %992 = vmatprep.subr.bf16.mxu0 0
  %993 = vmatpush1.bf16.msra.mxu0 0
  %994 = vmatprep.subr.bf16.mxu0 0
  %995 = vmatpush1.bf16.msra.mxu0 0
  %996 = vmatprep.subr.bf16.mxu0 0
  %997 = vmatpush1.bf16.msra.mxu0 0
  %998 = vmatprep.mubr.bf16.mxu0 0
  %999 = vmatmul.mubr.bf16.gmra.mrb[0].mxu0 %v962
  %v1000 = vpop.f32.mrb[0].mxu0
  %v1001 = vadd.f32 0.0, %v1000
  %v1002 = vpop.f32.mrb[0].mxu0
  %v1003 = vpop.f32.mrb[0].mxu0
  %v1004 = vadd.f32 0.0, %v1003
  %v1005 = vpop.f32.mrb[0].mxu0
  %1006 = vmatprep.mubr.bf16.mxu0 0
  %1007 = vmatmul.mubr.bf16.gmra.mrb[0].mxu0 %v963
  %v1008 = vpop.f32.mrb[0].mxu0
  %v1009 = vadd.f32 0.0, %v1008
  %v1010 = vpop.f32.mrb[0].mxu0
  %v1011 = vpop.f32.mrb[0].mxu0
  %v1012 = vadd.f32 0.0, %v1011
  %v1013 = vpop.f32.mrb[0].mxu0
  %1014 = vdwg.mxu0
  %v1015 = vpack.c.bf16 %v1004, %v1001
  %v1016 = vpack.c.bf16 %v1012, %v1009
  %s1017 = scalar_lea.vmem %s4, 128
  %v1018 = vld [vmem:[%s1017] sm:$0xf]
  %v1019 = vld [vmem:[%s1017 + $0x4] sm:$0xf]
  %v1020 = vld [vmem:[%s1017 + $0x8] sm:$0xf]
  %v1021 = vld [vmem:[%s1017 + $0xc] sm:$0xf]
  %v1022 = vld [vmem:[%s1017 + $0x10] sm:$0xf]
  %v1023 = vld [vmem:[%s1017 + $0x14] sm:$0xf]
  %v1024 = vld [vmem:[%s1017 + $0x18] sm:$0xf]
  %v1025 = vld [vmem:[%s1017 + $0x1c] sm:$0xf]
  %v1034 = vunpack.c.l.b16 %v1018
  %v1035 = vunpack.c.l.b16 %v1019
  %v1036 = vunpack.c.l.b16 %v1020
  %v1037 = vunpack.c.l.b16 %v1021
  %v1038 = vunpack.c.l.b16 %v1022
  %v1039 = vunpack.c.l.b16 %v1023
  %v1040 = vunpack.c.l.b16 %v1024
  %v1041 = vunpack.c.l.b16 %v1025
  %v1042 = vpack.c.b16 %v1035, %v1034
  %v1043 = vpack.c.b16 %v1037, %v1036
  %v1044 = vpack.c.b16 %v1039, %v1038
  %v1045 = vpack.c.b16 %v1041, %v1040
  %v1051 = vsel %vm157, %v1015, 0
  %v1054 = vsel %vm157, %v1016, 0
  %1056 = vmatprep.subr.bf16.mxu0 0
  %1057 = vmatpush1.bf16.msra.mxu0 %v1042
  %1058 = vmatprep.subr.bf16.mxu0 0
  %1059 = vmatpush1.bf16.msra.mxu0 %v1043
  %1060 = vmatprep.subr.bf16.mxu0 0
  %1061 = vmatpush1.bf16.msra.mxu0 %v1044
  %1062 = vmatprep.subr.bf16.mxu0 0
  %1063 = vmatpush1.bf16.msra.mxu0 %v1045
  %1064 = vmatprep.subr.bf16.mxu0 0
  %1065 = vmatpush1.bf16.msra.mxu0 0
  %1066 = vmatprep.subr.bf16.mxu0 0
  %1067 = vmatpush1.bf16.msra.mxu0 0
  %1068 = vmatprep.subr.bf16.mxu0 0
  %1069 = vmatpush1.bf16.msra.mxu0 0
  %1070 = vmatprep.subr.bf16.mxu0 0
  %1071 = vmatpush1.bf16.msra.mxu0 0
  %1072 = vmatprep.subr.bf16.mxu0 0
  %1073 = vmatpush1.bf16.msra.mxu0 0
  %1074 = vmatprep.subr.bf16.mxu0 0
  %1075 = vmatpush1.bf16.msra.mxu0 0
  %1076 = vmatprep.subr.bf16.mxu0 0
  %1077 = vmatpush1.bf16.msra.mxu0 0
  %1078 = vmatprep.subr.bf16.mxu0 0
  %1079 = vmatpush1.bf16.msra.mxu0 0
  %1080 = vmatprep.subr.bf16.mxu0 0
  %1081 = vmatpush1.bf16.msra.mxu0 0
  %1082 = vmatprep.subr.bf16.mxu0 0
  %1083 = vmatpush1.bf16.msra.mxu0 0
  %1084 = vmatprep.subr.bf16.mxu0 0
  %1085 = vmatpush1.bf16.msra.mxu0 0
  %1086 = vmatprep.subr.bf16.mxu0 0
  %1087 = vmatpush1.bf16.msra.mxu0 0
  %1088 = vmatprep.mubr.bf16.mxu0 0
  %1089 = vmatmul.mubr.bf16.gmra.mrb[0].mxu0 %v1051
  %v1090 = vpop.f32.mrb[0].mxu0
  %v1091 = vadd.f32 0.0, %v1090
  %v1092 = vpop.f32.mrb[0].mxu0
  %v1093 = vpop.f32.mrb[0].mxu0
  %v1094 = vadd.f32 0.0, %v1093
  %v1095 = vpop.f32.mrb[0].mxu0
  %1096 = vmatprep.mubr.bf16.mxu0 0
  %1097 = vmatmul.mubr.bf16.gmra.mrb[0].mxu0 %v1054
  %v1098 = vpop.f32.mrb[0].mxu0
  %v1099 = vadd.f32 0.0, %v1098
  %v1100 = vpop.f32.mrb[0].mxu0
  %v1101 = vpop.f32.mrb[0].mxu0
  %v1102 = vadd.f32 0.0, %v1101
  %v1103 = vpop.f32.mrb[0].mxu0
  %1104 = vdwg.mxu0
  %v1105 = vadd.f32 %v945, %v1091
  %v1106 = vadd.f32 %v946, %v1094
  %v1107 = vadd.f32 %v947, %v1099
  %v1108 = vadd.f32 %v948, %v1102
  %s1109 = scalar_lea.vmem %s3, 80
  %v1110 = vld [vmem:[%s1109] sm:$0xf]
  %v1111 = vld [vmem:[%s1109 + $0x4] sm:$0xf]
  %v1112 = vld [vmem:[%s1109 + $0x8] sm:$0xf]
  %v1113 = vld [vmem:[%s1109 + $0xc] sm:$0xf]
  %v1118 = vunpack.c.l.b16 %v1110
  %v1119 = vunpack.c.l.b16 %v1111
  %v1120 = vunpack.c.l.b16 %v1112
  %v1121 = vunpack.c.l.b16 %v1113
  %v1122 = vpack.c.b16 %v1119, %v1118
  %v1123 = vpack.c.b16 %v1121, %v1120
  %1126 = vmatprep.subr.bf16.mxu0 0
  %1127 = vmatpush1.bf16.msra.mxu0 %v311
  %1128 = vmatprep.subr.bf16.mxu0 0
  %1129 = vmatpush1.bf16.msra.mxu0 %v312
  %1130 = vmatprep.subr.bf16.mxu0 0
  %1131 = vmatpush1.bf16.msra.mxu0 %v313
  %1132 = vmatprep.subr.bf16.mxu0 0
  %1133 = vmatpush1.bf16.msra.mxu0 %v314
  %1134 = vmatprep.subr.bf16.mxu0 0
  %1135 = vmatpush1.bf16.msra.mxu0 %v315
  %1136 = vmatprep.subr.bf16.mxu0 0
  %1137 = vmatpush1.bf16.msra.mxu0 %v316
  %1138 = vmatprep.subr.bf16.mxu0 0
  %1139 = vmatpush1.bf16.msra.mxu0 %v317
  %1140 = vmatprep.subr.bf16.mxu0 0
  %1141 = vmatpush1.bf16.msra.mxu0 %v318
  %1142 = vmatprep.subr.bf16.mxu0 0
  %1143 = vmatpush1.bf16.msra.mxu0 0
  %1144 = vmatprep.subr.bf16.mxu0 0
  %1145 = vmatpush1.bf16.msra.mxu0 0
  %1146 = vmatprep.subr.bf16.mxu0 0
  %1147 = vmatpush1.bf16.msra.mxu0 0
  %1148 = vmatprep.subr.bf16.mxu0 0
  %1149 = vmatpush1.bf16.msra.mxu0 0
  %1150 = vmatprep.subr.bf16.mxu0 0
  %1151 = vmatpush1.bf16.msra.mxu0 0
  %1152 = vmatprep.subr.bf16.mxu0 0
  %1153 = vmatpush1.bf16.msra.mxu0 0
  %1154 = vmatprep.subr.bf16.mxu0 0
  %1155 = vmatpush1.bf16.msra.mxu0 0
  %1156 = vmatprep.subr.bf16.mxu0 0
  %1157 = vmatpush1.bf16.msra.mxu0 0
  %1158 = vmatprep.mubr.bf16.mxu0 0
  %1159 = vmatmul.mubr.bf16.gmra.mrb[0].mxu0 %v1122
  %v1160 = vpop.f32.mrb[0].mxu0
  %v1161 = vadd.f32 0.0, %v1160
  %v1162 = vpop.f32.mrb[0].mxu0
  %v1163 = vpop.f32.mrb[0].mxu0
  %v1164 = vadd.f32 0.0, %v1163
  %v1165 = vpop.f32.mrb[0].mxu0
  %1166 = vmatprep.mubr.bf16.mxu0 0
  %1167 = vmatmul.mubr.bf16.gmra.mrb[0].mxu0 %v1123
  %v1168 = vpop.f32.mrb[0].mxu0
  %v1169 = vadd.f32 0.0, %v1168
  %v1170 = vpop.f32.mrb[0].mxu0
  %v1171 = vpop.f32.mrb[0].mxu0
  %v1172 = vadd.f32 0.0, %v1171
  %v1173 = vpop.f32.mrb[0].mxu0
  %1174 = vdwg.mxu0
  %v1175 = vpack.c.bf16 %v1164, %v1161
  %v1176 = vpack.c.bf16 %v1172, %v1169
  %s1177 = scalar_lea.vmem %s4, 160
  %v1178 = vld [vmem:[%s1177] sm:$0xf]
  %v1179 = vld [vmem:[%s1177 + $0x4] sm:$0xf]
  %v1180 = vld [vmem:[%s1177 + $0x8] sm:$0xf]
  %v1181 = vld [vmem:[%s1177 + $0xc] sm:$0xf]
  %v1182 = vld [vmem:[%s1177 + $0x10] sm:$0xf]
  %v1183 = vld [vmem:[%s1177 + $0x14] sm:$0xf]
  %v1184 = vld [vmem:[%s1177 + $0x18] sm:$0xf]
  %v1185 = vld [vmem:[%s1177 + $0x1c] sm:$0xf]
  %v1194 = vunpack.c.l.b16 %v1178
  %v1195 = vunpack.c.l.b16 %v1179
  %v1196 = vunpack.c.l.b16 %v1180
  %v1197 = vunpack.c.l.b16 %v1181
  %v1198 = vunpack.c.l.b16 %v1182
  %v1199 = vunpack.c.l.b16 %v1183
  %v1200 = vunpack.c.l.b16 %v1184
  %v1201 = vunpack.c.l.b16 %v1185
  %v1202 = vpack.c.b16 %v1195, %v1194
  %v1203 = vpack.c.b16 %v1197, %v1196
  %v1204 = vpack.c.b16 %v1199, %v1198
  %v1205 = vpack.c.b16 %v1201, %v1200
  %v1211 = vsel %vm157, %v1175, 0
  %v1214 = vsel %vm157, %v1176, 0
  %1216 = vmatprep.subr.bf16.mxu0 0
  %1217 = vmatpush1.bf16.msra.mxu0 %v1202
  %1218 = vmatprep.subr.bf16.mxu0 0
  %1219 = vmatpush1.bf16.msra.mxu0 %v1203
  %1220 = vmatprep.subr.bf16.mxu0 0
  %1221 = vmatpush1.bf16.msra.mxu0 %v1204
  %1222 = vmatprep.subr.bf16.mxu0 0
  %1223 = vmatpush1.bf16.msra.mxu0 %v1205
  %1224 = vmatprep.subr.bf16.mxu0 0
  %1225 = vmatpush1.bf16.msra.mxu0 0
  %1226 = vmatprep.subr.bf16.mxu0 0
  %1227 = vmatpush1.bf16.msra.mxu0 0
  %1228 = vmatprep.subr.bf16.mxu0 0
  %1229 = vmatpush1.bf16.msra.mxu0 0
  %1230 = vmatprep.subr.bf16.mxu0 0
  %1231 = vmatpush1.bf16.msra.mxu0 0
  %1232 = vmatprep.subr.bf16.mxu0 0
  %1233 = vmatpush1.bf16.msra.mxu0 0
  %1234 = vmatprep.subr.bf16.mxu0 0
  %1235 = vmatpush1.bf16.msra.mxu0 0
  %1236 = vmatprep.subr.bf16.mxu0 0
  %1237 = vmatpush1.bf16.msra.mxu0 0
  %1238 = vmatprep.subr.bf16.mxu0 0
  %1239 = vmatpush1.bf16.msra.mxu0 0
  %1240 = vmatprep.subr.bf16.mxu0 0
  %1241 = vmatpush1.bf16.msra.mxu0 0
  %1242 = vmatprep.subr.bf16.mxu0 0
  %1243 = vmatpush1.bf16.msra.mxu0 0
  %1244 = vmatprep.subr.bf16.mxu0 0
  %1245 = vmatpush1.bf16.msra.mxu0 0
  %1246 = vmatprep.subr.bf16.mxu0 0
  %1247 = vmatpush1.bf16.msra.mxu0 0
  %1248 = vmatprep.mubr.bf16.mxu0 0
  %1249 = vmatmul.mubr.bf16.gmra.mrb[0].mxu0 %v1211
  %v1250 = vpop.f32.mrb[0].mxu0
  %v1251 = vadd.f32 0.0, %v1250
  %v1252 = vpop.f32.mrb[0].mxu0
  %v1253 = vpop.f32.mrb[0].mxu0
  %v1254 = vadd.f32 0.0, %v1253
  %v1255 = vpop.f32.mrb[0].mxu0
  %1256 = vmatprep.mubr.bf16.mxu0 0
  %1257 = vmatmul.mubr.bf16.gmra.mrb[0].mxu0 %v1214
  %v1258 = vpop.f32.mrb[0].mxu0
  %v1259 = vadd.f32 0.0, %v1258
  %v1260 = vpop.f32.mrb[0].mxu0
  %v1261 = vpop.f32.mrb[0].mxu0
  %v1262 = vadd.f32 0.0, %v1261
  %v1263 = vpop.f32.mrb[0].mxu0
  %1264 = vdwg.mxu0
  %v1265 = vadd.f32 %v1105, %v1251
  %v1266 = vadd.f32 %v1106, %v1254
  %v1267 = vadd.f32 %v1107, %v1259
  %v1268 = vadd.f32 %v1108, %v1262
  %s1269 = scalar_lea.vmem %s3, 96
  %v1270 = vld [vmem:[%s1269] sm:$0xf]
  %v1271 = vld [vmem:[%s1269 + $0x4] sm:$0xf]
  %v1272 = vld [vmem:[%s1269 + $0x8] sm:$0xf]
  %v1273 = vld [vmem:[%s1269 + $0xc] sm:$0xf]
  %v1278 = vunpack.c.l.b16 %v1270
  %v1279 = vunpack.c.l.b16 %v1271
  %v1280 = vunpack.c.l.b16 %v1272
  %v1281 = vunpack.c.l.b16 %v1273
  %v1282 = vpack.c.b16 %v1279, %v1278
  %v1283 = vpack.c.b16 %v1281, %v1280
  %1286 = vmatprep.subr.bf16.mxu0 0
  %1287 = vmatpush1.bf16.msra.mxu0 %v311
  %1288 = vmatprep.subr.bf16.mxu0 0
  %1289 = vmatpush1.bf16.msra.mxu0 %v312
  %1290 = vmatprep.subr.bf16.mxu0 0
  %1291 = vmatpush1.bf16.msra.mxu0 %v313
  %1292 = vmatprep.subr.bf16.mxu0 0
  %1293 = vmatpush1.bf16.msra.mxu0 %v314
  %1294 = vmatprep.subr.bf16.mxu0 0
  %1295 = vmatpush1.bf16.msra.mxu0 %v315
  %1296 = vmatprep.subr.bf16.mxu0 0
  %1297 = vmatpush1.bf16.msra.mxu0 %v316
  %1298 = vmatprep.subr.bf16.mxu0 0
  %1299 = vmatpush1.bf16.msra.mxu0 %v317
  %1300 = vmatprep.subr.bf16.mxu0 0
  %1301 = vmatpush1.bf16.msra.mxu0 %v318
  %1302 = vmatprep.subr.bf16.mxu0 0
  %1303 = vmatpush1.bf16.msra.mxu0 0
  %1304 = vmatprep.subr.bf16.mxu0 0
  %1305 = vmatpush1.bf16.msra.mxu0 0
  %1306 = vmatprep.subr.bf16.mxu0 0
  %1307 = vmatpush1.bf16.msra.mxu0 0
  %1308 = vmatprep.subr.bf16.mxu0 0
  %1309 = vmatpush1.bf16.msra.mxu0 0
  %1310 = vmatprep.subr.bf16.mxu0 0
  %1311 = vmatpush1.bf16.msra.mxu0 0
  %1312 = vmatprep.subr.bf16.mxu0 0
  %1313 = vmatpush1.bf16.msra.mxu0 0
  %1314 = vmatprep.subr.bf16.mxu0 0
  %1315 = vmatpush1.bf16.msra.mxu0 0
  %1316 = vmatprep.subr.bf16.mxu0 0
  %1317 = vmatpush1.bf16.msra.mxu0 0
  %1318 = vmatprep.mubr.bf16.mxu0 0
  %1319 = vmatmul.mubr.bf16.gmra.mrb[0].mxu0 %v1282
  %v1320 = vpop.f32.mrb[0].mxu0
  %v1321 = vadd.f32 0.0, %v1320
  %v1322 = vpop.f32.mrb[0].mxu0
  %v1323 = vpop.f32.mrb[0].mxu0
  %v1324 = vadd.f32 0.0, %v1323
  %v1325 = vpop.f32.mrb[0].mxu0
  %1326 = vmatprep.mubr.bf16.mxu0 0
  %1327 = vmatmul.mubr.bf16.gmra.mrb[0].mxu0 %v1283
  %v1328 = vpop.f32.mrb[0].mxu0
  %v1329 = vadd.f32 0.0, %v1328
  %v1330 = vpop.f32.mrb[0].mxu0
  %v1331 = vpop.f32.mrb[0].mxu0
  %v1332 = vadd.f32 0.0, %v1331
  %v1333 = vpop.f32.mrb[0].mxu0
  %1334 = vdwg.mxu0
  %v1335 = vpack.c.bf16 %v1324, %v1321
  %v1336 = vpack.c.bf16 %v1332, %v1329
  %s1337 = scalar_lea.vmem %s4, 192
  %v1338 = vld [vmem:[%s1337] sm:$0xf]
  %v1339 = vld [vmem:[%s1337 + $0x4] sm:$0xf]
  %v1340 = vld [vmem:[%s1337 + $0x8] sm:$0xf]
  %v1341 = vld [vmem:[%s1337 + $0xc] sm:$0xf]
  %v1342 = vld [vmem:[%s1337 + $0x10] sm:$0xf]
  %v1343 = vld [vmem:[%s1337 + $0x14] sm:$0xf]
  %v1344 = vld [vmem:[%s1337 + $0x18] sm:$0xf]
  %v1345 = vld [vmem:[%s1337 + $0x1c] sm:$0xf]
  %v1354 = vunpack.c.l.b16 %v1338
  %v1355 = vunpack.c.l.b16 %v1339
  %v1356 = vunpack.c.l.b16 %v1340
  %v1357 = vunpack.c.l.b16 %v1341
  %v1358 = vunpack.c.l.b16 %v1342
  %v1359 = vunpack.c.l.b16 %v1343
  %v1360 = vunpack.c.l.b16 %v1344
  %v1361 = vunpack.c.l.b16 %v1345
  %v1362 = vpack.c.b16 %v1355, %v1354
  %v1363 = vpack.c.b16 %v1357, %v1356
  %v1364 = vpack.c.b16 %v1359, %v1358
  %v1365 = vpack.c.b16 %v1361, %v1360
  %v1371 = vsel %vm157, %v1335, 0
  %v1374 = vsel %vm157, %v1336, 0
  %1376 = vmatprep.subr.bf16.mxu0 0
  %1377 = vmatpush1.bf16.msra.mxu0 %v1362
  %1378 = vmatprep.subr.bf16.mxu0 0
  %1379 = vmatpush1.bf16.msra.mxu0 %v1363
  %1380 = vmatprep.subr.bf16.mxu0 0
  %1381 = vmatpush1.bf16.msra.mxu0 %v1364
  %1382 = vmatprep.subr.bf16.mxu0 0
  %1383 = vmatpush1.bf16.msra.mxu0 %v1365
  %1384 = vmatprep.subr.bf16.mxu0 0
  %1385 = vmatpush1.bf16.msra.mxu0 0
  %1386 = vmatprep.subr.bf16.mxu0 0
  %1387 = vmatpush1.bf16.msra.mxu0 0
  %1388 = vmatprep.subr.bf16.mxu0 0
  %1389 = vmatpush1.bf16.msra.mxu0 0
  %1390 = vmatprep.subr.bf16.mxu0 0
  %1391 = vmatpush1.bf16.msra.mxu0 0
  %1392 = vmatprep.subr.bf16.mxu0 0
  %1393 = vmatpush1.bf16.msra.mxu0 0
  %1394 = vmatprep.subr.bf16.mxu0 0
  %1395 = vmatpush1.bf16.msra.mxu0 0
  %1396 = vmatprep.subr.bf16.mxu0 0
  %1397 = vmatpush1.bf16.msra.mxu0 0
  %1398 = vmatprep.subr.bf16.mxu0 0
  %1399 = vmatpush1.bf16.msra.mxu0 0
  %1400 = vmatprep.subr.bf16.mxu0 0
  %1401 = vmatpush1.bf16.msra.mxu0 0
  %1402 = vmatprep.subr.bf16.mxu0 0
  %1403 = vmatpush1.bf16.msra.mxu0 0
  %1404 = vmatprep.subr.bf16.mxu0 0
  %1405 = vmatpush1.bf16.msra.mxu0 0
  %1406 = vmatprep.subr.bf16.mxu0 0
  %1407 = vmatpush1.bf16.msra.mxu0 0
  %1408 = vmatprep.mubr.bf16.mxu0 0
  %1409 = vmatmul.mubr.bf16.gmra.mrb[0].mxu0 %v1371
  %v1410 = vpop.f32.mrb[0].mxu0
  %v1411 = vadd.f32 0.0, %v1410
  %v1412 = vpop.f32.mrb[0].mxu0
  %v1413 = vpop.f32.mrb[0].mxu0
  %v1414 = vadd.f32 0.0, %v1413
  %v1415 = vpop.f32.mrb[0].mxu0
  %1416 = vmatprep.mubr.bf16.mxu0 0
  %1417 = vmatmul.mubr.bf16.gmra.mrb[0].mxu0 %v1374
  %v1418 = vpop.f32.mrb[0].mxu0
  %v1419 = vadd.f32 0.0, %v1418
  %v1420 = vpop.f32.mrb[0].mxu0
  %v1421 = vpop.f32.mrb[0].mxu0
  %v1422 = vadd.f32 0.0, %v1421
  %v1423 = vpop.f32.mrb[0].mxu0
  %1424 = vdwg.mxu0
  %v1425 = vadd.f32 %v1265, %v1411
  %v1426 = vadd.f32 %v1266, %v1414
  %v1427 = vadd.f32 %v1267, %v1419
  %v1428 = vadd.f32 %v1268, %v1422
  %s1429 = scalar_lea.vmem %s3, 112
  %v1430 = vld [vmem:[%s1429] sm:$0xf]
  %v1431 = vld [vmem:[%s1429 + $0x4] sm:$0xf]
  %v1432 = vld [vmem:[%s1429 + $0x8] sm:$0xf]
  %v1433 = vld [vmem:[%s1429 + $0xc] sm:$0xf]
  %v1438 = vunpack.c.l.b16 %v1430
  %v1439 = vunpack.c.l.b16 %v1431
  %v1440 = vunpack.c.l.b16 %v1432
  %v1441 = vunpack.c.l.b16 %v1433
  %v1442 = vpack.c.b16 %v1439, %v1438
  %v1443 = vpack.c.b16 %v1441, %v1440
  %1446 = vmatprep.subr.bf16.mxu0 0
  %1447 = vmatpush1.bf16.msra.mxu0 %v311
  %1448 = vmatprep.subr.bf16.mxu0 0
  %1449 = vmatpush1.bf16.msra.mxu0 %v312
  %1450 = vmatprep.subr.bf16.mxu0 0
  %1451 = vmatpush1.bf16.msra.mxu0 %v313
  %1452 = vmatprep.subr.bf16.mxu0 0
  %1453 = vmatpush1.bf16.msra.mxu0 %v314
  %1454 = vmatprep.subr.bf16.mxu0 0
  %1455 = vmatpush1.bf16.msra.mxu0 %v315
  %1456 = vmatprep.subr.bf16.mxu0 0
  %1457 = vmatpush1.bf16.msra.mxu0 %v316
  %1458 = vmatprep.subr.bf16.mxu0 0
  %1459 = vmatpush1.bf16.msra.mxu0 %v317
  %1460 = vmatprep.subr.bf16.mxu0 0
  %1461 = vmatpush1.bf16.msra.mxu0 %v318
  %1462 = vmatprep.subr.bf16.mxu0 0
  %1463 = vmatpush1.bf16.msra.mxu0 0
  %1464 = vmatprep.subr.bf16.mxu0 0
  %1465 = vmatpush1.bf16.msra.mxu0 0
  %1466 = vmatprep.subr.bf16.mxu0 0
  %1467 = vmatpush1.bf16.msra.mxu0 0
  %1468 = vmatprep.subr.bf16.mxu0 0
  %1469 = vmatpush1.bf16.msra.mxu0 0
  %1470 = vmatprep.subr.bf16.mxu0 0
  %1471 = vmatpush1.bf16.msra.mxu0 0
  %1472 = vmatprep.subr.bf16.mxu0 0
  %1473 = vmatpush1.bf16.msra.mxu0 0
  %1474 = vmatprep.subr.bf16.mxu0 0
  %1475 = vmatpush1.bf16.msra.mxu0 0
  %1476 = vmatprep.subr.bf16.mxu0 0
  %1477 = vmatpush1.bf16.msra.mxu0 0
  %1478 = vmatprep.mubr.bf16.mxu0 0
  %1479 = vmatmul.mubr.bf16.gmra.mrb[0].mxu0 %v1442
  %v1480 = vpop.f32.mrb[0].mxu0
  %v1481 = vadd.f32 0.0, %v1480
  %v1482 = vpop.f32.mrb[0].mxu0
  %v1483 = vpop.f32.mrb[0].mxu0
  %v1484 = vadd.f32 0.0, %v1483
  %v1485 = vpop.f32.mrb[0].mxu0
  %1486 = vmatprep.mubr.bf16.mxu0 0
  %1487 = vmatmul.mubr.bf16.gmra.mrb[0].mxu0 %v1443
  %v1488 = vpop.f32.mrb[0].mxu0
  %v1489 = vadd.f32 0.0, %v1488
  %v1490 = vpop.f32.mrb[0].mxu0
  %v1491 = vpop.f32.mrb[0].mxu0
  %v1492 = vadd.f32 0.0, %v1491
  %v1493 = vpop.f32.mrb[0].mxu0
  %1494 = vdwg.mxu0
  %v1495 = vpack.c.bf16 %v1484, %v1481
  %v1496 = vpack.c.bf16 %v1492, %v1489
  %s1497 = scalar_lea.vmem %s4, 224
  %v1498 = vld [vmem:[%s1497] sm:$0xf]
  %v1499 = vld [vmem:[%s1497 + $0x4] sm:$0xf]
  %v1500 = vld [vmem:[%s1497 + $0x8] sm:$0xf]
  %v1501 = vld [vmem:[%s1497 + $0xc] sm:$0xf]
  %v1502 = vld [vmem:[%s1497 + $0x10] sm:$0xf]
  %v1503 = vld [vmem:[%s1497 + $0x14] sm:$0xf]
  %v1504 = vld [vmem:[%s1497 + $0x18] sm:$0xf]
  %v1505 = vld [vmem:[%s1497 + $0x1c] sm:$0xf]
  %v1514 = vunpack.c.l.b16 %v1498
  %v1515 = vunpack.c.l.b16 %v1499
  %v1516 = vunpack.c.l.b16 %v1500
  %v1517 = vunpack.c.l.b16 %v1501
  %v1518 = vunpack.c.l.b16 %v1502
  %v1519 = vunpack.c.l.b16 %v1503
  %v1520 = vunpack.c.l.b16 %v1504
  %v1521 = vunpack.c.l.b16 %v1505
  %v1522 = vpack.c.b16 %v1515, %v1514
  %v1523 = vpack.c.b16 %v1517, %v1516
  %v1524 = vpack.c.b16 %v1519, %v1518
  %v1525 = vpack.c.b16 %v1521, %v1520
  %v1531 = vsel %vm157, %v1495, 0
  %v1534 = vsel %vm157, %v1496, 0
  %1536 = vmatprep.subr.bf16.mxu0 0
  %1537 = vmatpush1.bf16.msra.mxu0 %v1522
  %1538 = vmatprep.subr.bf16.mxu0 0
  %1539 = vmatpush1.bf16.msra.mxu0 %v1523
  %1540 = vmatprep.subr.bf16.mxu0 0
  %1541 = vmatpush1.bf16.msra.mxu0 %v1524
  %1542 = vmatprep.subr.bf16.mxu0 0
  %1543 = vmatpush1.bf16.msra.mxu0 %v1525
  %1544 = vmatprep.subr.bf16.mxu0 0
  %1545 = vmatpush1.bf16.msra.mxu0 0
  %1546 = vmatprep.subr.bf16.mxu0 0
  %1547 = vmatpush1.bf16.msra.mxu0 0
  %1548 = vmatprep.subr.bf16.mxu0 0
  %1549 = vmatpush1.bf16.msra.mxu0 0
  %1550 = vmatprep.subr.bf16.mxu0 0
  %1551 = vmatpush1.bf16.msra.mxu0 0
  %1552 = vmatprep.subr.bf16.mxu0 0
  %1553 = vmatpush1.bf16.msra.mxu0 0
  %1554 = vmatprep.subr.bf16.mxu0 0
  %1555 = vmatpush1.bf16.msra.mxu0 0
  %1556 = vmatprep.subr.bf16.mxu0 0
  %1557 = vmatpush1.bf16.msra.mxu0 0
  %1558 = vmatprep.subr.bf16.mxu0 0
  %1559 = vmatpush1.bf16.msra.mxu0 0
  %1560 = vmatprep.subr.bf16.mxu0 0
  %1561 = vmatpush1.bf16.msra.mxu0 0
  %1562 = vmatprep.subr.bf16.mxu0 0
  %1563 = vmatpush1.bf16.msra.mxu0 0
  %1564 = vmatprep.subr.bf16.mxu0 0
  %1565 = vmatpush1.bf16.msra.mxu0 0
  %1566 = vmatprep.subr.bf16.mxu0 0
  %1567 = vmatpush1.bf16.msra.mxu0 0
  %1568 = vmatprep.mubr.bf16.mxu0 0
  %1569 = vmatmul.mubr.bf16.gmra.mrb[0].mxu0 %v1531
  %v1570 = vpop.f32.mrb[0].mxu0
  %v1571 = vadd.f32 0.0, %v1570
  %v1572 = vpop.f32.mrb[0].mxu0
  %v1573 = vpop.f32.mrb[0].mxu0
  %v1574 = vadd.f32 0.0, %v1573
  %v1575 = vpop.f32.mrb[0].mxu0
  %1576 = vmatprep.mubr.bf16.mxu0 0
  %1577 = vmatmul.mubr.bf16.gmra.mrb[0].mxu0 %v1534
  %v1578 = vpop.f32.mrb[0].mxu0
  %v1579 = vadd.f32 0.0, %v1578
  %v1580 = vpop.f32.mrb[0].mxu0
  %v1581 = vpop.f32.mrb[0].mxu0
  %v1582 = vadd.f32 0.0, %v1581
  %v1583 = vpop.f32.mrb[0].mxu0
  %1584 = vdwg.mxu0
  %v1585 = vadd.f32 %v1425, %v1571
  %v1586 = vadd.f32 %v1426, %v1574
  %v1587 = vadd.f32 %v1427, %v1579
  %v1588 = vadd.f32 %v1428, %v1582
  %s1589 = scalar_lea.vmem %s3, 128
  %v1590 = vld [vmem:[%s1589] sm:$0xf]
  %v1591 = vld [vmem:[%s1589 + $0x4] sm:$0xf]
  %v1592 = vld [vmem:[%s1589 + $0x8] sm:$0xf]
  %v1593 = vld [vmem:[%s1589 + $0xc] sm:$0xf]
  %v1598 = vunpack.c.l.b16 %v1590
  %v1599 = vunpack.c.l.b16 %v1591
  %v1600 = vunpack.c.l.b16 %v1592
  %v1601 = vunpack.c.l.b16 %v1593
  %v1602 = vpack.c.b16 %v1599, %v1598
  %v1603 = vpack.c.b16 %v1601, %v1600
  %1606 = vmatprep.subr.bf16.mxu0 0
  %1607 = vmatpush1.bf16.msra.mxu0 %v311
  %1608 = vmatprep.subr.bf16.mxu0 0
  %1609 = vmatpush1.bf16.msra.mxu0 %v312
  %1610 = vmatprep.subr.bf16.mxu0 0
  %1611 = vmatpush1.bf16.msra.mxu0 %v313
  %1612 = vmatprep.subr.bf16.mxu0 0
  %1613 = vmatpush1.bf16.msra.mxu0 %v314
  %1614 = vmatprep.subr.bf16.mxu0 0
  %1615 = vmatpush1.bf16.msra.mxu0 %v315
  %1616 = vmatprep.subr.bf16.mxu0 0
  %1617 = vmatpush1.bf16.msra.mxu0 %v316
  %1618 = vmatprep.subr.bf16.mxu0 0
  %1619 = vmatpush1.bf16.msra.mxu0 %v317
  %1620 = vmatprep.subr.bf16.mxu0 0
  %1621 = vmatpush1.bf16.msra.mxu0 %v318
  %1622 = vmatprep.subr.bf16.mxu0 0
  %1623 = vmatpush1.bf16.msra.mxu0 0
  %1624 = vmatprep.subr.bf16.mxu0 0
  %1625 = vmatpush1.bf16.msra.mxu0 0
  %1626 = vmatprep.subr.bf16.mxu0 0
  %1627 = vmatpush1.bf16.msra.mxu0 0
  %1628 = vmatprep.subr.bf16.mxu0 0
  %1629 = vmatpush1.bf16.msra.mxu0 0
  %1630 = vmatprep.subr.bf16.mxu0 0
  %1631 = vmatpush1.bf16.msra.mxu0 0
  %1632 = vmatprep.subr.bf16.mxu0 0
  %1633 = vmatpush1.bf16.msra.mxu0 0
  %1634 = vmatprep.subr.bf16.mxu0 0
  %1635 = vmatpush1.bf16.msra.mxu0 0
  %1636 = vmatprep.subr.bf16.mxu0 0
  %1637 = vmatpush1.bf16.msra.mxu0 0
  %1638 = vmatprep.mubr.bf16.mxu0 0
  %1639 = vmatmul.mubr.bf16.gmra.mrb[0].mxu0 %v1602
  %v1640 = vpop.f32.mrb[0].mxu0
  %v1641 = vadd.f32 0.0, %v1640
  %v1642 = vpop.f32.mrb[0].mxu0
  %v1643 = vpop.f32.mrb[0].mxu0
  %v1644 = vadd.f32 0.0, %v1643
  %v1645 = vpop.f32.mrb[0].mxu0
  %1646 = vmatprep.mubr.bf16.mxu0 0
  %1647 = vmatmul.mubr.bf16.gmra.mrb[0].mxu0 %v1603
  %v1648 = vpop.f32.mrb[0].mxu0
  %v1649 = vadd.f32 0.0, %v1648
  %v1650 = vpop.f32.mrb[0].mxu0
  %v1651 = vpop.f32.mrb[0].mxu0
  %v1652 = vadd.f32 0.0, %v1651
  %v1653 = vpop.f32.mrb[0].mxu0
  %1654 = vdwg.mxu0
  %v1655 = vpack.c.bf16 %v1644, %v1641
  %v1656 = vpack.c.bf16 %v1652, %v1649
  %s1657 = scalar_lea.vmem %s4, 256
  %v1658 = vld [vmem:[%s1657] sm:$0xf]
  %v1659 = vld [vmem:[%s1657 + $0x4] sm:$0xf]
  %v1660 = vld [vmem:[%s1657 + $0x8] sm:$0xf]
  %v1661 = vld [vmem:[%s1657 + $0xc] sm:$0xf]
  %v1662 = vld [vmem:[%s1657 + $0x10] sm:$0xf]
  %v1663 = vld [vmem:[%s1657 + $0x14] sm:$0xf]
  %v1664 = vld [vmem:[%s1657 + $0x18] sm:$0xf]
  %v1665 = vld [vmem:[%s1657 + $0x1c] sm:$0xf]
  %v1674 = vunpack.c.l.b16 %v1658
  %v1675 = vunpack.c.l.b16 %v1659
  %v1676 = vunpack.c.l.b16 %v1660
  %v1677 = vunpack.c.l.b16 %v1661
  %v1678 = vunpack.c.l.b16 %v1662
  %v1679 = vunpack.c.l.b16 %v1663
  %v1680 = vunpack.c.l.b16 %v1664
  %v1681 = vunpack.c.l.b16 %v1665
  %v1682 = vpack.c.b16 %v1675, %v1674
  %v1683 = vpack.c.b16 %v1677, %v1676
  %v1684 = vpack.c.b16 %v1679, %v1678
  %v1685 = vpack.c.b16 %v1681, %v1680
  %v1691 = vsel %vm157, %v1655, 0
  %v1694 = vsel %vm157, %v1656, 0
  %1696 = vmatprep.subr.bf16.mxu0 0
  %1697 = vmatpush1.bf16.msra.mxu0 %v1682
  %1698 = vmatprep.subr.bf16.mxu0 0
  %1699 = vmatpush1.bf16.msra.mxu0 %v1683
  %1700 = vmatprep.subr.bf16.mxu0 0
  %1701 = vmatpush1.bf16.msra.mxu0 %v1684
  %1702 = vmatprep.subr.bf16.mxu0 0
  %1703 = vmatpush1.bf16.msra.mxu0 %v1685
  %1704 = vmatprep.subr.bf16.mxu0 0
  %1705 = vmatpush1.bf16.msra.mxu0 0
  %1706 = vmatprep.subr.bf16.mxu0 0
  %1707 = vmatpush1.bf16.msra.mxu0 0
  %1708 = vmatprep.subr.bf16.mxu0 0
  %1709 = vmatpush1.bf16.msra.mxu0 0
  %1710 = vmatprep.subr.bf16.mxu0 0
  %1711 = vmatpush1.bf16.msra.mxu0 0
  %1712 = vmatprep.subr.bf16.mxu0 0
  %1713 = vmatpush1.bf16.msra.mxu0 0
  %1714 = vmatprep.subr.bf16.mxu0 0
  %1715 = vmatpush1.bf16.msra.mxu0 0
  %1716 = vmatprep.subr.bf16.mxu0 0
  %1717 = vmatpush1.bf16.msra.mxu0 0
  %1718 = vmatprep.subr.bf16.mxu0 0
  %1719 = vmatpush1.bf16.msra.mxu0 0
  %1720 = vmatprep.subr.bf16.mxu0 0
  %1721 = vmatpush1.bf16.msra.mxu0 0
  %1722 = vmatprep.subr.bf16.mxu0 0
  %1723 = vmatpush1.bf16.msra.mxu0 0
  %1724 = vmatprep.subr.bf16.mxu0 0
  %1725 = vmatpush1.bf16.msra.mxu0 0
  %1726 = vmatprep.subr.bf16.mxu0 0
  %1727 = vmatpush1.bf16.msra.mxu0 0
  %1728 = vmatprep.mubr.bf16.mxu0 0
  %1729 = vmatmul.mubr.bf16.gmra.mrb[0].mxu0 %v1691
  %v1730 = vpop.f32.mrb[0].mxu0
  %v1731 = vadd.f32 0.0, %v1730
  %v1732 = vpop.f32.mrb[0].mxu0
  %v1733 = vpop.f32.mrb[0].mxu0
  %v1734 = vadd.f32 0.0, %v1733
  %v1735 = vpop.f32.mrb[0].mxu0
  %1736 = vmatprep.mubr.bf16.mxu0 0
  %1737 = vmatmul.mubr.bf16.gmra.mrb[0].mxu0 %v1694
  %v1738 = vpop.f32.mrb[0].mxu0
  %v1739 = vadd.f32 0.0, %v1738
  %v1740 = vpop.f32.mrb[0].mxu0
  %v1741 = vpop.f32.mrb[0].mxu0
  %v1742 = vadd.f32 0.0, %v1741
  %v1743 = vpop.f32.mrb[0].mxu0
  %1744 = vdwg.mxu0
  %v1745 = vadd.f32 %v1585, %v1731
  %v1746 = vadd.f32 %v1586, %v1734
  %v1747 = vadd.f32 %v1587, %v1739
  %v1748 = vadd.f32 %v1588, %v1742
  %s1749 = scalar_lea.vmem %s3, 144
  %v1750 = vld [vmem:[%s1749] sm:$0xf]
  %v1751 = vld [vmem:[%s1749 + $0x4] sm:$0xf]
  %v1752 = vld [vmem:[%s1749 + $0x8] sm:$0xf]
  %v1753 = vld [vmem:[%s1749 + $0xc] sm:$0xf]
  %v1758 = vunpack.c.l.b16 %v1750
  %v1759 = vunpack.c.l.b16 %v1751
  %v1760 = vunpack.c.l.b16 %v1752
  %v1761 = vunpack.c.l.b16 %v1753
  %v1762 = vpack.c.b16 %v1759, %v1758
  %v1763 = vpack.c.b16 %v1761, %v1760
  %1766 = vmatprep.subr.bf16.mxu0 0
  %1767 = vmatpush1.bf16.msra.mxu0 %v311
  %1768 = vmatprep.subr.bf16.mxu0 0
  %1769 = vmatpush1.bf16.msra.mxu0 %v312
  %1770 = vmatprep.subr.bf16.mxu0 0
  %1771 = vmatpush1.bf16.msra.mxu0 %v313
  %1772 = vmatprep.subr.bf16.mxu0 0
  %1773 = vmatpush1.bf16.msra.mxu0 %v314
  %1774 = vmatprep.subr.bf16.mxu0 0
  %1775 = vmatpush1.bf16.msra.mxu0 %v315
  %1776 = vmatprep.subr.bf16.mxu0 0
  %1777 = vmatpush1.bf16.msra.mxu0 %v316
  %1778 = vmatprep.subr.bf16.mxu0 0
  %1779 = vmatpush1.bf16.msra.mxu0 %v317
  %1780 = vmatprep.subr.bf16.mxu0 0
  %1781 = vmatpush1.bf16.msra.mxu0 %v318
  %1782 = vmatprep.subr.bf16.mxu0 0
  %1783 = vmatpush1.bf16.msra.mxu0 0
  %1784 = vmatprep.subr.bf16.mxu0 0
  %1785 = vmatpush1.bf16.msra.mxu0 0
  %1786 = vmatprep.subr.bf16.mxu0 0
  %1787 = vmatpush1.bf16.msra.mxu0 0
  %1788 = vmatprep.subr.bf16.mxu0 0
  %1789 = vmatpush1.bf16.msra.mxu0 0
  %1790 = vmatprep.subr.bf16.mxu0 0
  %1791 = vmatpush1.bf16.msra.mxu0 0
  %1792 = vmatprep.subr.bf16.mxu0 0
  %1793 = vmatpush1.bf16.msra.mxu0 0
  %1794 = vmatprep.subr.bf16.mxu0 0
  %1795 = vmatpush1.bf16.msra.mxu0 0
  %1796 = vmatprep.subr.bf16.mxu0 0
  %1797 = vmatpush1.bf16.msra.mxu0 0
  %1798 = vmatprep.mubr.bf16.mxu0 0
  %1799 = vmatmul.mubr.bf16.gmra.mrb[0].mxu0 %v1762
  %v1800 = vpop.f32.mrb[0].mxu0
  %v1801 = vadd.f32 0.0, %v1800
  %v1802 = vpop.f32.mrb[0].mxu0
  %v1803 = vpop.f32.mrb[0].mxu0
  %v1804 = vadd.f32 0.0, %v1803
  %v1805 = vpop.f32.mrb[0].mxu0
  %1806 = vmatprep.mubr.bf16.mxu0 0
  %1807 = vmatmul.mubr.bf16.gmra.mrb[0].mxu0 %v1763
  %v1808 = vpop.f32.mrb[0].mxu0
  %v1809 = vadd.f32 0.0, %v1808
  %v1810 = vpop.f32.mrb[0].mxu0
  %v1811 = vpop.f32.mrb[0].mxu0
  %v1812 = vadd.f32 0.0, %v1811
  %v1813 = vpop.f32.mrb[0].mxu0
  %1814 = vdwg.mxu0
  %v1815 = vpack.c.bf16 %v1804, %v1801
  %v1816 = vpack.c.bf16 %v1812, %v1809
  %s1817 = scalar_lea.vmem %s4, 288
  %v1818 = vld [vmem:[%s1817] sm:$0xf]
  %v1819 = vld [vmem:[%s1817 + $0x4] sm:$0xf]
  %v1820 = vld [vmem:[%s1817 + $0x8] sm:$0xf]
  %v1821 = vld [vmem:[%s1817 + $0xc] sm:$0xf]
  %v1822 = vld [vmem:[%s1817 + $0x10] sm:$0xf]
  %v1823 = vld [vmem:[%s1817 + $0x14] sm:$0xf]
  %v1824 = vld [vmem:[%s1817 + $0x18] sm:$0xf]
  %v1825 = vld [vmem:[%s1817 + $0x1c] sm:$0xf]
  %v1834 = vunpack.c.l.b16 %v1818
  %v1835 = vunpack.c.l.b16 %v1819
  %v1836 = vunpack.c.l.b16 %v1820
  %v1837 = vunpack.c.l.b16 %v1821
  %v1838 = vunpack.c.l.b16 %v1822
  %v1839 = vunpack.c.l.b16 %v1823
  %v1840 = vunpack.c.l.b16 %v1824
  %v1841 = vunpack.c.l.b16 %v1825
  %v1842 = vpack.c.b16 %v1835, %v1834
  %v1843 = vpack.c.b16 %v1837, %v1836
  %v1844 = vpack.c.b16 %v1839, %v1838
  %v1845 = vpack.c.b16 %v1841, %v1840
  %v1851 = vsel %vm157, %v1815, 0
  %v1854 = vsel %vm157, %v1816, 0
  %1856 = vmatprep.subr.bf16.mxu0 0
  %1857 = vmatpush1.bf16.msra.mxu0 %v1842
  %1858 = vmatprep.subr.bf16.mxu0 0
  %1859 = vmatpush1.bf16.msra.mxu0 %v1843
  %1860 = vmatprep.subr.bf16.mxu0 0
  %1861 = vmatpush1.bf16.msra.mxu0 %v1844
  %1862 = vmatprep.subr.bf16.mxu0 0
  %1863 = vmatpush1.bf16.msra.mxu0 %v1845
  %1864 = vmatprep.subr.bf16.mxu0 0
  %1865 = vmatpush1.bf16.msra.mxu0 0
  %1866 = vmatprep.subr.bf16.mxu0 0
  %1867 = vmatpush1.bf16.msra.mxu0 0
  %1868 = vmatprep.subr.bf16.mxu0 0
  %1869 = vmatpush1.bf16.msra.mxu0 0
  %1870 = vmatprep.subr.bf16.mxu0 0
  %1871 = vmatpush1.bf16.msra.mxu0 0
  %1872 = vmatprep.subr.bf16.mxu0 0
  %1873 = vmatpush1.bf16.msra.mxu0 0
  %1874 = vmatprep.subr.bf16.mxu0 0
  %1875 = vmatpush1.bf16.msra.mxu0 0
  %1876 = vmatprep.subr.bf16.mxu0 0
  %1877 = vmatpush1.bf16.msra.mxu0 0
  %1878 = vmatprep.subr.bf16.mxu0 0
  %1879 = vmatpush1.bf16.msra.mxu0 0
  %1880 = vmatprep.subr.bf16.mxu0 0
  %1881 = vmatpush1.bf16.msra.mxu0 0
  %1882 = vmatprep.subr.bf16.mxu0 0
  %1883 = vmatpush1.bf16.msra.mxu0 0
  %1884 = vmatprep.subr.bf16.mxu0 0
  %1885 = vmatpush1.bf16.msra.mxu0 0
  %1886 = vmatprep.subr.bf16.mxu0 0
  %1887 = vmatpush1.bf16.msra.mxu0 0
  %1888 = vmatprep.mubr.bf16.mxu0 0
  %1889 = vmatmul.mubr.bf16.gmra.mrb[0].mxu0 %v1851
  %v1890 = vpop.f32.mrb[0].mxu0
  %v1891 = vadd.f32 0.0, %v1890
  %v1892 = vpop.f32.mrb[0].mxu0
  %v1893 = vpop.f32.mrb[0].mxu0
  %v1894 = vadd.f32 0.0, %v1893
  %v1895 = vpop.f32.mrb[0].mxu0
  %1896 = vmatprep.mubr.bf16.mxu0 0
  %1897 = vmatmul.mubr.bf16.gmra.mrb[0].mxu0 %v1854
  %v1898 = vpop.f32.mrb[0].mxu0
  %v1899 = vadd.f32 0.0, %v1898
  %v1900 = vpop.f32.mrb[0].mxu0
  %v1901 = vpop.f32.mrb[0].mxu0
  %v1902 = vadd.f32 0.0, %v1901
  %v1903 = vpop.f32.mrb[0].mxu0
  %1904 = vdwg.mxu0
  %v1905 = vadd.f32 %v1745, %v1891
  %v1906 = vadd.f32 %v1746, %v1894
  %v1907 = vadd.f32 %v1747, %v1899
  %v1908 = vadd.f32 %v1748, %v1902
  %s1909 = scalar_lea.vmem %s3, 160
  %v1910 = vld [vmem:[%s1909] sm:$0xf]
  %v1911 = vld [vmem:[%s1909 + $0x4] sm:$0xf]
  %v1912 = vld [vmem:[%s1909 + $0x8] sm:$0xf]
  %v1913 = vld [vmem:[%s1909 + $0xc] sm:$0xf]
  %v1918 = vunpack.c.l.b16 %v1910
  %v1919 = vunpack.c.l.b16 %v1911
  %v1920 = vunpack.c.l.b16 %v1912
  %v1921 = vunpack.c.l.b16 %v1913
  %v1922 = vpack.c.b16 %v1919, %v1918
  %v1923 = vpack.c.b16 %v1921, %v1920
  %1926 = vmatprep.subr.bf16.mxu0 0
  %1927 = vmatpush1.bf16.msra.mxu0 %v311
  %1928 = vmatprep.subr.bf16.mxu0 0
  %1929 = vmatpush1.bf16.msra.mxu0 %v312
  %1930 = vmatprep.subr.bf16.mxu0 0
  %1931 = vmatpush1.bf16.msra.mxu0 %v313
  %1932 = vmatprep.subr.bf16.mxu0 0
  %1933 = vmatpush1.bf16.msra.mxu0 %v314
  %1934 = vmatprep.subr.bf16.mxu0 0
  %1935 = vmatpush1.bf16.msra.mxu0 %v315
  %1936 = vmatprep.subr.bf16.mxu0 0
  %1937 = vmatpush1.bf16.msra.mxu0 %v316
  %1938 = vmatprep.subr.bf16.mxu0 0
  %1939 = vmatpush1.bf16.msra.mxu0 %v317
  %1940 = vmatprep.subr.bf16.mxu0 0
  %1941 = vmatpush1.bf16.msra.mxu0 %v318
  %1942 = vmatprep.subr.bf16.mxu0 0
  %1943 = vmatpush1.bf16.msra.mxu0 0
  %1944 = vmatprep.subr.bf16.mxu0 0
  %1945 = vmatpush1.bf16.msra.mxu0 0
  %1946 = vmatprep.subr.bf16.mxu0 0
  %1947 = vmatpush1.bf16.msra.mxu0 0
  %1948 = vmatprep.subr.bf16.mxu0 0
  %1949 = vmatpush1.bf16.msra.mxu0 0
  %1950 = vmatprep.subr.bf16.mxu0 0
  %1951 = vmatpush1.bf16.msra.mxu0 0
  %1952 = vmatprep.subr.bf16.mxu0 0
  %1953 = vmatpush1.bf16.msra.mxu0 0
  %1954 = vmatprep.subr.bf16.mxu0 0
  %1955 = vmatpush1.bf16.msra.mxu0 0
  %1956 = vmatprep.subr.bf16.mxu0 0
  %1957 = vmatpush1.bf16.msra.mxu0 0
  %1958 = vmatprep.mubr.bf16.mxu0 0
  %1959 = vmatmul.mubr.bf16.gmra.mrb[0].mxu0 %v1922
  %v1960 = vpop.f32.mrb[0].mxu0
  %v1961 = vadd.f32 0.0, %v1960
  %v1962 = vpop.f32.mrb[0].mxu0
  %v1963 = vpop.f32.mrb[0].mxu0
  %v1964 = vadd.f32 0.0, %v1963
  %v1965 = vpop.f32.mrb[0].mxu0
  %1966 = vmatprep.mubr.bf16.mxu0 0
  %1967 = vmatmul.mubr.bf16.gmra.mrb[0].mxu0 %v1923
  %v1968 = vpop.f32.mrb[0].mxu0
  %v1969 = vadd.f32 0.0, %v1968
  %v1970 = vpop.f32.mrb[0].mxu0
  %v1971 = vpop.f32.mrb[0].mxu0
  %v1972 = vadd.f32 0.0, %v1971
  %v1973 = vpop.f32.mrb[0].mxu0
  %1974 = vdwg.mxu0
  %v1975 = vpack.c.bf16 %v1964, %v1961
  %v1976 = vpack.c.bf16 %v1972, %v1969
  %s1977 = scalar_lea.vmem %s4, 320
  %v1978 = vld [vmem:[%s1977] sm:$0xf]
  %v1979 = vld [vmem:[%s1977 + $0x4] sm:$0xf]
  %v1980 = vld [vmem:[%s1977 + $0x8] sm:$0xf]
  %v1981 = vld [vmem:[%s1977 + $0xc] sm:$0xf]
  %v1982 = vld [vmem:[%s1977 + $0x10] sm:$0xf]
  %v1983 = vld [vmem:[%s1977 + $0x14] sm:$0xf]
  %v1984 = vld [vmem:[%s1977 + $0x18] sm:$0xf]
  %v1985 = vld [vmem:[%s1977 + $0x1c] sm:$0xf]
  %v1994 = vunpack.c.l.b16 %v1978
  %v1995 = vunpack.c.l.b16 %v1979
  %v1996 = vunpack.c.l.b16 %v1980
  %v1997 = vunpack.c.l.b16 %v1981
  %v1998 = vunpack.c.l.b16 %v1982
  %v1999 = vunpack.c.l.b16 %v1983
  %v2000 = vunpack.c.l.b16 %v1984
  %v2001 = vunpack.c.l.b16 %v1985
  %v2002 = vpack.c.b16 %v1995, %v1994
  %v2003 = vpack.c.b16 %v1997, %v1996
  %v2004 = vpack.c.b16 %v1999, %v1998
  %v2005 = vpack.c.b16 %v2001, %v2000
  %v2011 = vsel %vm157, %v1975, 0
  %v2014 = vsel %vm157, %v1976, 0
  %2016 = vmatprep.subr.bf16.mxu0 0
  %2017 = vmatpush1.bf16.msra.mxu0 %v2002
  %2018 = vmatprep.subr.bf16.mxu0 0
  %2019 = vmatpush1.bf16.msra.mxu0 %v2003
  %2020 = vmatprep.subr.bf16.mxu0 0
  %2021 = vmatpush1.bf16.msra.mxu0 %v2004
  %2022 = vmatprep.subr.bf16.mxu0 0
  %2023 = vmatpush1.bf16.msra.mxu0 %v2005
  %2024 = vmatprep.subr.bf16.mxu0 0
  %2025 = vmatpush1.bf16.msra.mxu0 0
  %2026 = vmatprep.subr.bf16.mxu0 0
  %2027 = vmatpush1.bf16.msra.mxu0 0
  %2028 = vmatprep.subr.bf16.mxu0 0
  %2029 = vmatpush1.bf16.msra.mxu0 0
  %2030 = vmatprep.subr.bf16.mxu0 0
  %2031 = vmatpush1.bf16.msra.mxu0 0
  %2032 = vmatprep.subr.bf16.mxu0 0
  %2033 = vmatpush1.bf16.msra.mxu0 0
  %2034 = vmatprep.subr.bf16.mxu0 0
  %2035 = vmatpush1.bf16.msra.mxu0 0
  %2036 = vmatprep.subr.bf16.mxu0 0
  %2037 = vmatpush1.bf16.msra.mxu0 0
  %2038 = vmatprep.subr.bf16.mxu0 0
  %2039 = vmatpush1.bf16.msra.mxu0 0
  %2040 = vmatprep.subr.bf16.mxu0 0
  %2041 = vmatpush1.bf16.msra.mxu0 0
  %2042 = vmatprep.subr.bf16.mxu0 0
  %2043 = vmatpush1.bf16.msra.mxu0 0
  %2044 = vmatprep.subr.bf16.mxu0 0
  %2045 = vmatpush1.bf16.msra.mxu0 0
  %2046 = vmatprep.subr.bf16.mxu0 0
  %2047 = vmatpush1.bf16.msra.mxu0 0
  %2048 = vmatprep.mubr.bf16.mxu0 0
  %2049 = vmatmul.mubr.bf16.gmra.mrb[0].mxu0 %v2011
  %v2050 = vpop.f32.mrb[0].mxu0
  %v2051 = vadd.f32 0.0, %v2050
  %v2052 = vpop.f32.mrb[0].mxu0
  %v2053 = vpop.f32.mrb[0].mxu0
  %v2054 = vadd.f32 0.0, %v2053
  %v2055 = vpop.f32.mrb[0].mxu0
  %2056 = vmatprep.mubr.bf16.mxu0 0
  %2057 = vmatmul.mubr.bf16.gmra.mrb[0].mxu0 %v2014
  %v2058 = vpop.f32.mrb[0].mxu0
  %v2059 = vadd.f32 0.0, %v2058
  %v2060 = vpop.f32.mrb[0].mxu0
  %v2061 = vpop.f32.mrb[0].mxu0
  %v2062 = vadd.f32 0.0, %v2061
  %v2063 = vpop.f32.mrb[0].mxu0
  %2064 = vdwg.mxu0
  %v2065 = vadd.f32 %v1905, %v2051
  %v2066 = vadd.f32 %v1906, %v2054
  %v2067 = vadd.f32 %v1907, %v2059
  %v2068 = vadd.f32 %v1908, %v2062
  %s2069 = scalar_lea.vmem %s3, 176
  %v2070 = vld [vmem:[%s2069] sm:$0xf]
  %v2071 = vld [vmem:[%s2069 + $0x4] sm:$0xf]
  %v2072 = vld [vmem:[%s2069 + $0x8] sm:$0xf]
  %v2073 = vld [vmem:[%s2069 + $0xc] sm:$0xf]
  %v2078 = vunpack.c.l.b16 %v2070
  %v2079 = vunpack.c.l.b16 %v2071
  %v2080 = vunpack.c.l.b16 %v2072
  %v2081 = vunpack.c.l.b16 %v2073
  %v2082 = vpack.c.b16 %v2079, %v2078
  %v2083 = vpack.c.b16 %v2081, %v2080
  %2086 = vmatprep.subr.bf16.mxu0 0
  %2087 = vmatpush1.bf16.msra.mxu0 %v311
  %2088 = vmatprep.subr.bf16.mxu0 0
  %2089 = vmatpush1.bf16.msra.mxu0 %v312
  %2090 = vmatprep.subr.bf16.mxu0 0
  %2091 = vmatpush1.bf16.msra.mxu0 %v313
  %2092 = vmatprep.subr.bf16.mxu0 0
  %2093 = vmatpush1.bf16.msra.mxu0 %v314
  %2094 = vmatprep.subr.bf16.mxu0 0
  %2095 = vmatpush1.bf16.msra.mxu0 %v315
  %2096 = vmatprep.subr.bf16.mxu0 0
  %2097 = vmatpush1.bf16.msra.mxu0 %v316
  %2098 = vmatprep.subr.bf16.mxu0 0
  %2099 = vmatpush1.bf16.msra.mxu0 %v317
  %2100 = vmatprep.subr.bf16.mxu0 0
  %2101 = vmatpush1.bf16.msra.mxu0 %v318
  %2102 = vmatprep.subr.bf16.mxu0 0
  %2103 = vmatpush1.bf16.msra.mxu0 0
  %2104 = vmatprep.subr.bf16.mxu0 0
  %2105 = vmatpush1.bf16.msra.mxu0 0
  %2106 = vmatprep.subr.bf16.mxu0 0
  %2107 = vmatpush1.bf16.msra.mxu0 0
  %2108 = vmatprep.subr.bf16.mxu0 0
  %2109 = vmatpush1.bf16.msra.mxu0 0
  %2110 = vmatprep.subr.bf16.mxu0 0
  %2111 = vmatpush1.bf16.msra.mxu0 0
  %2112 = vmatprep.subr.bf16.mxu0 0
  %2113 = vmatpush1.bf16.msra.mxu0 0
  %2114 = vmatprep.subr.bf16.mxu0 0
  %2115 = vmatpush1.bf16.msra.mxu0 0
  %2116 = vmatprep.subr.bf16.mxu0 0
  %2117 = vmatpush1.bf16.msra.mxu0 0
  %2118 = vmatprep.mubr.bf16.mxu0 0
  %2119 = vmatmul.mubr.bf16.gmra.mrb[0].mxu0 %v2082
  %v2120 = vpop.f32.mrb[0].mxu0
  %v2121 = vadd.f32 0.0, %v2120
  %v2122 = vpop.f32.mrb[0].mxu0
  %v2123 = vpop.f32.mrb[0].mxu0
  %v2124 = vadd.f32 0.0, %v2123
  %v2125 = vpop.f32.mrb[0].mxu0
  %2126 = vmatprep.mubr.bf16.mxu0 0
  %2127 = vmatmul.mubr.bf16.gmra.mrb[0].mxu0 %v2083
  %v2128 = vpop.f32.mrb[0].mxu0
  %v2129 = vadd.f32 0.0, %v2128
  %v2130 = vpop.f32.mrb[0].mxu0
  %v2131 = vpop.f32.mrb[0].mxu0
  %v2132 = vadd.f32 0.0, %v2131
  %v2133 = vpop.f32.mrb[0].mxu0
  %2134 = vdwg.mxu0
  %v2135 = vpack.c.bf16 %v2124, %v2121
  %v2136 = vpack.c.bf16 %v2132, %v2129
  %s2137 = scalar_lea.vmem %s4, 352
  %v2138 = vld [vmem:[%s2137] sm:$0xf]
  %v2139 = vld [vmem:[%s2137 + $0x4] sm:$0xf]
  %v2140 = vld [vmem:[%s2137 + $0x8] sm:$0xf]
  %v2141 = vld [vmem:[%s2137 + $0xc] sm:$0xf]
  %v2142 = vld [vmem:[%s2137 + $0x10] sm:$0xf]
  %v2143 = vld [vmem:[%s2137 + $0x14] sm:$0xf]
  %v2144 = vld [vmem:[%s2137 + $0x18] sm:$0xf]
  %v2145 = vld [vmem:[%s2137 + $0x1c] sm:$0xf]
  %v2154 = vunpack.c.l.b16 %v2138
  %v2155 = vunpack.c.l.b16 %v2139
  %v2156 = vunpack.c.l.b16 %v2140
  %v2157 = vunpack.c.l.b16 %v2141
  %v2158 = vunpack.c.l.b16 %v2142
  %v2159 = vunpack.c.l.b16 %v2143
  %v2160 = vunpack.c.l.b16 %v2144
  %v2161 = vunpack.c.l.b16 %v2145
  %v2162 = vpack.c.b16 %v2155, %v2154
  %v2163 = vpack.c.b16 %v2157, %v2156
  %v2164 = vpack.c.b16 %v2159, %v2158
  %v2165 = vpack.c.b16 %v2161, %v2160
  %v2171 = vsel %vm157, %v2135, 0
  %v2174 = vsel %vm157, %v2136, 0
  %2176 = vmatprep.subr.bf16.mxu0 0
  %2177 = vmatpush1.bf16.msra.mxu0 %v2162
  %2178 = vmatprep.subr.bf16.mxu0 0
  %2179 = vmatpush1.bf16.msra.mxu0 %v2163
  %2180 = vmatprep.subr.bf16.mxu0 0
  %2181 = vmatpush1.bf16.msra.mxu0 %v2164
  %2182 = vmatprep.subr.bf16.mxu0 0
  %2183 = vmatpush1.bf16.msra.mxu0 %v2165
  %2184 = vmatprep.subr.bf16.mxu0 0
  %2185 = vmatpush1.bf16.msra.mxu0 0
  %2186 = vmatprep.subr.bf16.mxu0 0
  %2187 = vmatpush1.bf16.msra.mxu0 0
  %2188 = vmatprep.subr.bf16.mxu0 0
  %2189 = vmatpush1.bf16.msra.mxu0 0
  %2190 = vmatprep.subr.bf16.mxu0 0
  %2191 = vmatpush1.bf16.msra.mxu0 0
  %2192 = vmatprep.subr.bf16.mxu0 0
  %2193 = vmatpush1.bf16.msra.mxu0 0
  %2194 = vmatprep.subr.bf16.mxu0 0
  %2195 = vmatpush1.bf16.msra.mxu0 0
  %2196 = vmatprep.subr.bf16.mxu0 0
  %2197 = vmatpush1.bf16.msra.mxu0 0
  %2198 = vmatprep.subr.bf16.mxu0 0
  %2199 = vmatpush1.bf16.msra.mxu0 0
  %2200 = vmatprep.subr.bf16.mxu0 0
  %2201 = vmatpush1.bf16.msra.mxu0 0
  %2202 = vmatprep.subr.bf16.mxu0 0
  %2203 = vmatpush1.bf16.msra.mxu0 0
  %2204 = vmatprep.subr.bf16.mxu0 0
  %2205 = vmatpush1.bf16.msra.mxu0 0
  %2206 = vmatprep.subr.bf16.mxu0 0
  %2207 = vmatpush1.bf16.msra.mxu0 0
  %2208 = vmatprep.mubr.bf16.mxu0 0
  %2209 = vmatmul.mubr.bf16.gmra.mrb[0].mxu0 %v2171
  %v2210 = vpop.f32.mrb[0].mxu0
  %v2211 = vadd.f32 0.0, %v2210
  %v2212 = vpop.f32.mrb[0].mxu0
  %v2213 = vpop.f32.mrb[0].mxu0
  %v2214 = vadd.f32 0.0, %v2213
  %v2215 = vpop.f32.mrb[0].mxu0
  %2216 = vmatprep.mubr.bf16.mxu0 0
  %2217 = vmatmul.mubr.bf16.gmra.mrb[0].mxu0 %v2174
  %v2218 = vpop.f32.mrb[0].mxu0
  %v2219 = vadd.f32 0.0, %v2218
  %v2220 = vpop.f32.mrb[0].mxu0
  %v2221 = vpop.f32.mrb[0].mxu0
  %v2222 = vadd.f32 0.0, %v2221
  %v2223 = vpop.f32.mrb[0].mxu0
  %2224 = vdwg.mxu0
  %v2225 = vadd.f32 %v2065, %v2211
  %v2226 = vadd.f32 %v2066, %v2214
  %v2227 = vadd.f32 %v2067, %v2219
  %v2228 = vadd.f32 %v2068, %v2222
  %s2229 = scalar_lea.vmem %s3, 192
  %v2230 = vld [vmem:[%s2229] sm:$0xf]
  %v2231 = vld [vmem:[%s2229 + $0x4] sm:$0xf]
  %v2232 = vld [vmem:[%s2229 + $0x8] sm:$0xf]
  %v2233 = vld [vmem:[%s2229 + $0xc] sm:$0xf]
  %v2238 = vunpack.c.l.b16 %v2230
  %v2239 = vunpack.c.l.b16 %v2231
  %v2240 = vunpack.c.l.b16 %v2232
  %v2241 = vunpack.c.l.b16 %v2233
  %v2242 = vpack.c.b16 %v2239, %v2238
  %v2243 = vpack.c.b16 %v2241, %v2240
  %2246 = vmatprep.subr.bf16.mxu0 0
  %2247 = vmatpush1.bf16.msra.mxu0 %v311
  %2248 = vmatprep.subr.bf16.mxu0 0
  %2249 = vmatpush1.bf16.msra.mxu0 %v312
  %2250 = vmatprep.subr.bf16.mxu0 0
  %2251 = vmatpush1.bf16.msra.mxu0 %v313
  %2252 = vmatprep.subr.bf16.mxu0 0
  %2253 = vmatpush1.bf16.msra.mxu0 %v314
  %2254 = vmatprep.subr.bf16.mxu0 0
  %2255 = vmatpush1.bf16.msra.mxu0 %v315
  %2256 = vmatprep.subr.bf16.mxu0 0
  %2257 = vmatpush1.bf16.msra.mxu0 %v316
  %2258 = vmatprep.subr.bf16.mxu0 0
  %2259 = vmatpush1.bf16.msra.mxu0 %v317
  %2260 = vmatprep.subr.bf16.mxu0 0
  %2261 = vmatpush1.bf16.msra.mxu0 %v318
  %2262 = vmatprep.subr.bf16.mxu0 0
  %2263 = vmatpush1.bf16.msra.mxu0 0
  %2264 = vmatprep.subr.bf16.mxu0 0
  %2265 = vmatpush1.bf16.msra.mxu0 0
  %2266 = vmatprep.subr.bf16.mxu0 0
  %2267 = vmatpush1.bf16.msra.mxu0 0
  %2268 = vmatprep.subr.bf16.mxu0 0
  %2269 = vmatpush1.bf16.msra.mxu0 0
  %2270 = vmatprep.subr.bf16.mxu0 0
  %2271 = vmatpush1.bf16.msra.mxu0 0
  %2272 = vmatprep.subr.bf16.mxu0 0
  %2273 = vmatpush1.bf16.msra.mxu0 0
  %2274 = vmatprep.subr.bf16.mxu0 0
  %2275 = vmatpush1.bf16.msra.mxu0 0
  %2276 = vmatprep.subr.bf16.mxu0 0
  %2277 = vmatpush1.bf16.msra.mxu0 0
  %2278 = vmatprep.mubr.bf16.mxu0 0
  %2279 = vmatmul.mubr.bf16.gmra.mrb[0].mxu0 %v2242
  %v2280 = vpop.f32.mrb[0].mxu0
  %v2281 = vadd.f32 0.0, %v2280
  %v2282 = vpop.f32.mrb[0].mxu0
  %v2283 = vpop.f32.mrb[0].mxu0
  %v2284 = vadd.f32 0.0, %v2283
  %v2285 = vpop.f32.mrb[0].mxu0
  %2286 = vmatprep.mubr.bf16.mxu0 0
  %2287 = vmatmul.mubr.bf16.gmra.mrb[0].mxu0 %v2243
  %v2288 = vpop.f32.mrb[0].mxu0
  %v2289 = vadd.f32 0.0, %v2288
  %v2290 = vpop.f32.mrb[0].mxu0
  %v2291 = vpop.f32.mrb[0].mxu0
  %v2292 = vadd.f32 0.0, %v2291
  %v2293 = vpop.f32.mrb[0].mxu0
  %2294 = vdwg.mxu0
  %v2295 = vpack.c.bf16 %v2284, %v2281
  %v2296 = vpack.c.bf16 %v2292, %v2289
  %s2297 = scalar_lea.vmem %s4, 384
  %v2298 = vld [vmem:[%s2297] sm:$0xf]
  %v2299 = vld [vmem:[%s2297 + $0x4] sm:$0xf]
  %v2300 = vld [vmem:[%s2297 + $0x8] sm:$0xf]
  %v2301 = vld [vmem:[%s2297 + $0xc] sm:$0xf]
  %v2302 = vld [vmem:[%s2297 + $0x10] sm:$0xf]
  %v2303 = vld [vmem:[%s2297 + $0x14] sm:$0xf]
  %v2304 = vld [vmem:[%s2297 + $0x18] sm:$0xf]
  %v2305 = vld [vmem:[%s2297 + $0x1c] sm:$0xf]
  %v2314 = vunpack.c.l.b16 %v2298
  %v2315 = vunpack.c.l.b16 %v2299
  %v2316 = vunpack.c.l.b16 %v2300
  %v2317 = vunpack.c.l.b16 %v2301
  %v2318 = vunpack.c.l.b16 %v2302
  %v2319 = vunpack.c.l.b16 %v2303
  %v2320 = vunpack.c.l.b16 %v2304
  %v2321 = vunpack.c.l.b16 %v2305
  %v2322 = vpack.c.b16 %v2315, %v2314
  %v2323 = vpack.c.b16 %v2317, %v2316
  %v2324 = vpack.c.b16 %v2319, %v2318
  %v2325 = vpack.c.b16 %v2321, %v2320
  %v2331 = vsel %vm157, %v2295, 0
  %v2334 = vsel %vm157, %v2296, 0
  %2336 = vmatprep.subr.bf16.mxu0 0
  %2337 = vmatpush1.bf16.msra.mxu0 %v2322
  %2338 = vmatprep.subr.bf16.mxu0 0
  %2339 = vmatpush1.bf16.msra.mxu0 %v2323
  %2340 = vmatprep.subr.bf16.mxu0 0
  %2341 = vmatpush1.bf16.msra.mxu0 %v2324
  %2342 = vmatprep.subr.bf16.mxu0 0
  %2343 = vmatpush1.bf16.msra.mxu0 %v2325
  %2344 = vmatprep.subr.bf16.mxu0 0
  %2345 = vmatpush1.bf16.msra.mxu0 0
  %2346 = vmatprep.subr.bf16.mxu0 0
  %2347 = vmatpush1.bf16.msra.mxu0 0
  %2348 = vmatprep.subr.bf16.mxu0 0
  %2349 = vmatpush1.bf16.msra.mxu0 0
  %2350 = vmatprep.subr.bf16.mxu0 0
  %2351 = vmatpush1.bf16.msra.mxu0 0
  %2352 = vmatprep.subr.bf16.mxu0 0
  %2353 = vmatpush1.bf16.msra.mxu0 0
  %2354 = vmatprep.subr.bf16.mxu0 0
  %2355 = vmatpush1.bf16.msra.mxu0 0
  %2356 = vmatprep.subr.bf16.mxu0 0
  %2357 = vmatpush1.bf16.msra.mxu0 0
  %2358 = vmatprep.subr.bf16.mxu0 0
  %2359 = vmatpush1.bf16.msra.mxu0 0
  %2360 = vmatprep.subr.bf16.mxu0 0
  %2361 = vmatpush1.bf16.msra.mxu0 0
  %2362 = vmatprep.subr.bf16.mxu0 0
  %2363 = vmatpush1.bf16.msra.mxu0 0
  %2364 = vmatprep.subr.bf16.mxu0 0
  %2365 = vmatpush1.bf16.msra.mxu0 0
  %2366 = vmatprep.subr.bf16.mxu0 0
  %2367 = vmatpush1.bf16.msra.mxu0 0
  %2368 = vmatprep.mubr.bf16.mxu0 0
  %2369 = vmatmul.mubr.bf16.gmra.mrb[0].mxu0 %v2331
  %v2370 = vpop.f32.mrb[0].mxu0
  %v2371 = vadd.f32 0.0, %v2370
  %v2372 = vpop.f32.mrb[0].mxu0
  %v2373 = vpop.f32.mrb[0].mxu0
  %v2374 = vadd.f32 0.0, %v2373
  %v2375 = vpop.f32.mrb[0].mxu0
  %2376 = vmatprep.mubr.bf16.mxu0 0
  %2377 = vmatmul.mubr.bf16.gmra.mrb[0].mxu0 %v2334
  %v2378 = vpop.f32.mrb[0].mxu0
  %v2379 = vadd.f32 0.0, %v2378
  %v2380 = vpop.f32.mrb[0].mxu0
  %v2381 = vpop.f32.mrb[0].mxu0
  %v2382 = vadd.f32 0.0, %v2381
  %v2383 = vpop.f32.mrb[0].mxu0
  %2384 = vdwg.mxu0
  %v2385 = vadd.f32 %v2225, %v2371
  %v2386 = vadd.f32 %v2226, %v2374
  %v2387 = vadd.f32 %v2227, %v2379
  %v2388 = vadd.f32 %v2228, %v2382
  %s2389 = scalar_lea.vmem %s3, 208
  %v2390 = vld [vmem:[%s2389] sm:$0xf]
  %v2391 = vld [vmem:[%s2389 + $0x4] sm:$0xf]
  %v2392 = vld [vmem:[%s2389 + $0x8] sm:$0xf]
  %v2393 = vld [vmem:[%s2389 + $0xc] sm:$0xf]
  %v2398 = vunpack.c.l.b16 %v2390
  %v2399 = vunpack.c.l.b16 %v2391
  %v2400 = vunpack.c.l.b16 %v2392
  %v2401 = vunpack.c.l.b16 %v2393
  %v2402 = vpack.c.b16 %v2399, %v2398
  %v2403 = vpack.c.b16 %v2401, %v2400
  %2406 = vmatprep.subr.bf16.mxu0 0
  %2407 = vmatpush1.bf16.msra.mxu0 %v311
  %2408 = vmatprep.subr.bf16.mxu0 0
  %2409 = vmatpush1.bf16.msra.mxu0 %v312
  %2410 = vmatprep.subr.bf16.mxu0 0
  %2411 = vmatpush1.bf16.msra.mxu0 %v313
  %2412 = vmatprep.subr.bf16.mxu0 0
  %2413 = vmatpush1.bf16.msra.mxu0 %v314
  %2414 = vmatprep.subr.bf16.mxu0 0
  %2415 = vmatpush1.bf16.msra.mxu0 %v315
  %2416 = vmatprep.subr.bf16.mxu0 0
  %2417 = vmatpush1.bf16.msra.mxu0 %v316
  %2418 = vmatprep.subr.bf16.mxu0 0
  %2419 = vmatpush1.bf16.msra.mxu0 %v317
  %2420 = vmatprep.subr.bf16.mxu0 0
  %2421 = vmatpush1.bf16.msra.mxu0 %v318
  %2422 = vmatprep.subr.bf16.mxu0 0
  %2423 = vmatpush1.bf16.msra.mxu0 0
  %2424 = vmatprep.subr.bf16.mxu0 0
  %2425 = vmatpush1.bf16.msra.mxu0 0
  %2426 = vmatprep.subr.bf16.mxu0 0
  %2427 = vmatpush1.bf16.msra.mxu0 0
  %2428 = vmatprep.subr.bf16.mxu0 0
  %2429 = vmatpush1.bf16.msra.mxu0 0
  %2430 = vmatprep.subr.bf16.mxu0 0
  %2431 = vmatpush1.bf16.msra.mxu0 0
  %2432 = vmatprep.subr.bf16.mxu0 0
  %2433 = vmatpush1.bf16.msra.mxu0 0
  %2434 = vmatprep.subr.bf16.mxu0 0
  %2435 = vmatpush1.bf16.msra.mxu0 0
  %2436 = vmatprep.subr.bf16.mxu0 0
  %2437 = vmatpush1.bf16.msra.mxu0 0
  %2438 = vmatprep.mubr.bf16.mxu0 0
  %2439 = vmatmul.mubr.bf16.gmra.mrb[0].mxu0 %v2402
  %v2440 = vpop.f32.mrb[0].mxu0
  %v2441 = vadd.f32 0.0, %v2440
  %v2442 = vpop.f32.mrb[0].mxu0
  %v2443 = vpop.f32.mrb[0].mxu0
  %v2444 = vadd.f32 0.0, %v2443
  %v2445 = vpop.f32.mrb[0].mxu0
  %2446 = vmatprep.mubr.bf16.mxu0 0
  %2447 = vmatmul.mubr.bf16.gmra.mrb[0].mxu0 %v2403
  %v2448 = vpop.f32.mrb[0].mxu0
  %v2449 = vadd.f32 0.0, %v2448
  %v2450 = vpop.f32.mrb[0].mxu0
  %v2451 = vpop.f32.mrb[0].mxu0
  %v2452 = vadd.f32 0.0, %v2451
  %v2453 = vpop.f32.mrb[0].mxu0
  %2454 = vdwg.mxu0
  %v2455 = vpack.c.bf16 %v2444, %v2441
  %v2456 = vpack.c.bf16 %v2452, %v2449
  %s2457 = scalar_lea.vmem %s4, 416
  %v2458 = vld [vmem:[%s2457] sm:$0xf]
  %v2459 = vld [vmem:[%s2457 + $0x4] sm:$0xf]
  %v2460 = vld [vmem:[%s2457 + $0x8] sm:$0xf]
  %v2461 = vld [vmem:[%s2457 + $0xc] sm:$0xf]
  %v2462 = vld [vmem:[%s2457 + $0x10] sm:$0xf]
  %v2463 = vld [vmem:[%s2457 + $0x14] sm:$0xf]
  %v2464 = vld [vmem:[%s2457 + $0x18] sm:$0xf]
  %v2465 = vld [vmem:[%s2457 + $0x1c] sm:$0xf]
  %v2474 = vunpack.c.l.b16 %v2458
  %v2475 = vunpack.c.l.b16 %v2459
  %v2476 = vunpack.c.l.b16 %v2460
  %v2477 = vunpack.c.l.b16 %v2461
  %v2478 = vunpack.c.l.b16 %v2462
  %v2479 = vunpack.c.l.b16 %v2463
  %v2480 = vunpack.c.l.b16 %v2464
  %v2481 = vunpack.c.l.b16 %v2465
  %v2482 = vpack.c.b16 %v2475, %v2474
  %v2483 = vpack.c.b16 %v2477, %v2476
  %v2484 = vpack.c.b16 %v2479, %v2478
  %v2485 = vpack.c.b16 %v2481, %v2480
  %v2491 = vsel %vm157, %v2455, 0
  %v2494 = vsel %vm157, %v2456, 0
  %2496 = vmatprep.subr.bf16.mxu0 0
  %2497 = vmatpush1.bf16.msra.mxu0 %v2482
  %2498 = vmatprep.subr.bf16.mxu0 0
  %2499 = vmatpush1.bf16.msra.mxu0 %v2483
  %2500 = vmatprep.subr.bf16.mxu0 0
  %2501 = vmatpush1.bf16.msra.mxu0 %v2484
  %2502 = vmatprep.subr.bf16.mxu0 0
  %2503 = vmatpush1.bf16.msra.mxu0 %v2485
  %2504 = vmatprep.subr.bf16.mxu0 0
  %2505 = vmatpush1.bf16.msra.mxu0 0
  %2506 = vmatprep.subr.bf16.mxu0 0
  %2507 = vmatpush1.bf16.msra.mxu0 0
  %2508 = vmatprep.subr.bf16.mxu0 0
  %2509 = vmatpush1.bf16.msra.mxu0 0
  %2510 = vmatprep.subr.bf16.mxu0 0
  %2511 = vmatpush1.bf16.msra.mxu0 0
  %2512 = vmatprep.subr.bf16.mxu0 0
  %2513 = vmatpush1.bf16.msra.mxu0 0
  %2514 = vmatprep.subr.bf16.mxu0 0
  %2515 = vmatpush1.bf16.msra.mxu0 0
  %2516 = vmatprep.subr.bf16.mxu0 0
  %2517 = vmatpush1.bf16.msra.mxu0 0
  %2518 = vmatprep.subr.bf16.mxu0 0
  %2519 = vmatpush1.bf16.msra.mxu0 0
  %2520 = vmatprep.subr.bf16.mxu0 0
  %2521 = vmatpush1.bf16.msra.mxu0 0
  %2522 = vmatprep.subr.bf16.mxu0 0
  %2523 = vmatpush1.bf16.msra.mxu0 0
  %2524 = vmatprep.subr.bf16.mxu0 0
  %2525 = vmatpush1.bf16.msra.mxu0 0
  %2526 = vmatprep.subr.bf16.mxu0 0
  %2527 = vmatpush1.bf16.msra.mxu0 0
  %2528 = vmatprep.mubr.bf16.mxu0 0
  %2529 = vmatmul.mubr.bf16.gmra.mrb[0].mxu0 %v2491
  %v2530 = vpop.f32.mrb[0].mxu0
  %v2531 = vadd.f32 0.0, %v2530
  %v2532 = vpop.f32.mrb[0].mxu0
  %v2533 = vpop.f32.mrb[0].mxu0
  %v2534 = vadd.f32 0.0, %v2533
  %v2535 = vpop.f32.mrb[0].mxu0
  %2536 = vmatprep.mubr.bf16.mxu0 0
  %2537 = vmatmul.mubr.bf16.gmra.mrb[0].mxu0 %v2494
  %v2538 = vpop.f32.mrb[0].mxu0
  %v2539 = vadd.f32 0.0, %v2538
  %v2540 = vpop.f32.mrb[0].mxu0
  %v2541 = vpop.f32.mrb[0].mxu0
  %v2542 = vadd.f32 0.0, %v2541
  %v2543 = vpop.f32.mrb[0].mxu0
  %2544 = vdwg.mxu0
  %v2545 = vadd.f32 %v2385, %v2531
  %v2546 = vadd.f32 %v2386, %v2534
  %v2547 = vadd.f32 %v2387, %v2539
  %v2548 = vadd.f32 %v2388, %v2542
  %s2549 = scalar_lea.vmem %s3, 224
  %v2550 = vld [vmem:[%s2549] sm:$0xf]
  %v2551 = vld [vmem:[%s2549 + $0x4] sm:$0xf]
  %v2552 = vld [vmem:[%s2549 + $0x8] sm:$0xf]
  %v2553 = vld [vmem:[%s2549 + $0xc] sm:$0xf]
  %v2558 = vunpack.c.l.b16 %v2550
  %v2559 = vunpack.c.l.b16 %v2551
  %v2560 = vunpack.c.l.b16 %v2552
  %v2561 = vunpack.c.l.b16 %v2553
  %v2562 = vpack.c.b16 %v2559, %v2558
  %v2563 = vpack.c.b16 %v2561, %v2560
  %2566 = vmatprep.subr.bf16.mxu0 0
  %2567 = vmatpush1.bf16.msra.mxu0 %v311
  %2568 = vmatprep.subr.bf16.mxu0 0
  %2569 = vmatpush1.bf16.msra.mxu0 %v312
  %2570 = vmatprep.subr.bf16.mxu0 0
  %2571 = vmatpush1.bf16.msra.mxu0 %v313
  %2572 = vmatprep.subr.bf16.mxu0 0
  %2573 = vmatpush1.bf16.msra.mxu0 %v314
  %2574 = vmatprep.subr.bf16.mxu0 0
  %2575 = vmatpush1.bf16.msra.mxu0 %v315
  %2576 = vmatprep.subr.bf16.mxu0 0
  %2577 = vmatpush1.bf16.msra.mxu0 %v316
  %2578 = vmatprep.subr.bf16.mxu0 0
  %2579 = vmatpush1.bf16.msra.mxu0 %v317
  %2580 = vmatprep.subr.bf16.mxu0 0
  %2581 = vmatpush1.bf16.msra.mxu0 %v318
  %2582 = vmatprep.subr.bf16.mxu0 0
  %2583 = vmatpush1.bf16.msra.mxu0 0
  %2584 = vmatprep.subr.bf16.mxu0 0
  %2585 = vmatpush1.bf16.msra.mxu0 0
  %2586 = vmatprep.subr.bf16.mxu0 0
  %2587 = vmatpush1.bf16.msra.mxu0 0
  %2588 = vmatprep.subr.bf16.mxu0 0
  %2589 = vmatpush1.bf16.msra.mxu0 0
  %2590 = vmatprep.subr.bf16.mxu0 0
  %2591 = vmatpush1.bf16.msra.mxu0 0
  %2592 = vmatprep.subr.bf16.mxu0 0
  %2593 = vmatpush1.bf16.msra.mxu0 0
  %2594 = vmatprep.subr.bf16.mxu0 0
  %2595 = vmatpush1.bf16.msra.mxu0 0
  %2596 = vmatprep.subr.bf16.mxu0 0
  %2597 = vmatpush1.bf16.msra.mxu0 0
  %2598 = vmatprep.mubr.bf16.mxu0 0
  %2599 = vmatmul.mubr.bf16.gmra.mrb[0].mxu0 %v2562
  %v2600 = vpop.f32.mrb[0].mxu0
  %v2601 = vadd.f32 0.0, %v2600
  %v2602 = vpop.f32.mrb[0].mxu0
  %v2603 = vpop.f32.mrb[0].mxu0
  %v2604 = vadd.f32 0.0, %v2603
  %v2605 = vpop.f32.mrb[0].mxu0
  %2606 = vmatprep.mubr.bf16.mxu0 0
  %2607 = vmatmul.mubr.bf16.gmra.mrb[0].mxu0 %v2563
  %v2608 = vpop.f32.mrb[0].mxu0
  %v2609 = vadd.f32 0.0, %v2608
  %v2610 = vpop.f32.mrb[0].mxu0
  %v2611 = vpop.f32.mrb[0].mxu0
  %v2612 = vadd.f32 0.0, %v2611
  %v2613 = vpop.f32.mrb[0].mxu0
  %2614 = vdwg.mxu0
  %v2615 = vpack.c.bf16 %v2604, %v2601
  %v2616 = vpack.c.bf16 %v2612, %v2609
  %s2617 = scalar_lea.vmem %s4, 448
  %v2618 = vld [vmem:[%s2617] sm:$0xf]
  %v2619 = vld [vmem:[%s2617 + $0x4] sm:$0xf]
  %v2620 = vld [vmem:[%s2617 + $0x8] sm:$0xf]
  %v2621 = vld [vmem:[%s2617 + $0xc] sm:$0xf]
  %v2622 = vld [vmem:[%s2617 + $0x10] sm:$0xf]
  %v2623 = vld [vmem:[%s2617 + $0x14] sm:$0xf]
  %v2624 = vld [vmem:[%s2617 + $0x18] sm:$0xf]
  %v2625 = vld [vmem:[%s2617 + $0x1c] sm:$0xf]
  %v2634 = vunpack.c.l.b16 %v2618
  %v2635 = vunpack.c.l.b16 %v2619
  %v2636 = vunpack.c.l.b16 %v2620
  %v2637 = vunpack.c.l.b16 %v2621
  %v2638 = vunpack.c.l.b16 %v2622
  %v2639 = vunpack.c.l.b16 %v2623
  %v2640 = vunpack.c.l.b16 %v2624
  %v2641 = vunpack.c.l.b16 %v2625
  %v2642 = vpack.c.b16 %v2635, %v2634
  %v2643 = vpack.c.b16 %v2637, %v2636
  %v2644 = vpack.c.b16 %v2639, %v2638
  %v2645 = vpack.c.b16 %v2641, %v2640
  %v2651 = vsel %vm157, %v2615, 0
  %v2654 = vsel %vm157, %v2616, 0
  %2656 = vmatprep.subr.bf16.mxu0 0
  %2657 = vmatpush1.bf16.msra.mxu0 %v2642
  %2658 = vmatprep.subr.bf16.mxu0 0
  %2659 = vmatpush1.bf16.msra.mxu0 %v2643
  %2660 = vmatprep.subr.bf16.mxu0 0
  %2661 = vmatpush1.bf16.msra.mxu0 %v2644
  %2662 = vmatprep.subr.bf16.mxu0 0
  %2663 = vmatpush1.bf16.msra.mxu0 %v2645
  %2664 = vmatprep.subr.bf16.mxu0 0
  %2665 = vmatpush1.bf16.msra.mxu0 0
  %2666 = vmatprep.subr.bf16.mxu0 0
  %2667 = vmatpush1.bf16.msra.mxu0 0
  %2668 = vmatprep.subr.bf16.mxu0 0
  %2669 = vmatpush1.bf16.msra.mxu0 0
  %2670 = vmatprep.subr.bf16.mxu0 0
  %2671 = vmatpush1.bf16.msra.mxu0 0
  %2672 = vmatprep.subr.bf16.mxu0 0
  %2673 = vmatpush1.bf16.msra.mxu0 0
  %2674 = vmatprep.subr.bf16.mxu0 0
  %2675 = vmatpush1.bf16.msra.mxu0 0
  %2676 = vmatprep.subr.bf16.mxu0 0
  %2677 = vmatpush1.bf16.msra.mxu0 0
  %2678 = vmatprep.subr.bf16.mxu0 0
  %2679 = vmatpush1.bf16.msra.mxu0 0
  %2680 = vmatprep.subr.bf16.mxu0 0
  %2681 = vmatpush1.bf16.msra.mxu0 0
  %2682 = vmatprep.subr.bf16.mxu0 0
  %2683 = vmatpush1.bf16.msra.mxu0 0
  %2684 = vmatprep.subr.bf16.mxu0 0
  %2685 = vmatpush1.bf16.msra.mxu0 0
  %2686 = vmatprep.subr.bf16.mxu0 0
  %2687 = vmatpush1.bf16.msra.mxu0 0
  %2688 = vmatprep.mubr.bf16.mxu0 0
  %2689 = vmatmul.mubr.bf16.gmra.mrb[0].mxu0 %v2651
  %v2690 = vpop.f32.mrb[0].mxu0
  %v2691 = vadd.f32 0.0, %v2690
  %v2692 = vpop.f32.mrb[0].mxu0
  %v2693 = vpop.f32.mrb[0].mxu0
  %v2694 = vadd.f32 0.0, %v2693
  %v2695 = vpop.f32.mrb[0].mxu0
  %2696 = vmatprep.mubr.bf16.mxu0 0
  %2697 = vmatmul.mubr.bf16.gmra.mrb[0].mxu0 %v2654
  %v2698 = vpop.f32.mrb[0].mxu0
  %v2699 = vadd.f32 0.0, %v2698
  %v2700 = vpop.f32.mrb[0].mxu0
  %v2701 = vpop.f32.mrb[0].mxu0
  %v2702 = vadd.f32 0.0, %v2701
  %v2703 = vpop.f32.mrb[0].mxu0
  %2704 = vdwg.mxu0
  %v2705 = vadd.f32 %v2545, %v2691
  %v2706 = vadd.f32 %v2546, %v2694
  %v2707 = vadd.f32 %v2547, %v2699
  %v2708 = vadd.f32 %v2548, %v2702
  %s2709 = scalar_lea.vmem %s3, 240
  %v2710 = vld [vmem:[%s2709] sm:$0xf]
  %v2711 = vld [vmem:[%s2709 + $0x4] sm:$0xf]
  %v2712 = vld [vmem:[%s2709 + $0x8] sm:$0xf]
  %v2713 = vld [vmem:[%s2709 + $0xc] sm:$0xf]
  %v2718 = vunpack.c.l.b16 %v2710
  %v2719 = vunpack.c.l.b16 %v2711
  %v2720 = vunpack.c.l.b16 %v2712
  %v2721 = vunpack.c.l.b16 %v2713
  %v2722 = vpack.c.b16 %v2719, %v2718
  %v2723 = vpack.c.b16 %v2721, %v2720
  %2726 = vmatprep.subr.bf16.mxu0 0
  %2727 = vmatpush1.bf16.msra.mxu0 %v311
  %2728 = vmatprep.subr.bf16.mxu0 0
  %2729 = vmatpush1.bf16.msra.mxu0 %v312
  %2730 = vmatprep.subr.bf16.mxu0 0
  %2731 = vmatpush1.bf16.msra.mxu0 %v313
  %2732 = vmatprep.subr.bf16.mxu0 0
  %2733 = vmatpush1.bf16.msra.mxu0 %v314
  %2734 = vmatprep.subr.bf16.mxu0 0
  %2735 = vmatpush1.bf16.msra.mxu0 %v315
  %2736 = vmatprep.subr.bf16.mxu0 0
  %2737 = vmatpush1.bf16.msra.mxu0 %v316
  %2738 = vmatprep.subr.bf16.mxu0 0
  %2739 = vmatpush1.bf16.msra.mxu0 %v317
  %2740 = vmatprep.subr.bf16.mxu0 0
  %2741 = vmatpush1.bf16.msra.mxu0 %v318
  %2742 = vmatprep.subr.bf16.mxu0 0
  %2743 = vmatpush1.bf16.msra.mxu0 0
  %2744 = vmatprep.subr.bf16.mxu0 0
  %2745 = vmatpush1.bf16.msra.mxu0 0
  %2746 = vmatprep.subr.bf16.mxu0 0
  %2747 = vmatpush1.bf16.msra.mxu0 0
  %2748 = vmatprep.subr.bf16.mxu0 0
  %2749 = vmatpush1.bf16.msra.mxu0 0
  %2750 = vmatprep.subr.bf16.mxu0 0
  %2751 = vmatpush1.bf16.msra.mxu0 0
  %2752 = vmatprep.subr.bf16.mxu0 0
  %2753 = vmatpush1.bf16.msra.mxu0 0
  %2754 = vmatprep.subr.bf16.mxu0 0
  %2755 = vmatpush1.bf16.msra.mxu0 0
  %2756 = vmatprep.subr.bf16.mxu0 0
  %2757 = vmatpush1.bf16.msra.mxu0 0
  %2758 = vmatprep.mubr.bf16.mxu0 0
  %2759 = vmatmul.mubr.bf16.gmra.mrb[0].mxu0 %v2722
  %v2760 = vpop.f32.mrb[0].mxu0
  %v2761 = vadd.f32 0.0, %v2760
  %v2762 = vpop.f32.mrb[0].mxu0
  %v2763 = vpop.f32.mrb[0].mxu0
  %v2764 = vadd.f32 0.0, %v2763
  %v2765 = vpop.f32.mrb[0].mxu0
  %2766 = vmatprep.mubr.bf16.mxu0 0
  %2767 = vmatmul.mubr.bf16.gmra.mrb[0].mxu0 %v2723
  %v2768 = vpop.f32.mrb[0].mxu0
  %v2769 = vadd.f32 0.0, %v2768
  %v2770 = vpop.f32.mrb[0].mxu0
  %v2771 = vpop.f32.mrb[0].mxu0
  %v2772 = vadd.f32 0.0, %v2771
  %v2773 = vpop.f32.mrb[0].mxu0
  %2774 = vdwg.mxu0
  %v2775 = vpack.c.bf16 %v2764, %v2761
  %v2776 = vpack.c.bf16 %v2772, %v2769
  %s2777 = scalar_lea.vmem %s4, 480
  %v2778 = vld [vmem:[%s2777] sm:$0xf]
  %v2779 = vld [vmem:[%s2777 + $0x4] sm:$0xf]
  %v2780 = vld [vmem:[%s2777 + $0x8] sm:$0xf]
  %v2781 = vld [vmem:[%s2777 + $0xc] sm:$0xf]
  %v2782 = vld [vmem:[%s2777 + $0x10] sm:$0xf]
  %v2783 = vld [vmem:[%s2777 + $0x14] sm:$0xf]
  %v2784 = vld [vmem:[%s2777 + $0x18] sm:$0xf]
  %v2785 = vld [vmem:[%s2777 + $0x1c] sm:$0xf]
  %v2794 = vunpack.c.l.b16 %v2778
  %v2795 = vunpack.c.l.b16 %v2779
  %v2796 = vunpack.c.l.b16 %v2780
  %v2797 = vunpack.c.l.b16 %v2781
  %v2798 = vunpack.c.l.b16 %v2782
  %v2799 = vunpack.c.l.b16 %v2783
  %v2800 = vunpack.c.l.b16 %v2784
  %v2801 = vunpack.c.l.b16 %v2785
  %v2802 = vpack.c.b16 %v2795, %v2794
  %v2803 = vpack.c.b16 %v2797, %v2796
  %v2804 = vpack.c.b16 %v2799, %v2798
  %v2805 = vpack.c.b16 %v2801, %v2800
  %v2811 = vsel %vm157, %v2775, 0
  %v2814 = vsel %vm157, %v2776, 0
  %2816 = vmatprep.subr.bf16.mxu0 0
  %2817 = vmatpush1.bf16.msra.mxu0 %v2802
  %2818 = vmatprep.subr.bf16.mxu0 0
  %2819 = vmatpush1.bf16.msra.mxu0 %v2803
  %2820 = vmatprep.subr.bf16.mxu0 0
  %2821 = vmatpush1.bf16.msra.mxu0 %v2804
  %2822 = vmatprep.subr.bf16.mxu0 0
  %2823 = vmatpush1.bf16.msra.mxu0 %v2805
  %2824 = vmatprep.subr.bf16.mxu0 0
  %2825 = vmatpush1.bf16.msra.mxu0 0
  %2826 = vmatprep.subr.bf16.mxu0 0
  %2827 = vmatpush1.bf16.msra.mxu0 0
  %2828 = vmatprep.subr.bf16.mxu0 0
  %2829 = vmatpush1.bf16.msra.mxu0 0
  %2830 = vmatprep.subr.bf16.mxu0 0
  %2831 = vmatpush1.bf16.msra.mxu0 0
  %2832 = vmatprep.subr.bf16.mxu0 0
  %2833 = vmatpush1.bf16.msra.mxu0 0
  %2834 = vmatprep.subr.bf16.mxu0 0
  %2835 = vmatpush1.bf16.msra.mxu0 0
  %2836 = vmatprep.subr.bf16.mxu0 0
  %2837 = vmatpush1.bf16.msra.mxu0 0
  %2838 = vmatprep.subr.bf16.mxu0 0
  %2839 = vmatpush1.bf16.msra.mxu0 0
  %2840 = vmatprep.subr.bf16.mxu0 0
  %2841 = vmatpush1.bf16.msra.mxu0 0
  %2842 = vmatprep.subr.bf16.mxu0 0
  %2843 = vmatpush1.bf16.msra.mxu0 0
  %2844 = vmatprep.subr.bf16.mxu0 0
  %2845 = vmatpush1.bf16.msra.mxu0 0
  %2846 = vmatprep.subr.bf16.mxu0 0
  %2847 = vmatpush1.bf16.msra.mxu0 0
  %2848 = vmatprep.mubr.bf16.mxu0 0
  %2849 = vmatmul.mubr.bf16.gmra.mrb[0].mxu0 %v2811
  %v2850 = vpop.f32.mrb[0].mxu0
  %v2851 = vadd.f32 0.0, %v2850
  %v2852 = vpop.f32.mrb[0].mxu0
  %v2853 = vpop.f32.mrb[0].mxu0
  %v2854 = vadd.f32 0.0, %v2853
  %v2855 = vpop.f32.mrb[0].mxu0
  %2856 = vmatprep.mubr.bf16.mxu0 0
  %2857 = vmatmul.mubr.bf16.gmra.mrb[0].mxu0 %v2814
  %v2858 = vpop.f32.mrb[0].mxu0
  %v2859 = vadd.f32 0.0, %v2858
  %v2860 = vpop.f32.mrb[0].mxu0
  %v2861 = vpop.f32.mrb[0].mxu0
  %v2862 = vadd.f32 0.0, %v2861
  %v2863 = vpop.f32.mrb[0].mxu0
  %2864 = vdwg.mxu0
  %v2865 = vadd.f32 %v2705, %v2851
  %v2866 = vadd.f32 %v2706, %v2854
  %v2867 = vadd.f32 %v2707, %v2859
  %v2868 = vadd.f32 %v2708, %v2862
  %v2869 = vadd.f32 %v2865, %v2866
  %v2870 = vadd.f32 %v2869, %v2867
  %v2871 = vadd.f32 %v2870, %v2868
  %v2872 = vrot.slane %v2871, 4
  %v2873 = vadd.f32 %v2871, %v2872
  %v2874 = vrot.slane %v2873, 2
  %v2875 = vadd.f32 %v2873, %v2874
  %v2876 = vrot.slane %v2875, 1
  %v2877 = vadd.f32 %v2875, %v2876
  %v2878 = vmul.f32 %v2877, 0.03125
  %v2879 = vsub.f32 %v2865, %v2878
  %v2880 = vsub.f32 %v2866, %v2878
  %v2881 = vsub.f32 %v2867, %v2878
  %v2882 = vsub.f32 %v2868, %v2878
  %v2883 = vmul.f32 %v2879, %v2879
  %v2884 = vmul.f32 %v2880, %v2880
  %v2885 = vmul.f32 %v2881, %v2881
  %v2886 = vmul.f32 %v2882, %v2882
  %v2887 = vadd.f32 %v2883, %v2884
  %v2888 = vadd.f32 %v2887, %v2885
  %v2889 = vadd.f32 %v2888, %v2886
  %v2890 = vrot.slane %v2889, 4
  %v2891 = vadd.f32 %v2889, %v2890
  %v2892 = vrot.slane %v2891, 2
  %v2893 = vadd.f32 %v2891, %v2892
  %v2894 = vrot.slane %v2893, 1
  %v2895 = vadd.f32 %v2893, %v2894
  %v2896 = vmul.f32 %v2895, 0.03125
  %v2897 = vadd.f32 %v2896, 1e-05
  %v2898 = vrsqrt.pop %v2897
  %v2899 = vmul.f32 %v2879, %v2898
  %v2900 = vmul.f32 %v2880, %v2898
  %v2901 = vmul.f32 %v2881, %v2898
  %v2902 = vmul.f32 %v2882, %v2898
  %v2903 = vld [vmem:[%s5] sm:$0x1]
  %v2905 = vlaneseq
  %v2906 = vshrl.u32 %v2905, 7
  %v2907 = vsub.s32 0, %v2906
  %v2908 = vrot.slane %v2903, %v2907
  %v2910 = vmul.f32 %v2899, %v2908
  %v2911 = vmul.f32 %v2900, %v2908
  %v2912 = vmul.f32 %v2901, %v2908
  %v2913 = vmul.f32 %v2902, %v2908
  %v2914 = vld [vmem:[%s6] sm:$0x1]
  %v2916 = vlaneseq
  %v2917 = vshrl.u32 %v2916, 7
  %v2918 = vsub.s32 0, %v2917
  %v2919 = vrot.slane %v2914, %v2918
  %v2921 = vadd.f32 %v2910, %v2919
  %v2922 = vadd.f32 %v2911, %v2919
  %v2923 = vadd.f32 %v2912, %v2919
  %v2924 = vadd.f32 %v2913, %v2919
  %v2925 = vmul.f32 %v2921, 0.2
  %v2926 = vmul.f32 %v2922, 0.2
  %v2927 = vmul.f32 %v2923, 0.2
  %v2928 = vmul.f32 %v2924, 0.2
  %v2929 = vmax.f32 %v2921, %v2925
  %v2930 = vmax.f32 %v2922, %v2926
  %v2931 = vmax.f32 %v2923, %v2927
  %v2932 = vmax.f32 %v2924, %v2928
  %v2933 = vpack.c.bf16 %v2930, %v2929
  %v2934 = vpack.c.bf16 %v2932, %v2931
  %v2935 = vld [vmem:[%s7] sm:$0xf]
  %vm2936 = vcmask 261120
  %v2938 = vsel %vm2936, %v2935, 0
  %2940 = vmatprep.subr.bf16.mxu0 0
  %2941 = vmatpush1.bf16.msra.mxu0 %v2933
  %2942 = vmatprep.subr.bf16.mxu0 0
  %2943 = vmatpush1.bf16.msra.mxu0 %v2934
  %2944 = vmatprep.subr.bf16.mxu0 0
  %2945 = vmatpush1.bf16.msra.mxu0 0
  %2946 = vmatprep.subr.bf16.mxu0 0
  %2947 = vmatpush1.bf16.msra.mxu0 0
  %2948 = vmatprep.subr.bf16.mxu0 0
  %2949 = vmatpush1.bf16.msra.mxu0 0
  %2950 = vmatprep.subr.bf16.mxu0 0
  %2951 = vmatpush1.bf16.msra.mxu0 0
  %2952 = vmatprep.subr.bf16.mxu0 0
  %2953 = vmatpush1.bf16.msra.mxu0 0
  %2954 = vmatprep.subr.bf16.mxu0 0
  %2955 = vmatpush1.bf16.msra.mxu0 0
  %2956 = vmatprep.subr.bf16.mxu0 0
  %2957 = vmatpush1.bf16.msra.mxu0 0
  %2958 = vmatprep.subr.bf16.mxu0 0
  %2959 = vmatpush1.bf16.msra.mxu0 0
  %2960 = vmatprep.subr.bf16.mxu0 0
  %2961 = vmatpush1.bf16.msra.mxu0 0
  %2962 = vmatprep.subr.bf16.mxu0 0
  %2963 = vmatpush1.bf16.msra.mxu0 0
  %2964 = vmatprep.subr.bf16.mxu0 0
  %2965 = vmatpush1.bf16.msra.mxu0 0
  %2966 = vmatprep.subr.bf16.mxu0 0
  %2967 = vmatpush1.bf16.msra.mxu0 0
  %2968 = vmatprep.subr.bf16.mxu0 0
  %2969 = vmatpush1.bf16.msra.mxu0 0
  %2970 = vmatprep.subr.bf16.mxu0 0
  %2971 = vmatpush1.bf16.msra.mxu0 0
  %2972 = vmatprep.mubr.bf16.mxu0 0
  %2973 = vmatmul.mubr.bf16.gmra.mrb[0].mxu0 %v2938
  %v2974 = vpop.f32.mrb[0].mxu0
  %v2975 = vadd.f32 0.0, %v2974
  %v2976 = vpop.f32.mrb[0].mxu0
  %v2977 = vpop.f32.mrb[0].mxu0
  %v2978 = vpop.f32.mrb[0].mxu0
  %2979 = vdwg.mxu0
  %v2980 = vpack.c.bf16 %v2975, %v2975
  %v2981 = vld [vmem:[%s8] sm:$0xff]
  %v2982 = vld [vmem:[%s8 + $0x8] sm:$0xff]
  %v2983 = vld [vmem:[%s8 + $0x10] sm:$0xff]
  %v2984 = vld [vmem:[%s8 + $0x18] sm:$0xff]
  %v2985 = vld [vmem:[%s8 + $0x20] sm:$0xff]
  %v2986 = vld [vmem:[%s8 + $0x28] sm:$0xff]
  %v2987 = vld [vmem:[%s8 + $0x30] sm:$0xff]
  %v2988 = vld [vmem:[%s8 + $0x38] sm:$0xff]
  %v2989 = vld [vmem:[%s8 + $0x40] sm:$0xff]
  %v2990 = vld [vmem:[%s8 + $0x48] sm:$0xff]
  %v2991 = vld [vmem:[%s8 + $0x50] sm:$0xff]
  %v2992 = vld [vmem:[%s8 + $0x58] sm:$0xff]
  %v2993 = vld [vmem:[%s8 + $0x60] sm:$0xff]
  %v2994 = vld [vmem:[%s8 + $0x68] sm:$0xff]
  %v2995 = vld [vmem:[%s8 + $0x70] sm:$0xff]
  %v2996 = vld [vmem:[%s8 + $0x78] sm:$0xff]
  %s2997 = scalar_lea.vmem %s7, 4
  %v2998 = vld [vmem:[%s2997] sm:$0xf]
  %v3000 = vsel %vm2936, %v2998, 0
  %3002 = vmatprep.subr.bf16.mxu0 0
  %3003 = vmatpush1.bf16.msra.mxu0 %v2933
  %3004 = vmatprep.subr.bf16.mxu0 0
  %3005 = vmatpush1.bf16.msra.mxu0 %v2934
  %3006 = vmatprep.subr.bf16.mxu0 0
  %3007 = vmatpush1.bf16.msra.mxu0 0
  %3008 = vmatprep.subr.bf16.mxu0 0
  %3009 = vmatpush1.bf16.msra.mxu0 0
  %3010 = vmatprep.subr.bf16.mxu0 0
  %3011 = vmatpush1.bf16.msra.mxu0 0
  %3012 = vmatprep.subr.bf16.mxu0 0
  %3013 = vmatpush1.bf16.msra.mxu0 0
  %3014 = vmatprep.subr.bf16.mxu0 0
  %3015 = vmatpush1.bf16.msra.mxu0 0
  %3016 = vmatprep.subr.bf16.mxu0 0
  %3017 = vmatpush1.bf16.msra.mxu0 0
  %3018 = vmatprep.subr.bf16.mxu0 0
  %3019 = vmatpush1.bf16.msra.mxu0 0
  %3020 = vmatprep.subr.bf16.mxu0 0
  %3021 = vmatpush1.bf16.msra.mxu0 0
  %3022 = vmatprep.subr.bf16.mxu0 0
  %3023 = vmatpush1.bf16.msra.mxu0 0
  %3024 = vmatprep.subr.bf16.mxu0 0
  %3025 = vmatpush1.bf16.msra.mxu0 0
  %3026 = vmatprep.subr.bf16.mxu0 0
  %3027 = vmatpush1.bf16.msra.mxu0 0
  %3028 = vmatprep.subr.bf16.mxu0 0
  %3029 = vmatpush1.bf16.msra.mxu0 0
  %3030 = vmatprep.subr.bf16.mxu0 0
  %3031 = vmatpush1.bf16.msra.mxu0 0
  %3032 = vmatprep.subr.bf16.mxu0 0
  %3033 = vmatpush1.bf16.msra.mxu0 0
  %3034 = vmatprep.mubr.bf16.mxu0 0
  %3035 = vmatmul.mubr.bf16.gmra.mrb[0].mxu0 %v3000
  %v3036 = vpop.f32.mrb[0].mxu0
  %v3037 = vadd.f32 0.0, %v3036
  %v3038 = vpop.f32.mrb[0].mxu0
  %v3039 = vpop.f32.mrb[0].mxu0
  %v3040 = vpop.f32.mrb[0].mxu0
  %3041 = vdwg.mxu0
  %v3042 = vpack.c.bf16 %v3037, %v3037
  %s3043 = scalar_lea.vmem %s8, 128
  %v3044 = vld [vmem:[%s3043] sm:$0xff]
  %v3045 = vld [vmem:[%s3043 + $0x8] sm:$0xff]
  %v3046 = vld [vmem:[%s3043 + $0x10] sm:$0xff]
  %v3047 = vld [vmem:[%s3043 + $0x18] sm:$0xff]
  %v3048 = vld [vmem:[%s3043 + $0x20] sm:$0xff]
  %v3049 = vld [vmem:[%s3043 + $0x28] sm:$0xff]
  %v3050 = vld [vmem:[%s3043 + $0x30] sm:$0xff]
  %v3051 = vld [vmem:[%s3043 + $0x38] sm:$0xff]
  %v3052 = vld [vmem:[%s3043 + $0x40] sm:$0xff]
  %v3053 = vld [vmem:[%s3043 + $0x48] sm:$0xff]
  %v3054 = vld [vmem:[%s3043 + $0x50] sm:$0xff]
  %v3055 = vld [vmem:[%s3043 + $0x58] sm:$0xff]
  %v3056 = vld [vmem:[%s3043 + $0x60] sm:$0xff]
  %v3057 = vld [vmem:[%s3043 + $0x68] sm:$0xff]
  %v3058 = vld [vmem:[%s3043 + $0x70] sm:$0xff]
  %v3059 = vld [vmem:[%s3043 + $0x78] sm:$0xff]
  %v3076 = vunpack.c.l.b16 %v3044
  %v3077 = vunpack.c.h.b16 %v3044
  %v3078 = vunpack.c.l.b16 %v3045
  %v3079 = vunpack.c.h.b16 %v3045
  %v3080 = vunpack.c.l.b16 %v3046
  %v3081 = vunpack.c.h.b16 %v3046
  %v3082 = vunpack.c.l.b16 %v3047
  %v3083 = vunpack.c.h.b16 %v3047
  %v3084 = vunpack.c.l.b16 %v3048
  %v3085 = vunpack.c.h.b16 %v3048
  %v3086 = vunpack.c.l.b16 %v3049
  %v3087 = vunpack.c.h.b16 %v3049
  %v3088 = vunpack.c.l.b16 %v3050
  %v3089 = vunpack.c.h.b16 %v3050
  %v3090 = vunpack.c.l.b16 %v3051
  %v3091 = vunpack.c.h.b16 %v3051
  %v3092 = vunpack.c.l.b16 %v3052
  %v3093 = vunpack.c.h.b16 %v3052
  %v3094 = vunpack.c.l.b16 %v3053
  %v3095 = vunpack.c.h.b16 %v3053
  %v3096 = vunpack.c.l.b16 %v3054
  %v3097 = vunpack.c.h.b16 %v3054
  %v3098 = vunpack.c.l.b16 %v3055
  %v3099 = vunpack.c.h.b16 %v3055
  %v3100 = vunpack.c.l.b16 %v3056
  %v3101 = vunpack.c.h.b16 %v3056
  %v3102 = vunpack.c.l.b16 %v3057
  %v3103 = vunpack.c.h.b16 %v3057
  %v3104 = vunpack.c.l.b16 %v3058
  %v3105 = vunpack.c.h.b16 %v3058
  %v3106 = vunpack.c.l.b16 %v3059
  %v3107 = vunpack.c.h.b16 %v3059
  %v3108 = vpack.c.b16 %v3078, %v3076
  %v3109 = vpack.c.b16 %v3079, %v3077
  %v3110 = vpack.c.b16 %v3082, %v3080
  %v3111 = vpack.c.b16 %v3083, %v3081
  %v3112 = vpack.c.b16 %v3086, %v3084
  %v3113 = vpack.c.b16 %v3087, %v3085
  %v3114 = vpack.c.b16 %v3090, %v3088
  %v3115 = vpack.c.b16 %v3091, %v3089
  %v3116 = vpack.c.b16 %v3094, %v3092
  %v3117 = vpack.c.b16 %v3095, %v3093
  %v3118 = vpack.c.b16 %v3098, %v3096
  %v3119 = vpack.c.b16 %v3099, %v3097
  %v3120 = vpack.c.b16 %v3102, %v3100
  %v3121 = vpack.c.b16 %v3103, %v3101
  %v3122 = vpack.c.b16 %v3106, %v3104
  %v3123 = vpack.c.b16 %v3107, %v3105
  %3140 = vmatprep.subr.bf16.mxu0 %v3109
  %3141 = vmatpush1.bf16.msra.mxu0 %v3108
  %3142 = vmatprep.subr.bf16.mxu0 %v3111
  %3143 = vmatpush1.bf16.msra.mxu0 %v3110
  %3144 = vmatprep.subr.bf16.mxu0 %v3113
  %3145 = vmatpush1.bf16.msra.mxu0 %v3112
  %3146 = vmatprep.subr.bf16.mxu0 %v3115
  %3147 = vmatpush1.bf16.msra.mxu0 %v3114
  %3148 = vmatprep.subr.bf16.mxu0 %v3117
  %3149 = vmatpush1.bf16.msra.mxu0 %v3116
  %3150 = vmatprep.subr.bf16.mxu0 %v3119
  %3151 = vmatpush1.bf16.msra.mxu0 %v3118
  %3152 = vmatprep.subr.bf16.mxu0 %v3121
  %3153 = vmatpush1.bf16.msra.mxu0 %v3120
  %3154 = vmatprep.subr.bf16.mxu0 %v3123
  %3155 = vmatpush1.bf16.msra.mxu0 %v3122
  %3156 = vmatprep.subr.bf16.mxu0 0
  %3157 = vmatpush1.bf16.msra.mxu0 0
  %3158 = vmatprep.subr.bf16.mxu0 0
  %3159 = vmatpush1.bf16.msra.mxu0 0
  %3160 = vmatprep.subr.bf16.mxu0 0
  %3161 = vmatpush1.bf16.msra.mxu0 0
  %3162 = vmatprep.subr.bf16.mxu0 0
  %3163 = vmatpush1.bf16.msra.mxu0 0
  %3164 = vmatprep.subr.bf16.mxu0 0
  %3165 = vmatpush1.bf16.msra.mxu0 0
  %3166 = vmatprep.subr.bf16.mxu0 0
  %3167 = vmatpush1.bf16.msra.mxu0 0
  %3168 = vmatprep.subr.bf16.mxu0 0
  %3169 = vmatpush1.bf16.msra.mxu0 0
  %3170 = vmatprep.subr.bf16.mxu0 0
  %3171 = vmatpush1.bf16.msra.mxu0 0
  %3172 = vmatprep.mubr.bf16.mxu0 0
  %3173 = vmatmul.mubr.bf16.gmra.mrb[0].mxu0 %v3042
  %v3174 = vpop.f32.mrb[0].mxu0
  %v3175 = vadd.f32 0.0, %v3174
  %v3176 = vpop.f32.mrb[0].mxu0
  %v3177 = vadd.f32 0.0, %v3176
  %v3178 = vpop.f32.mrb[0].mxu0
  %v3179 = vpop.f32.mrb[0].mxu0
  %3180 = vdwg.mxu0
  %v3197 = vunpack.c.l.b16 %v2981
  %v3198 = vunpack.c.h.b16 %v2981
  %v3199 = vunpack.c.l.b16 %v2982
  %v3200 = vunpack.c.h.b16 %v2982
  %v3201 = vunpack.c.l.b16 %v2983
  %v3202 = vunpack.c.h.b16 %v2983
  %v3203 = vunpack.c.l.b16 %v2984
  %v3204 = vunpack.c.h.b16 %v2984
  %v3205 = vunpack.c.l.b16 %v2985
  %v3206 = vunpack.c.h.b16 %v2985
  %v3207 = vunpack.c.l.b16 %v2986
  %v3208 = vunpack.c.h.b16 %v2986
  %v3209 = vunpack.c.l.b16 %v2987
  %v3210 = vunpack.c.h.b16 %v2987
  %v3211 = vunpack.c.l.b16 %v2988
  %v3212 = vunpack.c.h.b16 %v2988
  %v3213 = vunpack.c.l.b16 %v2989
  %v3214 = vunpack.c.h.b16 %v2989
  %v3215 = vunpack.c.l.b16 %v2990
  %v3216 = vunpack.c.h.b16 %v2990
  %v3217 = vunpack.c.l.b16 %v2991
  %v3218 = vunpack.c.h.b16 %v2991
  %v3219 = vunpack.c.l.b16 %v2992
  %v3220 = vunpack.c.h.b16 %v2992
  %v3221 = vunpack.c.l.b16 %v2993
  %v3222 = vunpack.c.h.b16 %v2993
  %v3223 = vunpack.c.l.b16 %v2994
  %v3224 = vunpack.c.h.b16 %v2994
  %v3225 = vunpack.c.l.b16 %v2995
  %v3226 = vunpack.c.h.b16 %v2995
  %v3227 = vunpack.c.l.b16 %v2996
  %v3228 = vunpack.c.h.b16 %v2996
  %v3229 = vpack.c.b16 %v3199, %v3197
  %v3230 = vpack.c.b16 %v3200, %v3198
  %v3231 = vpack.c.b16 %v3203, %v3201
  %v3232 = vpack.c.b16 %v3204, %v3202
  %v3233 = vpack.c.b16 %v3207, %v3205
  %v3234 = vpack.c.b16 %v3208, %v3206
  %v3235 = vpack.c.b16 %v3211, %v3209
  %v3236 = vpack.c.b16 %v3212, %v3210
  %v3237 = vpack.c.b16 %v3215, %v3213
  %v3238 = vpack.c.b16 %v3216, %v3214
  %v3239 = vpack.c.b16 %v3219, %v3217
  %v3240 = vpack.c.b16 %v3220, %v3218
  %v3241 = vpack.c.b16 %v3223, %v3221
  %v3242 = vpack.c.b16 %v3224, %v3222
  %v3243 = vpack.c.b16 %v3227, %v3225
  %v3244 = vpack.c.b16 %v3228, %v3226
  %3261 = vmatprep.subr.bf16.mxu0 %v3230
  %3262 = vmatpush1.bf16.msra.mxu0 %v3229
  %3263 = vmatprep.subr.bf16.mxu0 %v3232
  %3264 = vmatpush1.bf16.msra.mxu0 %v3231
  %3265 = vmatprep.subr.bf16.mxu0 %v3234
  %3266 = vmatpush1.bf16.msra.mxu0 %v3233
  %3267 = vmatprep.subr.bf16.mxu0 %v3236
  %3268 = vmatpush1.bf16.msra.mxu0 %v3235
  %3269 = vmatprep.subr.bf16.mxu0 %v3238
  %3270 = vmatpush1.bf16.msra.mxu0 %v3237
  %3271 = vmatprep.subr.bf16.mxu0 %v3240
  %3272 = vmatpush1.bf16.msra.mxu0 %v3239
  %3273 = vmatprep.subr.bf16.mxu0 %v3242
  %3274 = vmatpush1.bf16.msra.mxu0 %v3241
  %3275 = vmatprep.subr.bf16.mxu0 %v3244
  %3276 = vmatpush1.bf16.msra.mxu0 %v3243
  %3277 = vmatprep.subr.bf16.mxu0 0
  %3278 = vmatpush1.bf16.msra.mxu0 0
  %3279 = vmatprep.subr.bf16.mxu0 0
  %3280 = vmatpush1.bf16.msra.mxu0 0
  %3281 = vmatprep.subr.bf16.mxu0 0
  %3282 = vmatpush1.bf16.msra.mxu0 0
  %3283 = vmatprep.subr.bf16.mxu0 0
  %3284 = vmatpush1.bf16.msra.mxu0 0
  %3285 = vmatprep.subr.bf16.mxu0 0
  %3286 = vmatpush1.bf16.msra.mxu0 0
  %3287 = vmatprep.subr.bf16.mxu0 0
  %3288 = vmatpush1.bf16.msra.mxu0 0
  %3289 = vmatprep.subr.bf16.mxu0 0
  %3290 = vmatpush1.bf16.msra.mxu0 0
  %3291 = vmatprep.subr.bf16.mxu0 0
  %3292 = vmatpush1.bf16.msra.mxu0 0
  %3293 = vmatprep.mubr.bf16.mxu0 0
  %3294 = vmatmul.mubr.bf16.gmra.mrb[0].mxu0 %v2980
  %v3295 = vpop.f32.mrb[0].mxu0
  %v3296 = vadd.f32 %v3175, %v3295
  %v3297 = vpop.f32.mrb[0].mxu0
  %v3298 = vadd.f32 %v3177, %v3297
  %v3299 = vpop.f32.mrb[0].mxu0
  %v3300 = vpop.f32.mrb[0].mxu0
  %3301 = vdwg.mxu0
  %s3302 = scalar_lea.vmem %s7, 8
  %v3303 = vld [vmem:[%s3302] sm:$0xf]
  %v3305 = vsel %vm2936, %v3303, 0
  %3307 = vmatprep.subr.bf16.mxu0 0
  %3308 = vmatpush1.bf16.msra.mxu0 %v2933
  %3309 = vmatprep.subr.bf16.mxu0 0
  %3310 = vmatpush1.bf16.msra.mxu0 %v2934
  %3311 = vmatprep.subr.bf16.mxu0 0
  %3312 = vmatpush1.bf16.msra.mxu0 0
  %3313 = vmatprep.subr.bf16.mxu0 0
  %3314 = vmatpush1.bf16.msra.mxu0 0
  %3315 = vmatprep.subr.bf16.mxu0 0
  %3316 = vmatpush1.bf16.msra.mxu0 0
  %3317 = vmatprep.subr.bf16.mxu0 0
  %3318 = vmatpush1.bf16.msra.mxu0 0
  %3319 = vmatprep.subr.bf16.mxu0 0
  %3320 = vmatpush1.bf16.msra.mxu0 0
  %3321 = vmatprep.subr.bf16.mxu0 0
  %3322 = vmatpush1.bf16.msra.mxu0 0
  %3323 = vmatprep.subr.bf16.mxu0 0
  %3324 = vmatpush1.bf16.msra.mxu0 0
  %3325 = vmatprep.subr.bf16.mxu0 0
  %3326 = vmatpush1.bf16.msra.mxu0 0
  %3327 = vmatprep.subr.bf16.mxu0 0
  %3328 = vmatpush1.bf16.msra.mxu0 0
  %3329 = vmatprep.subr.bf16.mxu0 0
  %3330 = vmatpush1.bf16.msra.mxu0 0
  %3331 = vmatprep.subr.bf16.mxu0 0
  %3332 = vmatpush1.bf16.msra.mxu0 0
  %3333 = vmatprep.subr.bf16.mxu0 0
  %3334 = vmatpush1.bf16.msra.mxu0 0
  %3335 = vmatprep.subr.bf16.mxu0 0
  %3336 = vmatpush1.bf16.msra.mxu0 0
  %3337 = vmatprep.subr.bf16.mxu0 0
  %3338 = vmatpush1.bf16.msra.mxu0 0
  %3339 = vmatprep.mubr.bf16.mxu0 0
  %3340 = vmatmul.mubr.bf16.gmra.mrb[0].mxu0 %v3305
  %v3341 = vpop.f32.mrb[0].mxu0
  %v3342 = vadd.f32 0.0, %v3341
  %v3343 = vpop.f32.mrb[0].mxu0
  %v3344 = vpop.f32.mrb[0].mxu0
  %v3345 = vpop.f32.mrb[0].mxu0
  %3346 = vdwg.mxu0
  %v3347 = vpack.c.bf16 %v3342, %v3342
  %s3348 = scalar_lea.vmem %s8, 256
  %v3349 = vld [vmem:[%s3348] sm:$0xff]
  %v3350 = vld [vmem:[%s3348 + $0x8] sm:$0xff]
  %v3351 = vld [vmem:[%s3348 + $0x10] sm:$0xff]
  %v3352 = vld [vmem:[%s3348 + $0x18] sm:$0xff]
  %v3353 = vld [vmem:[%s3348 + $0x20] sm:$0xff]
  %v3354 = vld [vmem:[%s3348 + $0x28] sm:$0xff]
  %v3355 = vld [vmem:[%s3348 + $0x30] sm:$0xff]
  %v3356 = vld [vmem:[%s3348 + $0x38] sm:$0xff]
  %v3357 = vld [vmem:[%s3348 + $0x40] sm:$0xff]
  %v3358 = vld [vmem:[%s3348 + $0x48] sm:$0xff]
  %v3359 = vld [vmem:[%s3348 + $0x50] sm:$0xff]
  %v3360 = vld [vmem:[%s3348 + $0x58] sm:$0xff]
  %v3361 = vld [vmem:[%s3348 + $0x60] sm:$0xff]
  %v3362 = vld [vmem:[%s3348 + $0x68] sm:$0xff]
  %v3363 = vld [vmem:[%s3348 + $0x70] sm:$0xff]
  %v3364 = vld [vmem:[%s3348 + $0x78] sm:$0xff]
  %v3381 = vunpack.c.l.b16 %v3349
  %v3382 = vunpack.c.h.b16 %v3349
  %v3383 = vunpack.c.l.b16 %v3350
  %v3384 = vunpack.c.h.b16 %v3350
  %v3385 = vunpack.c.l.b16 %v3351
  %v3386 = vunpack.c.h.b16 %v3351
  %v3387 = vunpack.c.l.b16 %v3352
  %v3388 = vunpack.c.h.b16 %v3352
  %v3389 = vunpack.c.l.b16 %v3353
  %v3390 = vunpack.c.h.b16 %v3353
  %v3391 = vunpack.c.l.b16 %v3354
  %v3392 = vunpack.c.h.b16 %v3354
  %v3393 = vunpack.c.l.b16 %v3355
  %v3394 = vunpack.c.h.b16 %v3355
  %v3395 = vunpack.c.l.b16 %v3356
  %v3396 = vunpack.c.h.b16 %v3356
  %v3397 = vunpack.c.l.b16 %v3357
  %v3398 = vunpack.c.h.b16 %v3357
  %v3399 = vunpack.c.l.b16 %v3358
  %v3400 = vunpack.c.h.b16 %v3358
  %v3401 = vunpack.c.l.b16 %v3359
  %v3402 = vunpack.c.h.b16 %v3359
  %v3403 = vunpack.c.l.b16 %v3360
  %v3404 = vunpack.c.h.b16 %v3360
  %v3405 = vunpack.c.l.b16 %v3361
  %v3406 = vunpack.c.h.b16 %v3361
  %v3407 = vunpack.c.l.b16 %v3362
  %v3408 = vunpack.c.h.b16 %v3362
  %v3409 = vunpack.c.l.b16 %v3363
  %v3410 = vunpack.c.h.b16 %v3363
  %v3411 = vunpack.c.l.b16 %v3364
  %v3412 = vunpack.c.h.b16 %v3364
  %v3413 = vpack.c.b16 %v3383, %v3381
  %v3414 = vpack.c.b16 %v3384, %v3382
  %v3415 = vpack.c.b16 %v3387, %v3385
  %v3416 = vpack.c.b16 %v3388, %v3386
  %v3417 = vpack.c.b16 %v3391, %v3389
  %v3418 = vpack.c.b16 %v3392, %v3390
  %v3419 = vpack.c.b16 %v3395, %v3393
  %v3420 = vpack.c.b16 %v3396, %v3394
  %v3421 = vpack.c.b16 %v3399, %v3397
  %v3422 = vpack.c.b16 %v3400, %v3398
  %v3423 = vpack.c.b16 %v3403, %v3401
  %v3424 = vpack.c.b16 %v3404, %v3402
  %v3425 = vpack.c.b16 %v3407, %v3405
  %v3426 = vpack.c.b16 %v3408, %v3406
  %v3427 = vpack.c.b16 %v3411, %v3409
  %v3428 = vpack.c.b16 %v3412, %v3410
  %3445 = vmatprep.subr.bf16.mxu0 %v3414
  %3446 = vmatpush1.bf16.msra.mxu0 %v3413
  %3447 = vmatprep.subr.bf16.mxu0 %v3416
  %3448 = vmatpush1.bf16.msra.mxu0 %v3415
  %3449 = vmatprep.subr.bf16.mxu0 %v3418
  %3450 = vmatpush1.bf16.msra.mxu0 %v3417
  %3451 = vmatprep.subr.bf16.mxu0 %v3420
  %3452 = vmatpush1.bf16.msra.mxu0 %v3419
  %3453 = vmatprep.subr.bf16.mxu0 %v3422
  %3454 = vmatpush1.bf16.msra.mxu0 %v3421
  %3455 = vmatprep.subr.bf16.mxu0 %v3424
  %3456 = vmatpush1.bf16.msra.mxu0 %v3423
  %3457 = vmatprep.subr.bf16.mxu0 %v3426
  %3458 = vmatpush1.bf16.msra.mxu0 %v3425
  %3459 = vmatprep.subr.bf16.mxu0 %v3428
  %3460 = vmatpush1.bf16.msra.mxu0 %v3427
  %3461 = vmatprep.subr.bf16.mxu0 0
  %3462 = vmatpush1.bf16.msra.mxu0 0
  %3463 = vmatprep.subr.bf16.mxu0 0
  %3464 = vmatpush1.bf16.msra.mxu0 0
  %3465 = vmatprep.subr.bf16.mxu0 0
  %3466 = vmatpush1.bf16.msra.mxu0 0
  %3467 = vmatprep.subr.bf16.mxu0 0
  %3468 = vmatpush1.bf16.msra.mxu0 0
  %3469 = vmatprep.subr.bf16.mxu0 0
  %3470 = vmatpush1.bf16.msra.mxu0 0
  %3471 = vmatprep.subr.bf16.mxu0 0
  %3472 = vmatpush1.bf16.msra.mxu0 0
  %3473 = vmatprep.subr.bf16.mxu0 0
  %3474 = vmatpush1.bf16.msra.mxu0 0
  %3475 = vmatprep.subr.bf16.mxu0 0
  %3476 = vmatpush1.bf16.msra.mxu0 0
  %3477 = vmatprep.mubr.bf16.mxu0 0
  %3478 = vmatmul.mubr.bf16.gmra.mrb[0].mxu0 %v3347
  %v3479 = vpop.f32.mrb[0].mxu0
  %v3480 = vadd.f32 0.0, %v3479
  %v3481 = vpop.f32.mrb[0].mxu0
  %v3482 = vadd.f32 0.0, %v3481
  %v3483 = vpop.f32.mrb[0].mxu0
  %v3484 = vpop.f32.mrb[0].mxu0
  %3485 = vdwg.mxu0
  %v3486 = vadd.f32 %v3296, %v3480
  %v3487 = vadd.f32 %v3298, %v3482
  %s3488 = scalar_lea.vmem %s7, 12
  %v3489 = vld [vmem:[%s3488] sm:$0xf]
  %v3491 = vsel %vm2936, %v3489, 0
  %3493 = vmatprep.subr.bf16.mxu0 0
  %3494 = vmatpush1.bf16.msra.mxu0 %v2933
  %3495 = vmatprep.subr.bf16.mxu0 0
  %3496 = vmatpush1.bf16.msra.mxu0 %v2934
  %3497 = vmatprep.subr.bf16.mxu0 0
  %3498 = vmatpush1.bf16.msra.mxu0 0
  %3499 = vmatprep.subr.bf16.mxu0 0
  %3500 = vmatpush1.bf16.msra.mxu0 0
  %3501 = vmatprep.subr.bf16.mxu0 0
  %3502 = vmatpush1.bf16.msra.mxu0 0
  %3503 = vmatprep.subr.bf16.mxu0 0
  %3504 = vmatpush1.bf16.msra.mxu0 0
  %3505 = vmatprep.subr.bf16.mxu0 0
  %3506 = vmatpush1.bf16.msra.mxu0 0
  %3507 = vmatprep.subr.bf16.mxu0 0
  %3508 = vmatpush1.bf16.msra.mxu0 0
  %3509 = vmatprep.subr.bf16.mxu0 0
  %3510 = vmatpush1.bf16.msra.mxu0 0
  %3511 = vmatprep.subr.bf16.mxu0 0
  %3512 = vmatpush1.bf16.msra.mxu0 0
  %3513 = vmatprep.subr.bf16.mxu0 0
  %3514 = vmatpush1.bf16.msra.mxu0 0
  %3515 = vmatprep.subr.bf16.mxu0 0
  %3516 = vmatpush1.bf16.msra.mxu0 0
  %3517 = vmatprep.subr.bf16.mxu0 0
  %3518 = vmatpush1.bf16.msra.mxu0 0
  %3519 = vmatprep.subr.bf16.mxu0 0
  %3520 = vmatpush1.bf16.msra.mxu0 0
  %3521 = vmatprep.subr.bf16.mxu0 0
  %3522 = vmatpush1.bf16.msra.mxu0 0
  %3523 = vmatprep.subr.bf16.mxu0 0
  %3524 = vmatpush1.bf16.msra.mxu0 0
  %3525 = vmatprep.mubr.bf16.mxu0 0
  %3526 = vmatmul.mubr.bf16.gmra.mrb[0].mxu0 %v3491
  %v3527 = vpop.f32.mrb[0].mxu0
  %v3528 = vadd.f32 0.0, %v3527
  %v3529 = vpop.f32.mrb[0].mxu0
  %v3530 = vpop.f32.mrb[0].mxu0
  %v3531 = vpop.f32.mrb[0].mxu0
  %3532 = vdwg.mxu0
  %v3533 = vpack.c.bf16 %v3528, %v3528
  %s3534 = scalar_lea.vmem %s8, 384
  %v3535 = vld [vmem:[%s3534] sm:$0xff]
  %v3536 = vld [vmem:[%s3534 + $0x8] sm:$0xff]
  %v3537 = vld [vmem:[%s3534 + $0x10] sm:$0xff]
  %v3538 = vld [vmem:[%s3534 + $0x18] sm:$0xff]
  %v3539 = vld [vmem:[%s3534 + $0x20] sm:$0xff]
  %v3540 = vld [vmem:[%s3534 + $0x28] sm:$0xff]
  %v3541 = vld [vmem:[%s3534 + $0x30] sm:$0xff]
  %v3542 = vld [vmem:[%s3534 + $0x38] sm:$0xff]
  %v3543 = vld [vmem:[%s3534 + $0x40] sm:$0xff]
  %v3544 = vld [vmem:[%s3534 + $0x48] sm:$0xff]
  %v3545 = vld [vmem:[%s3534 + $0x50] sm:$0xff]
  %v3546 = vld [vmem:[%s3534 + $0x58] sm:$0xff]
  %v3547 = vld [vmem:[%s3534 + $0x60] sm:$0xff]
  %v3548 = vld [vmem:[%s3534 + $0x68] sm:$0xff]
  %v3549 = vld [vmem:[%s3534 + $0x70] sm:$0xff]
  %v3550 = vld [vmem:[%s3534 + $0x78] sm:$0xff]
  %v3567 = vunpack.c.l.b16 %v3535
  %v3568 = vunpack.c.h.b16 %v3535
  %v3569 = vunpack.c.l.b16 %v3536
  %v3570 = vunpack.c.h.b16 %v3536
  %v3571 = vunpack.c.l.b16 %v3537
  %v3572 = vunpack.c.h.b16 %v3537
  %v3573 = vunpack.c.l.b16 %v3538
  %v3574 = vunpack.c.h.b16 %v3538
  %v3575 = vunpack.c.l.b16 %v3539
  %v3576 = vunpack.c.h.b16 %v3539
  %v3577 = vunpack.c.l.b16 %v3540
  %v3578 = vunpack.c.h.b16 %v3540
  %v3579 = vunpack.c.l.b16 %v3541
  %v3580 = vunpack.c.h.b16 %v3541
  %v3581 = vunpack.c.l.b16 %v3542
  %v3582 = vunpack.c.h.b16 %v3542
  %v3583 = vunpack.c.l.b16 %v3543
  %v3584 = vunpack.c.h.b16 %v3543
  %v3585 = vunpack.c.l.b16 %v3544
  %v3586 = vunpack.c.h.b16 %v3544
  %v3587 = vunpack.c.l.b16 %v3545
  %v3588 = vunpack.c.h.b16 %v3545
  %v3589 = vunpack.c.l.b16 %v3546
  %v3590 = vunpack.c.h.b16 %v3546
  %v3591 = vunpack.c.l.b16 %v3547
  %v3592 = vunpack.c.h.b16 %v3547
  %v3593 = vunpack.c.l.b16 %v3548
  %v3594 = vunpack.c.h.b16 %v3548
  %v3595 = vunpack.c.l.b16 %v3549
  %v3596 = vunpack.c.h.b16 %v3549
  %v3597 = vunpack.c.l.b16 %v3550
  %v3598 = vunpack.c.h.b16 %v3550
  %v3599 = vpack.c.b16 %v3569, %v3567
  %v3600 = vpack.c.b16 %v3570, %v3568
  %v3601 = vpack.c.b16 %v3573, %v3571
  %v3602 = vpack.c.b16 %v3574, %v3572
  %v3603 = vpack.c.b16 %v3577, %v3575
  %v3604 = vpack.c.b16 %v3578, %v3576
  %v3605 = vpack.c.b16 %v3581, %v3579
  %v3606 = vpack.c.b16 %v3582, %v3580
  %v3607 = vpack.c.b16 %v3585, %v3583
  %v3608 = vpack.c.b16 %v3586, %v3584
  %v3609 = vpack.c.b16 %v3589, %v3587
  %v3610 = vpack.c.b16 %v3590, %v3588
  %v3611 = vpack.c.b16 %v3593, %v3591
  %v3612 = vpack.c.b16 %v3594, %v3592
  %v3613 = vpack.c.b16 %v3597, %v3595
  %v3614 = vpack.c.b16 %v3598, %v3596
  %3631 = vmatprep.subr.bf16.mxu0 %v3600
  %3632 = vmatpush1.bf16.msra.mxu0 %v3599
  %3633 = vmatprep.subr.bf16.mxu0 %v3602
  %3634 = vmatpush1.bf16.msra.mxu0 %v3601
  %3635 = vmatprep.subr.bf16.mxu0 %v3604
  %3636 = vmatpush1.bf16.msra.mxu0 %v3603
  %3637 = vmatprep.subr.bf16.mxu0 %v3606
  %3638 = vmatpush1.bf16.msra.mxu0 %v3605
  %3639 = vmatprep.subr.bf16.mxu0 %v3608
  %3640 = vmatpush1.bf16.msra.mxu0 %v3607
  %3641 = vmatprep.subr.bf16.mxu0 %v3610
  %3642 = vmatpush1.bf16.msra.mxu0 %v3609
  %3643 = vmatprep.subr.bf16.mxu0 %v3612
  %3644 = vmatpush1.bf16.msra.mxu0 %v3611
  %3645 = vmatprep.subr.bf16.mxu0 %v3614
  %3646 = vmatpush1.bf16.msra.mxu0 %v3613
  %3647 = vmatprep.subr.bf16.mxu0 0
  %3648 = vmatpush1.bf16.msra.mxu0 0
  %3649 = vmatprep.subr.bf16.mxu0 0
  %3650 = vmatpush1.bf16.msra.mxu0 0
  %3651 = vmatprep.subr.bf16.mxu0 0
  %3652 = vmatpush1.bf16.msra.mxu0 0
  %3653 = vmatprep.subr.bf16.mxu0 0
  %3654 = vmatpush1.bf16.msra.mxu0 0
  %3655 = vmatprep.subr.bf16.mxu0 0
  %3656 = vmatpush1.bf16.msra.mxu0 0
  %3657 = vmatprep.subr.bf16.mxu0 0
  %3658 = vmatpush1.bf16.msra.mxu0 0
  %3659 = vmatprep.subr.bf16.mxu0 0
  %3660 = vmatpush1.bf16.msra.mxu0 0
  %3661 = vmatprep.subr.bf16.mxu0 0
  %3662 = vmatpush1.bf16.msra.mxu0 0
  %3663 = vmatprep.mubr.bf16.mxu0 0
  %3664 = vmatmul.mubr.bf16.gmra.mrb[0].mxu0 %v3533
  %v3665 = vpop.f32.mrb[0].mxu0
  %v3666 = vadd.f32 0.0, %v3665
  %v3667 = vpop.f32.mrb[0].mxu0
  %v3668 = vadd.f32 0.0, %v3667
  %v3669 = vpop.f32.mrb[0].mxu0
  %v3670 = vpop.f32.mrb[0].mxu0
  %3671 = vdwg.mxu0
  %v3672 = vadd.f32 %v3486, %v3666
  %v3673 = vadd.f32 %v3487, %v3668
  %s3674 = scalar_lea.vmem %s7, 16
  %v3675 = vld [vmem:[%s3674] sm:$0xf]
  %v3677 = vsel %vm2936, %v3675, 0
  %3679 = vmatprep.subr.bf16.mxu0 0
  %3680 = vmatpush1.bf16.msra.mxu0 %v2933
  %3681 = vmatprep.subr.bf16.mxu0 0
  %3682 = vmatpush1.bf16.msra.mxu0 %v2934
  %3683 = vmatprep.subr.bf16.mxu0 0
  %3684 = vmatpush1.bf16.msra.mxu0 0
  %3685 = vmatprep.subr.bf16.mxu0 0
  %3686 = vmatpush1.bf16.msra.mxu0 0
  %3687 = vmatprep.subr.bf16.mxu0 0
  %3688 = vmatpush1.bf16.msra.mxu0 0
  %3689 = vmatprep.subr.bf16.mxu0 0
  %3690 = vmatpush1.bf16.msra.mxu0 0
  %3691 = vmatprep.subr.bf16.mxu0 0
  %3692 = vmatpush1.bf16.msra.mxu0 0
  %3693 = vmatprep.subr.bf16.mxu0 0
  %3694 = vmatpush1.bf16.msra.mxu0 0
  %3695 = vmatprep.subr.bf16.mxu0 0
  %3696 = vmatpush1.bf16.msra.mxu0 0
  %3697 = vmatprep.subr.bf16.mxu0 0
  %3698 = vmatpush1.bf16.msra.mxu0 0
  %3699 = vmatprep.subr.bf16.mxu0 0
  %3700 = vmatpush1.bf16.msra.mxu0 0
  %3701 = vmatprep.subr.bf16.mxu0 0
  %3702 = vmatpush1.bf16.msra.mxu0 0
  %3703 = vmatprep.subr.bf16.mxu0 0
  %3704 = vmatpush1.bf16.msra.mxu0 0
  %3705 = vmatprep.subr.bf16.mxu0 0
  %3706 = vmatpush1.bf16.msra.mxu0 0
  %3707 = vmatprep.subr.bf16.mxu0 0
  %3708 = vmatpush1.bf16.msra.mxu0 0
  %3709 = vmatprep.subr.bf16.mxu0 0
  %3710 = vmatpush1.bf16.msra.mxu0 0
  %3711 = vmatprep.mubr.bf16.mxu0 0
  %3712 = vmatmul.mubr.bf16.gmra.mrb[0].mxu0 %v3677
  %v3713 = vpop.f32.mrb[0].mxu0
  %v3714 = vadd.f32 0.0, %v3713
  %v3715 = vpop.f32.mrb[0].mxu0
  %v3716 = vpop.f32.mrb[0].mxu0
  %v3717 = vpop.f32.mrb[0].mxu0
  %3718 = vdwg.mxu0
  %v3719 = vpack.c.bf16 %v3714, %v3714
  %s3720 = scalar_lea.vmem %s8, 512
  %v3721 = vld [vmem:[%s3720] sm:$0xff]
  %v3722 = vld [vmem:[%s3720 + $0x8] sm:$0xff]
  %v3723 = vld [vmem:[%s3720 + $0x10] sm:$0xff]
  %v3724 = vld [vmem:[%s3720 + $0x18] sm:$0xff]
  %v3725 = vld [vmem:[%s3720 + $0x20] sm:$0xff]
  %v3726 = vld [vmem:[%s3720 + $0x28] sm:$0xff]
  %v3727 = vld [vmem:[%s3720 + $0x30] sm:$0xff]
  %v3728 = vld [vmem:[%s3720 + $0x38] sm:$0xff]
  %v3729 = vld [vmem:[%s3720 + $0x40] sm:$0xff]
  %v3730 = vld [vmem:[%s3720 + $0x48] sm:$0xff]
  %v3731 = vld [vmem:[%s3720 + $0x50] sm:$0xff]
  %v3732 = vld [vmem:[%s3720 + $0x58] sm:$0xff]
  %v3733 = vld [vmem:[%s3720 + $0x60] sm:$0xff]
  %v3734 = vld [vmem:[%s3720 + $0x68] sm:$0xff]
  %v3735 = vld [vmem:[%s3720 + $0x70] sm:$0xff]
  %v3736 = vld [vmem:[%s3720 + $0x78] sm:$0xff]
  %v3753 = vunpack.c.l.b16 %v3721
  %v3754 = vunpack.c.h.b16 %v3721
  %v3755 = vunpack.c.l.b16 %v3722
  %v3756 = vunpack.c.h.b16 %v3722
  %v3757 = vunpack.c.l.b16 %v3723
  %v3758 = vunpack.c.h.b16 %v3723
  %v3759 = vunpack.c.l.b16 %v3724
  %v3760 = vunpack.c.h.b16 %v3724
  %v3761 = vunpack.c.l.b16 %v3725
  %v3762 = vunpack.c.h.b16 %v3725
  %v3763 = vunpack.c.l.b16 %v3726
  %v3764 = vunpack.c.h.b16 %v3726
  %v3765 = vunpack.c.l.b16 %v3727
  %v3766 = vunpack.c.h.b16 %v3727
  %v3767 = vunpack.c.l.b16 %v3728
  %v3768 = vunpack.c.h.b16 %v3728
  %v3769 = vunpack.c.l.b16 %v3729
  %v3770 = vunpack.c.h.b16 %v3729
  %v3771 = vunpack.c.l.b16 %v3730
  %v3772 = vunpack.c.h.b16 %v3730
  %v3773 = vunpack.c.l.b16 %v3731
  %v3774 = vunpack.c.h.b16 %v3731
  %v3775 = vunpack.c.l.b16 %v3732
  %v3776 = vunpack.c.h.b16 %v3732
  %v3777 = vunpack.c.l.b16 %v3733
  %v3778 = vunpack.c.h.b16 %v3733
  %v3779 = vunpack.c.l.b16 %v3734
  %v3780 = vunpack.c.h.b16 %v3734
  %v3781 = vunpack.c.l.b16 %v3735
  %v3782 = vunpack.c.h.b16 %v3735
  %v3783 = vunpack.c.l.b16 %v3736
  %v3784 = vunpack.c.h.b16 %v3736
  %v3785 = vpack.c.b16 %v3755, %v3753
  %v3786 = vpack.c.b16 %v3756, %v3754
  %v3787 = vpack.c.b16 %v3759, %v3757
  %v3788 = vpack.c.b16 %v3760, %v3758
  %v3789 = vpack.c.b16 %v3763, %v3761
  %v3790 = vpack.c.b16 %v3764, %v3762
  %v3791 = vpack.c.b16 %v3767, %v3765
  %v3792 = vpack.c.b16 %v3768, %v3766
  %v3793 = vpack.c.b16 %v3771, %v3769
  %v3794 = vpack.c.b16 %v3772, %v3770
  %v3795 = vpack.c.b16 %v3775, %v3773
  %v3796 = vpack.c.b16 %v3776, %v3774
  %v3797 = vpack.c.b16 %v3779, %v3777
  %v3798 = vpack.c.b16 %v3780, %v3778
  %v3799 = vpack.c.b16 %v3783, %v3781
  %v3800 = vpack.c.b16 %v3784, %v3782
  %3817 = vmatprep.subr.bf16.mxu0 %v3786
  %3818 = vmatpush1.bf16.msra.mxu0 %v3785
  %3819 = vmatprep.subr.bf16.mxu0 %v3788
  %3820 = vmatpush1.bf16.msra.mxu0 %v3787
  %3821 = vmatprep.subr.bf16.mxu0 %v3790
  %3822 = vmatpush1.bf16.msra.mxu0 %v3789
  %3823 = vmatprep.subr.bf16.mxu0 %v3792
  %3824 = vmatpush1.bf16.msra.mxu0 %v3791
  %3825 = vmatprep.subr.bf16.mxu0 %v3794
  %3826 = vmatpush1.bf16.msra.mxu0 %v3793
  %3827 = vmatprep.subr.bf16.mxu0 %v3796
  %3828 = vmatpush1.bf16.msra.mxu0 %v3795
  %3829 = vmatprep.subr.bf16.mxu0 %v3798
  %3830 = vmatpush1.bf16.msra.mxu0 %v3797
  %3831 = vmatprep.subr.bf16.mxu0 %v3800
  %3832 = vmatpush1.bf16.msra.mxu0 %v3799
  %3833 = vmatprep.subr.bf16.mxu0 0
  %3834 = vmatpush1.bf16.msra.mxu0 0
  %3835 = vmatprep.subr.bf16.mxu0 0
  %3836 = vmatpush1.bf16.msra.mxu0 0
  %3837 = vmatprep.subr.bf16.mxu0 0
  %3838 = vmatpush1.bf16.msra.mxu0 0
  %3839 = vmatprep.subr.bf16.mxu0 0
  %3840 = vmatpush1.bf16.msra.mxu0 0
  %3841 = vmatprep.subr.bf16.mxu0 0
  %3842 = vmatpush1.bf16.msra.mxu0 0
  %3843 = vmatprep.subr.bf16.mxu0 0
  %3844 = vmatpush1.bf16.msra.mxu0 0
  %3845 = vmatprep.subr.bf16.mxu0 0
  %3846 = vmatpush1.bf16.msra.mxu0 0
  %3847 = vmatprep.subr.bf16.mxu0 0
  %3848 = vmatpush1.bf16.msra.mxu0 0
  %3849 = vmatprep.mubr.bf16.mxu0 0
  %3850 = vmatmul.mubr.bf16.gmra.mrb[0].mxu0 %v3719
  %v3851 = vpop.f32.mrb[0].mxu0
  %v3852 = vadd.f32 0.0, %v3851
  %v3853 = vpop.f32.mrb[0].mxu0
  %v3854 = vadd.f32 0.0, %v3853
  %v3855 = vpop.f32.mrb[0].mxu0
  %v3856 = vpop.f32.mrb[0].mxu0
  %3857 = vdwg.mxu0
  %v3858 = vadd.f32 %v3672, %v3852
  %v3859 = vadd.f32 %v3673, %v3854
  %s3860 = scalar_lea.vmem %s7, 20
  %v3861 = vld [vmem:[%s3860] sm:$0xf]
  %v3863 = vsel %vm2936, %v3861, 0
  %3865 = vmatprep.subr.bf16.mxu0 0
  %3866 = vmatpush1.bf16.msra.mxu0 %v2933
  %3867 = vmatprep.subr.bf16.mxu0 0
  %3868 = vmatpush1.bf16.msra.mxu0 %v2934
  %3869 = vmatprep.subr.bf16.mxu0 0
  %3870 = vmatpush1.bf16.msra.mxu0 0
  %3871 = vmatprep.subr.bf16.mxu0 0
  %3872 = vmatpush1.bf16.msra.mxu0 0
  %3873 = vmatprep.subr.bf16.mxu0 0
  %3874 = vmatpush1.bf16.msra.mxu0 0
  %3875 = vmatprep.subr.bf16.mxu0 0
  %3876 = vmatpush1.bf16.msra.mxu0 0
  %3877 = vmatprep.subr.bf16.mxu0 0
  %3878 = vmatpush1.bf16.msra.mxu0 0
  %3879 = vmatprep.subr.bf16.mxu0 0
  %3880 = vmatpush1.bf16.msra.mxu0 0
  %3881 = vmatprep.subr.bf16.mxu0 0
  %3882 = vmatpush1.bf16.msra.mxu0 0
  %3883 = vmatprep.subr.bf16.mxu0 0
  %3884 = vmatpush1.bf16.msra.mxu0 0
  %3885 = vmatprep.subr.bf16.mxu0 0
  %3886 = vmatpush1.bf16.msra.mxu0 0
  %3887 = vmatprep.subr.bf16.mxu0 0
  %3888 = vmatpush1.bf16.msra.mxu0 0
  %3889 = vmatprep.subr.bf16.mxu0 0
  %3890 = vmatpush1.bf16.msra.mxu0 0
  %3891 = vmatprep.subr.bf16.mxu0 0
  %3892 = vmatpush1.bf16.msra.mxu0 0
  %3893 = vmatprep.subr.bf16.mxu0 0
  %3894 = vmatpush1.bf16.msra.mxu0 0
  %3895 = vmatprep.subr.bf16.mxu0 0
  %3896 = vmatpush1.bf16.msra.mxu0 0
  %3897 = vmatprep.mubr.bf16.mxu0 0
  %3898 = vmatmul.mubr.bf16.gmra.mrb[0].mxu0 %v3863
  %v3899 = vpop.f32.mrb[0].mxu0
  %v3900 = vadd.f32 0.0, %v3899
  %v3901 = vpop.f32.mrb[0].mxu0
  %v3902 = vpop.f32.mrb[0].mxu0
  %v3903 = vpop.f32.mrb[0].mxu0
  %3904 = vdwg.mxu0
  %v3905 = vpack.c.bf16 %v3900, %v3900
  %s3906 = scalar_lea.vmem %s8, 640
  %v3907 = vld [vmem:[%s3906] sm:$0xff]
  %v3908 = vld [vmem:[%s3906 + $0x8] sm:$0xff]
  %v3909 = vld [vmem:[%s3906 + $0x10] sm:$0xff]
  %v3910 = vld [vmem:[%s3906 + $0x18] sm:$0xff]
  %v3911 = vld [vmem:[%s3906 + $0x20] sm:$0xff]
  %v3912 = vld [vmem:[%s3906 + $0x28] sm:$0xff]
  %v3913 = vld [vmem:[%s3906 + $0x30] sm:$0xff]
  %v3914 = vld [vmem:[%s3906 + $0x38] sm:$0xff]
  %v3915 = vld [vmem:[%s3906 + $0x40] sm:$0xff]
  %v3916 = vld [vmem:[%s3906 + $0x48] sm:$0xff]
  %v3917 = vld [vmem:[%s3906 + $0x50] sm:$0xff]
  %v3918 = vld [vmem:[%s3906 + $0x58] sm:$0xff]
  %v3919 = vld [vmem:[%s3906 + $0x60] sm:$0xff]
  %v3920 = vld [vmem:[%s3906 + $0x68] sm:$0xff]
  %v3921 = vld [vmem:[%s3906 + $0x70] sm:$0xff]
  %v3922 = vld [vmem:[%s3906 + $0x78] sm:$0xff]
  %v3939 = vunpack.c.l.b16 %v3907
  %v3940 = vunpack.c.h.b16 %v3907
  %v3941 = vunpack.c.l.b16 %v3908
  %v3942 = vunpack.c.h.b16 %v3908
  %v3943 = vunpack.c.l.b16 %v3909
  %v3944 = vunpack.c.h.b16 %v3909
  %v3945 = vunpack.c.l.b16 %v3910
  %v3946 = vunpack.c.h.b16 %v3910
  %v3947 = vunpack.c.l.b16 %v3911
  %v3948 = vunpack.c.h.b16 %v3911
  %v3949 = vunpack.c.l.b16 %v3912
  %v3950 = vunpack.c.h.b16 %v3912
  %v3951 = vunpack.c.l.b16 %v3913
  %v3952 = vunpack.c.h.b16 %v3913
  %v3953 = vunpack.c.l.b16 %v3914
  %v3954 = vunpack.c.h.b16 %v3914
  %v3955 = vunpack.c.l.b16 %v3915
  %v3956 = vunpack.c.h.b16 %v3915
  %v3957 = vunpack.c.l.b16 %v3916
  %v3958 = vunpack.c.h.b16 %v3916
  %v3959 = vunpack.c.l.b16 %v3917
  %v3960 = vunpack.c.h.b16 %v3917
  %v3961 = vunpack.c.l.b16 %v3918
  %v3962 = vunpack.c.h.b16 %v3918
  %v3963 = vunpack.c.l.b16 %v3919
  %v3964 = vunpack.c.h.b16 %v3919
  %v3965 = vunpack.c.l.b16 %v3920
  %v3966 = vunpack.c.h.b16 %v3920
  %v3967 = vunpack.c.l.b16 %v3921
  %v3968 = vunpack.c.h.b16 %v3921
  %v3969 = vunpack.c.l.b16 %v3922
  %v3970 = vunpack.c.h.b16 %v3922
  %v3971 = vpack.c.b16 %v3941, %v3939
  %v3972 = vpack.c.b16 %v3942, %v3940
  %v3973 = vpack.c.b16 %v3945, %v3943
  %v3974 = vpack.c.b16 %v3946, %v3944
  %v3975 = vpack.c.b16 %v3949, %v3947
  %v3976 = vpack.c.b16 %v3950, %v3948
  %v3977 = vpack.c.b16 %v3953, %v3951
  %v3978 = vpack.c.b16 %v3954, %v3952
  %v3979 = vpack.c.b16 %v3957, %v3955
  %v3980 = vpack.c.b16 %v3958, %v3956
  %v3981 = vpack.c.b16 %v3961, %v3959
  %v3982 = vpack.c.b16 %v3962, %v3960
  %v3983 = vpack.c.b16 %v3965, %v3963
  %v3984 = vpack.c.b16 %v3966, %v3964
  %v3985 = vpack.c.b16 %v3969, %v3967
  %v3986 = vpack.c.b16 %v3970, %v3968
  %4003 = vmatprep.subr.bf16.mxu0 %v3972
  %4004 = vmatpush1.bf16.msra.mxu0 %v3971
  %4005 = vmatprep.subr.bf16.mxu0 %v3974
  %4006 = vmatpush1.bf16.msra.mxu0 %v3973
  %4007 = vmatprep.subr.bf16.mxu0 %v3976
  %4008 = vmatpush1.bf16.msra.mxu0 %v3975
  %4009 = vmatprep.subr.bf16.mxu0 %v3978
  %4010 = vmatpush1.bf16.msra.mxu0 %v3977
  %4011 = vmatprep.subr.bf16.mxu0 %v3980
  %4012 = vmatpush1.bf16.msra.mxu0 %v3979
  %4013 = vmatprep.subr.bf16.mxu0 %v3982
  %4014 = vmatpush1.bf16.msra.mxu0 %v3981
  %4015 = vmatprep.subr.bf16.mxu0 %v3984
  %4016 = vmatpush1.bf16.msra.mxu0 %v3983
  %4017 = vmatprep.subr.bf16.mxu0 %v3986
  %4018 = vmatpush1.bf16.msra.mxu0 %v3985
  %4019 = vmatprep.subr.bf16.mxu0 0
  %4020 = vmatpush1.bf16.msra.mxu0 0
  %4021 = vmatprep.subr.bf16.mxu0 0
  %4022 = vmatpush1.bf16.msra.mxu0 0
  %4023 = vmatprep.subr.bf16.mxu0 0
  %4024 = vmatpush1.bf16.msra.mxu0 0
  %4025 = vmatprep.subr.bf16.mxu0 0
  %4026 = vmatpush1.bf16.msra.mxu0 0
  %4027 = vmatprep.subr.bf16.mxu0 0
  %4028 = vmatpush1.bf16.msra.mxu0 0
  %4029 = vmatprep.subr.bf16.mxu0 0
  %4030 = vmatpush1.bf16.msra.mxu0 0
  %4031 = vmatprep.subr.bf16.mxu0 0
  %4032 = vmatpush1.bf16.msra.mxu0 0
  %4033 = vmatprep.subr.bf16.mxu0 0
  %4034 = vmatpush1.bf16.msra.mxu0 0
  %4035 = vmatprep.mubr.bf16.mxu0 0
  %4036 = vmatmul.mubr.bf16.gmra.mrb[0].mxu0 %v3905
  %v4037 = vpop.f32.mrb[0].mxu0
  %v4038 = vadd.f32 0.0, %v4037
  %v4039 = vpop.f32.mrb[0].mxu0
  %v4040 = vadd.f32 0.0, %v4039
  %v4041 = vpop.f32.mrb[0].mxu0
  %v4042 = vpop.f32.mrb[0].mxu0
  %4043 = vdwg.mxu0
  %v4044 = vadd.f32 %v3858, %v4038
  %v4045 = vadd.f32 %v3859, %v4040
  %s4046 = scalar_lea.vmem %s7, 24
  %v4047 = vld [vmem:[%s4046] sm:$0xf]
  %v4049 = vsel %vm2936, %v4047, 0
  %4051 = vmatprep.subr.bf16.mxu0 0
  %4052 = vmatpush1.bf16.msra.mxu0 %v2933
  %4053 = vmatprep.subr.bf16.mxu0 0
  %4054 = vmatpush1.bf16.msra.mxu0 %v2934
  %4055 = vmatprep.subr.bf16.mxu0 0
  %4056 = vmatpush1.bf16.msra.mxu0 0
  %4057 = vmatprep.subr.bf16.mxu0 0
  %4058 = vmatpush1.bf16.msra.mxu0 0
  %4059 = vmatprep.subr.bf16.mxu0 0
  %4060 = vmatpush1.bf16.msra.mxu0 0
  %4061 = vmatprep.subr.bf16.mxu0 0
  %4062 = vmatpush1.bf16.msra.mxu0 0
  %4063 = vmatprep.subr.bf16.mxu0 0
  %4064 = vmatpush1.bf16.msra.mxu0 0
  %4065 = vmatprep.subr.bf16.mxu0 0
  %4066 = vmatpush1.bf16.msra.mxu0 0
  %4067 = vmatprep.subr.bf16.mxu0 0
  %4068 = vmatpush1.bf16.msra.mxu0 0
  %4069 = vmatprep.subr.bf16.mxu0 0
  %4070 = vmatpush1.bf16.msra.mxu0 0
  %4071 = vmatprep.subr.bf16.mxu0 0
  %4072 = vmatpush1.bf16.msra.mxu0 0
  %4073 = vmatprep.subr.bf16.mxu0 0
  %4074 = vmatpush1.bf16.msra.mxu0 0
  %4075 = vmatprep.subr.bf16.mxu0 0
  %4076 = vmatpush1.bf16.msra.mxu0 0
  %4077 = vmatprep.subr.bf16.mxu0 0
  %4078 = vmatpush1.bf16.msra.mxu0 0
  %4079 = vmatprep.subr.bf16.mxu0 0
  %4080 = vmatpush1.bf16.msra.mxu0 0
  %4081 = vmatprep.subr.bf16.mxu0 0
  %4082 = vmatpush1.bf16.msra.mxu0 0
  %4083 = vmatprep.mubr.bf16.mxu0 0
  %4084 = vmatmul.mubr.bf16.gmra.mrb[0].mxu0 %v4049
  %v4085 = vpop.f32.mrb[0].mxu0
  %v4086 = vadd.f32 0.0, %v4085
  %v4087 = vpop.f32.mrb[0].mxu0
  %v4088 = vpop.f32.mrb[0].mxu0
  %v4089 = vpop.f32.mrb[0].mxu0
  %4090 = vdwg.mxu0
  %v4091 = vpack.c.bf16 %v4086, %v4086
  %s4092 = scalar_lea.vmem %s8, 768
  %v4093 = vld [vmem:[%s4092] sm:$0xff]
  %v4094 = vld [vmem:[%s4092 + $0x8] sm:$0xff]
  %v4095 = vld [vmem:[%s4092 + $0x10] sm:$0xff]
  %v4096 = vld [vmem:[%s4092 + $0x18] sm:$0xff]
  %v4097 = vld [vmem:[%s4092 + $0x20] sm:$0xff]
  %v4098 = vld [vmem:[%s4092 + $0x28] sm:$0xff]
  %v4099 = vld [vmem:[%s4092 + $0x30] sm:$0xff]
  %v4100 = vld [vmem:[%s4092 + $0x38] sm:$0xff]
  %v4101 = vld [vmem:[%s4092 + $0x40] sm:$0xff]
  %v4102 = vld [vmem:[%s4092 + $0x48] sm:$0xff]
  %v4103 = vld [vmem:[%s4092 + $0x50] sm:$0xff]
  %v4104 = vld [vmem:[%s4092 + $0x58] sm:$0xff]
  %v4105 = vld [vmem:[%s4092 + $0x60] sm:$0xff]
  %v4106 = vld [vmem:[%s4092 + $0x68] sm:$0xff]
  %v4107 = vld [vmem:[%s4092 + $0x70] sm:$0xff]
  %v4108 = vld [vmem:[%s4092 + $0x78] sm:$0xff]
  %v4125 = vunpack.c.l.b16 %v4093
  %v4126 = vunpack.c.h.b16 %v4093
  %v4127 = vunpack.c.l.b16 %v4094
  %v4128 = vunpack.c.h.b16 %v4094
  %v4129 = vunpack.c.l.b16 %v4095
  %v4130 = vunpack.c.h.b16 %v4095
  %v4131 = vunpack.c.l.b16 %v4096
  %v4132 = vunpack.c.h.b16 %v4096
  %v4133 = vunpack.c.l.b16 %v4097
  %v4134 = vunpack.c.h.b16 %v4097
  %v4135 = vunpack.c.l.b16 %v4098
  %v4136 = vunpack.c.h.b16 %v4098
  %v4137 = vunpack.c.l.b16 %v4099
  %v4138 = vunpack.c.h.b16 %v4099
  %v4139 = vunpack.c.l.b16 %v4100
  %v4140 = vunpack.c.h.b16 %v4100
  %v4141 = vunpack.c.l.b16 %v4101
  %v4142 = vunpack.c.h.b16 %v4101
  %v4143 = vunpack.c.l.b16 %v4102
  %v4144 = vunpack.c.h.b16 %v4102
  %v4145 = vunpack.c.l.b16 %v4103
  %v4146 = vunpack.c.h.b16 %v4103
  %v4147 = vunpack.c.l.b16 %v4104
  %v4148 = vunpack.c.h.b16 %v4104
  %v4149 = vunpack.c.l.b16 %v4105
  %v4150 = vunpack.c.h.b16 %v4105
  %v4151 = vunpack.c.l.b16 %v4106
  %v4152 = vunpack.c.h.b16 %v4106
  %v4153 = vunpack.c.l.b16 %v4107
  %v4154 = vunpack.c.h.b16 %v4107
  %v4155 = vunpack.c.l.b16 %v4108
  %v4156 = vunpack.c.h.b16 %v4108
  %v4157 = vpack.c.b16 %v4127, %v4125
  %v4158 = vpack.c.b16 %v4128, %v4126
  %v4159 = vpack.c.b16 %v4131, %v4129
  %v4160 = vpack.c.b16 %v4132, %v4130
  %v4161 = vpack.c.b16 %v4135, %v4133
  %v4162 = vpack.c.b16 %v4136, %v4134
  %v4163 = vpack.c.b16 %v4139, %v4137
  %v4164 = vpack.c.b16 %v4140, %v4138
  %v4165 = vpack.c.b16 %v4143, %v4141
  %v4166 = vpack.c.b16 %v4144, %v4142
  %v4167 = vpack.c.b16 %v4147, %v4145
  %v4168 = vpack.c.b16 %v4148, %v4146
  %v4169 = vpack.c.b16 %v4151, %v4149
  %v4170 = vpack.c.b16 %v4152, %v4150
  %v4171 = vpack.c.b16 %v4155, %v4153
  %v4172 = vpack.c.b16 %v4156, %v4154
  %4189 = vmatprep.subr.bf16.mxu0 %v4158
  %4190 = vmatpush1.bf16.msra.mxu0 %v4157
  %4191 = vmatprep.subr.bf16.mxu0 %v4160
  %4192 = vmatpush1.bf16.msra.mxu0 %v4159
  %4193 = vmatprep.subr.bf16.mxu0 %v4162
  %4194 = vmatpush1.bf16.msra.mxu0 %v4161
  %4195 = vmatprep.subr.bf16.mxu0 %v4164
  %4196 = vmatpush1.bf16.msra.mxu0 %v4163
  %4197 = vmatprep.subr.bf16.mxu0 %v4166
  %4198 = vmatpush1.bf16.msra.mxu0 %v4165
  %4199 = vmatprep.subr.bf16.mxu0 %v4168
  %4200 = vmatpush1.bf16.msra.mxu0 %v4167
  %4201 = vmatprep.subr.bf16.mxu0 %v4170
  %4202 = vmatpush1.bf16.msra.mxu0 %v4169
  %4203 = vmatprep.subr.bf16.mxu0 %v4172
  %4204 = vmatpush1.bf16.msra.mxu0 %v4171
  %4205 = vmatprep.subr.bf16.mxu0 0
  %4206 = vmatpush1.bf16.msra.mxu0 0
  %4207 = vmatprep.subr.bf16.mxu0 0
  %4208 = vmatpush1.bf16.msra.mxu0 0
  %4209 = vmatprep.subr.bf16.mxu0 0
  %4210 = vmatpush1.bf16.msra.mxu0 0
  %4211 = vmatprep.subr.bf16.mxu0 0
  %4212 = vmatpush1.bf16.msra.mxu0 0
  %4213 = vmatprep.subr.bf16.mxu0 0
  %4214 = vmatpush1.bf16.msra.mxu0 0
  %4215 = vmatprep.subr.bf16.mxu0 0
  %4216 = vmatpush1.bf16.msra.mxu0 0
  %4217 = vmatprep.subr.bf16.mxu0 0
  %4218 = vmatpush1.bf16.msra.mxu0 0
  %4219 = vmatprep.subr.bf16.mxu0 0
  %4220 = vmatpush1.bf16.msra.mxu0 0
  %4221 = vmatprep.mubr.bf16.mxu0 0
  %4222 = vmatmul.mubr.bf16.gmra.mrb[0].mxu0 %v4091
  %v4223 = vpop.f32.mrb[0].mxu0
  %v4224 = vadd.f32 0.0, %v4223
  %v4225 = vpop.f32.mrb[0].mxu0
  %v4226 = vadd.f32 0.0, %v4225
  %v4227 = vpop.f32.mrb[0].mxu0
  %v4228 = vpop.f32.mrb[0].mxu0
  %4229 = vdwg.mxu0
  %v4230 = vadd.f32 %v4044, %v4224
  %v4231 = vadd.f32 %v4045, %v4226
  %s4232 = scalar_lea.vmem %s7, 28
  %v4233 = vld [vmem:[%s4232] sm:$0xf]
  %v4235 = vsel %vm2936, %v4233, 0
  %4237 = vmatprep.subr.bf16.mxu0 0
  %4238 = vmatpush1.bf16.msra.mxu0 %v2933
  %4239 = vmatprep.subr.bf16.mxu0 0
  %4240 = vmatpush1.bf16.msra.mxu0 %v2934
  %4241 = vmatprep.subr.bf16.mxu0 0
  %4242 = vmatpush1.bf16.msra.mxu0 0
  %4243 = vmatprep.subr.bf16.mxu0 0
  %4244 = vmatpush1.bf16.msra.mxu0 0
  %4245 = vmatprep.subr.bf16.mxu0 0
  %4246 = vmatpush1.bf16.msra.mxu0 0
  %4247 = vmatprep.subr.bf16.mxu0 0
  %4248 = vmatpush1.bf16.msra.mxu0 0
  %4249 = vmatprep.subr.bf16.mxu0 0
  %4250 = vmatpush1.bf16.msra.mxu0 0
  %4251 = vmatprep.subr.bf16.mxu0 0
  %4252 = vmatpush1.bf16.msra.mxu0 0
  %4253 = vmatprep.subr.bf16.mxu0 0
  %4254 = vmatpush1.bf16.msra.mxu0 0
  %4255 = vmatprep.subr.bf16.mxu0 0
  %4256 = vmatpush1.bf16.msra.mxu0 0
  %4257 = vmatprep.subr.bf16.mxu0 0
  %4258 = vmatpush1.bf16.msra.mxu0 0
  %4259 = vmatprep.subr.bf16.mxu0 0
  %4260 = vmatpush1.bf16.msra.mxu0 0
  %4261 = vmatprep.subr.bf16.mxu0 0
  %4262 = vmatpush1.bf16.msra.mxu0 0
  %4263 = vmatprep.subr.bf16.mxu0 0
  %4264 = vmatpush1.bf16.msra.mxu0 0
  %4265 = vmatprep.subr.bf16.mxu0 0
  %4266 = vmatpush1.bf16.msra.mxu0 0
  %4267 = vmatprep.subr.bf16.mxu0 0
  %4268 = vmatpush1.bf16.msra.mxu0 0
  %4269 = vmatprep.mubr.bf16.mxu0 0
  %4270 = vmatmul.mubr.bf16.gmra.mrb[0].mxu0 %v4235
  %v4271 = vpop.f32.mrb[0].mxu0
  %v4272 = vadd.f32 0.0, %v4271
  %v4273 = vpop.f32.mrb[0].mxu0
  %v4274 = vpop.f32.mrb[0].mxu0
  %v4275 = vpop.f32.mrb[0].mxu0
  %4276 = vdwg.mxu0
  %v4277 = vpack.c.bf16 %v4272, %v4272
  %s4278 = scalar_lea.vmem %s8, 896
  %v4279 = vld [vmem:[%s4278] sm:$0xff]
  %v4280 = vld [vmem:[%s4278 + $0x8] sm:$0xff]
  %v4281 = vld [vmem:[%s4278 + $0x10] sm:$0xff]
  %v4282 = vld [vmem:[%s4278 + $0x18] sm:$0xff]
  %v4283 = vld [vmem:[%s4278 + $0x20] sm:$0xff]
  %v4284 = vld [vmem:[%s4278 + $0x28] sm:$0xff]
  %v4285 = vld [vmem:[%s4278 + $0x30] sm:$0xff]
  %v4286 = vld [vmem:[%s4278 + $0x38] sm:$0xff]
  %v4287 = vld [vmem:[%s4278 + $0x40] sm:$0xff]
  %v4288 = vld [vmem:[%s4278 + $0x48] sm:$0xff]
  %v4289 = vld [vmem:[%s4278 + $0x50] sm:$0xff]
  %v4290 = vld [vmem:[%s4278 + $0x58] sm:$0xff]
  %v4291 = vld [vmem:[%s4278 + $0x60] sm:$0xff]
  %v4292 = vld [vmem:[%s4278 + $0x68] sm:$0xff]
  %v4293 = vld [vmem:[%s4278 + $0x70] sm:$0xff]
  %v4294 = vld [vmem:[%s4278 + $0x78] sm:$0xff]
  %v4311 = vunpack.c.l.b16 %v4279
  %v4312 = vunpack.c.h.b16 %v4279
  %v4313 = vunpack.c.l.b16 %v4280
  %v4314 = vunpack.c.h.b16 %v4280
  %v4315 = vunpack.c.l.b16 %v4281
  %v4316 = vunpack.c.h.b16 %v4281
  %v4317 = vunpack.c.l.b16 %v4282
  %v4318 = vunpack.c.h.b16 %v4282
  %v4319 = vunpack.c.l.b16 %v4283
  %v4320 = vunpack.c.h.b16 %v4283
  %v4321 = vunpack.c.l.b16 %v4284
  %v4322 = vunpack.c.h.b16 %v4284
  %v4323 = vunpack.c.l.b16 %v4285
  %v4324 = vunpack.c.h.b16 %v4285
  %v4325 = vunpack.c.l.b16 %v4286
  %v4326 = vunpack.c.h.b16 %v4286
  %v4327 = vunpack.c.l.b16 %v4287
  %v4328 = vunpack.c.h.b16 %v4287
  %v4329 = vunpack.c.l.b16 %v4288
  %v4330 = vunpack.c.h.b16 %v4288
  %v4331 = vunpack.c.l.b16 %v4289
  %v4332 = vunpack.c.h.b16 %v4289
  %v4333 = vunpack.c.l.b16 %v4290
  %v4334 = vunpack.c.h.b16 %v4290
  %v4335 = vunpack.c.l.b16 %v4291
  %v4336 = vunpack.c.h.b16 %v4291
  %v4337 = vunpack.c.l.b16 %v4292
  %v4338 = vunpack.c.h.b16 %v4292
  %v4339 = vunpack.c.l.b16 %v4293
  %v4340 = vunpack.c.h.b16 %v4293
  %v4341 = vunpack.c.l.b16 %v4294
  %v4342 = vunpack.c.h.b16 %v4294
  %v4343 = vpack.c.b16 %v4313, %v4311
  %v4344 = vpack.c.b16 %v4314, %v4312
  %v4345 = vpack.c.b16 %v4317, %v4315
  %v4346 = vpack.c.b16 %v4318, %v4316
  %v4347 = vpack.c.b16 %v4321, %v4319
  %v4348 = vpack.c.b16 %v4322, %v4320
  %v4349 = vpack.c.b16 %v4325, %v4323
  %v4350 = vpack.c.b16 %v4326, %v4324
  %v4351 = vpack.c.b16 %v4329, %v4327
  %v4352 = vpack.c.b16 %v4330, %v4328
  %v4353 = vpack.c.b16 %v4333, %v4331
  %v4354 = vpack.c.b16 %v4334, %v4332
  %v4355 = vpack.c.b16 %v4337, %v4335
  %v4356 = vpack.c.b16 %v4338, %v4336
  %v4357 = vpack.c.b16 %v4341, %v4339
  %v4358 = vpack.c.b16 %v4342, %v4340
  %4375 = vmatprep.subr.bf16.mxu0 %v4344
  %4376 = vmatpush1.bf16.msra.mxu0 %v4343
  %4377 = vmatprep.subr.bf16.mxu0 %v4346
  %4378 = vmatpush1.bf16.msra.mxu0 %v4345
  %4379 = vmatprep.subr.bf16.mxu0 %v4348
  %4380 = vmatpush1.bf16.msra.mxu0 %v4347
  %4381 = vmatprep.subr.bf16.mxu0 %v4350
  %4382 = vmatpush1.bf16.msra.mxu0 %v4349
  %4383 = vmatprep.subr.bf16.mxu0 %v4352
  %4384 = vmatpush1.bf16.msra.mxu0 %v4351
  %4385 = vmatprep.subr.bf16.mxu0 %v4354
  %4386 = vmatpush1.bf16.msra.mxu0 %v4353
  %4387 = vmatprep.subr.bf16.mxu0 %v4356
  %4388 = vmatpush1.bf16.msra.mxu0 %v4355
  %4389 = vmatprep.subr.bf16.mxu0 %v4358
  %4390 = vmatpush1.bf16.msra.mxu0 %v4357
  %4391 = vmatprep.subr.bf16.mxu0 0
  %4392 = vmatpush1.bf16.msra.mxu0 0
  %4393 = vmatprep.subr.bf16.mxu0 0
  %4394 = vmatpush1.bf16.msra.mxu0 0
  %4395 = vmatprep.subr.bf16.mxu0 0
  %4396 = vmatpush1.bf16.msra.mxu0 0
  %4397 = vmatprep.subr.bf16.mxu0 0
  %4398 = vmatpush1.bf16.msra.mxu0 0
  %4399 = vmatprep.subr.bf16.mxu0 0
  %4400 = vmatpush1.bf16.msra.mxu0 0
  %4401 = vmatprep.subr.bf16.mxu0 0
  %4402 = vmatpush1.bf16.msra.mxu0 0
  %4403 = vmatprep.subr.bf16.mxu0 0
  %4404 = vmatpush1.bf16.msra.mxu0 0
  %4405 = vmatprep.subr.bf16.mxu0 0
  %4406 = vmatpush1.bf16.msra.mxu0 0
  %4407 = vmatprep.mubr.bf16.mxu0 0
  %4408 = vmatmul.mubr.bf16.gmra.mrb[0].mxu0 %v4277
  %v4409 = vpop.f32.mrb[0].mxu0
  %v4410 = vadd.f32 0.0, %v4409
  %v4411 = vpop.f32.mrb[0].mxu0
  %v4412 = vadd.f32 0.0, %v4411
  %v4413 = vpop.f32.mrb[0].mxu0
  %v4414 = vpop.f32.mrb[0].mxu0
  %4415 = vdwg.mxu0
  %v4416 = vadd.f32 %v4230, %v4410
  %v4417 = vadd.f32 %v4231, %v4412
  %s4418 = scalar_lea.vmem %s7, 32
  %v4419 = vld [vmem:[%s4418] sm:$0xf]
  %v4421 = vsel %vm2936, %v4419, 0
  %4423 = vmatprep.subr.bf16.mxu0 0
  %4424 = vmatpush1.bf16.msra.mxu0 %v2933
  %4425 = vmatprep.subr.bf16.mxu0 0
  %4426 = vmatpush1.bf16.msra.mxu0 %v2934
  %4427 = vmatprep.subr.bf16.mxu0 0
  %4428 = vmatpush1.bf16.msra.mxu0 0
  %4429 = vmatprep.subr.bf16.mxu0 0
  %4430 = vmatpush1.bf16.msra.mxu0 0
  %4431 = vmatprep.subr.bf16.mxu0 0
  %4432 = vmatpush1.bf16.msra.mxu0 0
  %4433 = vmatprep.subr.bf16.mxu0 0
  %4434 = vmatpush1.bf16.msra.mxu0 0
  %4435 = vmatprep.subr.bf16.mxu0 0
  %4436 = vmatpush1.bf16.msra.mxu0 0
  %4437 = vmatprep.subr.bf16.mxu0 0
  %4438 = vmatpush1.bf16.msra.mxu0 0
  %4439 = vmatprep.subr.bf16.mxu0 0
  %4440 = vmatpush1.bf16.msra.mxu0 0
  %4441 = vmatprep.subr.bf16.mxu0 0
  %4442 = vmatpush1.bf16.msra.mxu0 0
  %4443 = vmatprep.subr.bf16.mxu0 0
  %4444 = vmatpush1.bf16.msra.mxu0 0
  %4445 = vmatprep.subr.bf16.mxu0 0
  %4446 = vmatpush1.bf16.msra.mxu0 0
  %4447 = vmatprep.subr.bf16.mxu0 0
  %4448 = vmatpush1.bf16.msra.mxu0 0
  %4449 = vmatprep.subr.bf16.mxu0 0
  %4450 = vmatpush1.bf16.msra.mxu0 0
  %4451 = vmatprep.subr.bf16.mxu0 0
  %4452 = vmatpush1.bf16.msra.mxu0 0
  %4453 = vmatprep.subr.bf16.mxu0 0
  %4454 = vmatpush1.bf16.msra.mxu0 0
  %4455 = vmatprep.mubr.bf16.mxu0 0
  %4456 = vmatmul.mubr.bf16.gmra.mrb[0].mxu0 %v4421
  %v4457 = vpop.f32.mrb[0].mxu0
  %v4458 = vadd.f32 0.0, %v4457
  %v4459 = vpop.f32.mrb[0].mxu0
  %v4460 = vpop.f32.mrb[0].mxu0
  %v4461 = vpop.f32.mrb[0].mxu0
  %4462 = vdwg.mxu0
  %v4463 = vpack.c.bf16 %v4458, %v4458
  %s4464 = scalar_lea.vmem %s8, 1024
  %v4465 = vld [vmem:[%s4464] sm:$0xff]
  %v4466 = vld [vmem:[%s4464 + $0x8] sm:$0xff]
  %v4467 = vld [vmem:[%s4464 + $0x10] sm:$0xff]
  %v4468 = vld [vmem:[%s4464 + $0x18] sm:$0xff]
  %v4469 = vld [vmem:[%s4464 + $0x20] sm:$0xff]
  %v4470 = vld [vmem:[%s4464 + $0x28] sm:$0xff]
  %v4471 = vld [vmem:[%s4464 + $0x30] sm:$0xff]
  %v4472 = vld [vmem:[%s4464 + $0x38] sm:$0xff]
  %v4473 = vld [vmem:[%s4464 + $0x40] sm:$0xff]
  %v4474 = vld [vmem:[%s4464 + $0x48] sm:$0xff]
  %v4475 = vld [vmem:[%s4464 + $0x50] sm:$0xff]
  %v4476 = vld [vmem:[%s4464 + $0x58] sm:$0xff]
  %v4477 = vld [vmem:[%s4464 + $0x60] sm:$0xff]
  %v4478 = vld [vmem:[%s4464 + $0x68] sm:$0xff]
  %v4479 = vld [vmem:[%s4464 + $0x70] sm:$0xff]
  %v4480 = vld [vmem:[%s4464 + $0x78] sm:$0xff]
  %v4497 = vunpack.c.l.b16 %v4465
  %v4498 = vunpack.c.h.b16 %v4465
  %v4499 = vunpack.c.l.b16 %v4466
  %v4500 = vunpack.c.h.b16 %v4466
  %v4501 = vunpack.c.l.b16 %v4467
  %v4502 = vunpack.c.h.b16 %v4467
  %v4503 = vunpack.c.l.b16 %v4468
  %v4504 = vunpack.c.h.b16 %v4468
  %v4505 = vunpack.c.l.b16 %v4469
  %v4506 = vunpack.c.h.b16 %v4469
  %v4507 = vunpack.c.l.b16 %v4470
  %v4508 = vunpack.c.h.b16 %v4470
  %v4509 = vunpack.c.l.b16 %v4471
  %v4510 = vunpack.c.h.b16 %v4471
  %v4511 = vunpack.c.l.b16 %v4472
  %v4512 = vunpack.c.h.b16 %v4472
  %v4513 = vunpack.c.l.b16 %v4473
  %v4514 = vunpack.c.h.b16 %v4473
  %v4515 = vunpack.c.l.b16 %v4474
  %v4516 = vunpack.c.h.b16 %v4474
  %v4517 = vunpack.c.l.b16 %v4475
  %v4518 = vunpack.c.h.b16 %v4475
  %v4519 = vunpack.c.l.b16 %v4476
  %v4520 = vunpack.c.h.b16 %v4476
  %v4521 = vunpack.c.l.b16 %v4477
  %v4522 = vunpack.c.h.b16 %v4477
  %v4523 = vunpack.c.l.b16 %v4478
  %v4524 = vunpack.c.h.b16 %v4478
  %v4525 = vunpack.c.l.b16 %v4479
  %v4526 = vunpack.c.h.b16 %v4479
  %v4527 = vunpack.c.l.b16 %v4480
  %v4528 = vunpack.c.h.b16 %v4480
  %v4529 = vpack.c.b16 %v4499, %v4497
  %v4530 = vpack.c.b16 %v4500, %v4498
  %v4531 = vpack.c.b16 %v4503, %v4501
  %v4532 = vpack.c.b16 %v4504, %v4502
  %v4533 = vpack.c.b16 %v4507, %v4505
  %v4534 = vpack.c.b16 %v4508, %v4506
  %v4535 = vpack.c.b16 %v4511, %v4509
  %v4536 = vpack.c.b16 %v4512, %v4510
  %v4537 = vpack.c.b16 %v4515, %v4513
  %v4538 = vpack.c.b16 %v4516, %v4514
  %v4539 = vpack.c.b16 %v4519, %v4517
  %v4540 = vpack.c.b16 %v4520, %v4518
  %v4541 = vpack.c.b16 %v4523, %v4521
  %v4542 = vpack.c.b16 %v4524, %v4522
  %v4543 = vpack.c.b16 %v4527, %v4525
  %v4544 = vpack.c.b16 %v4528, %v4526
  %4561 = vmatprep.subr.bf16.mxu0 %v4530
  %4562 = vmatpush1.bf16.msra.mxu0 %v4529
  %4563 = vmatprep.subr.bf16.mxu0 %v4532
  %4564 = vmatpush1.bf16.msra.mxu0 %v4531
  %4565 = vmatprep.subr.bf16.mxu0 %v4534
  %4566 = vmatpush1.bf16.msra.mxu0 %v4533
  %4567 = vmatprep.subr.bf16.mxu0 %v4536
  %4568 = vmatpush1.bf16.msra.mxu0 %v4535
  %4569 = vmatprep.subr.bf16.mxu0 %v4538
  %4570 = vmatpush1.bf16.msra.mxu0 %v4537
  %4571 = vmatprep.subr.bf16.mxu0 %v4540
  %4572 = vmatpush1.bf16.msra.mxu0 %v4539
  %4573 = vmatprep.subr.bf16.mxu0 %v4542
  %4574 = vmatpush1.bf16.msra.mxu0 %v4541
  %4575 = vmatprep.subr.bf16.mxu0 %v4544
  %4576 = vmatpush1.bf16.msra.mxu0 %v4543
  %4577 = vmatprep.subr.bf16.mxu0 0
  %4578 = vmatpush1.bf16.msra.mxu0 0
  %4579 = vmatprep.subr.bf16.mxu0 0
  %4580 = vmatpush1.bf16.msra.mxu0 0
  %4581 = vmatprep.subr.bf16.mxu0 0
  %4582 = vmatpush1.bf16.msra.mxu0 0
  %4583 = vmatprep.subr.bf16.mxu0 0
  %4584 = vmatpush1.bf16.msra.mxu0 0
  %4585 = vmatprep.subr.bf16.mxu0 0
  %4586 = vmatpush1.bf16.msra.mxu0 0
  %4587 = vmatprep.subr.bf16.mxu0 0
  %4588 = vmatpush1.bf16.msra.mxu0 0
  %4589 = vmatprep.subr.bf16.mxu0 0
  %4590 = vmatpush1.bf16.msra.mxu0 0
  %4591 = vmatprep.subr.bf16.mxu0 0
  %4592 = vmatpush1.bf16.msra.mxu0 0
  %4593 = vmatprep.mubr.bf16.mxu0 0
  %4594 = vmatmul.mubr.bf16.gmra.mrb[0].mxu0 %v4463
  %v4595 = vpop.f32.mrb[0].mxu0
  %v4596 = vadd.f32 0.0, %v4595
  %v4597 = vpop.f32.mrb[0].mxu0
  %v4598 = vadd.f32 0.0, %v4597
  %v4599 = vpop.f32.mrb[0].mxu0
  %v4600 = vpop.f32.mrb[0].mxu0
  %4601 = vdwg.mxu0
  %v4602 = vadd.f32 %v4416, %v4596
  %v4603 = vadd.f32 %v4417, %v4598
  %s4604 = scalar_lea.vmem %s7, 36
  %v4605 = vld [vmem:[%s4604] sm:$0xf]
  %v4607 = vsel %vm2936, %v4605, 0
  %4609 = vmatprep.subr.bf16.mxu0 0
  %4610 = vmatpush1.bf16.msra.mxu0 %v2933
  %4611 = vmatprep.subr.bf16.mxu0 0
  %4612 = vmatpush1.bf16.msra.mxu0 %v2934
  %4613 = vmatprep.subr.bf16.mxu0 0
  %4614 = vmatpush1.bf16.msra.mxu0 0
  %4615 = vmatprep.subr.bf16.mxu0 0
  %4616 = vmatpush1.bf16.msra.mxu0 0
  %4617 = vmatprep.subr.bf16.mxu0 0
  %4618 = vmatpush1.bf16.msra.mxu0 0
  %4619 = vmatprep.subr.bf16.mxu0 0
  %4620 = vmatpush1.bf16.msra.mxu0 0
  %4621 = vmatprep.subr.bf16.mxu0 0
  %4622 = vmatpush1.bf16.msra.mxu0 0
  %4623 = vmatprep.subr.bf16.mxu0 0
  %4624 = vmatpush1.bf16.msra.mxu0 0
  %4625 = vmatprep.subr.bf16.mxu0 0
  %4626 = vmatpush1.bf16.msra.mxu0 0
  %4627 = vmatprep.subr.bf16.mxu0 0
  %4628 = vmatpush1.bf16.msra.mxu0 0
  %4629 = vmatprep.subr.bf16.mxu0 0
  %4630 = vmatpush1.bf16.msra.mxu0 0
  %4631 = vmatprep.subr.bf16.mxu0 0
  %4632 = vmatpush1.bf16.msra.mxu0 0
  %4633 = vmatprep.subr.bf16.mxu0 0
  %4634 = vmatpush1.bf16.msra.mxu0 0
  %4635 = vmatprep.subr.bf16.mxu0 0
  %4636 = vmatpush1.bf16.msra.mxu0 0
  %4637 = vmatprep.subr.bf16.mxu0 0
  %4638 = vmatpush1.bf16.msra.mxu0 0
  %4639 = vmatprep.subr.bf16.mxu0 0
  %4640 = vmatpush1.bf16.msra.mxu0 0
  %4641 = vmatprep.mubr.bf16.mxu0 0
  %4642 = vmatmul.mubr.bf16.gmra.mrb[0].mxu0 %v4607
  %v4643 = vpop.f32.mrb[0].mxu0
  %v4644 = vadd.f32 0.0, %v4643
  %v4645 = vpop.f32.mrb[0].mxu0
  %v4646 = vpop.f32.mrb[0].mxu0
  %v4647 = vpop.f32.mrb[0].mxu0
  %4648 = vdwg.mxu0
  %v4649 = vpack.c.bf16 %v4644, %v4644
  %s4650 = scalar_lea.vmem %s8, 1152
  %v4651 = vld [vmem:[%s4650] sm:$0xff]
  %v4652 = vld [vmem:[%s4650 + $0x8] sm:$0xff]
  %v4653 = vld [vmem:[%s4650 + $0x10] sm:$0xff]
  %v4654 = vld [vmem:[%s4650 + $0x18] sm:$0xff]
  %v4655 = vld [vmem:[%s4650 + $0x20] sm:$0xff]
  %v4656 = vld [vmem:[%s4650 + $0x28] sm:$0xff]
  %v4657 = vld [vmem:[%s4650 + $0x30] sm:$0xff]
  %v4658 = vld [vmem:[%s4650 + $0x38] sm:$0xff]
  %v4659 = vld [vmem:[%s4650 + $0x40] sm:$0xff]
  %v4660 = vld [vmem:[%s4650 + $0x48] sm:$0xff]
  %v4661 = vld [vmem:[%s4650 + $0x50] sm:$0xff]
  %v4662 = vld [vmem:[%s4650 + $0x58] sm:$0xff]
  %v4663 = vld [vmem:[%s4650 + $0x60] sm:$0xff]
  %v4664 = vld [vmem:[%s4650 + $0x68] sm:$0xff]
  %v4665 = vld [vmem:[%s4650 + $0x70] sm:$0xff]
  %v4666 = vld [vmem:[%s4650 + $0x78] sm:$0xff]
  %v4683 = vunpack.c.l.b16 %v4651
  %v4684 = vunpack.c.h.b16 %v4651
  %v4685 = vunpack.c.l.b16 %v4652
  %v4686 = vunpack.c.h.b16 %v4652
  %v4687 = vunpack.c.l.b16 %v4653
  %v4688 = vunpack.c.h.b16 %v4653
  %v4689 = vunpack.c.l.b16 %v4654
  %v4690 = vunpack.c.h.b16 %v4654
  %v4691 = vunpack.c.l.b16 %v4655
  %v4692 = vunpack.c.h.b16 %v4655
  %v4693 = vunpack.c.l.b16 %v4656
  %v4694 = vunpack.c.h.b16 %v4656
  %v4695 = vunpack.c.l.b16 %v4657
  %v4696 = vunpack.c.h.b16 %v4657
  %v4697 = vunpack.c.l.b16 %v4658
  %v4698 = vunpack.c.h.b16 %v4658
  %v4699 = vunpack.c.l.b16 %v4659
  %v4700 = vunpack.c.h.b16 %v4659
  %v4701 = vunpack.c.l.b16 %v4660
  %v4702 = vunpack.c.h.b16 %v4660
  %v4703 = vunpack.c.l.b16 %v4661
  %v4704 = vunpack.c.h.b16 %v4661
  %v4705 = vunpack.c.l.b16 %v4662
  %v4706 = vunpack.c.h.b16 %v4662
  %v4707 = vunpack.c.l.b16 %v4663
  %v4708 = vunpack.c.h.b16 %v4663
  %v4709 = vunpack.c.l.b16 %v4664
  %v4710 = vunpack.c.h.b16 %v4664
  %v4711 = vunpack.c.l.b16 %v4665
  %v4712 = vunpack.c.h.b16 %v4665
  %v4713 = vunpack.c.l.b16 %v4666
  %v4714 = vunpack.c.h.b16 %v4666
  %v4715 = vpack.c.b16 %v4685, %v4683
  %v4716 = vpack.c.b16 %v4686, %v4684
  %v4717 = vpack.c.b16 %v4689, %v4687
  %v4718 = vpack.c.b16 %v4690, %v4688
  %v4719 = vpack.c.b16 %v4693, %v4691
  %v4720 = vpack.c.b16 %v4694, %v4692
  %v4721 = vpack.c.b16 %v4697, %v4695
  %v4722 = vpack.c.b16 %v4698, %v4696
  %v4723 = vpack.c.b16 %v4701, %v4699
  %v4724 = vpack.c.b16 %v4702, %v4700
  %v4725 = vpack.c.b16 %v4705, %v4703
  %v4726 = vpack.c.b16 %v4706, %v4704
  %v4727 = vpack.c.b16 %v4709, %v4707
  %v4728 = vpack.c.b16 %v4710, %v4708
  %v4729 = vpack.c.b16 %v4713, %v4711
  %v4730 = vpack.c.b16 %v4714, %v4712
  %4747 = vmatprep.subr.bf16.mxu0 %v4716
  %4748 = vmatpush1.bf16.msra.mxu0 %v4715
  %4749 = vmatprep.subr.bf16.mxu0 %v4718
  %4750 = vmatpush1.bf16.msra.mxu0 %v4717
  %4751 = vmatprep.subr.bf16.mxu0 %v4720
  %4752 = vmatpush1.bf16.msra.mxu0 %v4719
  %4753 = vmatprep.subr.bf16.mxu0 %v4722
  %4754 = vmatpush1.bf16.msra.mxu0 %v4721
  %4755 = vmatprep.subr.bf16.mxu0 %v4724
  %4756 = vmatpush1.bf16.msra.mxu0 %v4723
  %4757 = vmatprep.subr.bf16.mxu0 %v4726
  %4758 = vmatpush1.bf16.msra.mxu0 %v4725
  %4759 = vmatprep.subr.bf16.mxu0 %v4728
  %4760 = vmatpush1.bf16.msra.mxu0 %v4727
  %4761 = vmatprep.subr.bf16.mxu0 %v4730
  %4762 = vmatpush1.bf16.msra.mxu0 %v4729
  %4763 = vmatprep.subr.bf16.mxu0 0
  %4764 = vmatpush1.bf16.msra.mxu0 0
  %4765 = vmatprep.subr.bf16.mxu0 0
  %4766 = vmatpush1.bf16.msra.mxu0 0
  %4767 = vmatprep.subr.bf16.mxu0 0
  %4768 = vmatpush1.bf16.msra.mxu0 0
  %4769 = vmatprep.subr.bf16.mxu0 0
  %4770 = vmatpush1.bf16.msra.mxu0 0
  %4771 = vmatprep.subr.bf16.mxu0 0
  %4772 = vmatpush1.bf16.msra.mxu0 0
  %4773 = vmatprep.subr.bf16.mxu0 0
  %4774 = vmatpush1.bf16.msra.mxu0 0
  %4775 = vmatprep.subr.bf16.mxu0 0
  %4776 = vmatpush1.bf16.msra.mxu0 0
  %4777 = vmatprep.subr.bf16.mxu0 0
  %4778 = vmatpush1.bf16.msra.mxu0 0
  %4779 = vmatprep.mubr.bf16.mxu0 0
  %4780 = vmatmul.mubr.bf16.gmra.mrb[0].mxu0 %v4649
  %v4781 = vpop.f32.mrb[0].mxu0
  %v4782 = vadd.f32 0.0, %v4781
  %v4783 = vpop.f32.mrb[0].mxu0
  %v4784 = vadd.f32 0.0, %v4783
  %v4785 = vpop.f32.mrb[0].mxu0
  %v4786 = vpop.f32.mrb[0].mxu0
  %4787 = vdwg.mxu0
  %v4788 = vadd.f32 %v4602, %v4782
  %v4789 = vadd.f32 %v4603, %v4784
  %s4790 = scalar_lea.vmem %s7, 40
  %v4791 = vld [vmem:[%s4790] sm:$0xf]
  %v4793 = vsel %vm2936, %v4791, 0
  %4795 = vmatprep.subr.bf16.mxu0 0
  %4796 = vmatpush1.bf16.msra.mxu0 %v2933
  %4797 = vmatprep.subr.bf16.mxu0 0
  %4798 = vmatpush1.bf16.msra.mxu0 %v2934
  %4799 = vmatprep.subr.bf16.mxu0 0
  %4800 = vmatpush1.bf16.msra.mxu0 0
  %4801 = vmatprep.subr.bf16.mxu0 0
  %4802 = vmatpush1.bf16.msra.mxu0 0
  %4803 = vmatprep.subr.bf16.mxu0 0
  %4804 = vmatpush1.bf16.msra.mxu0 0
  %4805 = vmatprep.subr.bf16.mxu0 0
  %4806 = vmatpush1.bf16.msra.mxu0 0
  %4807 = vmatprep.subr.bf16.mxu0 0
  %4808 = vmatpush1.bf16.msra.mxu0 0
  %4809 = vmatprep.subr.bf16.mxu0 0
  %4810 = vmatpush1.bf16.msra.mxu0 0
  %4811 = vmatprep.subr.bf16.mxu0 0
  %4812 = vmatpush1.bf16.msra.mxu0 0
  %4813 = vmatprep.subr.bf16.mxu0 0
  %4814 = vmatpush1.bf16.msra.mxu0 0
  %4815 = vmatprep.subr.bf16.mxu0 0
  %4816 = vmatpush1.bf16.msra.mxu0 0
  %4817 = vmatprep.subr.bf16.mxu0 0
  %4818 = vmatpush1.bf16.msra.mxu0 0
  %4819 = vmatprep.subr.bf16.mxu0 0
  %4820 = vmatpush1.bf16.msra.mxu0 0
  %4821 = vmatprep.subr.bf16.mxu0 0
  %4822 = vmatpush1.bf16.msra.mxu0 0
  %4823 = vmatprep.subr.bf16.mxu0 0
  %4824 = vmatpush1.bf16.msra.mxu0 0
  %4825 = vmatprep.subr.bf16.mxu0 0
  %4826 = vmatpush1.bf16.msra.mxu0 0
  %4827 = vmatprep.mubr.bf16.mxu0 0
  %4828 = vmatmul.mubr.bf16.gmra.mrb[0].mxu0 %v4793
  %v4829 = vpop.f32.mrb[0].mxu0
  %v4830 = vadd.f32 0.0, %v4829
  %v4831 = vpop.f32.mrb[0].mxu0
  %v4832 = vpop.f32.mrb[0].mxu0
  %v4833 = vpop.f32.mrb[0].mxu0
  %4834 = vdwg.mxu0
  %v4835 = vpack.c.bf16 %v4830, %v4830
  %s4836 = scalar_lea.vmem %s8, 1280
  %v4837 = vld [vmem:[%s4836] sm:$0xff]
  %v4838 = vld [vmem:[%s4836 + $0x8] sm:$0xff]
  %v4839 = vld [vmem:[%s4836 + $0x10] sm:$0xff]
  %v4840 = vld [vmem:[%s4836 + $0x18] sm:$0xff]
  %v4841 = vld [vmem:[%s4836 + $0x20] sm:$0xff]
  %v4842 = vld [vmem:[%s4836 + $0x28] sm:$0xff]
  %v4843 = vld [vmem:[%s4836 + $0x30] sm:$0xff]
  %v4844 = vld [vmem:[%s4836 + $0x38] sm:$0xff]
  %v4845 = vld [vmem:[%s4836 + $0x40] sm:$0xff]
  %v4846 = vld [vmem:[%s4836 + $0x48] sm:$0xff]
  %v4847 = vld [vmem:[%s4836 + $0x50] sm:$0xff]
  %v4848 = vld [vmem:[%s4836 + $0x58] sm:$0xff]
  %v4849 = vld [vmem:[%s4836 + $0x60] sm:$0xff]
  %v4850 = vld [vmem:[%s4836 + $0x68] sm:$0xff]
  %v4851 = vld [vmem:[%s4836 + $0x70] sm:$0xff]
  %v4852 = vld [vmem:[%s4836 + $0x78] sm:$0xff]
  %v4869 = vunpack.c.l.b16 %v4837
  %v4870 = vunpack.c.h.b16 %v4837
  %v4871 = vunpack.c.l.b16 %v4838
  %v4872 = vunpack.c.h.b16 %v4838
  %v4873 = vunpack.c.l.b16 %v4839
  %v4874 = vunpack.c.h.b16 %v4839
  %v4875 = vunpack.c.l.b16 %v4840
  %v4876 = vunpack.c.h.b16 %v4840
  %v4877 = vunpack.c.l.b16 %v4841
  %v4878 = vunpack.c.h.b16 %v4841
  %v4879 = vunpack.c.l.b16 %v4842
  %v4880 = vunpack.c.h.b16 %v4842
  %v4881 = vunpack.c.l.b16 %v4843
  %v4882 = vunpack.c.h.b16 %v4843
  %v4883 = vunpack.c.l.b16 %v4844
  %v4884 = vunpack.c.h.b16 %v4844
  %v4885 = vunpack.c.l.b16 %v4845
  %v4886 = vunpack.c.h.b16 %v4845
  %v4887 = vunpack.c.l.b16 %v4846
  %v4888 = vunpack.c.h.b16 %v4846
  %v4889 = vunpack.c.l.b16 %v4847
  %v4890 = vunpack.c.h.b16 %v4847
  %v4891 = vunpack.c.l.b16 %v4848
  %v4892 = vunpack.c.h.b16 %v4848
  %v4893 = vunpack.c.l.b16 %v4849
  %v4894 = vunpack.c.h.b16 %v4849
  %v4895 = vunpack.c.l.b16 %v4850
  %v4896 = vunpack.c.h.b16 %v4850
  %v4897 = vunpack.c.l.b16 %v4851
  %v4898 = vunpack.c.h.b16 %v4851
  %v4899 = vunpack.c.l.b16 %v4852
  %v4900 = vunpack.c.h.b16 %v4852
  %v4901 = vpack.c.b16 %v4871, %v4869
  %v4902 = vpack.c.b16 %v4872, %v4870
  %v4903 = vpack.c.b16 %v4875, %v4873
  %v4904 = vpack.c.b16 %v4876, %v4874
  %v4905 = vpack.c.b16 %v4879, %v4877
  %v4906 = vpack.c.b16 %v4880, %v4878
  %v4907 = vpack.c.b16 %v4883, %v4881
  %v4908 = vpack.c.b16 %v4884, %v4882
  %v4909 = vpack.c.b16 %v4887, %v4885
  %v4910 = vpack.c.b16 %v4888, %v4886
  %v4911 = vpack.c.b16 %v4891, %v4889
  %v4912 = vpack.c.b16 %v4892, %v4890
  %v4913 = vpack.c.b16 %v4895, %v4893
  %v4914 = vpack.c.b16 %v4896, %v4894
  %v4915 = vpack.c.b16 %v4899, %v4897
  %v4916 = vpack.c.b16 %v4900, %v4898
  %4933 = vmatprep.subr.bf16.mxu0 %v4902
  %4934 = vmatpush1.bf16.msra.mxu0 %v4901
  %4935 = vmatprep.subr.bf16.mxu0 %v4904
  %4936 = vmatpush1.bf16.msra.mxu0 %v4903
  %4937 = vmatprep.subr.bf16.mxu0 %v4906
  %4938 = vmatpush1.bf16.msra.mxu0 %v4905
  %4939 = vmatprep.subr.bf16.mxu0 %v4908
  %4940 = vmatpush1.bf16.msra.mxu0 %v4907
  %4941 = vmatprep.subr.bf16.mxu0 %v4910
  %4942 = vmatpush1.bf16.msra.mxu0 %v4909
  %4943 = vmatprep.subr.bf16.mxu0 %v4912
  %4944 = vmatpush1.bf16.msra.mxu0 %v4911
  %4945 = vmatprep.subr.bf16.mxu0 %v4914
  %4946 = vmatpush1.bf16.msra.mxu0 %v4913
  %4947 = vmatprep.subr.bf16.mxu0 %v4916
  %4948 = vmatpush1.bf16.msra.mxu0 %v4915
  %4949 = vmatprep.subr.bf16.mxu0 0
  %4950 = vmatpush1.bf16.msra.mxu0 0
  %4951 = vmatprep.subr.bf16.mxu0 0
  %4952 = vmatpush1.bf16.msra.mxu0 0
  %4953 = vmatprep.subr.bf16.mxu0 0
  %4954 = vmatpush1.bf16.msra.mxu0 0
  %4955 = vmatprep.subr.bf16.mxu0 0
  %4956 = vmatpush1.bf16.msra.mxu0 0
  %4957 = vmatprep.subr.bf16.mxu0 0
  %4958 = vmatpush1.bf16.msra.mxu0 0
  %4959 = vmatprep.subr.bf16.mxu0 0
  %4960 = vmatpush1.bf16.msra.mxu0 0
  %4961 = vmatprep.subr.bf16.mxu0 0
  %4962 = vmatpush1.bf16.msra.mxu0 0
  %4963 = vmatprep.subr.bf16.mxu0 0
  %4964 = vmatpush1.bf16.msra.mxu0 0
  %4965 = vmatprep.mubr.bf16.mxu0 0
  %4966 = vmatmul.mubr.bf16.gmra.mrb[0].mxu0 %v4835
  %v4967 = vpop.f32.mrb[0].mxu0
  %v4968 = vadd.f32 0.0, %v4967
  %v4969 = vpop.f32.mrb[0].mxu0
  %v4970 = vadd.f32 0.0, %v4969
  %v4971 = vpop.f32.mrb[0].mxu0
  %v4972 = vpop.f32.mrb[0].mxu0
  %4973 = vdwg.mxu0
  %v4974 = vadd.f32 %v4788, %v4968
  %v4975 = vadd.f32 %v4789, %v4970
  %s4976 = scalar_lea.vmem %s7, 44
  %v4977 = vld [vmem:[%s4976] sm:$0xf]
  %v4979 = vsel %vm2936, %v4977, 0
  %4981 = vmatprep.subr.bf16.mxu0 0
  %4982 = vmatpush1.bf16.msra.mxu0 %v2933
  %4983 = vmatprep.subr.bf16.mxu0 0
  %4984 = vmatpush1.bf16.msra.mxu0 %v2934
  %4985 = vmatprep.subr.bf16.mxu0 0
  %4986 = vmatpush1.bf16.msra.mxu0 0
  %4987 = vmatprep.subr.bf16.mxu0 0
  %4988 = vmatpush1.bf16.msra.mxu0 0
  %4989 = vmatprep.subr.bf16.mxu0 0
  %4990 = vmatpush1.bf16.msra.mxu0 0
  %4991 = vmatprep.subr.bf16.mxu0 0
  %4992 = vmatpush1.bf16.msra.mxu0 0
  %4993 = vmatprep.subr.bf16.mxu0 0
  %4994 = vmatpush1.bf16.msra.mxu0 0
  %4995 = vmatprep.subr.bf16.mxu0 0
  %4996 = vmatpush1.bf16.msra.mxu0 0
  %4997 = vmatprep.subr.bf16.mxu0 0
  %4998 = vmatpush1.bf16.msra.mxu0 0
  %4999 = vmatprep.subr.bf16.mxu0 0
  %5000 = vmatpush1.bf16.msra.mxu0 0
  %5001 = vmatprep.subr.bf16.mxu0 0
  %5002 = vmatpush1.bf16.msra.mxu0 0
  %5003 = vmatprep.subr.bf16.mxu0 0
  %5004 = vmatpush1.bf16.msra.mxu0 0
  %5005 = vmatprep.subr.bf16.mxu0 0
  %5006 = vmatpush1.bf16.msra.mxu0 0
  %5007 = vmatprep.subr.bf16.mxu0 0
  %5008 = vmatpush1.bf16.msra.mxu0 0
  %5009 = vmatprep.subr.bf16.mxu0 0
  %5010 = vmatpush1.bf16.msra.mxu0 0
  %5011 = vmatprep.subr.bf16.mxu0 0
  %5012 = vmatpush1.bf16.msra.mxu0 0
  %5013 = vmatprep.mubr.bf16.mxu0 0
  %5014 = vmatmul.mubr.bf16.gmra.mrb[0].mxu0 %v4979
  %v5015 = vpop.f32.mrb[0].mxu0
  %v5016 = vadd.f32 0.0, %v5015
  %v5017 = vpop.f32.mrb[0].mxu0
  %v5018 = vpop.f32.mrb[0].mxu0
  %v5019 = vpop.f32.mrb[0].mxu0
  %5020 = vdwg.mxu0
  %v5021 = vpack.c.bf16 %v5016, %v5016
  %s5022 = scalar_lea.vmem %s8, 1408
  %v5023 = vld [vmem:[%s5022] sm:$0xff]
  %v5024 = vld [vmem:[%s5022 + $0x8] sm:$0xff]
  %v5025 = vld [vmem:[%s5022 + $0x10] sm:$0xff]
  %v5026 = vld [vmem:[%s5022 + $0x18] sm:$0xff]
  %v5027 = vld [vmem:[%s5022 + $0x20] sm:$0xff]
  %v5028 = vld [vmem:[%s5022 + $0x28] sm:$0xff]
  %v5029 = vld [vmem:[%s5022 + $0x30] sm:$0xff]
  %v5030 = vld [vmem:[%s5022 + $0x38] sm:$0xff]
  %v5031 = vld [vmem:[%s5022 + $0x40] sm:$0xff]
  %v5032 = vld [vmem:[%s5022 + $0x48] sm:$0xff]
  %v5033 = vld [vmem:[%s5022 + $0x50] sm:$0xff]
  %v5034 = vld [vmem:[%s5022 + $0x58] sm:$0xff]
  %v5035 = vld [vmem:[%s5022 + $0x60] sm:$0xff]
  %v5036 = vld [vmem:[%s5022 + $0x68] sm:$0xff]
  %v5037 = vld [vmem:[%s5022 + $0x70] sm:$0xff]
  %v5038 = vld [vmem:[%s5022 + $0x78] sm:$0xff]
  %v5055 = vunpack.c.l.b16 %v5023
  %v5056 = vunpack.c.h.b16 %v5023
  %v5057 = vunpack.c.l.b16 %v5024
  %v5058 = vunpack.c.h.b16 %v5024
  %v5059 = vunpack.c.l.b16 %v5025
  %v5060 = vunpack.c.h.b16 %v5025
  %v5061 = vunpack.c.l.b16 %v5026
  %v5062 = vunpack.c.h.b16 %v5026
  %v5063 = vunpack.c.l.b16 %v5027
  %v5064 = vunpack.c.h.b16 %v5027
  %v5065 = vunpack.c.l.b16 %v5028
  %v5066 = vunpack.c.h.b16 %v5028
  %v5067 = vunpack.c.l.b16 %v5029
  %v5068 = vunpack.c.h.b16 %v5029
  %v5069 = vunpack.c.l.b16 %v5030
  %v5070 = vunpack.c.h.b16 %v5030
  %v5071 = vunpack.c.l.b16 %v5031
  %v5072 = vunpack.c.h.b16 %v5031
  %v5073 = vunpack.c.l.b16 %v5032
  %v5074 = vunpack.c.h.b16 %v5032
  %v5075 = vunpack.c.l.b16 %v5033
  %v5076 = vunpack.c.h.b16 %v5033
  %v5077 = vunpack.c.l.b16 %v5034
  %v5078 = vunpack.c.h.b16 %v5034
  %v5079 = vunpack.c.l.b16 %v5035
  %v5080 = vunpack.c.h.b16 %v5035
  %v5081 = vunpack.c.l.b16 %v5036
  %v5082 = vunpack.c.h.b16 %v5036
  %v5083 = vunpack.c.l.b16 %v5037
  %v5084 = vunpack.c.h.b16 %v5037
  %v5085 = vunpack.c.l.b16 %v5038
  %v5086 = vunpack.c.h.b16 %v5038
  %v5087 = vpack.c.b16 %v5057, %v5055
  %v5088 = vpack.c.b16 %v5058, %v5056
  %v5089 = vpack.c.b16 %v5061, %v5059
  %v5090 = vpack.c.b16 %v5062, %v5060
  %v5091 = vpack.c.b16 %v5065, %v5063
  %v5092 = vpack.c.b16 %v5066, %v5064
  %v5093 = vpack.c.b16 %v5069, %v5067
  %v5094 = vpack.c.b16 %v5070, %v5068
  %v5095 = vpack.c.b16 %v5073, %v5071
  %v5096 = vpack.c.b16 %v5074, %v5072
  %v5097 = vpack.c.b16 %v5077, %v5075
  %v5098 = vpack.c.b16 %v5078, %v5076
  %v5099 = vpack.c.b16 %v5081, %v5079
  %v5100 = vpack.c.b16 %v5082, %v5080
  %v5101 = vpack.c.b16 %v5085, %v5083
  %v5102 = vpack.c.b16 %v5086, %v5084
  %5119 = vmatprep.subr.bf16.mxu0 %v5088
  %5120 = vmatpush1.bf16.msra.mxu0 %v5087
  %5121 = vmatprep.subr.bf16.mxu0 %v5090
  %5122 = vmatpush1.bf16.msra.mxu0 %v5089
  %5123 = vmatprep.subr.bf16.mxu0 %v5092
  %5124 = vmatpush1.bf16.msra.mxu0 %v5091
  %5125 = vmatprep.subr.bf16.mxu0 %v5094
  %5126 = vmatpush1.bf16.msra.mxu0 %v5093
  %5127 = vmatprep.subr.bf16.mxu0 %v5096
  %5128 = vmatpush1.bf16.msra.mxu0 %v5095
  %5129 = vmatprep.subr.bf16.mxu0 %v5098
  %5130 = vmatpush1.bf16.msra.mxu0 %v5097
  %5131 = vmatprep.subr.bf16.mxu0 %v5100
  %5132 = vmatpush1.bf16.msra.mxu0 %v5099
  %5133 = vmatprep.subr.bf16.mxu0 %v5102
  %5134 = vmatpush1.bf16.msra.mxu0 %v5101
  %5135 = vmatprep.subr.bf16.mxu0 0
  %5136 = vmatpush1.bf16.msra.mxu0 0
  %5137 = vmatprep.subr.bf16.mxu0 0
  %5138 = vmatpush1.bf16.msra.mxu0 0
  %5139 = vmatprep.subr.bf16.mxu0 0
  %5140 = vmatpush1.bf16.msra.mxu0 0
  %5141 = vmatprep.subr.bf16.mxu0 0
  %5142 = vmatpush1.bf16.msra.mxu0 0
  %5143 = vmatprep.subr.bf16.mxu0 0
  %5144 = vmatpush1.bf16.msra.mxu0 0
  %5145 = vmatprep.subr.bf16.mxu0 0
  %5146 = vmatpush1.bf16.msra.mxu0 0
  %5147 = vmatprep.subr.bf16.mxu0 0
  %5148 = vmatpush1.bf16.msra.mxu0 0
  %5149 = vmatprep.subr.bf16.mxu0 0
  %5150 = vmatpush1.bf16.msra.mxu0 0
  %5151 = vmatprep.mubr.bf16.mxu0 0
  %5152 = vmatmul.mubr.bf16.gmra.mrb[0].mxu0 %v5021
  %v5153 = vpop.f32.mrb[0].mxu0
  %v5154 = vadd.f32 0.0, %v5153
  %v5155 = vpop.f32.mrb[0].mxu0
  %v5156 = vadd.f32 0.0, %v5155
  %v5157 = vpop.f32.mrb[0].mxu0
  %v5158 = vpop.f32.mrb[0].mxu0
  %5159 = vdwg.mxu0
  %v5160 = vadd.f32 %v4974, %v5154
  %v5161 = vadd.f32 %v4975, %v5156
  %s5162 = scalar_lea.vmem %s7, 48
  %v5163 = vld [vmem:[%s5162] sm:$0xf]
  %v5165 = vsel %vm2936, %v5163, 0
  %5167 = vmatprep.subr.bf16.mxu0 0
  %5168 = vmatpush1.bf16.msra.mxu0 %v2933
  %5169 = vmatprep.subr.bf16.mxu0 0
  %5170 = vmatpush1.bf16.msra.mxu0 %v2934
  %5171 = vmatprep.subr.bf16.mxu0 0
  %5172 = vmatpush1.bf16.msra.mxu0 0
  %5173 = vmatprep.subr.bf16.mxu0 0
  %5174 = vmatpush1.bf16.msra.mxu0 0
  %5175 = vmatprep.subr.bf16.mxu0 0
  %5176 = vmatpush1.bf16.msra.mxu0 0
  %5177 = vmatprep.subr.bf16.mxu0 0
  %5178 = vmatpush1.bf16.msra.mxu0 0
  %5179 = vmatprep.subr.bf16.mxu0 0
  %5180 = vmatpush1.bf16.msra.mxu0 0
  %5181 = vmatprep.subr.bf16.mxu0 0
  %5182 = vmatpush1.bf16.msra.mxu0 0
  %5183 = vmatprep.subr.bf16.mxu0 0
  %5184 = vmatpush1.bf16.msra.mxu0 0
  %5185 = vmatprep.subr.bf16.mxu0 0
  %5186 = vmatpush1.bf16.msra.mxu0 0
  %5187 = vmatprep.subr.bf16.mxu0 0
  %5188 = vmatpush1.bf16.msra.mxu0 0
  %5189 = vmatprep.subr.bf16.mxu0 0
  %5190 = vmatpush1.bf16.msra.mxu0 0
  %5191 = vmatprep.subr.bf16.mxu0 0
  %5192 = vmatpush1.bf16.msra.mxu0 0
  %5193 = vmatprep.subr.bf16.mxu0 0
  %5194 = vmatpush1.bf16.msra.mxu0 0
  %5195 = vmatprep.subr.bf16.mxu0 0
  %5196 = vmatpush1.bf16.msra.mxu0 0
  %5197 = vmatprep.subr.bf16.mxu0 0
  %5198 = vmatpush1.bf16.msra.mxu0 0
  %5199 = vmatprep.mubr.bf16.mxu0 0
  %5200 = vmatmul.mubr.bf16.gmra.mrb[0].mxu0 %v5165
  %v5201 = vpop.f32.mrb[0].mxu0
  %v5202 = vadd.f32 0.0, %v5201
  %v5203 = vpop.f32.mrb[0].mxu0
  %v5204 = vpop.f32.mrb[0].mxu0
  %v5205 = vpop.f32.mrb[0].mxu0
  %5206 = vdwg.mxu0
  %v5207 = vpack.c.bf16 %v5202, %v5202
  %s5208 = scalar_lea.vmem %s8, 1536
  %v5209 = vld [vmem:[%s5208] sm:$0xff]
  %v5210 = vld [vmem:[%s5208 + $0x8] sm:$0xff]
  %v5211 = vld [vmem:[%s5208 + $0x10] sm:$0xff]
  %v5212 = vld [vmem:[%s5208 + $0x18] sm:$0xff]
  %v5213 = vld [vmem:[%s5208 + $0x20] sm:$0xff]
  %v5214 = vld [vmem:[%s5208 + $0x28] sm:$0xff]
  %v5215 = vld [vmem:[%s5208 + $0x30] sm:$0xff]
  %v5216 = vld [vmem:[%s5208 + $0x38] sm:$0xff]
  %v5217 = vld [vmem:[%s5208 + $0x40] sm:$0xff]
  %v5218 = vld [vmem:[%s5208 + $0x48] sm:$0xff]
  %v5219 = vld [vmem:[%s5208 + $0x50] sm:$0xff]
  %v5220 = vld [vmem:[%s5208 + $0x58] sm:$0xff]
  %v5221 = vld [vmem:[%s5208 + $0x60] sm:$0xff]
  %v5222 = vld [vmem:[%s5208 + $0x68] sm:$0xff]
  %v5223 = vld [vmem:[%s5208 + $0x70] sm:$0xff]
  %v5224 = vld [vmem:[%s5208 + $0x78] sm:$0xff]
  %v5241 = vunpack.c.l.b16 %v5209
  %v5242 = vunpack.c.h.b16 %v5209
  %v5243 = vunpack.c.l.b16 %v5210
  %v5244 = vunpack.c.h.b16 %v5210
  %v5245 = vunpack.c.l.b16 %v5211
  %v5246 = vunpack.c.h.b16 %v5211
  %v5247 = vunpack.c.l.b16 %v5212
  %v5248 = vunpack.c.h.b16 %v5212
  %v5249 = vunpack.c.l.b16 %v5213
  %v5250 = vunpack.c.h.b16 %v5213
  %v5251 = vunpack.c.l.b16 %v5214
  %v5252 = vunpack.c.h.b16 %v5214
  %v5253 = vunpack.c.l.b16 %v5215
  %v5254 = vunpack.c.h.b16 %v5215
  %v5255 = vunpack.c.l.b16 %v5216
  %v5256 = vunpack.c.h.b16 %v5216
  %v5257 = vunpack.c.l.b16 %v5217
  %v5258 = vunpack.c.h.b16 %v5217
  %v5259 = vunpack.c.l.b16 %v5218
  %v5260 = vunpack.c.h.b16 %v5218
  %v5261 = vunpack.c.l.b16 %v5219
  %v5262 = vunpack.c.h.b16 %v5219
  %v5263 = vunpack.c.l.b16 %v5220
  %v5264 = vunpack.c.h.b16 %v5220
  %v5265 = vunpack.c.l.b16 %v5221
  %v5266 = vunpack.c.h.b16 %v5221
  %v5267 = vunpack.c.l.b16 %v5222
  %v5268 = vunpack.c.h.b16 %v5222
  %v5269 = vunpack.c.l.b16 %v5223
  %v5270 = vunpack.c.h.b16 %v5223
  %v5271 = vunpack.c.l.b16 %v5224
  %v5272 = vunpack.c.h.b16 %v5224
  %v5273 = vpack.c.b16 %v5243, %v5241
  %v5274 = vpack.c.b16 %v5244, %v5242
  %v5275 = vpack.c.b16 %v5247, %v5245
  %v5276 = vpack.c.b16 %v5248, %v5246
  %v5277 = vpack.c.b16 %v5251, %v5249
  %v5278 = vpack.c.b16 %v5252, %v5250
  %v5279 = vpack.c.b16 %v5255, %v5253
  %v5280 = vpack.c.b16 %v5256, %v5254
  %v5281 = vpack.c.b16 %v5259, %v5257
  %v5282 = vpack.c.b16 %v5260, %v5258
  %v5283 = vpack.c.b16 %v5263, %v5261
  %v5284 = vpack.c.b16 %v5264, %v5262
  %v5285 = vpack.c.b16 %v5267, %v5265
  %v5286 = vpack.c.b16 %v5268, %v5266
  %v5287 = vpack.c.b16 %v5271, %v5269
  %v5288 = vpack.c.b16 %v5272, %v5270
  %5305 = vmatprep.subr.bf16.mxu0 %v5274
  %5306 = vmatpush1.bf16.msra.mxu0 %v5273
  %5307 = vmatprep.subr.bf16.mxu0 %v5276
  %5308 = vmatpush1.bf16.msra.mxu0 %v5275
  %5309 = vmatprep.subr.bf16.mxu0 %v5278
  %5310 = vmatpush1.bf16.msra.mxu0 %v5277
  %5311 = vmatprep.subr.bf16.mxu0 %v5280
  %5312 = vmatpush1.bf16.msra.mxu0 %v5279
  %5313 = vmatprep.subr.bf16.mxu0 %v5282
  %5314 = vmatpush1.bf16.msra.mxu0 %v5281
  %5315 = vmatprep.subr.bf16.mxu0 %v5284
  %5316 = vmatpush1.bf16.msra.mxu0 %v5283
  %5317 = vmatprep.subr.bf16.mxu0 %v5286
  %5318 = vmatpush1.bf16.msra.mxu0 %v5285
  %5319 = vmatprep.subr.bf16.mxu0 %v5288
  %5320 = vmatpush1.bf16.msra.mxu0 %v5287
  %5321 = vmatprep.subr.bf16.mxu0 0
  %5322 = vmatpush1.bf16.msra.mxu0 0
  %5323 = vmatprep.subr.bf16.mxu0 0
  %5324 = vmatpush1.bf16.msra.mxu0 0
  %5325 = vmatprep.subr.bf16.mxu0 0
  %5326 = vmatpush1.bf16.msra.mxu0 0
  %5327 = vmatprep.subr.bf16.mxu0 0
  %5328 = vmatpush1.bf16.msra.mxu0 0
  %5329 = vmatprep.subr.bf16.mxu0 0
  %5330 = vmatpush1.bf16.msra.mxu0 0
  %5331 = vmatprep.subr.bf16.mxu0 0
  %5332 = vmatpush1.bf16.msra.mxu0 0
  %5333 = vmatprep.subr.bf16.mxu0 0
  %5334 = vmatpush1.bf16.msra.mxu0 0
  %5335 = vmatprep.subr.bf16.mxu0 0
  %5336 = vmatpush1.bf16.msra.mxu0 0
  %5337 = vmatprep.mubr.bf16.mxu0 0
  %5338 = vmatmul.mubr.bf16.gmra.mrb[0].mxu0 %v5207
  %v5339 = vpop.f32.mrb[0].mxu0
  %v5340 = vadd.f32 0.0, %v5339
  %v5341 = vpop.f32.mrb[0].mxu0
  %v5342 = vadd.f32 0.0, %v5341
  %v5343 = vpop.f32.mrb[0].mxu0
  %v5344 = vpop.f32.mrb[0].mxu0
  %5345 = vdwg.mxu0
  %v5346 = vadd.f32 %v5160, %v5340
  %v5347 = vadd.f32 %v5161, %v5342
  %s5348 = scalar_lea.vmem %s7, 52
  %v5349 = vld [vmem:[%s5348] sm:$0xf]
  %v5351 = vsel %vm2936, %v5349, 0
  %5353 = vmatprep.subr.bf16.mxu0 0
  %5354 = vmatpush1.bf16.msra.mxu0 %v2933
  %5355 = vmatprep.subr.bf16.mxu0 0
  %5356 = vmatpush1.bf16.msra.mxu0 %v2934
  %5357 = vmatprep.subr.bf16.mxu0 0
  %5358 = vmatpush1.bf16.msra.mxu0 0
  %5359 = vmatprep.subr.bf16.mxu0 0
  %5360 = vmatpush1.bf16.msra.mxu0 0
  %5361 = vmatprep.subr.bf16.mxu0 0
  %5362 = vmatpush1.bf16.msra.mxu0 0
  %5363 = vmatprep.subr.bf16.mxu0 0
  %5364 = vmatpush1.bf16.msra.mxu0 0
  %5365 = vmatprep.subr.bf16.mxu0 0
  %5366 = vmatpush1.bf16.msra.mxu0 0
  %5367 = vmatprep.subr.bf16.mxu0 0
  %5368 = vmatpush1.bf16.msra.mxu0 0
  %5369 = vmatprep.subr.bf16.mxu0 0
  %5370 = vmatpush1.bf16.msra.mxu0 0
  %5371 = vmatprep.subr.bf16.mxu0 0
  %5372 = vmatpush1.bf16.msra.mxu0 0
  %5373 = vmatprep.subr.bf16.mxu0 0
  %5374 = vmatpush1.bf16.msra.mxu0 0
  %5375 = vmatprep.subr.bf16.mxu0 0
  %5376 = vmatpush1.bf16.msra.mxu0 0
  %5377 = vmatprep.subr.bf16.mxu0 0
  %5378 = vmatpush1.bf16.msra.mxu0 0
  %5379 = vmatprep.subr.bf16.mxu0 0
  %5380 = vmatpush1.bf16.msra.mxu0 0
  %5381 = vmatprep.subr.bf16.mxu0 0
  %5382 = vmatpush1.bf16.msra.mxu0 0
  %5383 = vmatprep.subr.bf16.mxu0 0
  %5384 = vmatpush1.bf16.msra.mxu0 0
  %5385 = vmatprep.mubr.bf16.mxu0 0
  %5386 = vmatmul.mubr.bf16.gmra.mrb[0].mxu0 %v5351
  %v5387 = vpop.f32.mrb[0].mxu0
  %v5388 = vadd.f32 0.0, %v5387
  %v5389 = vpop.f32.mrb[0].mxu0
  %v5390 = vpop.f32.mrb[0].mxu0
  %v5391 = vpop.f32.mrb[0].mxu0
  %5392 = vdwg.mxu0
  %v5393 = vpack.c.bf16 %v5388, %v5388
  %s5394 = scalar_lea.vmem %s8, 1664
  %v5395 = vld [vmem:[%s5394] sm:$0xff]
  %v5396 = vld [vmem:[%s5394 + $0x8] sm:$0xff]
  %v5397 = vld [vmem:[%s5394 + $0x10] sm:$0xff]
  %v5398 = vld [vmem:[%s5394 + $0x18] sm:$0xff]
  %v5399 = vld [vmem:[%s5394 + $0x20] sm:$0xff]
  %v5400 = vld [vmem:[%s5394 + $0x28] sm:$0xff]
  %v5401 = vld [vmem:[%s5394 + $0x30] sm:$0xff]
  %v5402 = vld [vmem:[%s5394 + $0x38] sm:$0xff]
  %v5403 = vld [vmem:[%s5394 + $0x40] sm:$0xff]
  %v5404 = vld [vmem:[%s5394 + $0x48] sm:$0xff]
  %v5405 = vld [vmem:[%s5394 + $0x50] sm:$0xff]
  %v5406 = vld [vmem:[%s5394 + $0x58] sm:$0xff]
  %v5407 = vld [vmem:[%s5394 + $0x60] sm:$0xff]
  %v5408 = vld [vmem:[%s5394 + $0x68] sm:$0xff]
  %v5409 = vld [vmem:[%s5394 + $0x70] sm:$0xff]
  %v5410 = vld [vmem:[%s5394 + $0x78] sm:$0xff]
  %v5427 = vunpack.c.l.b16 %v5395
  %v5428 = vunpack.c.h.b16 %v5395
  %v5429 = vunpack.c.l.b16 %v5396
  %v5430 = vunpack.c.h.b16 %v5396
  %v5431 = vunpack.c.l.b16 %v5397
  %v5432 = vunpack.c.h.b16 %v5397
  %v5433 = vunpack.c.l.b16 %v5398
  %v5434 = vunpack.c.h.b16 %v5398
  %v5435 = vunpack.c.l.b16 %v5399
  %v5436 = vunpack.c.h.b16 %v5399
  %v5437 = vunpack.c.l.b16 %v5400
  %v5438 = vunpack.c.h.b16 %v5400
  %v5439 = vunpack.c.l.b16 %v5401
  %v5440 = vunpack.c.h.b16 %v5401
  %v5441 = vunpack.c.l.b16 %v5402
  %v5442 = vunpack.c.h.b16 %v5402
  %v5443 = vunpack.c.l.b16 %v5403
  %v5444 = vunpack.c.h.b16 %v5403
  %v5445 = vunpack.c.l.b16 %v5404
  %v5446 = vunpack.c.h.b16 %v5404
  %v5447 = vunpack.c.l.b16 %v5405
  %v5448 = vunpack.c.h.b16 %v5405
  %v5449 = vunpack.c.l.b16 %v5406
  %v5450 = vunpack.c.h.b16 %v5406
  %v5451 = vunpack.c.l.b16 %v5407
  %v5452 = vunpack.c.h.b16 %v5407
  %v5453 = vunpack.c.l.b16 %v5408
  %v5454 = vunpack.c.h.b16 %v5408
  %v5455 = vunpack.c.l.b16 %v5409
  %v5456 = vunpack.c.h.b16 %v5409
  %v5457 = vunpack.c.l.b16 %v5410
  %v5458 = vunpack.c.h.b16 %v5410
  %v5459 = vpack.c.b16 %v5429, %v5427
  %v5460 = vpack.c.b16 %v5430, %v5428
  %v5461 = vpack.c.b16 %v5433, %v5431
  %v5462 = vpack.c.b16 %v5434, %v5432
  %v5463 = vpack.c.b16 %v5437, %v5435
  %v5464 = vpack.c.b16 %v5438, %v5436
  %v5465 = vpack.c.b16 %v5441, %v5439
  %v5466 = vpack.c.b16 %v5442, %v5440
  %v5467 = vpack.c.b16 %v5445, %v5443
  %v5468 = vpack.c.b16 %v5446, %v5444
  %v5469 = vpack.c.b16 %v5449, %v5447
  %v5470 = vpack.c.b16 %v5450, %v5448
  %v5471 = vpack.c.b16 %v5453, %v5451
  %v5472 = vpack.c.b16 %v5454, %v5452
  %v5473 = vpack.c.b16 %v5457, %v5455
  %v5474 = vpack.c.b16 %v5458, %v5456
  %5491 = vmatprep.subr.bf16.mxu0 %v5460
  %5492 = vmatpush1.bf16.msra.mxu0 %v5459
  %5493 = vmatprep.subr.bf16.mxu0 %v5462
  %5494 = vmatpush1.bf16.msra.mxu0 %v5461
  %5495 = vmatprep.subr.bf16.mxu0 %v5464
  %5496 = vmatpush1.bf16.msra.mxu0 %v5463
  %5497 = vmatprep.subr.bf16.mxu0 %v5466
  %5498 = vmatpush1.bf16.msra.mxu0 %v5465
  %5499 = vmatprep.subr.bf16.mxu0 %v5468
  %5500 = vmatpush1.bf16.msra.mxu0 %v5467
  %5501 = vmatprep.subr.bf16.mxu0 %v5470
  %5502 = vmatpush1.bf16.msra.mxu0 %v5469
  %5503 = vmatprep.subr.bf16.mxu0 %v5472
  %5504 = vmatpush1.bf16.msra.mxu0 %v5471
  %5505 = vmatprep.subr.bf16.mxu0 %v5474
  %5506 = vmatpush1.bf16.msra.mxu0 %v5473
  %5507 = vmatprep.subr.bf16.mxu0 0
  %5508 = vmatpush1.bf16.msra.mxu0 0
  %5509 = vmatprep.subr.bf16.mxu0 0
  %5510 = vmatpush1.bf16.msra.mxu0 0
  %5511 = vmatprep.subr.bf16.mxu0 0
  %5512 = vmatpush1.bf16.msra.mxu0 0
  %5513 = vmatprep.subr.bf16.mxu0 0
  %5514 = vmatpush1.bf16.msra.mxu0 0
  %5515 = vmatprep.subr.bf16.mxu0 0
  %5516 = vmatpush1.bf16.msra.mxu0 0
  %5517 = vmatprep.subr.bf16.mxu0 0
  %5518 = vmatpush1.bf16.msra.mxu0 0
  %5519 = vmatprep.subr.bf16.mxu0 0
  %5520 = vmatpush1.bf16.msra.mxu0 0
  %5521 = vmatprep.subr.bf16.mxu0 0
  %5522 = vmatpush1.bf16.msra.mxu0 0
  %5523 = vmatprep.mubr.bf16.mxu0 0
  %5524 = vmatmul.mubr.bf16.gmra.mrb[0].mxu0 %v5393
  %v5525 = vpop.f32.mrb[0].mxu0
  %v5526 = vadd.f32 0.0, %v5525
  %v5527 = vpop.f32.mrb[0].mxu0
  %v5528 = vadd.f32 0.0, %v5527
  %v5529 = vpop.f32.mrb[0].mxu0
  %v5530 = vpop.f32.mrb[0].mxu0
  %5531 = vdwg.mxu0
  %v5532 = vadd.f32 %v5346, %v5526
  %v5533 = vadd.f32 %v5347, %v5528
  %s5534 = scalar_lea.vmem %s7, 56
  %v5535 = vld [vmem:[%s5534] sm:$0xf]
  %v5537 = vsel %vm2936, %v5535, 0
  %5539 = vmatprep.subr.bf16.mxu0 0
  %5540 = vmatpush1.bf16.msra.mxu0 %v2933
  %5541 = vmatprep.subr.bf16.mxu0 0
  %5542 = vmatpush1.bf16.msra.mxu0 %v2934
  %5543 = vmatprep.subr.bf16.mxu0 0
  %5544 = vmatpush1.bf16.msra.mxu0 0
  %5545 = vmatprep.subr.bf16.mxu0 0
  %5546 = vmatpush1.bf16.msra.mxu0 0
  %5547 = vmatprep.subr.bf16.mxu0 0
  %5548 = vmatpush1.bf16.msra.mxu0 0
  %5549 = vmatprep.subr.bf16.mxu0 0
  %5550 = vmatpush1.bf16.msra.mxu0 0
  %5551 = vmatprep.subr.bf16.mxu0 0
  %5552 = vmatpush1.bf16.msra.mxu0 0
  %5553 = vmatprep.subr.bf16.mxu0 0
  %5554 = vmatpush1.bf16.msra.mxu0 0
  %5555 = vmatprep.subr.bf16.mxu0 0
  %5556 = vmatpush1.bf16.msra.mxu0 0
  %5557 = vmatprep.subr.bf16.mxu0 0
  %5558 = vmatpush1.bf16.msra.mxu0 0
  %5559 = vmatprep.subr.bf16.mxu0 0
  %5560 = vmatpush1.bf16.msra.mxu0 0
  %5561 = vmatprep.subr.bf16.mxu0 0
  %5562 = vmatpush1.bf16.msra.mxu0 0
  %5563 = vmatprep.subr.bf16.mxu0 0
  %5564 = vmatpush1.bf16.msra.mxu0 0
  %5565 = vmatprep.subr.bf16.mxu0 0
  %5566 = vmatpush1.bf16.msra.mxu0 0
  %5567 = vmatprep.subr.bf16.mxu0 0
  %5568 = vmatpush1.bf16.msra.mxu0 0
  %5569 = vmatprep.subr.bf16.mxu0 0
  %5570 = vmatpush1.bf16.msra.mxu0 0
  %5571 = vmatprep.mubr.bf16.mxu0 0
  %5572 = vmatmul.mubr.bf16.gmra.mrb[0].mxu0 %v5537
  %v5573 = vpop.f32.mrb[0].mxu0
  %v5574 = vadd.f32 0.0, %v5573
  %v5575 = vpop.f32.mrb[0].mxu0
  %v5576 = vpop.f32.mrb[0].mxu0
  %v5577 = vpop.f32.mrb[0].mxu0
  %5578 = vdwg.mxu0
  %v5579 = vpack.c.bf16 %v5574, %v5574
  %s5580 = scalar_lea.vmem %s8, 1792
  %v5581 = vld [vmem:[%s5580] sm:$0xff]
  %v5582 = vld [vmem:[%s5580 + $0x8] sm:$0xff]
  %v5583 = vld [vmem:[%s5580 + $0x10] sm:$0xff]
  %v5584 = vld [vmem:[%s5580 + $0x18] sm:$0xff]
  %v5585 = vld [vmem:[%s5580 + $0x20] sm:$0xff]
  %v5586 = vld [vmem:[%s5580 + $0x28] sm:$0xff]
  %v5587 = vld [vmem:[%s5580 + $0x30] sm:$0xff]
  %v5588 = vld [vmem:[%s5580 + $0x38] sm:$0xff]
  %v5589 = vld [vmem:[%s5580 + $0x40] sm:$0xff]
  %v5590 = vld [vmem:[%s5580 + $0x48] sm:$0xff]
  %v5591 = vld [vmem:[%s5580 + $0x50] sm:$0xff]
  %v5592 = vld [vmem:[%s5580 + $0x58] sm:$0xff]
  %v5593 = vld [vmem:[%s5580 + $0x60] sm:$0xff]
  %v5594 = vld [vmem:[%s5580 + $0x68] sm:$0xff]
  %v5595 = vld [vmem:[%s5580 + $0x70] sm:$0xff]
  %v5596 = vld [vmem:[%s5580 + $0x78] sm:$0xff]
  %v5613 = vunpack.c.l.b16 %v5581
  %v5614 = vunpack.c.h.b16 %v5581
  %v5615 = vunpack.c.l.b16 %v5582
  %v5616 = vunpack.c.h.b16 %v5582
  %v5617 = vunpack.c.l.b16 %v5583
  %v5618 = vunpack.c.h.b16 %v5583
  %v5619 = vunpack.c.l.b16 %v5584
  %v5620 = vunpack.c.h.b16 %v5584
  %v5621 = vunpack.c.l.b16 %v5585
  %v5622 = vunpack.c.h.b16 %v5585
  %v5623 = vunpack.c.l.b16 %v5586
  %v5624 = vunpack.c.h.b16 %v5586
  %v5625 = vunpack.c.l.b16 %v5587
  %v5626 = vunpack.c.h.b16 %v5587
  %v5627 = vunpack.c.l.b16 %v5588
  %v5628 = vunpack.c.h.b16 %v5588
  %v5629 = vunpack.c.l.b16 %v5589
  %v5630 = vunpack.c.h.b16 %v5589
  %v5631 = vunpack.c.l.b16 %v5590
  %v5632 = vunpack.c.h.b16 %v5590
  %v5633 = vunpack.c.l.b16 %v5591
  %v5634 = vunpack.c.h.b16 %v5591
  %v5635 = vunpack.c.l.b16 %v5592
  %v5636 = vunpack.c.h.b16 %v5592
  %v5637 = vunpack.c.l.b16 %v5593
  %v5638 = vunpack.c.h.b16 %v5593
  %v5639 = vunpack.c.l.b16 %v5594
  %v5640 = vunpack.c.h.b16 %v5594
  %v5641 = vunpack.c.l.b16 %v5595
  %v5642 = vunpack.c.h.b16 %v5595
  %v5643 = vunpack.c.l.b16 %v5596
  %v5644 = vunpack.c.h.b16 %v5596
  %v5645 = vpack.c.b16 %v5615, %v5613
  %v5646 = vpack.c.b16 %v5616, %v5614
  %v5647 = vpack.c.b16 %v5619, %v5617
  %v5648 = vpack.c.b16 %v5620, %v5618
  %v5649 = vpack.c.b16 %v5623, %v5621
  %v5650 = vpack.c.b16 %v5624, %v5622
  %v5651 = vpack.c.b16 %v5627, %v5625
  %v5652 = vpack.c.b16 %v5628, %v5626
  %v5653 = vpack.c.b16 %v5631, %v5629
  %v5654 = vpack.c.b16 %v5632, %v5630
  %v5655 = vpack.c.b16 %v5635, %v5633
  %v5656 = vpack.c.b16 %v5636, %v5634
  %v5657 = vpack.c.b16 %v5639, %v5637
  %v5658 = vpack.c.b16 %v5640, %v5638
  %v5659 = vpack.c.b16 %v5643, %v5641
  %v5660 = vpack.c.b16 %v5644, %v5642
  %5677 = vmatprep.subr.bf16.mxu0 %v5646
  %5678 = vmatpush1.bf16.msra.mxu0 %v5645
  %5679 = vmatprep.subr.bf16.mxu0 %v5648
  %5680 = vmatpush1.bf16.msra.mxu0 %v5647
  %5681 = vmatprep.subr.bf16.mxu0 %v5650
  %5682 = vmatpush1.bf16.msra.mxu0 %v5649
  %5683 = vmatprep.subr.bf16.mxu0 %v5652
  %5684 = vmatpush1.bf16.msra.mxu0 %v5651
  %5685 = vmatprep.subr.bf16.mxu0 %v5654
  %5686 = vmatpush1.bf16.msra.mxu0 %v5653
  %5687 = vmatprep.subr.bf16.mxu0 %v5656
  %5688 = vmatpush1.bf16.msra.mxu0 %v5655
  %5689 = vmatprep.subr.bf16.mxu0 %v5658
  %5690 = vmatpush1.bf16.msra.mxu0 %v5657
  %5691 = vmatprep.subr.bf16.mxu0 %v5660
  %5692 = vmatpush1.bf16.msra.mxu0 %v5659
  %5693 = vmatprep.subr.bf16.mxu0 0
  %5694 = vmatpush1.bf16.msra.mxu0 0
  %5695 = vmatprep.subr.bf16.mxu0 0
  %5696 = vmatpush1.bf16.msra.mxu0 0
  %5697 = vmatprep.subr.bf16.mxu0 0
  %5698 = vmatpush1.bf16.msra.mxu0 0
  %5699 = vmatprep.subr.bf16.mxu0 0
  %5700 = vmatpush1.bf16.msra.mxu0 0
  %5701 = vmatprep.subr.bf16.mxu0 0
  %5702 = vmatpush1.bf16.msra.mxu0 0
  %5703 = vmatprep.subr.bf16.mxu0 0
  %5704 = vmatpush1.bf16.msra.mxu0 0
  %5705 = vmatprep.subr.bf16.mxu0 0
  %5706 = vmatpush1.bf16.msra.mxu0 0
  %5707 = vmatprep.subr.bf16.mxu0 0
  %5708 = vmatpush1.bf16.msra.mxu0 0
  %5709 = vmatprep.mubr.bf16.mxu0 0
  %5710 = vmatmul.mubr.bf16.gmra.mrb[0].mxu0 %v5579
  %v5711 = vpop.f32.mrb[0].mxu0
  %v5712 = vadd.f32 0.0, %v5711
  %v5713 = vpop.f32.mrb[0].mxu0
  %v5714 = vadd.f32 0.0, %v5713
  %v5715 = vpop.f32.mrb[0].mxu0
  %v5716 = vpop.f32.mrb[0].mxu0
  %5717 = vdwg.mxu0
  %v5718 = vadd.f32 %v5532, %v5712
  %v5719 = vadd.f32 %v5533, %v5714
  %s5720 = scalar_lea.vmem %s7, 60
  %v5721 = vld [vmem:[%s5720] sm:$0xf]
  %v5723 = vsel %vm2936, %v5721, 0
  %5725 = vmatprep.subr.bf16.mxu0 0
  %5726 = vmatpush1.bf16.msra.mxu0 %v2933
  %5727 = vmatprep.subr.bf16.mxu0 0
  %5728 = vmatpush1.bf16.msra.mxu0 %v2934
  %5729 = vmatprep.subr.bf16.mxu0 0
  %5730 = vmatpush1.bf16.msra.mxu0 0
  %5731 = vmatprep.subr.bf16.mxu0 0
  %5732 = vmatpush1.bf16.msra.mxu0 0
  %5733 = vmatprep.subr.bf16.mxu0 0
  %5734 = vmatpush1.bf16.msra.mxu0 0
  %5735 = vmatprep.subr.bf16.mxu0 0
  %5736 = vmatpush1.bf16.msra.mxu0 0
  %5737 = vmatprep.subr.bf16.mxu0 0
  %5738 = vmatpush1.bf16.msra.mxu0 0
  %5739 = vmatprep.subr.bf16.mxu0 0
  %5740 = vmatpush1.bf16.msra.mxu0 0
  %5741 = vmatprep.subr.bf16.mxu0 0
  %5742 = vmatpush1.bf16.msra.mxu0 0
  %5743 = vmatprep.subr.bf16.mxu0 0
  %5744 = vmatpush1.bf16.msra.mxu0 0
  %5745 = vmatprep.subr.bf16.mxu0 0
  %5746 = vmatpush1.bf16.msra.mxu0 0
  %5747 = vmatprep.subr.bf16.mxu0 0
  %5748 = vmatpush1.bf16.msra.mxu0 0
  %5749 = vmatprep.subr.bf16.mxu0 0
  %5750 = vmatpush1.bf16.msra.mxu0 0
  %5751 = vmatprep.subr.bf16.mxu0 0
  %5752 = vmatpush1.bf16.msra.mxu0 0
  %5753 = vmatprep.subr.bf16.mxu0 0
  %5754 = vmatpush1.bf16.msra.mxu0 0
  %5755 = vmatprep.subr.bf16.mxu0 0
  %5756 = vmatpush1.bf16.msra.mxu0 0
  %5757 = vmatprep.mubr.bf16.mxu0 0
  %5758 = vmatmul.mubr.bf16.gmra.mrb[0].mxu0 %v5723
  %v5759 = vpop.f32.mrb[0].mxu0
  %v5760 = vadd.f32 0.0, %v5759
  %v5761 = vpop.f32.mrb[0].mxu0
  %v5762 = vpop.f32.mrb[0].mxu0
  %v5763 = vpop.f32.mrb[0].mxu0
  %5764 = vdwg.mxu0
  %v5765 = vpack.c.bf16 %v5760, %v5760
  %s5766 = scalar_lea.vmem %s8, 1920
  %v5767 = vld [vmem:[%s5766] sm:$0xff]
  %v5768 = vld [vmem:[%s5766 + $0x8] sm:$0xff]
  %v5769 = vld [vmem:[%s5766 + $0x10] sm:$0xff]
  %v5770 = vld [vmem:[%s5766 + $0x18] sm:$0xff]
  %v5771 = vld [vmem:[%s5766 + $0x20] sm:$0xff]
  %v5772 = vld [vmem:[%s5766 + $0x28] sm:$0xff]
  %v5773 = vld [vmem:[%s5766 + $0x30] sm:$0xff]
  %v5774 = vld [vmem:[%s5766 + $0x38] sm:$0xff]
  %v5775 = vld [vmem:[%s5766 + $0x40] sm:$0xff]
  %v5776 = vld [vmem:[%s5766 + $0x48] sm:$0xff]
  %v5777 = vld [vmem:[%s5766 + $0x50] sm:$0xff]
  %v5778 = vld [vmem:[%s5766 + $0x58] sm:$0xff]
  %v5779 = vld [vmem:[%s5766 + $0x60] sm:$0xff]
  %v5780 = vld [vmem:[%s5766 + $0x68] sm:$0xff]
  %v5781 = vld [vmem:[%s5766 + $0x70] sm:$0xff]
  %v5782 = vld [vmem:[%s5766 + $0x78] sm:$0xff]
  %v5799 = vunpack.c.l.b16 %v5767
  %v5800 = vunpack.c.h.b16 %v5767
  %v5801 = vunpack.c.l.b16 %v5768
  %v5802 = vunpack.c.h.b16 %v5768
  %v5803 = vunpack.c.l.b16 %v5769
  %v5804 = vunpack.c.h.b16 %v5769
  %v5805 = vunpack.c.l.b16 %v5770
  %v5806 = vunpack.c.h.b16 %v5770
  %v5807 = vunpack.c.l.b16 %v5771
  %v5808 = vunpack.c.h.b16 %v5771
  %v5809 = vunpack.c.l.b16 %v5772
  %v5810 = vunpack.c.h.b16 %v5772
  %v5811 = vunpack.c.l.b16 %v5773
  %v5812 = vunpack.c.h.b16 %v5773
  %v5813 = vunpack.c.l.b16 %v5774
  %v5814 = vunpack.c.h.b16 %v5774
  %v5815 = vunpack.c.l.b16 %v5775
  %v5816 = vunpack.c.h.b16 %v5775
  %v5817 = vunpack.c.l.b16 %v5776
  %v5818 = vunpack.c.h.b16 %v5776
  %v5819 = vunpack.c.l.b16 %v5777
  %v5820 = vunpack.c.h.b16 %v5777
  %v5821 = vunpack.c.l.b16 %v5778
  %v5822 = vunpack.c.h.b16 %v5778
  %v5823 = vunpack.c.l.b16 %v5779
  %v5824 = vunpack.c.h.b16 %v5779
  %v5825 = vunpack.c.l.b16 %v5780
  %v5826 = vunpack.c.h.b16 %v5780
  %v5827 = vunpack.c.l.b16 %v5781
  %v5828 = vunpack.c.h.b16 %v5781
  %v5829 = vunpack.c.l.b16 %v5782
  %v5830 = vunpack.c.h.b16 %v5782
  %v5831 = vpack.c.b16 %v5801, %v5799
  %v5832 = vpack.c.b16 %v5802, %v5800
  %v5833 = vpack.c.b16 %v5805, %v5803
  %v5834 = vpack.c.b16 %v5806, %v5804
  %v5835 = vpack.c.b16 %v5809, %v5807
  %v5836 = vpack.c.b16 %v5810, %v5808
  %v5837 = vpack.c.b16 %v5813, %v5811
  %v5838 = vpack.c.b16 %v5814, %v5812
  %v5839 = vpack.c.b16 %v5817, %v5815
  %v5840 = vpack.c.b16 %v5818, %v5816
  %v5841 = vpack.c.b16 %v5821, %v5819
  %v5842 = vpack.c.b16 %v5822, %v5820
  %v5843 = vpack.c.b16 %v5825, %v5823
  %v5844 = vpack.c.b16 %v5826, %v5824
  %v5845 = vpack.c.b16 %v5829, %v5827
  %v5846 = vpack.c.b16 %v5830, %v5828
  %5863 = vmatprep.subr.bf16.mxu0 %v5832
  %5864 = vmatpush1.bf16.msra.mxu0 %v5831
  %5865 = vmatprep.subr.bf16.mxu0 %v5834
  %5866 = vmatpush1.bf16.msra.mxu0 %v5833
  %5867 = vmatprep.subr.bf16.mxu0 %v5836
  %5868 = vmatpush1.bf16.msra.mxu0 %v5835
  %5869 = vmatprep.subr.bf16.mxu0 %v5838
  %5870 = vmatpush1.bf16.msra.mxu0 %v5837
  %5871 = vmatprep.subr.bf16.mxu0 %v5840
  %5872 = vmatpush1.bf16.msra.mxu0 %v5839
  %5873 = vmatprep.subr.bf16.mxu0 %v5842
  %5874 = vmatpush1.bf16.msra.mxu0 %v5841
  %5875 = vmatprep.subr.bf16.mxu0 %v5844
  %5876 = vmatpush1.bf16.msra.mxu0 %v5843
  %5877 = vmatprep.subr.bf16.mxu0 %v5846
  %5878 = vmatpush1.bf16.msra.mxu0 %v5845
  %5879 = vmatprep.subr.bf16.mxu0 0
  %5880 = vmatpush1.bf16.msra.mxu0 0
  %5881 = vmatprep.subr.bf16.mxu0 0
  %5882 = vmatpush1.bf16.msra.mxu0 0
  %5883 = vmatprep.subr.bf16.mxu0 0
  %5884 = vmatpush1.bf16.msra.mxu0 0
  %5885 = vmatprep.subr.bf16.mxu0 0
  %5886 = vmatpush1.bf16.msra.mxu0 0
  %5887 = vmatprep.subr.bf16.mxu0 0
  %5888 = vmatpush1.bf16.msra.mxu0 0
  %5889 = vmatprep.subr.bf16.mxu0 0
  %5890 = vmatpush1.bf16.msra.mxu0 0
  %5891 = vmatprep.subr.bf16.mxu0 0
  %5892 = vmatpush1.bf16.msra.mxu0 0
  %5893 = vmatprep.subr.bf16.mxu0 0
  %5894 = vmatpush1.bf16.msra.mxu0 0
  %5895 = vmatprep.mubr.bf16.mxu0 0
  %5896 = vmatmul.mubr.bf16.gmra.mrb[0].mxu0 %v5765
  %v5897 = vpop.f32.mrb[0].mxu0
  %v5898 = vadd.f32 0.0, %v5897
  %v5899 = vpop.f32.mrb[0].mxu0
  %v5900 = vadd.f32 0.0, %v5899
  %v5901 = vpop.f32.mrb[0].mxu0
  %v5902 = vpop.f32.mrb[0].mxu0
  %5903 = vdwg.mxu0
  %v5904 = vadd.f32 %v5718, %v5898
  %v5905 = vadd.f32 %v5719, %v5900
  %v5906 = vrot.slane %v5904, 4
  %v5907 = vadd.f32 %v5904, %v5906
  %v5908 = vrot.slane %v5907, 2
  %v5909 = vadd.f32 %v5907, %v5908
  %v5910 = vrot.slane %v5909, 1
  %v5911 = vadd.f32 %v5909, %v5910
  %v5912 = vrot.slane %v5905, 4
  %v5913 = vadd.f32 %v5905, %v5912
  %v5914 = vrot.slane %v5913, 2
  %v5915 = vadd.f32 %v5913, %v5914
  %v5916 = vrot.slane %v5915, 1
  %v5917 = vadd.f32 %v5915, %v5916
  %v5918 = vmul.f32 %v5911, 0.125
  %v5919 = vmul.f32 %v5917, 0.125
  %v5920 = vsub.f32 %v5904, %v5918
  %v5921 = vsub.f32 %v5905, %v5919
  %v5922 = vmul.f32 %v5920, %v5920
  %v5923 = vmul.f32 %v5921, %v5921
  %v5924 = vrot.slane %v5922, 4
  %v5925 = vadd.f32 %v5922, %v5924
  %v5926 = vrot.slane %v5925, 2
  %v5927 = vadd.f32 %v5925, %v5926
  %v5928 = vrot.slane %v5927, 1
  %v5929 = vadd.f32 %v5927, %v5928
  %v5930 = vrot.slane %v5923, 4
  %v5931 = vadd.f32 %v5923, %v5930
  %v5932 = vrot.slane %v5931, 2
  %v5933 = vadd.f32 %v5931, %v5932
  %v5934 = vrot.slane %v5933, 1
  %v5935 = vadd.f32 %v5933, %v5934
  %v5936 = vmul.f32 %v5929, 0.125
  %v5937 = vmul.f32 %v5935, 0.125
  %v5938 = vadd.f32 %v5936, 1e-05
  %v5939 = vadd.f32 %v5937, 1e-05
  %v5940 = vrsqrt.pop %v5938
  %v5941 = vrsqrt.pop %v5939
  %v5942 = vmul.f32 %v5920, %v5940
  %v5943 = vmul.f32 %v5921, %v5941
  %v5944 = vld [vmem:[%s9] sm:$0x3]
  %v5946 = vlaneseq
  %v5947 = vshrl.u32 %v5946, 7
  %v5948 = vsub.s32 0, %v5947
  %v5949 = vrot.slane %v5944, %v5948
  %v5950 = vlaneseq
  %v5951 = vshrl.u32 %v5950, 7
  %v5952 = vsub.s32 1, %v5951
  %v5953 = vrot.slane %v5944, %v5952
  %v5956 = vmul.f32 %v5942, %v5949
  %v5957 = vmul.f32 %v5943, %v5953
  %v5958 = vld [vmem:[%s10] sm:$0x3]
  %v5960 = vlaneseq
  %v5961 = vshrl.u32 %v5960, 7
  %v5962 = vsub.s32 0, %v5961
  %v5963 = vrot.slane %v5958, %v5962
  %v5964 = vlaneseq
  %v5965 = vshrl.u32 %v5964, 7
  %v5966 = vsub.s32 1, %v5965
  %v5967 = vrot.slane %v5958, %v5966
  %v5970 = vadd.f32 %v5956, %v5963
  %v5971 = vadd.f32 %v5957, %v5967
  %v5972 = vmul.f32 %v5970, 0.2
  %v5973 = vmul.f32 %v5971, 0.2
  %v5974 = vmax.f32 %v5970, %v5972
  %v5975 = vmax.f32 %v5971, %v5973
  %v5976 = vpack.c.bf16 %v5974, %v5974
  %v5977 = vpack.c.bf16 %v5975, %v5975
  %v5978 = vld [vmem:[%s11] sm:$0x1]
  %vm5979 = vcmask 64512
  %v5981 = vsel %vm5979, %v5978, 0
  %vm5983 = vcmask 1043456
  %v5985 = vsel %vm5983, %v5976, 0
  %v5988 = vsel %vm5983, %v5977, 0
  %5990 = vmatprep.subr.bf16.mxu0 %v5988
  %5991 = vmatpush1.bf16.msra.mxu0 %v5985
  %5992 = vmatprep.subr.bf16.mxu0 0
  %5993 = vmatpush1.bf16.msra.mxu0 0
  %5994 = vmatprep.subr.bf16.mxu0 0
  %5995 = vmatpush1.bf16.msra.mxu0 0
  %5996 = vmatprep.subr.bf16.mxu0 0
  %5997 = vmatpush1.bf16.msra.mxu0 0
  %5998 = vmatprep.subr.bf16.mxu0 0
  %5999 = vmatpush1.bf16.msra.mxu0 0
  %6000 = vmatprep.subr.bf16.mxu0 0
  %6001 = vmatpush1.bf16.msra.mxu0 0
  %6002 = vmatprep.subr.bf16.mxu0 0
  %6003 = vmatpush1.bf16.msra.mxu0 0
  %6004 = vmatprep.subr.bf16.mxu0 0
  %6005 = vmatpush1.bf16.msra.mxu0 0
  %6006 = vmatprep.subr.bf16.mxu0 0
  %6007 = vmatpush1.bf16.msra.mxu0 0
  %6008 = vmatprep.subr.bf16.mxu0 0
  %6009 = vmatpush1.bf16.msra.mxu0 0
  %6010 = vmatprep.subr.bf16.mxu0 0
  %6011 = vmatpush1.bf16.msra.mxu0 0
  %6012 = vmatprep.subr.bf16.mxu0 0
  %6013 = vmatpush1.bf16.msra.mxu0 0
  %6014 = vmatprep.subr.bf16.mxu0 0
  %6015 = vmatpush1.bf16.msra.mxu0 0
  %6016 = vmatprep.subr.bf16.mxu0 0
  %6017 = vmatpush1.bf16.msra.mxu0 0
  %6018 = vmatprep.subr.bf16.mxu0 0
  %6019 = vmatpush1.bf16.msra.mxu0 0
  %6020 = vmatprep.subr.bf16.mxu0 0
  %6021 = vmatpush1.bf16.msra.mxu0 0
  %6022 = vmatprep.mubr.bf16.mxu0 0
  %6023 = vmatmul.mubr.bf16.gmra.mrb[0].mxu0 %v5981
  %v6024 = vpop.f32.mrb[0].mxu0
  %v6025 = vadd.f32 0.0, %v6024
  %v6026 = vpop.f32.mrb[0].mxu0
  %v6027 = vadd.f32 0.0, %v6026
  %v6028 = vpop.f32.mrb[0].mxu0
  %v6029 = vpop.f32.mrb[0].mxu0
  %6030 = vdwg.mxu0
  %v6031 = vpack.c.bf16 %v6025, %v6025
  %v6032 = vpack.c.bf16 %v6027, %v6027
  %v6033 = vld [vmem:[%s12] sm:$0xff]
  %v6034 = vld [vmem:[%s12 + $0x8] sm:$0xff]
  %v6035 = vld [vmem:[%s12 + $0x10] sm:$0xff]
  %v6036 = vld [vmem:[%s12 + $0x18] sm:$0xff]
  %v6037 = vld [vmem:[%s12 + $0x20] sm:$0xff]
  %v6038 = vld [vmem:[%s12 + $0x28] sm:$0xff]
  %v6039 = vld [vmem:[%s12 + $0x30] sm:$0xff]
  %v6040 = vld [vmem:[%s12 + $0x38] sm:$0xff]
  %v6041 = vld [vmem:[%s12 + $0x40] sm:$0xff]
  %v6042 = vld [vmem:[%s12 + $0x48] sm:$0xff]
  %v6043 = vld [vmem:[%s12 + $0x50] sm:$0xff]
  %v6044 = vld [vmem:[%s12 + $0x58] sm:$0xff]
  %v6045 = vld [vmem:[%s12 + $0x60] sm:$0xff]
  %v6046 = vld [vmem:[%s12 + $0x68] sm:$0xff]
  %v6047 = vld [vmem:[%s12 + $0x70] sm:$0xff]
  %v6048 = vld [vmem:[%s12 + $0x78] sm:$0xff]
  %v6049 = vld [vmem:[%s12 + $0x80] sm:$0xff]
  %v6050 = vld [vmem:[%s12 + $0x88] sm:$0xff]
  %v6051 = vld [vmem:[%s12 + $0x90] sm:$0xff]
  %v6052 = vld [vmem:[%s12 + $0x98] sm:$0xff]
  %v6053 = vld [vmem:[%s12 + $0xa0] sm:$0xff]
  %v6054 = vld [vmem:[%s12 + $0xa8] sm:$0xff]
  %v6055 = vld [vmem:[%s12 + $0xb0] sm:$0xff]
  %v6056 = vld [vmem:[%s12 + $0xb8] sm:$0xff]
  %v6057 = vld [vmem:[%s12 + $0xc0] sm:$0xff]
  %v6058 = vld [vmem:[%s12 + $0xc8] sm:$0xff]
  %v6059 = vld [vmem:[%s12 + $0xd0] sm:$0xff]
  %v6060 = vld [vmem:[%s12 + $0xd8] sm:$0xff]
  %v6061 = vld [vmem:[%s12 + $0xe0] sm:$0xff]
  %v6062 = vld [vmem:[%s12 + $0xe8] sm:$0xff]
  %v6063 = vld [vmem:[%s12 + $0xf0] sm:$0xff]
  %v6064 = vld [vmem:[%s12 + $0xf8] sm:$0xff]
  %v6065 = vld [vmem:[%s12 + $0x100] sm:$0xff]
  %v6066 = vld [vmem:[%s12 + $0x108] sm:$0xff]
  %v6067 = vld [vmem:[%s12 + $0x110] sm:$0xff]
  %v6068 = vld [vmem:[%s12 + $0x118] sm:$0xff]
  %v6069 = vld [vmem:[%s12 + $0x120] sm:$0xff]
  %v6070 = vld [vmem:[%s12 + $0x128] sm:$0xff]
  %v6071 = vld [vmem:[%s12 + $0x130] sm:$0xff]
  %v6072 = vld [vmem:[%s12 + $0x138] sm:$0xff]
  %v6073 = vld [vmem:[%s12 + $0x140] sm:$0xff]
  %v6074 = vld [vmem:[%s12 + $0x148] sm:$0xff]
  %v6075 = vld [vmem:[%s12 + $0x150] sm:$0xff]
  %v6076 = vld [vmem:[%s12 + $0x158] sm:$0xff]
  %v6077 = vld [vmem:[%s12 + $0x160] sm:$0xff]
  %v6078 = vld [vmem:[%s12 + $0x168] sm:$0xff]
  %v6079 = vld [vmem:[%s12 + $0x170] sm:$0xff]
  %v6080 = vld [vmem:[%s12 + $0x178] sm:$0xff]
  %v6081 = vld [vmem:[%s12 + $0x180] sm:$0xff]
  %v6082 = vld [vmem:[%s12 + $0x188] sm:$0xff]
  %v6083 = vld [vmem:[%s12 + $0x190] sm:$0xff]
  %v6084 = vld [vmem:[%s12 + $0x198] sm:$0xff]
  %v6085 = vld [vmem:[%s12 + $0x1a0] sm:$0xff]
  %v6086 = vld [vmem:[%s12 + $0x1a8] sm:$0xff]
  %v6087 = vld [vmem:[%s12 + $0x1b0] sm:$0xff]
  %v6088 = vld [vmem:[%s12 + $0x1b8] sm:$0xff]
  %v6089 = vld [vmem:[%s12 + $0x1c0] sm:$0xff]
  %v6090 = vld [vmem:[%s12 + $0x1c8] sm:$0xff]
  %v6091 = vld [vmem:[%s12 + $0x1d0] sm:$0xff]
  %v6092 = vld [vmem:[%s12 + $0x1d8] sm:$0xff]
  %v6093 = vld [vmem:[%s12 + $0x1e0] sm:$0xff]
  %v6094 = vld [vmem:[%s12 + $0x1e8] sm:$0xff]
  %v6095 = vld [vmem:[%s12 + $0x1f0] sm:$0xff]
  %v6096 = vld [vmem:[%s12 + $0x1f8] sm:$0xff]
  %s6097 = scalar_lea.vmem %s11, 1
  %v6098 = vld [vmem:[%s6097] sm:$0x1]
  %v6100 = vsel %vm5979, %v6098, 0
  %6102 = vmatprep.subr.bf16.mxu0 %v5988
  %6103 = vmatpush1.bf16.msra.mxu0 %v5985
  %6104 = vmatprep.subr.bf16.mxu0 0
  %6105 = vmatpush1.bf16.msra.mxu0 0
  %6106 = vmatprep.subr.bf16.mxu0 0
  %6107 = vmatpush1.bf16.msra.mxu0 0
  %6108 = vmatprep.subr.bf16.mxu0 0
  %6109 = vmatpush1.bf16.msra.mxu0 0
  %6110 = vmatprep.subr.bf16.mxu0 0
  %6111 = vmatpush1.bf16.msra.mxu0 0
  %6112 = vmatprep.subr.bf16.mxu0 0
  %6113 = vmatpush1.bf16.msra.mxu0 0
  %6114 = vmatprep.subr.bf16.mxu0 0
  %6115 = vmatpush1.bf16.msra.mxu0 0
  %6116 = vmatprep.subr.bf16.mxu0 0
  %6117 = vmatpush1.bf16.msra.mxu0 0
  %6118 = vmatprep.subr.bf16.mxu0 0
  %6119 = vmatpush1.bf16.msra.mxu0 0
  %6120 = vmatprep.subr.bf16.mxu0 0
  %6121 = vmatpush1.bf16.msra.mxu0 0
  %6122 = vmatprep.subr.bf16.mxu0 0
  %6123 = vmatpush1.bf16.msra.mxu0 0
  %6124 = vmatprep.subr.bf16.mxu0 0
  %6125 = vmatpush1.bf16.msra.mxu0 0
  %6126 = vmatprep.subr.bf16.mxu0 0
  %6127 = vmatpush1.bf16.msra.mxu0 0
  %6128 = vmatprep.subr.bf16.mxu0 0
  %6129 = vmatpush1.bf16.msra.mxu0 0
  %6130 = vmatprep.subr.bf16.mxu0 0
  %6131 = vmatpush1.bf16.msra.mxu0 0
  %6132 = vmatprep.subr.bf16.mxu0 0
  %6133 = vmatpush1.bf16.msra.mxu0 0
  %6134 = vmatprep.mubr.bf16.mxu0 0
  %6135 = vmatmul.mubr.bf16.gmra.mrb[0].mxu0 %v6100
  %v6136 = vpop.f32.mrb[0].mxu0
  %v6137 = vadd.f32 0.0, %v6136
  %v6138 = vpop.f32.mrb[0].mxu0
  %v6139 = vadd.f32 0.0, %v6138
  %v6140 = vpop.f32.mrb[0].mxu0
  %v6141 = vpop.f32.mrb[0].mxu0
  %6142 = vdwg.mxu0
  %v6143 = vpack.c.bf16 %v6137, %v6137
  %v6144 = vpack.c.bf16 %v6139, %v6139
  %s6145 = scalar_lea.vmem %s12, 512
  %v6146 = vld [vmem:[%s6145] sm:$0xff]
  %v6147 = vld [vmem:[%s6145 + $0x8] sm:$0xff]
  %v6148 = vld [vmem:[%s6145 + $0x10] sm:$0xff]
  %v6149 = vld [vmem:[%s6145 + $0x18] sm:$0xff]
  %v6150 = vld [vmem:[%s6145 + $0x20] sm:$0xff]
  %v6151 = vld [vmem:[%s6145 + $0x28] sm:$0xff]
  %v6152 = vld [vmem:[%s6145 + $0x30] sm:$0xff]
  %v6153 = vld [vmem:[%s6145 + $0x38] sm:$0xff]
  %v6154 = vld [vmem:[%s6145 + $0x40] sm:$0xff]
  %v6155 = vld [vmem:[%s6145 + $0x48] sm:$0xff]
  %v6156 = vld [vmem:[%s6145 + $0x50] sm:$0xff]
  %v6157 = vld [vmem:[%s6145 + $0x58] sm:$0xff]
  %v6158 = vld [vmem:[%s6145 + $0x60] sm:$0xff]
  %v6159 = vld [vmem:[%s6145 + $0x68] sm:$0xff]
  %v6160 = vld [vmem:[%s6145 + $0x70] sm:$0xff]
  %v6161 = vld [vmem:[%s6145 + $0x78] sm:$0xff]
  %v6162 = vld [vmem:[%s6145 + $0x80] sm:$0xff]
  %v6163 = vld [vmem:[%s6145 + $0x88] sm:$0xff]
  %v6164 = vld [vmem:[%s6145 + $0x90] sm:$0xff]
  %v6165 = vld [vmem:[%s6145 + $0x98] sm:$0xff]
  %v6166 = vld [vmem:[%s6145 + $0xa0] sm:$0xff]
  %v6167 = vld [vmem:[%s6145 + $0xa8] sm:$0xff]
  %v6168 = vld [vmem:[%s6145 + $0xb0] sm:$0xff]
  %v6169 = vld [vmem:[%s6145 + $0xb8] sm:$0xff]
  %v6170 = vld [vmem:[%s6145 + $0xc0] sm:$0xff]
  %v6171 = vld [vmem:[%s6145 + $0xc8] sm:$0xff]
  %v6172 = vld [vmem:[%s6145 + $0xd0] sm:$0xff]
  %v6173 = vld [vmem:[%s6145 + $0xd8] sm:$0xff]
  %v6174 = vld [vmem:[%s6145 + $0xe0] sm:$0xff]
  %v6175 = vld [vmem:[%s6145 + $0xe8] sm:$0xff]
  %v6176 = vld [vmem:[%s6145 + $0xf0] sm:$0xff]
  %v6177 = vld [vmem:[%s6145 + $0xf8] sm:$0xff]
  %v6178 = vld [vmem:[%s6145 + $0x100] sm:$0xff]
  %v6179 = vld [vmem:[%s6145 + $0x108] sm:$0xff]
  %v6180 = vld [vmem:[%s6145 + $0x110] sm:$0xff]
  %v6181 = vld [vmem:[%s6145 + $0x118] sm:$0xff]
  %v6182 = vld [vmem:[%s6145 + $0x120] sm:$0xff]
  %v6183 = vld [vmem:[%s6145 + $0x128] sm:$0xff]
  %v6184 = vld [vmem:[%s6145 + $0x130] sm:$0xff]
  %v6185 = vld [vmem:[%s6145 + $0x138] sm:$0xff]
  %v6186 = vld [vmem:[%s6145 + $0x140] sm:$0xff]
  %v6187 = vld [vmem:[%s6145 + $0x148] sm:$0xff]
  %v6188 = vld [vmem:[%s6145 + $0x150] sm:$0xff]
  %v6189 = vld [vmem:[%s6145 + $0x158] sm:$0xff]
  %v6190 = vld [vmem:[%s6145 + $0x160] sm:$0xff]
  %v6191 = vld [vmem:[%s6145 + $0x168] sm:$0xff]
  %v6192 = vld [vmem:[%s6145 + $0x170] sm:$0xff]
  %v6193 = vld [vmem:[%s6145 + $0x178] sm:$0xff]
  %v6194 = vld [vmem:[%s6145 + $0x180] sm:$0xff]
  %v6195 = vld [vmem:[%s6145 + $0x188] sm:$0xff]
  %v6196 = vld [vmem:[%s6145 + $0x190] sm:$0xff]
  %v6197 = vld [vmem:[%s6145 + $0x198] sm:$0xff]
  %v6198 = vld [vmem:[%s6145 + $0x1a0] sm:$0xff]
  %v6199 = vld [vmem:[%s6145 + $0x1a8] sm:$0xff]
  %v6200 = vld [vmem:[%s6145 + $0x1b0] sm:$0xff]
  %v6201 = vld [vmem:[%s6145 + $0x1b8] sm:$0xff]
  %v6202 = vld [vmem:[%s6145 + $0x1c0] sm:$0xff]
  %v6203 = vld [vmem:[%s6145 + $0x1c8] sm:$0xff]
  %v6204 = vld [vmem:[%s6145 + $0x1d0] sm:$0xff]
  %v6205 = vld [vmem:[%s6145 + $0x1d8] sm:$0xff]
  %v6206 = vld [vmem:[%s6145 + $0x1e0] sm:$0xff]
  %v6207 = vld [vmem:[%s6145 + $0x1e8] sm:$0xff]
  %v6208 = vld [vmem:[%s6145 + $0x1f0] sm:$0xff]
  %v6209 = vld [vmem:[%s6145 + $0x1f8] sm:$0xff]
  %v6274 = vunpack.c.l.b16 %v6146
  %v6275 = vunpack.c.h.b16 %v6146
  %v6276 = vunpack.c.l.b16 %v6147
  %v6277 = vunpack.c.h.b16 %v6147
  %v6278 = vunpack.c.l.b16 %v6148
  %v6279 = vunpack.c.h.b16 %v6148
  %v6280 = vunpack.c.l.b16 %v6149
  %v6281 = vunpack.c.h.b16 %v6149
  %v6282 = vunpack.c.l.b16 %v6150
  %v6283 = vunpack.c.h.b16 %v6150
  %v6284 = vunpack.c.l.b16 %v6151
  %v6285 = vunpack.c.h.b16 %v6151
  %v6286 = vunpack.c.l.b16 %v6152
  %v6287 = vunpack.c.h.b16 %v6152
  %v6288 = vunpack.c.l.b16 %v6153
  %v6289 = vunpack.c.h.b16 %v6153
  %v6290 = vunpack.c.l.b16 %v6154
  %v6291 = vunpack.c.h.b16 %v6154
  %v6292 = vunpack.c.l.b16 %v6155
  %v6293 = vunpack.c.h.b16 %v6155
  %v6294 = vunpack.c.l.b16 %v6156
  %v6295 = vunpack.c.h.b16 %v6156
  %v6296 = vunpack.c.l.b16 %v6157
  %v6297 = vunpack.c.h.b16 %v6157
  %v6298 = vunpack.c.l.b16 %v6158
  %v6299 = vunpack.c.h.b16 %v6158
  %v6300 = vunpack.c.l.b16 %v6159
  %v6301 = vunpack.c.h.b16 %v6159
  %v6302 = vunpack.c.l.b16 %v6160
  %v6303 = vunpack.c.h.b16 %v6160
  %v6304 = vunpack.c.l.b16 %v6161
  %v6305 = vunpack.c.h.b16 %v6161
  %v6306 = vunpack.c.l.b16 %v6162
  %v6307 = vunpack.c.h.b16 %v6162
  %v6308 = vunpack.c.l.b16 %v6163
  %v6309 = vunpack.c.h.b16 %v6163
  %v6310 = vunpack.c.l.b16 %v6164
  %v6311 = vunpack.c.h.b16 %v6164
  %v6312 = vunpack.c.l.b16 %v6165
  %v6313 = vunpack.c.h.b16 %v6165
  %v6314 = vunpack.c.l.b16 %v6166
  %v6315 = vunpack.c.h.b16 %v6166
  %v6316 = vunpack.c.l.b16 %v6167
  %v6317 = vunpack.c.h.b16 %v6167
  %v6318 = vunpack.c.l.b16 %v6168
  %v6319 = vunpack.c.h.b16 %v6168
  %v6320 = vunpack.c.l.b16 %v6169
  %v6321 = vunpack.c.h.b16 %v6169
  %v6322 = vunpack.c.l.b16 %v6170
  %v6323 = vunpack.c.h.b16 %v6170
  %v6324 = vunpack.c.l.b16 %v6171
  %v6325 = vunpack.c.h.b16 %v6171
  %v6326 = vunpack.c.l.b16 %v6172
  %v6327 = vunpack.c.h.b16 %v6172
  %v6328 = vunpack.c.l.b16 %v6173
  %v6329 = vunpack.c.h.b16 %v6173
  %v6330 = vunpack.c.l.b16 %v6174
  %v6331 = vunpack.c.h.b16 %v6174
  %v6332 = vunpack.c.l.b16 %v6175
  %v6333 = vunpack.c.h.b16 %v6175
  %v6334 = vunpack.c.l.b16 %v6176
  %v6335 = vunpack.c.h.b16 %v6176
  %v6336 = vunpack.c.l.b16 %v6177
  %v6337 = vunpack.c.h.b16 %v6177
  %v6338 = vunpack.c.l.b16 %v6178
  %v6339 = vunpack.c.h.b16 %v6178
  %v6340 = vunpack.c.l.b16 %v6179
  %v6341 = vunpack.c.h.b16 %v6179
  %v6342 = vunpack.c.l.b16 %v6180
  %v6343 = vunpack.c.h.b16 %v6180
  %v6344 = vunpack.c.l.b16 %v6181
  %v6345 = vunpack.c.h.b16 %v6181
  %v6346 = vunpack.c.l.b16 %v6182
  %v6347 = vunpack.c.h.b16 %v6182
  %v6348 = vunpack.c.l.b16 %v6183
  %v6349 = vunpack.c.h.b16 %v6183
  %v6350 = vunpack.c.l.b16 %v6184
  %v6351 = vunpack.c.h.b16 %v6184
  %v6352 = vunpack.c.l.b16 %v6185
  %v6353 = vunpack.c.h.b16 %v6185
  %v6354 = vunpack.c.l.b16 %v6186
  %v6355 = vunpack.c.h.b16 %v6186
  %v6356 = vunpack.c.l.b16 %v6187
  %v6357 = vunpack.c.h.b16 %v6187
  %v6358 = vunpack.c.l.b16 %v6188
  %v6359 = vunpack.c.h.b16 %v6188
  %v6360 = vunpack.c.l.b16 %v6189
  %v6361 = vunpack.c.h.b16 %v6189
  %v6362 = vunpack.c.l.b16 %v6190
  %v6363 = vunpack.c.h.b16 %v6190
  %v6364 = vunpack.c.l.b16 %v6191
  %v6365 = vunpack.c.h.b16 %v6191
  %v6366 = vunpack.c.l.b16 %v6192
  %v6367 = vunpack.c.h.b16 %v6192
  %v6368 = vunpack.c.l.b16 %v6193
  %v6369 = vunpack.c.h.b16 %v6193
  %v6370 = vunpack.c.l.b16 %v6194
  %v6371 = vunpack.c.h.b16 %v6194
  %v6372 = vunpack.c.l.b16 %v6195
  %v6373 = vunpack.c.h.b16 %v6195
  %v6374 = vunpack.c.l.b16 %v6196
  %v6375 = vunpack.c.h.b16 %v6196
  %v6376 = vunpack.c.l.b16 %v6197
  %v6377 = vunpack.c.h.b16 %v6197
  %v6378 = vunpack.c.l.b16 %v6198
  %v6379 = vunpack.c.h.b16 %v6198
  %v6380 = vunpack.c.l.b16 %v6199
  %v6381 = vunpack.c.h.b16 %v6199
  %v6382 = vunpack.c.l.b16 %v6200
  %v6383 = vunpack.c.h.b16 %v6200
  %v6384 = vunpack.c.l.b16 %v6201
  %v6385 = vunpack.c.h.b16 %v6201
  %v6386 = vunpack.c.l.b16 %v6202
  %v6387 = vunpack.c.h.b16 %v6202
  %v6388 = vunpack.c.l.b16 %v6203
  %v6389 = vunpack.c.h.b16 %v6203
  %v6390 = vunpack.c.l.b16 %v6204
  %v6391 = vunpack.c.h.b16 %v6204
  %v6392 = vunpack.c.l.b16 %v6205
  %v6393 = vunpack.c.h.b16 %v6205
  %v6394 = vunpack.c.l.b16 %v6206
  %v6395 = vunpack.c.h.b16 %v6206
  %v6396 = vunpack.c.l.b16 %v6207
  %v6397 = vunpack.c.h.b16 %v6207
  %v6398 = vunpack.c.l.b16 %v6208
  %v6399 = vunpack.c.h.b16 %v6208
  %v6400 = vunpack.c.l.b16 %v6209
  %v6401 = vunpack.c.h.b16 %v6209
  %v6402 = vpack.c.b16 %v6278, %v6274
  %v6403 = vpack.c.b16 %v6279, %v6275
  %v6404 = vpack.c.b16 %v6280, %v6276
  %v6405 = vpack.c.b16 %v6281, %v6277
  %v6406 = vpack.c.b16 %v6286, %v6282
  %v6407 = vpack.c.b16 %v6287, %v6283
  %v6408 = vpack.c.b16 %v6288, %v6284
  %v6409 = vpack.c.b16 %v6289, %v6285
  %v6410 = vpack.c.b16 %v6294, %v6290
  %v6411 = vpack.c.b16 %v6295, %v6291
  %v6412 = vpack.c.b16 %v6296, %v6292
  %v6413 = vpack.c.b16 %v6297, %v6293
  %v6414 = vpack.c.b16 %v6302, %v6298
  %v6415 = vpack.c.b16 %v6303, %v6299
  %v6416 = vpack.c.b16 %v6304, %v6300
  %v6417 = vpack.c.b16 %v6305, %v6301
  %v6418 = vpack.c.b16 %v6310, %v6306
  %v6419 = vpack.c.b16 %v6311, %v6307
  %v6420 = vpack.c.b16 %v6312, %v6308
  %v6421 = vpack.c.b16 %v6313, %v6309
  %v6422 = vpack.c.b16 %v6318, %v6314
  %v6423 = vpack.c.b16 %v6319, %v6315
  %v6424 = vpack.c.b16 %v6320, %v6316
  %v6425 = vpack.c.b16 %v6321, %v6317
  %v6426 = vpack.c.b16 %v6326, %v6322
  %v6427 = vpack.c.b16 %v6327, %v6323
  %v6428 = vpack.c.b16 %v6328, %v6324
  %v6429 = vpack.c.b16 %v6329, %v6325
  %v6430 = vpack.c.b16 %v6334, %v6330
  %v6431 = vpack.c.b16 %v6335, %v6331
  %v6432 = vpack.c.b16 %v6336, %v6332
  %v6433 = vpack.c.b16 %v6337, %v6333
  %v6434 = vpack.c.b16 %v6342, %v6338
  %v6435 = vpack.c.b16 %v6343, %v6339
  %v6436 = vpack.c.b16 %v6344, %v6340
  %v6437 = vpack.c.b16 %v6345, %v6341
  %v6438 = vpack.c.b16 %v6350, %v6346
  %v6439 = vpack.c.b16 %v6351, %v6347
  %v6440 = vpack.c.b16 %v6352, %v6348
  %v6441 = vpack.c.b16 %v6353, %v6349
  %v6442 = vpack.c.b16 %v6358, %v6354
  %v6443 = vpack.c.b16 %v6359, %v6355
  %v6444 = vpack.c.b16 %v6360, %v6356
  %v6445 = vpack.c.b16 %v6361, %v6357
  %v6446 = vpack.c.b16 %v6366, %v6362
  %v6447 = vpack.c.b16 %v6367, %v6363
  %v6448 = vpack.c.b16 %v6368, %v6364
  %v6449 = vpack.c.b16 %v6369, %v6365
  %v6450 = vpack.c.b16 %v6374, %v6370
  %v6451 = vpack.c.b16 %v6375, %v6371
  %v6452 = vpack.c.b16 %v6376, %v6372
  %v6453 = vpack.c.b16 %v6377, %v6373
  %v6454 = vpack.c.b16 %v6382, %v6378
  %v6455 = vpack.c.b16 %v6383, %v6379
  %v6456 = vpack.c.b16 %v6384, %v6380
  %v6457 = vpack.c.b16 %v6385, %v6381
  %v6458 = vpack.c.b16 %v6390, %v6386
  %v6459 = vpack.c.b16 %v6391, %v6387
  %v6460 = vpack.c.b16 %v6392, %v6388
  %v6461 = vpack.c.b16 %v6393, %v6389
  %v6462 = vpack.c.b16 %v6398, %v6394
  %v6463 = vpack.c.b16 %v6399, %v6395
  %v6464 = vpack.c.b16 %v6400, %v6396
  %v6465 = vpack.c.b16 %v6401, %v6397
  %6530 = vmatprep.subr.bf16.mxu0 %v6403
  %6531 = vmatpush1.bf16.msra.mxu0 %v6402
  %6532 = vmatprep.subr.bf16.mxu0 %v6407
  %6533 = vmatpush1.bf16.msra.mxu0 %v6406
  %6534 = vmatprep.subr.bf16.mxu0 %v6411
  %6535 = vmatpush1.bf16.msra.mxu0 %v6410
  %6536 = vmatprep.subr.bf16.mxu0 %v6415
  %6537 = vmatpush1.bf16.msra.mxu0 %v6414
  %6538 = vmatprep.subr.bf16.mxu0 %v6419
  %6539 = vmatpush1.bf16.msra.mxu0 %v6418
  %6540 = vmatprep.subr.bf16.mxu0 %v6423
  %6541 = vmatpush1.bf16.msra.mxu0 %v6422
  %6542 = vmatprep.subr.bf16.mxu0 %v6427
  %6543 = vmatpush1.bf16.msra.mxu0 %v6426
  %6544 = vmatprep.subr.bf16.mxu0 %v6431
  %6545 = vmatpush1.bf16.msra.mxu0 %v6430
  %6546 = vmatprep.subr.bf16.mxu0 %v6435
  %6547 = vmatpush1.bf16.msra.mxu0 %v6434
  %6548 = vmatprep.subr.bf16.mxu0 %v6439
  %6549 = vmatpush1.bf16.msra.mxu0 %v6438
  %6550 = vmatprep.subr.bf16.mxu0 %v6443
  %6551 = vmatpush1.bf16.msra.mxu0 %v6442
  %6552 = vmatprep.subr.bf16.mxu0 %v6447
  %6553 = vmatpush1.bf16.msra.mxu0 %v6446
  %6554 = vmatprep.subr.bf16.mxu0 %v6451
  %6555 = vmatpush1.bf16.msra.mxu0 %v6450
  %6556 = vmatprep.subr.bf16.mxu0 %v6455
  %6557 = vmatpush1.bf16.msra.mxu0 %v6454
  %6558 = vmatprep.subr.bf16.mxu0 %v6459
  %6559 = vmatpush1.bf16.msra.mxu0 %v6458
  %6560 = vmatprep.subr.bf16.mxu0 %v6463
  %6561 = vmatpush1.bf16.msra.mxu0 %v6462
  %6562 = vmatprep.mubr.bf16.mxu0 %v6144
  %6563 = vmatmul.mubr.bf16.gmra.mrb[0].mxu0 %v6143
  %v6564 = vpop.f32.mrb[0].mxu0
  %v6565 = vadd.f32 0.0, %v6564
  %v6566 = vpop.f32.mrb[0].mxu0
  %v6567 = vadd.f32 0.0, %v6566
  %v6568 = vpop.f32.mrb[0].mxu0
  %v6569 = vpop.f32.mrb[0].mxu0
  %6570 = vdwg.mxu0
  %6571 = vmatprep.subr.bf16.mxu0 %v6405
  %6572 = vmatpush1.bf16.msra.mxu0 %v6404
  %6573 = vmatprep.subr.bf16.mxu0 %v6409
  %6574 = vmatpush1.bf16.msra.mxu0 %v6408
  %6575 = vmatprep.subr.bf16.mxu0 %v6413
  %6576 = vmatpush1.bf16.msra.mxu0 %v6412
  %6577 = vmatprep.subr.bf16.mxu0 %v6417
  %6578 = vmatpush1.bf16.msra.mxu0 %v6416
  %6579 = vmatprep.subr.bf16.mxu0 %v6421
  %6580 = vmatpush1.bf16.msra.mxu0 %v6420
  %6581 = vmatprep.subr.bf16.mxu0 %v6425
  %6582 = vmatpush1.bf16.msra.mxu0 %v6424
  %6583 = vmatprep.subr.bf16.mxu0 %v6429
  %6584 = vmatpush1.bf16.msra.mxu0 %v6428
  %6585 = vmatprep.subr.bf16.mxu0 %v6433
  %6586 = vmatpush1.bf16.msra.mxu0 %v6432
  %6587 = vmatprep.subr.bf16.mxu0 %v6437
  %6588 = vmatpush1.bf16.msra.mxu0 %v6436
  %6589 = vmatprep.subr.bf16.mxu0 %v6441
  %6590 = vmatpush1.bf16.msra.mxu0 %v6440
  %6591 = vmatprep.subr.bf16.mxu0 %v6445
  %6592 = vmatpush1.bf16.msra.mxu0 %v6444
  %6593 = vmatprep.subr.bf16.mxu0 %v6449
  %6594 = vmatpush1.bf16.msra.mxu0 %v6448
  %6595 = vmatprep.subr.bf16.mxu0 %v6453
  %6596 = vmatpush1.bf16.msra.mxu0 %v6452
  %6597 = vmatprep.subr.bf16.mxu0 %v6457
  %6598 = vmatpush1.bf16.msra.mxu0 %v6456
  %6599 = vmatprep.subr.bf16.mxu0 %v6461
  %6600 = vmatpush1.bf16.msra.mxu0 %v6460
  %6601 = vmatprep.subr.bf16.mxu0 %v6465
  %6602 = vmatpush1.bf16.msra.mxu0 %v6464
  %6603 = vmatprep.mubr.bf16.mxu0 %v6144
  %6604 = vmatmul.mubr.bf16.gmra.mrb[0].mxu0 %v6143
  %v6605 = vpop.f32.mrb[0].mxu0
  %v6606 = vadd.f32 0.0, %v6605
  %v6607 = vpop.f32.mrb[0].mxu0
  %v6608 = vadd.f32 0.0, %v6607
  %v6609 = vpop.f32.mrb[0].mxu0
  %v6610 = vpop.f32.mrb[0].mxu0
  %6611 = vdwg.mxu0
  %v6676 = vunpack.c.l.b16 %v6033
  %v6677 = vunpack.c.h.b16 %v6033
  %v6678 = vunpack.c.l.b16 %v6034
  %v6679 = vunpack.c.h.b16 %v6034
  %v6680 = vunpack.c.l.b16 %v6035
  %v6681 = vunpack.c.h.b16 %v6035
  %v6682 = vunpack.c.l.b16 %v6036
  %v6683 = vunpack.c.h.b16 %v6036
  %v6684 = vunpack.c.l.b16 %v6037
  %v6685 = vunpack.c.h.b16 %v6037
  %v6686 = vunpack.c.l.b16 %v6038
  %v6687 = vunpack.c.h.b16 %v6038
  %v6688 = vunpack.c.l.b16 %v6039
  %v6689 = vunpack.c.h.b16 %v6039
  %v6690 = vunpack.c.l.b16 %v6040
  %v6691 = vunpack.c.h.b16 %v6040
  %v6692 = vunpack.c.l.b16 %v6041
  %v6693 = vunpack.c.h.b16 %v6041
  %v6694 = vunpack.c.l.b16 %v6042
  %v6695 = vunpack.c.h.b16 %v6042
  %v6696 = vunpack.c.l.b16 %v6043
  %v6697 = vunpack.c.h.b16 %v6043
  %v6698 = vunpack.c.l.b16 %v6044
  %v6699 = vunpack.c.h.b16 %v6044
  %v6700 = vunpack.c.l.b16 %v6045
  %v6701 = vunpack.c.h.b16 %v6045
  %v6702 = vunpack.c.l.b16 %v6046
  %v6703 = vunpack.c.h.b16 %v6046
  %v6704 = vunpack.c.l.b16 %v6047
  %v6705 = vunpack.c.h.b16 %v6047
  %v6706 = vunpack.c.l.b16 %v6048
  %v6707 = vunpack.c.h.b16 %v6048
  %v6708 = vunpack.c.l.b16 %v6049
  %v6709 = vunpack.c.h.b16 %v6049
  %v6710 = vunpack.c.l.b16 %v6050
  %v6711 = vunpack.c.h.b16 %v6050
  %v6712 = vunpack.c.l.b16 %v6051
  %v6713 = vunpack.c.h.b16 %v6051
  %v6714 = vunpack.c.l.b16 %v6052
  %v6715 = vunpack.c.h.b16 %v6052
  %v6716 = vunpack.c.l.b16 %v6053
  %v6717 = vunpack.c.h.b16 %v6053
  %v6718 = vunpack.c.l.b16 %v6054
  %v6719 = vunpack.c.h.b16 %v6054
  %v6720 = vunpack.c.l.b16 %v6055
  %v6721 = vunpack.c.h.b16 %v6055
  %v6722 = vunpack.c.l.b16 %v6056
  %v6723 = vunpack.c.h.b16 %v6056
  %v6724 = vunpack.c.l.b16 %v6057
  %v6725 = vunpack.c.h.b16 %v6057
  %v6726 = vunpack.c.l.b16 %v6058
  %v6727 = vunpack.c.h.b16 %v6058
  %v6728 = vunpack.c.l.b16 %v6059
  %v6729 = vunpack.c.h.b16 %v6059
  %v6730 = vunpack.c.l.b16 %v6060
  %v6731 = vunpack.c.h.b16 %v6060
  %v6732 = vunpack.c.l.b16 %v6061
  %v6733 = vunpack.c.h.b16 %v6061
  %v6734 = vunpack.c.l.b16 %v6062
  %v6735 = vunpack.c.h.b16 %v6062
  %v6736 = vunpack.c.l.b16 %v6063
  %v6737 = vunpack.c.h.b16 %v6063
  %v6738 = vunpack.c.l.b16 %v6064
  %v6739 = vunpack.c.h.b16 %v6064
  %v6740 = vunpack.c.l.b16 %v6065
  %v6741 = vunpack.c.h.b16 %v6065
  %v6742 = vunpack.c.l.b16 %v6066
  %v6743 = vunpack.c.h.b16 %v6066
  %v6744 = vunpack.c.l.b16 %v6067
  %v6745 = vunpack.c.h.b16 %v6067
  %v6746 = vunpack.c.l.b16 %v6068
  %v6747 = vunpack.c.h.b16 %v6068
  %v6748 = vunpack.c.l.b16 %v6069
  %v6749 = vunpack.c.h.b16 %v6069
  %v6750 = vunpack.c.l.b16 %v6070
  %v6751 = vunpack.c.h.b16 %v6070
  %v6752 = vunpack.c.l.b16 %v6071
  %v6753 = vunpack.c.h.b16 %v6071
  %v6754 = vunpack.c.l.b16 %v6072
  %v6755 = vunpack.c.h.b16 %v6072
  %v6756 = vunpack.c.l.b16 %v6073
  %v6757 = vunpack.c.h.b16 %v6073
  %v6758 = vunpack.c.l.b16 %v6074
  %v6759 = vunpack.c.h.b16 %v6074
  %v6760 = vunpack.c.l.b16 %v6075
  %v6761 = vunpack.c.h.b16 %v6075
  %v6762 = vunpack.c.l.b16 %v6076
  %v6763 = vunpack.c.h.b16 %v6076
  %v6764 = vunpack.c.l.b16 %v6077
  %v6765 = vunpack.c.h.b16 %v6077
  %v6766 = vunpack.c.l.b16 %v6078
  %v6767 = vunpack.c.h.b16 %v6078
  %v6768 = vunpack.c.l.b16 %v6079
  %v6769 = vunpack.c.h.b16 %v6079
  %v6770 = vunpack.c.l.b16 %v6080
  %v6771 = vunpack.c.h.b16 %v6080
  %v6772 = vunpack.c.l.b16 %v6081
  %v6773 = vunpack.c.h.b16 %v6081
  %v6774 = vunpack.c.l.b16 %v6082
  %v6775 = vunpack.c.h.b16 %v6082
  %v6776 = vunpack.c.l.b16 %v6083
  %v6777 = vunpack.c.h.b16 %v6083
  %v6778 = vunpack.c.l.b16 %v6084
  %v6779 = vunpack.c.h.b16 %v6084
  %v6780 = vunpack.c.l.b16 %v6085
  %v6781 = vunpack.c.h.b16 %v6085
  %v6782 = vunpack.c.l.b16 %v6086
  %v6783 = vunpack.c.h.b16 %v6086
  %v6784 = vunpack.c.l.b16 %v6087
  %v6785 = vunpack.c.h.b16 %v6087
  %v6786 = vunpack.c.l.b16 %v6088
  %v6787 = vunpack.c.h.b16 %v6088
  %v6788 = vunpack.c.l.b16 %v6089
  %v6789 = vunpack.c.h.b16 %v6089
  %v6790 = vunpack.c.l.b16 %v6090
  %v6791 = vunpack.c.h.b16 %v6090
  %v6792 = vunpack.c.l.b16 %v6091
  %v6793 = vunpack.c.h.b16 %v6091
  %v6794 = vunpack.c.l.b16 %v6092
  %v6795 = vunpack.c.h.b16 %v6092
  %v6796 = vunpack.c.l.b16 %v6093
  %v6797 = vunpack.c.h.b16 %v6093
  %v6798 = vunpack.c.l.b16 %v6094
  %v6799 = vunpack.c.h.b16 %v6094
  %v6800 = vunpack.c.l.b16 %v6095
  %v6801 = vunpack.c.h.b16 %v6095
  %v6802 = vunpack.c.l.b16 %v6096
  %v6803 = vunpack.c.h.b16 %v6096
  %v6804 = vpack.c.b16 %v6680, %v6676
  %v6805 = vpack.c.b16 %v6681, %v6677
  %v6806 = vpack.c.b16 %v6682, %v6678
  %v6807 = vpack.c.b16 %v6683, %v6679
  %v6808 = vpack.c.b16 %v6688, %v6684
  %v6809 = vpack.c.b16 %v6689, %v6685
  %v6810 = vpack.c.b16 %v6690, %v6686
  %v6811 = vpack.c.b16 %v6691, %v6687
  %v6812 = vpack.c.b16 %v6696, %v6692
  %v6813 = vpack.c.b16 %v6697, %v6693
  %v6814 = vpack.c.b16 %v6698, %v6694
  %v6815 = vpack.c.b16 %v6699, %v6695
  %v6816 = vpack.c.b16 %v6704, %v6700
  %v6817 = vpack.c.b16 %v6705, %v6701
  %v6818 = vpack.c.b16 %v6706, %v6702
  %v6819 = vpack.c.b16 %v6707, %v6703
  %v6820 = vpack.c.b16 %v6712, %v6708
  %v6821 = vpack.c.b16 %v6713, %v6709
  %v6822 = vpack.c.b16 %v6714, %v6710
  %v6823 = vpack.c.b16 %v6715, %v6711
  %v6824 = vpack.c.b16 %v6720, %v6716
  %v6825 = vpack.c.b16 %v6721, %v6717
  %v6826 = vpack.c.b16 %v6722, %v6718
  %v6827 = vpack.c.b16 %v6723, %v6719
  %v6828 = vpack.c.b16 %v6728, %v6724
  %v6829 = vpack.c.b16 %v6729, %v6725
  %v6830 = vpack.c.b16 %v6730, %v6726
  %v6831 = vpack.c.b16 %v6731, %v6727
  %v6832 = vpack.c.b16 %v6736, %v6732
  %v6833 = vpack.c.b16 %v6737, %v6733
  %v6834 = vpack.c.b16 %v6738, %v6734
  %v6835 = vpack.c.b16 %v6739, %v6735
  %v6836 = vpack.c.b16 %v6744, %v6740
  %v6837 = vpack.c.b16 %v6745, %v6741
  %v6838 = vpack.c.b16 %v6746, %v6742
  %v6839 = vpack.c.b16 %v6747, %v6743
  %v6840 = vpack.c.b16 %v6752, %v6748
  %v6841 = vpack.c.b16 %v6753, %v6749
  %v6842 = vpack.c.b16 %v6754, %v6750
  %v6843 = vpack.c.b16 %v6755, %v6751
  %v6844 = vpack.c.b16 %v6760, %v6756
  %v6845 = vpack.c.b16 %v6761, %v6757
  %v6846 = vpack.c.b16 %v6762, %v6758
  %v6847 = vpack.c.b16 %v6763, %v6759
  %v6848 = vpack.c.b16 %v6768, %v6764
  %v6849 = vpack.c.b16 %v6769, %v6765
  %v6850 = vpack.c.b16 %v6770, %v6766
  %v6851 = vpack.c.b16 %v6771, %v6767
  %v6852 = vpack.c.b16 %v6776, %v6772
  %v6853 = vpack.c.b16 %v6777, %v6773
  %v6854 = vpack.c.b16 %v6778, %v6774
  %v6855 = vpack.c.b16 %v6779, %v6775
  %v6856 = vpack.c.b16 %v6784, %v6780
  %v6857 = vpack.c.b16 %v6785, %v6781
  %v6858 = vpack.c.b16 %v6786, %v6782
  %v6859 = vpack.c.b16 %v6787, %v6783
  %v6860 = vpack.c.b16 %v6792, %v6788
  %v6861 = vpack.c.b16 %v6793, %v6789
  %v6862 = vpack.c.b16 %v6794, %v6790
  %v6863 = vpack.c.b16 %v6795, %v6791
  %v6864 = vpack.c.b16 %v6800, %v6796
  %v6865 = vpack.c.b16 %v6801, %v6797
  %v6866 = vpack.c.b16 %v6802, %v6798
  %v6867 = vpack.c.b16 %v6803, %v6799
  %6932 = vmatprep.subr.bf16.mxu0 %v6805
  %6933 = vmatpush1.bf16.msra.mxu0 %v6804
  %6934 = vmatprep.subr.bf16.mxu0 %v6809
  %6935 = vmatpush1.bf16.msra.mxu0 %v6808
  %6936 = vmatprep.subr.bf16.mxu0 %v6813
  %6937 = vmatpush1.bf16.msra.mxu0 %v6812
  %6938 = vmatprep.subr.bf16.mxu0 %v6817
  %6939 = vmatpush1.bf16.msra.mxu0 %v6816
  %6940 = vmatprep.subr.bf16.mxu0 %v6821
  %6941 = vmatpush1.bf16.msra.mxu0 %v6820
  %6942 = vmatprep.subr.bf16.mxu0 %v6825
  %6943 = vmatpush1.bf16.msra.mxu0 %v6824
  %6944 = vmatprep.subr.bf16.mxu0 %v6829
  %6945 = vmatpush1.bf16.msra.mxu0 %v6828
  %6946 = vmatprep.subr.bf16.mxu0 %v6833
  %6947 = vmatpush1.bf16.msra.mxu0 %v6832
  %6948 = vmatprep.subr.bf16.mxu0 %v6837
  %6949 = vmatpush1.bf16.msra.mxu0 %v6836
  %6950 = vmatprep.subr.bf16.mxu0 %v6841
  %6951 = vmatpush1.bf16.msra.mxu0 %v6840
  %6952 = vmatprep.subr.bf16.mxu0 %v6845
  %6953 = vmatpush1.bf16.msra.mxu0 %v6844
  %6954 = vmatprep.subr.bf16.mxu0 %v6849
  %6955 = vmatpush1.bf16.msra.mxu0 %v6848
  %6956 = vmatprep.subr.bf16.mxu0 %v6853
  %6957 = vmatpush1.bf16.msra.mxu0 %v6852
  %6958 = vmatprep.subr.bf16.mxu0 %v6857
  %6959 = vmatpush1.bf16.msra.mxu0 %v6856
  %6960 = vmatprep.subr.bf16.mxu0 %v6861
  %6961 = vmatpush1.bf16.msra.mxu0 %v6860
  %6962 = vmatprep.subr.bf16.mxu0 %v6865
  %6963 = vmatpush1.bf16.msra.mxu0 %v6864
  %6964 = vmatprep.mubr.bf16.mxu0 %v6032
  %6965 = vmatmul.mubr.bf16.gmra.mrb[0].mxu0 %v6031
  %v6966 = vpop.f32.mrb[0].mxu0
  %v6967 = vadd.f32 %v6565, %v6966
  %v6968 = vpop.f32.mrb[0].mxu0
  %v6969 = vadd.f32 %v6567, %v6968
  %v6970 = vpop.f32.mrb[0].mxu0
  %v6971 = vpop.f32.mrb[0].mxu0
  %6972 = vdwg.mxu0
  %6973 = vmatprep.subr.bf16.mxu0 %v6807
  %6974 = vmatpush1.bf16.msra.mxu0 %v6806
  %6975 = vmatprep.subr.bf16.mxu0 %v6811
  %6976 = vmatpush1.bf16.msra.mxu0 %v6810
  %6977 = vmatprep.subr.bf16.mxu0 %v6815
  %6978 = vmatpush1.bf16.msra.mxu0 %v6814
  %6979 = vmatprep.subr.bf16.mxu0 %v6819
  %6980 = vmatpush1.bf16.msra.mxu0 %v6818
  %6981 = vmatprep.subr.bf16.mxu0 %v6823
  %6982 = vmatpush1.bf16.msra.mxu0 %v6822
  %6983 = vmatprep.subr.bf16.mxu0 %v6827
  %6984 = vmatpush1.bf16.msra.mxu0 %v6826
  %6985 = vmatprep.subr.bf16.mxu0 %v6831
  %6986 = vmatpush1.bf16.msra.mxu0 %v6830
  %6987 = vmatprep.subr.bf16.mxu0 %v6835
  %6988 = vmatpush1.bf16.msra.mxu0 %v6834
  %6989 = vmatprep.subr.bf16.mxu0 %v6839
  %6990 = vmatpush1.bf16.msra.mxu0 %v6838
  %6991 = vmatprep.subr.bf16.mxu0 %v6843
  %6992 = vmatpush1.bf16.msra.mxu0 %v6842
  %6993 = vmatprep.subr.bf16.mxu0 %v6847
  %6994 = vmatpush1.bf16.msra.mxu0 %v6846
  %6995 = vmatprep.subr.bf16.mxu0 %v6851
  %6996 = vmatpush1.bf16.msra.mxu0 %v6850
  %6997 = vmatprep.subr.bf16.mxu0 %v6855
  %6998 = vmatpush1.bf16.msra.mxu0 %v6854
  %6999 = vmatprep.subr.bf16.mxu0 %v6859
  %7000 = vmatpush1.bf16.msra.mxu0 %v6858
  %7001 = vmatprep.subr.bf16.mxu0 %v6863
  %7002 = vmatpush1.bf16.msra.mxu0 %v6862
  %7003 = vmatprep.subr.bf16.mxu0 %v6867
  %7004 = vmatpush1.bf16.msra.mxu0 %v6866
  %7005 = vmatprep.mubr.bf16.mxu0 %v6032
  %7006 = vmatmul.mubr.bf16.gmra.mrb[0].mxu0 %v6031
  %v7007 = vpop.f32.mrb[0].mxu0
  %v7008 = vadd.f32 %v6606, %v7007
  %v7009 = vpop.f32.mrb[0].mxu0
  %v7010 = vadd.f32 %v6608, %v7009
  %v7011 = vpop.f32.mrb[0].mxu0
  %v7012 = vpop.f32.mrb[0].mxu0
  %7013 = vdwg.mxu0
  %s7014 = scalar_lea.vmem %s11, 2
  %v7015 = vld [vmem:[%s7014] sm:$0x1]
  %v7017 = vsel %vm5979, %v7015, 0
  %7019 = vmatprep.subr.bf16.mxu0 %v5988
  %7020 = vmatpush1.bf16.msra.mxu0 %v5985
  %7021 = vmatprep.subr.bf16.mxu0 0
  %7022 = vmatpush1.bf16.msra.mxu0 0
  %7023 = vmatprep.subr.bf16.mxu0 0
  %7024 = vmatpush1.bf16.msra.mxu0 0
  %7025 = vmatprep.subr.bf16.mxu0 0
  %7026 = vmatpush1.bf16.msra.mxu0 0
  %7027 = vmatprep.subr.bf16.mxu0 0
  %7028 = vmatpush1.bf16.msra.mxu0 0
  %7029 = vmatprep.subr.bf16.mxu0 0
  %7030 = vmatpush1.bf16.msra.mxu0 0
  %7031 = vmatprep.subr.bf16.mxu0 0
  %7032 = vmatpush1.bf16.msra.mxu0 0
  %7033 = vmatprep.subr.bf16.mxu0 0
  %7034 = vmatpush1.bf16.msra.mxu0 0
  %7035 = vmatprep.subr.bf16.mxu0 0
  %7036 = vmatpush1.bf16.msra.mxu0 0
  %7037 = vmatprep.subr.bf16.mxu0 0
  %7038 = vmatpush1.bf16.msra.mxu0 0
  %7039 = vmatprep.subr.bf16.mxu0 0
  %7040 = vmatpush1.bf16.msra.mxu0 0
  %7041 = vmatprep.subr.bf16.mxu0 0
  %7042 = vmatpush1.bf16.msra.mxu0 0
  %7043 = vmatprep.subr.bf16.mxu0 0
  %7044 = vmatpush1.bf16.msra.mxu0 0
  %7045 = vmatprep.subr.bf16.mxu0 0
  %7046 = vmatpush1.bf16.msra.mxu0 0
  %7047 = vmatprep.subr.bf16.mxu0 0
  %7048 = vmatpush1.bf16.msra.mxu0 0
  %7049 = vmatprep.subr.bf16.mxu0 0
  %7050 = vmatpush1.bf16.msra.mxu0 0
  %7051 = vmatprep.mubr.bf16.mxu0 0
  %7052 = vmatmul.mubr.bf16.gmra.mrb[0].mxu0 %v7017
  %v7053 = vpop.f32.mrb[0].mxu0
  %v7054 = vadd.f32 0.0, %v7053
  %v7055 = vpop.f32.mrb[0].mxu0
  %v7056 = vadd.f32 0.0, %v7055
  %v7057 = vpop.f32.mrb[0].mxu0
  %v7058 = vpop.f32.mrb[0].mxu0
  %7059 = vdwg.mxu0
  %v7060 = vpack.c.bf16 %v7054, %v7054
  %v7061 = vpack.c.bf16 %v7056, %v7056
  %s7062 = scalar_lea.vmem %s12, 1024
  %v7063 = vld [vmem:[%s7062] sm:$0xff]
  %v7064 = vld [vmem:[%s7062 + $0x8] sm:$0xff]
  %v7065 = vld [vmem:[%s7062 + $0x10] sm:$0xff]
  %v7066 = vld [vmem:[%s7062 + $0x18] sm:$0xff]
  %v7067 = vld [vmem:[%s7062 + $0x20] sm:$0xff]
  %v7068 = vld [vmem:[%s7062 + $0x28] sm:$0xff]
  %v7069 = vld [vmem:[%s7062 + $0x30] sm:$0xff]
  %v7070 = vld [vmem:[%s7062 + $0x38] sm:$0xff]
  %v7071 = vld [vmem:[%s7062 + $0x40] sm:$0xff]
  %v7072 = vld [vmem:[%s7062 + $0x48] sm:$0xff]
  %v7073 = vld [vmem:[%s7062 + $0x50] sm:$0xff]
  %v7074 = vld [vmem:[%s7062 + $0x58] sm:$0xff]
  %v7075 = vld [vmem:[%s7062 + $0x60] sm:$0xff]
  %v7076 = vld [vmem:[%s7062 + $0x68] sm:$0xff]
  %v7077 = vld [vmem:[%s7062 + $0x70] sm:$0xff]
  %v7078 = vld [vmem:[%s7062 + $0x78] sm:$0xff]
  %v7079 = vld [vmem:[%s7062 + $0x80] sm:$0xff]
  %v7080 = vld [vmem:[%s7062 + $0x88] sm:$0xff]
  %v7081 = vld [vmem:[%s7062 + $0x90] sm:$0xff]
  %v7082 = vld [vmem:[%s7062 + $0x98] sm:$0xff]
  %v7083 = vld [vmem:[%s7062 + $0xa0] sm:$0xff]
  %v7084 = vld [vmem:[%s7062 + $0xa8] sm:$0xff]
  %v7085 = vld [vmem:[%s7062 + $0xb0] sm:$0xff]
  %v7086 = vld [vmem:[%s7062 + $0xb8] sm:$0xff]
  %v7087 = vld [vmem:[%s7062 + $0xc0] sm:$0xff]
  %v7088 = vld [vmem:[%s7062 + $0xc8] sm:$0xff]
  %v7089 = vld [vmem:[%s7062 + $0xd0] sm:$0xff]
  %v7090 = vld [vmem:[%s7062 + $0xd8] sm:$0xff]
  %v7091 = vld [vmem:[%s7062 + $0xe0] sm:$0xff]
  %v7092 = vld [vmem:[%s7062 + $0xe8] sm:$0xff]
  %v7093 = vld [vmem:[%s7062 + $0xf0] sm:$0xff]
  %v7094 = vld [vmem:[%s7062 + $0xf8] sm:$0xff]
  %v7095 = vld [vmem:[%s7062 + $0x100] sm:$0xff]
  %v7096 = vld [vmem:[%s7062 + $0x108] sm:$0xff]
  %v7097 = vld [vmem:[%s7062 + $0x110] sm:$0xff]
  %v7098 = vld [vmem:[%s7062 + $0x118] sm:$0xff]
  %v7099 = vld [vmem:[%s7062 + $0x120] sm:$0xff]
  %v7100 = vld [vmem:[%s7062 + $0x128] sm:$0xff]
  %v7101 = vld [vmem:[%s7062 + $0x130] sm:$0xff]
  %v7102 = vld [vmem:[%s7062 + $0x138] sm:$0xff]
  %v7103 = vld [vmem:[%s7062 + $0x140] sm:$0xff]
  %v7104 = vld [vmem:[%s7062 + $0x148] sm:$0xff]
  %v7105 = vld [vmem:[%s7062 + $0x150] sm:$0xff]
  %v7106 = vld [vmem:[%s7062 + $0x158] sm:$0xff]
  %v7107 = vld [vmem:[%s7062 + $0x160] sm:$0xff]
  %v7108 = vld [vmem:[%s7062 + $0x168] sm:$0xff]
  %v7109 = vld [vmem:[%s7062 + $0x170] sm:$0xff]
  %v7110 = vld [vmem:[%s7062 + $0x178] sm:$0xff]
  %v7111 = vld [vmem:[%s7062 + $0x180] sm:$0xff]
  %v7112 = vld [vmem:[%s7062 + $0x188] sm:$0xff]
  %v7113 = vld [vmem:[%s7062 + $0x190] sm:$0xff]
  %v7114 = vld [vmem:[%s7062 + $0x198] sm:$0xff]
  %v7115 = vld [vmem:[%s7062 + $0x1a0] sm:$0xff]
  %v7116 = vld [vmem:[%s7062 + $0x1a8] sm:$0xff]
  %v7117 = vld [vmem:[%s7062 + $0x1b0] sm:$0xff]
  %v7118 = vld [vmem:[%s7062 + $0x1b8] sm:$0xff]
  %v7119 = vld [vmem:[%s7062 + $0x1c0] sm:$0xff]
  %v7120 = vld [vmem:[%s7062 + $0x1c8] sm:$0xff]
  %v7121 = vld [vmem:[%s7062 + $0x1d0] sm:$0xff]
  %v7122 = vld [vmem:[%s7062 + $0x1d8] sm:$0xff]
  %v7123 = vld [vmem:[%s7062 + $0x1e0] sm:$0xff]
  %v7124 = vld [vmem:[%s7062 + $0x1e8] sm:$0xff]
  %v7125 = vld [vmem:[%s7062 + $0x1f0] sm:$0xff]
  %v7126 = vld [vmem:[%s7062 + $0x1f8] sm:$0xff]
  %v7191 = vunpack.c.l.b16 %v7063
  %v7192 = vunpack.c.h.b16 %v7063
  %v7193 = vunpack.c.l.b16 %v7064
  %v7194 = vunpack.c.h.b16 %v7064
  %v7195 = vunpack.c.l.b16 %v7065
  %v7196 = vunpack.c.h.b16 %v7065
  %v7197 = vunpack.c.l.b16 %v7066
  %v7198 = vunpack.c.h.b16 %v7066
  %v7199 = vunpack.c.l.b16 %v7067
  %v7200 = vunpack.c.h.b16 %v7067
  %v7201 = vunpack.c.l.b16 %v7068
  %v7202 = vunpack.c.h.b16 %v7068
  %v7203 = vunpack.c.l.b16 %v7069
  %v7204 = vunpack.c.h.b16 %v7069
  %v7205 = vunpack.c.l.b16 %v7070
  %v7206 = vunpack.c.h.b16 %v7070
  %v7207 = vunpack.c.l.b16 %v7071
  %v7208 = vunpack.c.h.b16 %v7071
  %v7209 = vunpack.c.l.b16 %v7072
  %v7210 = vunpack.c.h.b16 %v7072
  %v7211 = vunpack.c.l.b16 %v7073
  %v7212 = vunpack.c.h.b16 %v7073
  %v7213 = vunpack.c.l.b16 %v7074
  %v7214 = vunpack.c.h.b16 %v7074
  %v7215 = vunpack.c.l.b16 %v7075
  %v7216 = vunpack.c.h.b16 %v7075
  %v7217 = vunpack.c.l.b16 %v7076
  %v7218 = vunpack.c.h.b16 %v7076
  %v7219 = vunpack.c.l.b16 %v7077
  %v7220 = vunpack.c.h.b16 %v7077
  %v7221 = vunpack.c.l.b16 %v7078
  %v7222 = vunpack.c.h.b16 %v7078
  %v7223 = vunpack.c.l.b16 %v7079
  %v7224 = vunpack.c.h.b16 %v7079
  %v7225 = vunpack.c.l.b16 %v7080
  %v7226 = vunpack.c.h.b16 %v7080
  %v7227 = vunpack.c.l.b16 %v7081
  %v7228 = vunpack.c.h.b16 %v7081
  %v7229 = vunpack.c.l.b16 %v7082
  %v7230 = vunpack.c.h.b16 %v7082
  %v7231 = vunpack.c.l.b16 %v7083
  %v7232 = vunpack.c.h.b16 %v7083
  %v7233 = vunpack.c.l.b16 %v7084
  %v7234 = vunpack.c.h.b16 %v7084
  %v7235 = vunpack.c.l.b16 %v7085
  %v7236 = vunpack.c.h.b16 %v7085
  %v7237 = vunpack.c.l.b16 %v7086
  %v7238 = vunpack.c.h.b16 %v7086
  %v7239 = vunpack.c.l.b16 %v7087
  %v7240 = vunpack.c.h.b16 %v7087
  %v7241 = vunpack.c.l.b16 %v7088
  %v7242 = vunpack.c.h.b16 %v7088
  %v7243 = vunpack.c.l.b16 %v7089
  %v7244 = vunpack.c.h.b16 %v7089
  %v7245 = vunpack.c.l.b16 %v7090
  %v7246 = vunpack.c.h.b16 %v7090
  %v7247 = vunpack.c.l.b16 %v7091
  %v7248 = vunpack.c.h.b16 %v7091
  %v7249 = vunpack.c.l.b16 %v7092
  %v7250 = vunpack.c.h.b16 %v7092
  %v7251 = vunpack.c.l.b16 %v7093
  %v7252 = vunpack.c.h.b16 %v7093
  %v7253 = vunpack.c.l.b16 %v7094
  %v7254 = vunpack.c.h.b16 %v7094
  %v7255 = vunpack.c.l.b16 %v7095
  %v7256 = vunpack.c.h.b16 %v7095
  %v7257 = vunpack.c.l.b16 %v7096
  %v7258 = vunpack.c.h.b16 %v7096
  %v7259 = vunpack.c.l.b16 %v7097
  %v7260 = vunpack.c.h.b16 %v7097
  %v7261 = vunpack.c.l.b16 %v7098
  %v7262 = vunpack.c.h.b16 %v7098
  %v7263 = vunpack.c.l.b16 %v7099
  %v7264 = vunpack.c.h.b16 %v7099
  %v7265 = vunpack.c.l.b16 %v7100
  %v7266 = vunpack.c.h.b16 %v7100
  %v7267 = vunpack.c.l.b16 %v7101
  %v7268 = vunpack.c.h.b16 %v7101
  %v7269 = vunpack.c.l.b16 %v7102
  %v7270 = vunpack.c.h.b16 %v7102
  %v7271 = vunpack.c.l.b16 %v7103
  %v7272 = vunpack.c.h.b16 %v7103
  %v7273 = vunpack.c.l.b16 %v7104
  %v7274 = vunpack.c.h.b16 %v7104
  %v7275 = vunpack.c.l.b16 %v7105
  %v7276 = vunpack.c.h.b16 %v7105
  %v7277 = vunpack.c.l.b16 %v7106
  %v7278 = vunpack.c.h.b16 %v7106
  %v7279 = vunpack.c.l.b16 %v7107
  %v7280 = vunpack.c.h.b16 %v7107
  %v7281 = vunpack.c.l.b16 %v7108
  %v7282 = vunpack.c.h.b16 %v7108
  %v7283 = vunpack.c.l.b16 %v7109
  %v7284 = vunpack.c.h.b16 %v7109
  %v7285 = vunpack.c.l.b16 %v7110
  %v7286 = vunpack.c.h.b16 %v7110
  %v7287 = vunpack.c.l.b16 %v7111
  %v7288 = vunpack.c.h.b16 %v7111
  %v7289 = vunpack.c.l.b16 %v7112
  %v7290 = vunpack.c.h.b16 %v7112
  %v7291 = vunpack.c.l.b16 %v7113
  %v7292 = vunpack.c.h.b16 %v7113
  %v7293 = vunpack.c.l.b16 %v7114
  %v7294 = vunpack.c.h.b16 %v7114
  %v7295 = vunpack.c.l.b16 %v7115
  %v7296 = vunpack.c.h.b16 %v7115
  %v7297 = vunpack.c.l.b16 %v7116
  %v7298 = vunpack.c.h.b16 %v7116
  %v7299 = vunpack.c.l.b16 %v7117
  %v7300 = vunpack.c.h.b16 %v7117
  %v7301 = vunpack.c.l.b16 %v7118
  %v7302 = vunpack.c.h.b16 %v7118
  %v7303 = vunpack.c.l.b16 %v7119
  %v7304 = vunpack.c.h.b16 %v7119
  %v7305 = vunpack.c.l.b16 %v7120
  %v7306 = vunpack.c.h.b16 %v7120
  %v7307 = vunpack.c.l.b16 %v7121
  %v7308 = vunpack.c.h.b16 %v7121
  %v7309 = vunpack.c.l.b16 %v7122
  %v7310 = vunpack.c.h.b16 %v7122
  %v7311 = vunpack.c.l.b16 %v7123
  %v7312 = vunpack.c.h.b16 %v7123
  %v7313 = vunpack.c.l.b16 %v7124
  %v7314 = vunpack.c.h.b16 %v7124
  %v7315 = vunpack.c.l.b16 %v7125
  %v7316 = vunpack.c.h.b16 %v7125
  %v7317 = vunpack.c.l.b16 %v7126
  %v7318 = vunpack.c.h.b16 %v7126
  %v7319 = vpack.c.b16 %v7195, %v7191
  %v7320 = vpack.c.b16 %v7196, %v7192
  %v7321 = vpack.c.b16 %v7197, %v7193
  %v7322 = vpack.c.b16 %v7198, %v7194
  %v7323 = vpack.c.b16 %v7203, %v7199
  %v7324 = vpack.c.b16 %v7204, %v7200
  %v7325 = vpack.c.b16 %v7205, %v7201
  %v7326 = vpack.c.b16 %v7206, %v7202
  %v7327 = vpack.c.b16 %v7211, %v7207
  %v7328 = vpack.c.b16 %v7212, %v7208
  %v7329 = vpack.c.b16 %v7213, %v7209
  %v7330 = vpack.c.b16 %v7214, %v7210
  %v7331 = vpack.c.b16 %v7219, %v7215
  %v7332 = vpack.c.b16 %v7220, %v7216
  %v7333 = vpack.c.b16 %v7221, %v7217
  %v7334 = vpack.c.b16 %v7222, %v7218
  %v7335 = vpack.c.b16 %v7227, %v7223
  %v7336 = vpack.c.b16 %v7228, %v7224
  %v7337 = vpack.c.b16 %v7229, %v7225
  %v7338 = vpack.c.b16 %v7230, %v7226
  %v7339 = vpack.c.b16 %v7235, %v7231
  %v7340 = vpack.c.b16 %v7236, %v7232
  %v7341 = vpack.c.b16 %v7237, %v7233
  %v7342 = vpack.c.b16 %v7238, %v7234
  %v7343 = vpack.c.b16 %v7243, %v7239
  %v7344 = vpack.c.b16 %v7244, %v7240
  %v7345 = vpack.c.b16 %v7245, %v7241
  %v7346 = vpack.c.b16 %v7246, %v7242
  %v7347 = vpack.c.b16 %v7251, %v7247
  %v7348 = vpack.c.b16 %v7252, %v7248
  %v7349 = vpack.c.b16 %v7253, %v7249
  %v7350 = vpack.c.b16 %v7254, %v7250
  %v7351 = vpack.c.b16 %v7259, %v7255
  %v7352 = vpack.c.b16 %v7260, %v7256
  %v7353 = vpack.c.b16 %v7261, %v7257
  %v7354 = vpack.c.b16 %v7262, %v7258
  %v7355 = vpack.c.b16 %v7267, %v7263
  %v7356 = vpack.c.b16 %v7268, %v7264
  %v7357 = vpack.c.b16 %v7269, %v7265
  %v7358 = vpack.c.b16 %v7270, %v7266
  %v7359 = vpack.c.b16 %v7275, %v7271
  %v7360 = vpack.c.b16 %v7276, %v7272
  %v7361 = vpack.c.b16 %v7277, %v7273
  %v7362 = vpack.c.b16 %v7278, %v7274
  %v7363 = vpack.c.b16 %v7283, %v7279
  %v7364 = vpack.c.b16 %v7284, %v7280
  %v7365 = vpack.c.b16 %v7285, %v7281
  %v7366 = vpack.c.b16 %v7286, %v7282
  %v7367 = vpack.c.b16 %v7291, %v7287
  %v7368 = vpack.c.b16 %v7292, %v7288
  %v7369 = vpack.c.b16 %v7293, %v7289
  %v7370 = vpack.c.b16 %v7294, %v7290
  %v7371 = vpack.c.b16 %v7299, %v7295
  %v7372 = vpack.c.b16 %v7300, %v7296
  %v7373 = vpack.c.b16 %v7301, %v7297
  %v7374 = vpack.c.b16 %v7302, %v7298
  %v7375 = vpack.c.b16 %v7307, %v7303
  %v7376 = vpack.c.b16 %v7308, %v7304
  %v7377 = vpack.c.b16 %v7309, %v7305
  %v7378 = vpack.c.b16 %v7310, %v7306
  %v7379 = vpack.c.b16 %v7315, %v7311
  %v7380 = vpack.c.b16 %v7316, %v7312
  %v7381 = vpack.c.b16 %v7317, %v7313
  %v7382 = vpack.c.b16 %v7318, %v7314
  %7447 = vmatprep.subr.bf16.mxu0 %v7320
  %7448 = vmatpush1.bf16.msra.mxu0 %v7319
  %7449 = vmatprep.subr.bf16.mxu0 %v7324
  %7450 = vmatpush1.bf16.msra.mxu0 %v7323
  %7451 = vmatprep.subr.bf16.mxu0 %v7328
  %7452 = vmatpush1.bf16.msra.mxu0 %v7327
  %7453 = vmatprep.subr.bf16.mxu0 %v7332
  %7454 = vmatpush1.bf16.msra.mxu0 %v7331
  %7455 = vmatprep.subr.bf16.mxu0 %v7336
  %7456 = vmatpush1.bf16.msra.mxu0 %v7335
  %7457 = vmatprep.subr.bf16.mxu0 %v7340
  %7458 = vmatpush1.bf16.msra.mxu0 %v7339
  %7459 = vmatprep.subr.bf16.mxu0 %v7344
  %7460 = vmatpush1.bf16.msra.mxu0 %v7343
  %7461 = vmatprep.subr.bf16.mxu0 %v7348
  %7462 = vmatpush1.bf16.msra.mxu0 %v7347
  %7463 = vmatprep.subr.bf16.mxu0 %v7352
  %7464 = vmatpush1.bf16.msra.mxu0 %v7351
  %7465 = vmatprep.subr.bf16.mxu0 %v7356
  %7466 = vmatpush1.bf16.msra.mxu0 %v7355
  %7467 = vmatprep.subr.bf16.mxu0 %v7360
  %7468 = vmatpush1.bf16.msra.mxu0 %v7359
  %7469 = vmatprep.subr.bf16.mxu0 %v7364
  %7470 = vmatpush1.bf16.msra.mxu0 %v7363
  %7471 = vmatprep.subr.bf16.mxu0 %v7368
  %7472 = vmatpush1.bf16.msra.mxu0 %v7367
  %7473 = vmatprep.subr.bf16.mxu0 %v7372
  %7474 = vmatpush1.bf16.msra.mxu0 %v7371
  %7475 = vmatprep.subr.bf16.mxu0 %v7376
  %7476 = vmatpush1.bf16.msra.mxu0 %v7375
  %7477 = vmatprep.subr.bf16.mxu0 %v7380
  %7478 = vmatpush1.bf16.msra.mxu0 %v7379
  %7479 = vmatprep.mubr.bf16.mxu0 %v7061
  %7480 = vmatmul.mubr.bf16.gmra.mrb[0].mxu0 %v7060
  %v7481 = vpop.f32.mrb[0].mxu0
  %v7482 = vadd.f32 0.0, %v7481
  %v7483 = vpop.f32.mrb[0].mxu0
  %v7484 = vadd.f32 0.0, %v7483
  %v7485 = vpop.f32.mrb[0].mxu0
  %v7486 = vpop.f32.mrb[0].mxu0
  %7487 = vdwg.mxu0
  %7488 = vmatprep.subr.bf16.mxu0 %v7322
  %7489 = vmatpush1.bf16.msra.mxu0 %v7321
  %7490 = vmatprep.subr.bf16.mxu0 %v7326
  %7491 = vmatpush1.bf16.msra.mxu0 %v7325
  %7492 = vmatprep.subr.bf16.mxu0 %v7330
  %7493 = vmatpush1.bf16.msra.mxu0 %v7329
  %7494 = vmatprep.subr.bf16.mxu0 %v7334
  %7495 = vmatpush1.bf16.msra.mxu0 %v7333
  %7496 = vmatprep.subr.bf16.mxu0 %v7338
  %7497 = vmatpush1.bf16.msra.mxu0 %v7337
  %7498 = vmatprep.subr.bf16.mxu0 %v7342
  %7499 = vmatpush1.bf16.msra.mxu0 %v7341
  %7500 = vmatprep.subr.bf16.mxu0 %v7346
  %7501 = vmatpush1.bf16.msra.mxu0 %v7345
  %7502 = vmatprep.subr.bf16.mxu0 %v7350
  %7503 = vmatpush1.bf16.msra.mxu0 %v7349
  %7504 = vmatprep.subr.bf16.mxu0 %v7354
  %7505 = vmatpush1.bf16.msra.mxu0 %v7353
  %7506 = vmatprep.subr.bf16.mxu0 %v7358
  %7507 = vmatpush1.bf16.msra.mxu0 %v7357
  %7508 = vmatprep.subr.bf16.mxu0 %v7362
  %7509 = vmatpush1.bf16.msra.mxu0 %v7361
  %7510 = vmatprep.subr.bf16.mxu0 %v7366
  %7511 = vmatpush1.bf16.msra.mxu0 %v7365
  %7512 = vmatprep.subr.bf16.mxu0 %v7370
  %7513 = vmatpush1.bf16.msra.mxu0 %v7369
  %7514 = vmatprep.subr.bf16.mxu0 %v7374
  %7515 = vmatpush1.bf16.msra.mxu0 %v7373
  %7516 = vmatprep.subr.bf16.mxu0 %v7378
  %7517 = vmatpush1.bf16.msra.mxu0 %v7377
  %7518 = vmatprep.subr.bf16.mxu0 %v7382
  %7519 = vmatpush1.bf16.msra.mxu0 %v7381
  %7520 = vmatprep.mubr.bf16.mxu0 %v7061
  %7521 = vmatmul.mubr.bf16.gmra.mrb[0].mxu0 %v7060
  %v7522 = vpop.f32.mrb[0].mxu0
  %v7523 = vadd.f32 0.0, %v7522
  %v7524 = vpop.f32.mrb[0].mxu0
  %v7525 = vadd.f32 0.0, %v7524
  %v7526 = vpop.f32.mrb[0].mxu0
  %v7527 = vpop.f32.mrb[0].mxu0
  %7528 = vdwg.mxu0
  %v7529 = vadd.f32 %v6967, %v7482
  %v7530 = vadd.f32 %v6969, %v7484
  %v7531 = vadd.f32 %v7008, %v7523
  %v7532 = vadd.f32 %v7010, %v7525
  %s7533 = scalar_lea.vmem %s11, 3
  %v7534 = vld [vmem:[%s7533] sm:$0x1]
  %v7536 = vsel %vm5979, %v7534, 0
  %7538 = vmatprep.subr.bf16.mxu0 %v5988
  %7539 = vmatpush1.bf16.msra.mxu0 %v5985
  %7540 = vmatprep.subr.bf16.mxu0 0
  %7541 = vmatpush1.bf16.msra.mxu0 0
  %7542 = vmatprep.subr.bf16.mxu0 0
  %7543 = vmatpush1.bf16.msra.mxu0 0
  %7544 = vmatprep.subr.bf16.mxu0 0
  %7545 = vmatpush1.bf16.msra.mxu0 0
  %7546 = vmatprep.subr.bf16.mxu0 0
  %7547 = vmatpush1.bf16.msra.mxu0 0
  %7548 = vmatprep.subr.bf16.mxu0 0
  %7549 = vmatpush1.bf16.msra.mxu0 0
  %7550 = vmatprep.subr.bf16.mxu0 0
  %7551 = vmatpush1.bf16.msra.mxu0 0
  %7552 = vmatprep.subr.bf16.mxu0 0
  %7553 = vmatpush1.bf16.msra.mxu0 0
  %7554 = vmatprep.subr.bf16.mxu0 0
  %7555 = vmatpush1.bf16.msra.mxu0 0
  %7556 = vmatprep.subr.bf16.mxu0 0
  %7557 = vmatpush1.bf16.msra.mxu0 0
  %7558 = vmatprep.subr.bf16.mxu0 0
  %7559 = vmatpush1.bf16.msra.mxu0 0
  %7560 = vmatprep.subr.bf16.mxu0 0
  %7561 = vmatpush1.bf16.msra.mxu0 0
  %7562 = vmatprep.subr.bf16.mxu0 0
  %7563 = vmatpush1.bf16.msra.mxu0 0
  %7564 = vmatprep.subr.bf16.mxu0 0
  %7565 = vmatpush1.bf16.msra.mxu0 0
  %7566 = vmatprep.subr.bf16.mxu0 0
  %7567 = vmatpush1.bf16.msra.mxu0 0
  %7568 = vmatprep.subr.bf16.mxu0 0
  %7569 = vmatpush1.bf16.msra.mxu0 0
  %7570 = vmatprep.mubr.bf16.mxu0 0
  %7571 = vmatmul.mubr.bf16.gmra.mrb[0].mxu0 %v7536
  %v7572 = vpop.f32.mrb[0].mxu0
  %v7573 = vadd.f32 0.0, %v7572
  %v7574 = vpop.f32.mrb[0].mxu0
  %v7575 = vadd.f32 0.0, %v7574
  %v7576 = vpop.f32.mrb[0].mxu0
  %v7577 = vpop.f32.mrb[0].mxu0
  %7578 = vdwg.mxu0
  %v7579 = vpack.c.bf16 %v7573, %v7573
  %v7580 = vpack.c.bf16 %v7575, %v7575
  %s7581 = scalar_lea.vmem %s12, 1536
  %v7582 = vld [vmem:[%s7581] sm:$0xff]
  %v7583 = vld [vmem:[%s7581 + $0x8] sm:$0xff]
  %v7584 = vld [vmem:[%s7581 + $0x10] sm:$0xff]
  %v7585 = vld [vmem:[%s7581 + $0x18] sm:$0xff]
  %v7586 = vld [vmem:[%s7581 + $0x20] sm:$0xff]
  %v7587 = vld [vmem:[%s7581 + $0x28] sm:$0xff]
  %v7588 = vld [vmem:[%s7581 + $0x30] sm:$0xff]
  %v7589 = vld [vmem:[%s7581 + $0x38] sm:$0xff]
  %v7590 = vld [vmem:[%s7581 + $0x40] sm:$0xff]
  %v7591 = vld [vmem:[%s7581 + $0x48] sm:$0xff]
  %v7592 = vld [vmem:[%s7581 + $0x50] sm:$0xff]
  %v7593 = vld [vmem:[%s7581 + $0x58] sm:$0xff]
  %v7594 = vld [vmem:[%s7581 + $0x60] sm:$0xff]
  %v7595 = vld [vmem:[%s7581 + $0x68] sm:$0xff]
  %v7596 = vld [vmem:[%s7581 + $0x70] sm:$0xff]
  %v7597 = vld [vmem:[%s7581 + $0x78] sm:$0xff]
  %v7598 = vld [vmem:[%s7581 + $0x80] sm:$0xff]
  %v7599 = vld [vmem:[%s7581 + $0x88] sm:$0xff]
  %v7600 = vld [vmem:[%s7581 + $0x90] sm:$0xff]
  %v7601 = vld [vmem:[%s7581 + $0x98] sm:$0xff]
  %v7602 = vld [vmem:[%s7581 + $0xa0] sm:$0xff]
  %v7603 = vld [vmem:[%s7581 + $0xa8] sm:$0xff]
  %v7604 = vld [vmem:[%s7581 + $0xb0] sm:$0xff]
  %v7605 = vld [vmem:[%s7581 + $0xb8] sm:$0xff]
  %v7606 = vld [vmem:[%s7581 + $0xc0] sm:$0xff]
  %v7607 = vld [vmem:[%s7581 + $0xc8] sm:$0xff]
  %v7608 = vld [vmem:[%s7581 + $0xd0] sm:$0xff]
  %v7609 = vld [vmem:[%s7581 + $0xd8] sm:$0xff]
  %v7610 = vld [vmem:[%s7581 + $0xe0] sm:$0xff]
  %v7611 = vld [vmem:[%s7581 + $0xe8] sm:$0xff]
  %v7612 = vld [vmem:[%s7581 + $0xf0] sm:$0xff]
  %v7613 = vld [vmem:[%s7581 + $0xf8] sm:$0xff]
  %v7614 = vld [vmem:[%s7581 + $0x100] sm:$0xff]
  %v7615 = vld [vmem:[%s7581 + $0x108] sm:$0xff]
  %v7616 = vld [vmem:[%s7581 + $0x110] sm:$0xff]
  %v7617 = vld [vmem:[%s7581 + $0x118] sm:$0xff]
  %v7618 = vld [vmem:[%s7581 + $0x120] sm:$0xff]
  %v7619 = vld [vmem:[%s7581 + $0x128] sm:$0xff]
  %v7620 = vld [vmem:[%s7581 + $0x130] sm:$0xff]
  %v7621 = vld [vmem:[%s7581 + $0x138] sm:$0xff]
  %v7622 = vld [vmem:[%s7581 + $0x140] sm:$0xff]
  %v7623 = vld [vmem:[%s7581 + $0x148] sm:$0xff]
  %v7624 = vld [vmem:[%s7581 + $0x150] sm:$0xff]
  %v7625 = vld [vmem:[%s7581 + $0x158] sm:$0xff]
  %v7626 = vld [vmem:[%s7581 + $0x160] sm:$0xff]
  %v7627 = vld [vmem:[%s7581 + $0x168] sm:$0xff]
  %v7628 = vld [vmem:[%s7581 + $0x170] sm:$0xff]
  %v7629 = vld [vmem:[%s7581 + $0x178] sm:$0xff]
  %v7630 = vld [vmem:[%s7581 + $0x180] sm:$0xff]
  %v7631 = vld [vmem:[%s7581 + $0x188] sm:$0xff]
  %v7632 = vld [vmem:[%s7581 + $0x190] sm:$0xff]
  %v7633 = vld [vmem:[%s7581 + $0x198] sm:$0xff]
  %v7634 = vld [vmem:[%s7581 + $0x1a0] sm:$0xff]
  %v7635 = vld [vmem:[%s7581 + $0x1a8] sm:$0xff]
  %v7636 = vld [vmem:[%s7581 + $0x1b0] sm:$0xff]
  %v7637 = vld [vmem:[%s7581 + $0x1b8] sm:$0xff]
  %v7638 = vld [vmem:[%s7581 + $0x1c0] sm:$0xff]
  %v7639 = vld [vmem:[%s7581 + $0x1c8] sm:$0xff]
  %v7640 = vld [vmem:[%s7581 + $0x1d0] sm:$0xff]
  %v7641 = vld [vmem:[%s7581 + $0x1d8] sm:$0xff]
  %v7642 = vld [vmem:[%s7581 + $0x1e0] sm:$0xff]
  %v7643 = vld [vmem:[%s7581 + $0x1e8] sm:$0xff]
  %v7644 = vld [vmem:[%s7581 + $0x1f0] sm:$0xff]
  %v7645 = vld [vmem:[%s7581 + $0x1f8] sm:$0xff]
  %v7710 = vunpack.c.l.b16 %v7582
  %v7711 = vunpack.c.h.b16 %v7582
  %v7712 = vunpack.c.l.b16 %v7583
  %v7713 = vunpack.c.h.b16 %v7583
  %v7714 = vunpack.c.l.b16 %v7584
  %v7715 = vunpack.c.h.b16 %v7584
  %v7716 = vunpack.c.l.b16 %v7585
  %v7717 = vunpack.c.h.b16 %v7585
  %v7718 = vunpack.c.l.b16 %v7586
  %v7719 = vunpack.c.h.b16 %v7586
  %v7720 = vunpack.c.l.b16 %v7587
  %v7721 = vunpack.c.h.b16 %v7587
  %v7722 = vunpack.c.l.b16 %v7588
  %v7723 = vunpack.c.h.b16 %v7588
  %v7724 = vunpack.c.l.b16 %v7589
  %v7725 = vunpack.c.h.b16 %v7589
  %v7726 = vunpack.c.l.b16 %v7590
  %v7727 = vunpack.c.h.b16 %v7590
  %v7728 = vunpack.c.l.b16 %v7591
  %v7729 = vunpack.c.h.b16 %v7591
  %v7730 = vunpack.c.l.b16 %v7592
  %v7731 = vunpack.c.h.b16 %v7592
  %v7732 = vunpack.c.l.b16 %v7593
  %v7733 = vunpack.c.h.b16 %v7593
  %v7734 = vunpack.c.l.b16 %v7594
  %v7735 = vunpack.c.h.b16 %v7594
  %v7736 = vunpack.c.l.b16 %v7595
  %v7737 = vunpack.c.h.b16 %v7595
  %v7738 = vunpack.c.l.b16 %v7596
  %v7739 = vunpack.c.h.b16 %v7596
  %v7740 = vunpack.c.l.b16 %v7597
  %v7741 = vunpack.c.h.b16 %v7597
  %v7742 = vunpack.c.l.b16 %v7598
  %v7743 = vunpack.c.h.b16 %v7598
  %v7744 = vunpack.c.l.b16 %v7599
  %v7745 = vunpack.c.h.b16 %v7599
  %v7746 = vunpack.c.l.b16 %v7600
  %v7747 = vunpack.c.h.b16 %v7600
  %v7748 = vunpack.c.l.b16 %v7601
  %v7749 = vunpack.c.h.b16 %v7601
  %v7750 = vunpack.c.l.b16 %v7602
  %v7751 = vunpack.c.h.b16 %v7602
  %v7752 = vunpack.c.l.b16 %v7603
  %v7753 = vunpack.c.h.b16 %v7603
  %v7754 = vunpack.c.l.b16 %v7604
  %v7755 = vunpack.c.h.b16 %v7604
  %v7756 = vunpack.c.l.b16 %v7605
  %v7757 = vunpack.c.h.b16 %v7605
  %v7758 = vunpack.c.l.b16 %v7606
  %v7759 = vunpack.c.h.b16 %v7606
  %v7760 = vunpack.c.l.b16 %v7607
  %v7761 = vunpack.c.h.b16 %v7607
  %v7762 = vunpack.c.l.b16 %v7608
  %v7763 = vunpack.c.h.b16 %v7608
  %v7764 = vunpack.c.l.b16 %v7609
  %v7765 = vunpack.c.h.b16 %v7609
  %v7766 = vunpack.c.l.b16 %v7610
  %v7767 = vunpack.c.h.b16 %v7610
  %v7768 = vunpack.c.l.b16 %v7611
  %v7769 = vunpack.c.h.b16 %v7611
  %v7770 = vunpack.c.l.b16 %v7612
  %v7771 = vunpack.c.h.b16 %v7612
  %v7772 = vunpack.c.l.b16 %v7613
  %v7773 = vunpack.c.h.b16 %v7613
  %v7774 = vunpack.c.l.b16 %v7614
  %v7775 = vunpack.c.h.b16 %v7614
  %v7776 = vunpack.c.l.b16 %v7615
  %v7777 = vunpack.c.h.b16 %v7615
  %v7778 = vunpack.c.l.b16 %v7616
  %v7779 = vunpack.c.h.b16 %v7616
  %v7780 = vunpack.c.l.b16 %v7617
  %v7781 = vunpack.c.h.b16 %v7617
  %v7782 = vunpack.c.l.b16 %v7618
  %v7783 = vunpack.c.h.b16 %v7618
  %v7784 = vunpack.c.l.b16 %v7619
  %v7785 = vunpack.c.h.b16 %v7619
  %v7786 = vunpack.c.l.b16 %v7620
  %v7787 = vunpack.c.h.b16 %v7620
  %v7788 = vunpack.c.l.b16 %v7621
  %v7789 = vunpack.c.h.b16 %v7621
  %v7790 = vunpack.c.l.b16 %v7622
  %v7791 = vunpack.c.h.b16 %v7622
  %v7792 = vunpack.c.l.b16 %v7623
  %v7793 = vunpack.c.h.b16 %v7623
  %v7794 = vunpack.c.l.b16 %v7624
  %v7795 = vunpack.c.h.b16 %v7624
  %v7796 = vunpack.c.l.b16 %v7625
  %v7797 = vunpack.c.h.b16 %v7625
  %v7798 = vunpack.c.l.b16 %v7626
  %v7799 = vunpack.c.h.b16 %v7626
  %v7800 = vunpack.c.l.b16 %v7627
  %v7801 = vunpack.c.h.b16 %v7627
  %v7802 = vunpack.c.l.b16 %v7628
  %v7803 = vunpack.c.h.b16 %v7628
  %v7804 = vunpack.c.l.b16 %v7629
  %v7805 = vunpack.c.h.b16 %v7629
  %v7806 = vunpack.c.l.b16 %v7630
  %v7807 = vunpack.c.h.b16 %v7630
  %v7808 = vunpack.c.l.b16 %v7631
  %v7809 = vunpack.c.h.b16 %v7631
  %v7810 = vunpack.c.l.b16 %v7632
  %v7811 = vunpack.c.h.b16 %v7632
  %v7812 = vunpack.c.l.b16 %v7633
  %v7813 = vunpack.c.h.b16 %v7633
  %v7814 = vunpack.c.l.b16 %v7634
  %v7815 = vunpack.c.h.b16 %v7634
  %v7816 = vunpack.c.l.b16 %v7635
  %v7817 = vunpack.c.h.b16 %v7635
  %v7818 = vunpack.c.l.b16 %v7636
  %v7819 = vunpack.c.h.b16 %v7636
  %v7820 = vunpack.c.l.b16 %v7637
  %v7821 = vunpack.c.h.b16 %v7637
  %v7822 = vunpack.c.l.b16 %v7638
  %v7823 = vunpack.c.h.b16 %v7638
  %v7824 = vunpack.c.l.b16 %v7639
  %v7825 = vunpack.c.h.b16 %v7639
  %v7826 = vunpack.c.l.b16 %v7640
  %v7827 = vunpack.c.h.b16 %v7640
  %v7828 = vunpack.c.l.b16 %v7641
  %v7829 = vunpack.c.h.b16 %v7641
  %v7830 = vunpack.c.l.b16 %v7642
  %v7831 = vunpack.c.h.b16 %v7642
  %v7832 = vunpack.c.l.b16 %v7643
  %v7833 = vunpack.c.h.b16 %v7643
  %v7834 = vunpack.c.l.b16 %v7644
  %v7835 = vunpack.c.h.b16 %v7644
  %v7836 = vunpack.c.l.b16 %v7645
  %v7837 = vunpack.c.h.b16 %v7645
  %v7838 = vpack.c.b16 %v7714, %v7710
  %v7839 = vpack.c.b16 %v7715, %v7711
  %v7840 = vpack.c.b16 %v7716, %v7712
  %v7841 = vpack.c.b16 %v7717, %v7713
  %v7842 = vpack.c.b16 %v7722, %v7718
  %v7843 = vpack.c.b16 %v7723, %v7719
  %v7844 = vpack.c.b16 %v7724, %v7720
  %v7845 = vpack.c.b16 %v7725, %v7721
  %v7846 = vpack.c.b16 %v7730, %v7726
  %v7847 = vpack.c.b16 %v7731, %v7727
  %v7848 = vpack.c.b16 %v7732, %v7728
  %v7849 = vpack.c.b16 %v7733, %v7729
  %v7850 = vpack.c.b16 %v7738, %v7734
  %v7851 = vpack.c.b16 %v7739, %v7735
  %v7852 = vpack.c.b16 %v7740, %v7736
  %v7853 = vpack.c.b16 %v7741, %v7737
  %v7854 = vpack.c.b16 %v7746, %v7742
  %v7855 = vpack.c.b16 %v7747, %v7743
  %v7856 = vpack.c.b16 %v7748, %v7744
  %v7857 = vpack.c.b16 %v7749, %v7745
  %v7858 = vpack.c.b16 %v7754, %v7750
  %v7859 = vpack.c.b16 %v7755, %v7751
  %v7860 = vpack.c.b16 %v7756, %v7752
  %v7861 = vpack.c.b16 %v7757, %v7753
  %v7862 = vpack.c.b16 %v7762, %v7758
  %v7863 = vpack.c.b16 %v7763, %v7759
  %v7864 = vpack.c.b16 %v7764, %v7760
  %v7865 = vpack.c.b16 %v7765, %v7761
  %v7866 = vpack.c.b16 %v7770, %v7766
  %v7867 = vpack.c.b16 %v7771, %v7767
  %v7868 = vpack.c.b16 %v7772, %v7768
  %v7869 = vpack.c.b16 %v7773, %v7769
  %v7870 = vpack.c.b16 %v7778, %v7774
  %v7871 = vpack.c.b16 %v7779, %v7775
  %v7872 = vpack.c.b16 %v7780, %v7776
  %v7873 = vpack.c.b16 %v7781, %v7777
  %v7874 = vpack.c.b16 %v7786, %v7782
  %v7875 = vpack.c.b16 %v7787, %v7783
  %v7876 = vpack.c.b16 %v7788, %v7784
  %v7877 = vpack.c.b16 %v7789, %v7785
  %v7878 = vpack.c.b16 %v7794, %v7790
  %v7879 = vpack.c.b16 %v7795, %v7791
  %v7880 = vpack.c.b16 %v7796, %v7792
  %v7881 = vpack.c.b16 %v7797, %v7793
  %v7882 = vpack.c.b16 %v7802, %v7798
  %v7883 = vpack.c.b16 %v7803, %v7799
  %v7884 = vpack.c.b16 %v7804, %v7800
  %v7885 = vpack.c.b16 %v7805, %v7801
  %v7886 = vpack.c.b16 %v7810, %v7806
  %v7887 = vpack.c.b16 %v7811, %v7807
  %v7888 = vpack.c.b16 %v7812, %v7808
  %v7889 = vpack.c.b16 %v7813, %v7809
  %v7890 = vpack.c.b16 %v7818, %v7814
  %v7891 = vpack.c.b16 %v7819, %v7815
  %v7892 = vpack.c.b16 %v7820, %v7816
  %v7893 = vpack.c.b16 %v7821, %v7817
  %v7894 = vpack.c.b16 %v7826, %v7822
  %v7895 = vpack.c.b16 %v7827, %v7823
  %v7896 = vpack.c.b16 %v7828, %v7824
  %v7897 = vpack.c.b16 %v7829, %v7825
  %v7898 = vpack.c.b16 %v7834, %v7830
  %v7899 = vpack.c.b16 %v7835, %v7831
  %v7900 = vpack.c.b16 %v7836, %v7832
  %v7901 = vpack.c.b16 %v7837, %v7833
  %7966 = vmatprep.subr.bf16.mxu0 %v7839
  %7967 = vmatpush1.bf16.msra.mxu0 %v7838
  %7968 = vmatprep.subr.bf16.mxu0 %v7843
  %7969 = vmatpush1.bf16.msra.mxu0 %v7842
  %7970 = vmatprep.subr.bf16.mxu0 %v7847
  %7971 = vmatpush1.bf16.msra.mxu0 %v7846
  %7972 = vmatprep.subr.bf16.mxu0 %v7851
  %7973 = vmatpush1.bf16.msra.mxu0 %v7850
  %7974 = vmatprep.subr.bf16.mxu0 %v7855
  %7975 = vmatpush1.bf16.msra.mxu0 %v7854
  %7976 = vmatprep.subr.bf16.mxu0 %v7859
  %7977 = vmatpush1.bf16.msra.mxu0 %v7858
  %7978 = vmatprep.subr.bf16.mxu0 %v7863
  %7979 = vmatpush1.bf16.msra.mxu0 %v7862
  %7980 = vmatprep.subr.bf16.mxu0 %v7867
  %7981 = vmatpush1.bf16.msra.mxu0 %v7866
  %7982 = vmatprep.subr.bf16.mxu0 %v7871
  %7983 = vmatpush1.bf16.msra.mxu0 %v7870
  %7984 = vmatprep.subr.bf16.mxu0 %v7875
  %7985 = vmatpush1.bf16.msra.mxu0 %v7874
  %7986 = vmatprep.subr.bf16.mxu0 %v7879
  %7987 = vmatpush1.bf16.msra.mxu0 %v7878
  %7988 = vmatprep.subr.bf16.mxu0 %v7883
  %7989 = vmatpush1.bf16.msra.mxu0 %v7882
  %7990 = vmatprep.subr.bf16.mxu0 %v7887
  %7991 = vmatpush1.bf16.msra.mxu0 %v7886
  %7992 = vmatprep.subr.bf16.mxu0 %v7891
  %7993 = vmatpush1.bf16.msra.mxu0 %v7890
  %7994 = vmatprep.subr.bf16.mxu0 %v7895
  %7995 = vmatpush1.bf16.msra.mxu0 %v7894
  %7996 = vmatprep.subr.bf16.mxu0 %v7899
  %7997 = vmatpush1.bf16.msra.mxu0 %v7898
  %7998 = vmatprep.mubr.bf16.mxu0 %v7580
  %7999 = vmatmul.mubr.bf16.gmra.mrb[0].mxu0 %v7579
  %v8000 = vpop.f32.mrb[0].mxu0
  %v8001 = vadd.f32 0.0, %v8000
  %v8002 = vpop.f32.mrb[0].mxu0
  %v8003 = vadd.f32 0.0, %v8002
  %v8004 = vpop.f32.mrb[0].mxu0
  %v8005 = vpop.f32.mrb[0].mxu0
  %8006 = vdwg.mxu0
  %8007 = vmatprep.subr.bf16.mxu0 %v7841
  %8008 = vmatpush1.bf16.msra.mxu0 %v7840
  %8009 = vmatprep.subr.bf16.mxu0 %v7845
  %8010 = vmatpush1.bf16.msra.mxu0 %v7844
  %8011 = vmatprep.subr.bf16.mxu0 %v7849
  %8012 = vmatpush1.bf16.msra.mxu0 %v7848
  %8013 = vmatprep.subr.bf16.mxu0 %v7853
  %8014 = vmatpush1.bf16.msra.mxu0 %v7852
  %8015 = vmatprep.subr.bf16.mxu0 %v7857
  %8016 = vmatpush1.bf16.msra.mxu0 %v7856
  %8017 = vmatprep.subr.bf16.mxu0 %v7861
  %8018 = vmatpush1.bf16.msra.mxu0 %v7860
  %8019 = vmatprep.subr.bf16.mxu0 %v7865
  %8020 = vmatpush1.bf16.msra.mxu0 %v7864
  %8021 = vmatprep.subr.bf16.mxu0 %v7869
  %8022 = vmatpush1.bf16.msra.mxu0 %v7868
  %8023 = vmatprep.subr.bf16.mxu0 %v7873
  %8024 = vmatpush1.bf16.msra.mxu0 %v7872
  %8025 = vmatprep.subr.bf16.mxu0 %v7877
  %8026 = vmatpush1.bf16.msra.mxu0 %v7876
  %8027 = vmatprep.subr.bf16.mxu0 %v7881
  %8028 = vmatpush1.bf16.msra.mxu0 %v7880
  %8029 = vmatprep.subr.bf16.mxu0 %v7885
  %8030 = vmatpush1.bf16.msra.mxu0 %v7884
  %8031 = vmatprep.subr.bf16.mxu0 %v7889
  %8032 = vmatpush1.bf16.msra.mxu0 %v7888
  %8033 = vmatprep.subr.bf16.mxu0 %v7893
  %8034 = vmatpush1.bf16.msra.mxu0 %v7892
  %8035 = vmatprep.subr.bf16.mxu0 %v7897
  %8036 = vmatpush1.bf16.msra.mxu0 %v7896
  %8037 = vmatprep.subr.bf16.mxu0 %v7901
  %8038 = vmatpush1.bf16.msra.mxu0 %v7900
  %8039 = vmatprep.mubr.bf16.mxu0 %v7580
  %8040 = vmatmul.mubr.bf16.gmra.mrb[0].mxu0 %v7579
  %v8041 = vpop.f32.mrb[0].mxu0
  %v8042 = vadd.f32 0.0, %v8041
  %v8043 = vpop.f32.mrb[0].mxu0
  %v8044 = vadd.f32 0.0, %v8043
  %v8045 = vpop.f32.mrb[0].mxu0
  %v8046 = vpop.f32.mrb[0].mxu0
  %8047 = vdwg.mxu0
  %v8048 = vadd.f32 %v7529, %v8001
  %v8049 = vadd.f32 %v7530, %v8003
  %v8050 = vadd.f32 %v7531, %v8042
  %v8051 = vadd.f32 %v7532, %v8044
  %vm8052 = vcmask 1041408
  %v8053 = vsel %vm8052, %v8048, 0.0
  %v8054 = vrot.slane %v8053, 4
  %v8055 = vadd.f32 %v8053, %v8054
  %v8056 = vrot.slane %v8055, 2
  %v8057 = vadd.f32 %v8055, %v8056
  %v8058 = vrot.slane %v8057, 1
  %v8059 = vadd.f32 %v8057, %v8058
  %v8060 = vsel %vm8052, %v8049, 0.0
  %v8061 = vrot.slane %v8060, 4
  %v8062 = vadd.f32 %v8060, %v8061
  %v8063 = vrot.slane %v8062, 2
  %v8064 = vadd.f32 %v8062, %v8063
  %v8065 = vrot.slane %v8064, 1
  %v8066 = vadd.f32 %v8064, %v8065
  %v8067 = vsel %vm8052, %v8050, 0.0
  %v8068 = vrot.slane %v8067, 4
  %v8069 = vadd.f32 %v8067, %v8068
  %v8070 = vrot.slane %v8069, 2
  %v8071 = vadd.f32 %v8069, %v8070
  %v8072 = vrot.slane %v8071, 1
  %v8073 = vadd.f32 %v8071, %v8072
  %v8074 = vsel %vm8052, %v8051, 0.0
  %v8075 = vrot.slane %v8074, 4
  %v8076 = vadd.f32 %v8074, %v8075
  %v8077 = vrot.slane %v8076, 2
  %v8078 = vadd.f32 %v8076, %v8077
  %v8079 = vrot.slane %v8078, 1
  %v8080 = vadd.f32 %v8078, %v8079
  %v8081 = vmul.f32 %v8059, 0.5
  %v8082 = vmul.f32 %v8066, 0.5
  %v8083 = vmul.f32 %v8073, 0.5
  %v8084 = vmul.f32 %v8080, 0.5
  %v8085 = vsub.f32 %v8048, %v8081
  %v8086 = vsub.f32 %v8049, %v8082
  %v8087 = vsub.f32 %v8050, %v8083
  %v8088 = vsub.f32 %v8051, %v8084
  %v8089 = vmul.f32 %v8085, %v8085
  %v8090 = vmul.f32 %v8086, %v8086
  %v8091 = vmul.f32 %v8087, %v8087
  %v8092 = vmul.f32 %v8088, %v8088
  %v8093 = vsel %vm8052, %v8089, 0.0
  %v8094 = vrot.slane %v8093, 4
  %v8095 = vadd.f32 %v8093, %v8094
  %v8096 = vrot.slane %v8095, 2
  %v8097 = vadd.f32 %v8095, %v8096
  %v8098 = vrot.slane %v8097, 1
  %v8099 = vadd.f32 %v8097, %v8098
  %v8100 = vsel %vm8052, %v8090, 0.0
  %v8101 = vrot.slane %v8100, 4
  %v8102 = vadd.f32 %v8100, %v8101
  %v8103 = vrot.slane %v8102, 2
  %v8104 = vadd.f32 %v8102, %v8103
  %v8105 = vrot.slane %v8104, 1
  %v8106 = vadd.f32 %v8104, %v8105
  %v8107 = vsel %vm8052, %v8091, 0.0
  %v8108 = vrot.slane %v8107, 4
  %v8109 = vadd.f32 %v8107, %v8108
  %v8110 = vrot.slane %v8109, 2
  %v8111 = vadd.f32 %v8109, %v8110
  %v8112 = vrot.slane %v8111, 1
  %v8113 = vadd.f32 %v8111, %v8112
  %v8114 = vsel %vm8052, %v8092, 0.0
  %v8115 = vrot.slane %v8114, 4
  %v8116 = vadd.f32 %v8114, %v8115
  %v8117 = vrot.slane %v8116, 2
  %v8118 = vadd.f32 %v8116, %v8117
  %v8119 = vrot.slane %v8118, 1
  %v8120 = vadd.f32 %v8118, %v8119
  %v8121 = vmul.f32 %v8099, 0.5
  %v8122 = vmul.f32 %v8106, 0.5
  %v8123 = vmul.f32 %v8113, 0.5
  %v8124 = vmul.f32 %v8120, 0.5
  %v8125 = vadd.f32 %v8121, 1e-05
  %v8126 = vadd.f32 %v8122, 1e-05
  %v8127 = vadd.f32 %v8123, 1e-05
  %v8128 = vadd.f32 %v8124, 1e-05
  %v8129 = vrsqrt.pop %v8125
  %v8130 = vrsqrt.pop %v8126
  %v8131 = vrsqrt.pop %v8127
  %v8132 = vrsqrt.pop %v8128
  %v8133 = vmul.f32 %v8085, %v8129
  %v8134 = vmul.f32 %v8086, %v8130
  %v8135 = vmul.f32 %v8087, %v8131
  %v8136 = vmul.f32 %v8088, %v8132
  %v8137 = vld [vmem:[%s13] sm:$0xf]
  %v8139 = vlaneseq
  %v8140 = vshrl.u32 %v8139, 7
  %v8141 = vsub.s32 0, %v8140
  %v8142 = vrot.slane %v8137, %v8141
  %v8143 = vlaneseq
  %v8144 = vshrl.u32 %v8143, 7
  %v8145 = vsub.s32 1, %v8144
  %v8146 = vrot.slane %v8137, %v8145
  %v8147 = vlaneseq
  %v8148 = vshrl.u32 %v8147, 7
  %v8149 = vsub.s32 2, %v8148
  %v8150 = vrot.slane %v8137, %v8149
  %v8151 = vlaneseq
  %v8152 = vshrl.u32 %v8151, 7
  %v8153 = vsub.s32 3, %v8152
  %v8154 = vrot.slane %v8137, %v8153
  %v8159 = vmul.f32 %v8133, %v8142
  %v8160 = vmul.f32 %v8134, %v8146
  %v8161 = vmul.f32 %v8135, %v8150
  %v8162 = vmul.f32 %v8136, %v8154
  %v8163 = vld [vmem:[%s14] sm:$0xf]
  %v8165 = vlaneseq
  %v8166 = vshrl.u32 %v8165, 7
  %v8167 = vsub.s32 0, %v8166
  %v8168 = vrot.slane %v8163, %v8167
  %v8169 = vlaneseq
  %v8170 = vshrl.u32 %v8169, 7
  %v8171 = vsub.s32 1, %v8170
  %v8172 = vrot.slane %v8163, %v8171
  %v8173 = vlaneseq
  %v8174 = vshrl.u32 %v8173, 7
  %v8175 = vsub.s32 2, %v8174
  %v8176 = vrot.slane %v8163, %v8175
  %v8177 = vlaneseq
  %v8178 = vshrl.u32 %v8177, 7
  %v8179 = vsub.s32 3, %v8178
  %v8180 = vrot.slane %v8163, %v8179
  %v8185 = vadd.f32 %v8159, %v8168
  %v8186 = vadd.f32 %v8160, %v8172
  %v8187 = vadd.f32 %v8161, %v8176
  %v8188 = vadd.f32 %v8162, %v8180
  %v8189 = vmul.f32 %v8185, 0.2
  %v8190 = vmul.f32 %v8186, 0.2
  %v8191 = vmul.f32 %v8187, 0.2
  %v8192 = vmul.f32 %v8188, 0.2
  %v8193 = vmax.f32 %v8185, %v8189
  %v8194 = vmax.f32 %v8186, %v8190
  %v8195 = vmax.f32 %v8187, %v8191
  %v8196 = vmax.f32 %v8188, %v8192
  %v8197 = vpack.c.bf16 %v8193, %v8193
  %v8198 = vpack.c.bf16 %v8194, %v8194
  %v8199 = vpack.c.bf16 %v8195, %v8195
  %v8200 = vpack.c.bf16 %v8196, %v8196
  %v8201 = vld [vmem:[%s15] sm:$0x1]
  %vm8202 = vcmask 15360
  %v8204 = vsel %vm8202, %v8201, 0
  %vm8206 = vcmask 1040384
  %v8208 = vsel %vm8206, %v8197, 0
  %v8211 = vsel %vm8206, %v8198, 0
  %v8214 = vsel %vm8206, %v8199, 0
  %v8217 = vsel %vm8206, %v8200, 0
  %8219 = vmatprep.subr.bf16.mxu0 %v8211
  %8220 = vmatpush1.bf16.msra.mxu0 %v8208
  %8221 = vmatprep.subr.bf16.mxu0 0
  %8222 = vmatpush1.bf16.msra.mxu0 0
  %8223 = vmatprep.subr.bf16.mxu0 0
  %8224 = vmatpush1.bf16.msra.mxu0 0
  %8225 = vmatprep.subr.bf16.mxu0 0
  %8226 = vmatpush1.bf16.msra.mxu0 0
  %8227 = vmatprep.subr.bf16.mxu0 0
  %8228 = vmatpush1.bf16.msra.mxu0 0
  %8229 = vmatprep.subr.bf16.mxu0 0
  %8230 = vmatpush1.bf16.msra.mxu0 0
  %8231 = vmatprep.subr.bf16.mxu0 0
  %8232 = vmatpush1.bf16.msra.mxu0 0
  %8233 = vmatprep.subr.bf16.mxu0 0
  %8234 = vmatpush1.bf16.msra.mxu0 0
  %8235 = vmatprep.subr.bf16.mxu0 0
  %8236 = vmatpush1.bf16.msra.mxu0 0
  %8237 = vmatprep.subr.bf16.mxu0 0
  %8238 = vmatpush1.bf16.msra.mxu0 0
  %8239 = vmatprep.subr.bf16.mxu0 0
  %8240 = vmatpush1.bf16.msra.mxu0 0
  %8241 = vmatprep.subr.bf16.mxu0 0
  %8242 = vmatpush1.bf16.msra.mxu0 0
  %8243 = vmatprep.subr.bf16.mxu0 0
  %8244 = vmatpush1.bf16.msra.mxu0 0
  %8245 = vmatprep.subr.bf16.mxu0 0
  %8246 = vmatpush1.bf16.msra.mxu0 0
  %8247 = vmatprep.subr.bf16.mxu0 0
  %8248 = vmatpush1.bf16.msra.mxu0 0
  %8249 = vmatprep.subr.bf16.mxu0 0
  %8250 = vmatpush1.bf16.msra.mxu0 0
  %8251 = vmatprep.mubr.bf16.mxu0 0
  %8252 = vmatmul.mubr.bf16.gmra.mrb[0].mxu0 %v8204
  %v8253 = vpop.f32.mrb[0].mxu0
  %v8254 = vadd.f32 0.0, %v8253
  %v8255 = vpop.f32.mrb[0].mxu0
  %v8256 = vadd.f32 0.0, %v8255
  %v8257 = vpop.f32.mrb[0].mxu0
  %v8258 = vpop.f32.mrb[0].mxu0
  %8259 = vdwg.mxu0
  %8260 = vmatprep.subr.bf16.mxu0 %v8217
  %8261 = vmatpush1.bf16.msra.mxu0 %v8214
  %8262 = vmatprep.subr.bf16.mxu0 0
  %8263 = vmatpush1.bf16.msra.mxu0 0
  %8264 = vmatprep.subr.bf16.mxu0 0
  %8265 = vmatpush1.bf16.msra.mxu0 0
  %8266 = vmatprep.subr.bf16.mxu0 0
  %8267 = vmatpush1.bf16.msra.mxu0 0
  %8268 = vmatprep.subr.bf16.mxu0 0
  %8269 = vmatpush1.bf16.msra.mxu0 0
  %8270 = vmatprep.subr.bf16.mxu0 0
  %8271 = vmatpush1.bf16.msra.mxu0 0
  %8272 = vmatprep.subr.bf16.mxu0 0
  %8273 = vmatpush1.bf16.msra.mxu0 0
  %8274 = vmatprep.subr.bf16.mxu0 0
  %8275 = vmatpush1.bf16.msra.mxu0 0
  %8276 = vmatprep.subr.bf16.mxu0 0
  %8277 = vmatpush1.bf16.msra.mxu0 0
  %8278 = vmatprep.subr.bf16.mxu0 0
  %8279 = vmatpush1.bf16.msra.mxu0 0
  %8280 = vmatprep.subr.bf16.mxu0 0
  %8281 = vmatpush1.bf16.msra.mxu0 0
  %8282 = vmatprep.subr.bf16.mxu0 0
  %8283 = vmatpush1.bf16.msra.mxu0 0
  %8284 = vmatprep.subr.bf16.mxu0 0
  %8285 = vmatpush1.bf16.msra.mxu0 0
  %8286 = vmatprep.subr.bf16.mxu0 0
  %8287 = vmatpush1.bf16.msra.mxu0 0
  %8288 = vmatprep.subr.bf16.mxu0 0
  %8289 = vmatpush1.bf16.msra.mxu0 0
  %8290 = vmatprep.subr.bf16.mxu0 0
  %8291 = vmatpush1.bf16.msra.mxu0 0
  %8292 = vmatprep.mubr.bf16.mxu0 0
  %8293 = vmatmul.mubr.bf16.gmra.mrb[0].mxu0 %v8204
  %v8294 = vpop.f32.mrb[0].mxu0
  %v8295 = vadd.f32 0.0, %v8294
  %v8296 = vpop.f32.mrb[0].mxu0
  %v8297 = vadd.f32 0.0, %v8296
  %v8298 = vpop.f32.mrb[0].mxu0
  %v8299 = vpop.f32.mrb[0].mxu0
  %8300 = vdwg.mxu0
  %v8301 = vld [vmem:[%s16] sm:$0xf]
  %v8302 = vunpack.c.l.bf16 %v8301
  %v8304 = vlaneseq
  %v8305 = vshrl.u32 %v8304, 7
  %v8306 = vsub.s32 0, %v8305
  %v8307 = vrot.slane %v8302, %v8306
  %v8308 = vlaneseq
  %v8309 = vshrl.u32 %v8308, 7
  %v8310 = vsub.s32 2, %v8309
  %v8311 = vrot.slane %v8302, %v8310
  %v8312 = vlaneseq
  %v8313 = vshrl.u32 %v8312, 7
  %v8314 = vsub.s32 4, %v8313
  %v8315 = vrot.slane %v8302, %v8314
  %v8316 = vlaneseq
  %v8317 = vshrl.u32 %v8316, 7
  %v8318 = vsub.s32 6, %v8317
  %v8319 = vrot.slane %v8302, %v8318
  %v8324 = vlaneseq
  %v8325 = vshrl.u32 %v8324, 7
  %v8326 = vsub.s32 0, %v8325
  %v8327 = vrot.slane %v8307, %v8326
  %v8328 = vlaneseq
  %v8329 = vshrl.u32 %v8328, 7
  %v8330 = vsub.s32 0, %v8329
  %v8331 = vrot.slane %v8311, %v8330
  %v8332 = vlaneseq
  %v8333 = vshrl.u32 %v8332, 7
  %v8334 = vsub.s32 0, %v8333
  %v8335 = vrot.slane %v8315, %v8334
  %v8336 = vlaneseq
  %v8337 = vshrl.u32 %v8336, 7
  %v8338 = vsub.s32 0, %v8337
  %v8339 = vrot.slane %v8319, %v8338
  %v8340 = vmul.f32 %v8254, %v8327
  %v8341 = vmul.f32 %v8256, %v8331
  %v8342 = vmul.f32 %v8295, %v8335
  %v8343 = vmul.f32 %v8297, %v8339
  %v8344 = vsel %vm8052, %v8340, 0.0
  %v8345 = vsel %vm8052, %v8341, 0.0
  %v8346 = vadd.f32 %v8344, %v8345
  %v8347 = vsel %vm8052, %v8342, 0.0
  %v8348 = vadd.f32 %v8346, %v8347
  %v8349 = vsel %vm8052, %v8343, 0.0
  %v8350 = vadd.f32 %v8348, %v8349
  %8351 = vadd.xlane.f32.xlu0 %v8350
  %v8352 = vpop.xlane.xlu0 %8351
  %v8353 = vadd.f32 %v8352, 0.0
  %v8354 = vld [vmem:[#allocation2] sm:$0x1]
  %v8356 = vlaneseq
  %v8357 = vshrl.u32 %v8356, 7
  %v8358 = vsub.s32 0, %v8357
  %v8359 = vrot.slane %v8354, %v8358
  %v8361 = vadd.f32 %v8353, %v8359
  %vm8362 = vcmask 1024
  %8363 = vst.msk [vmem:[%s18] sm:$0x3] %vm8362, %v8361
  // Predicated region
  $region74: #{_lambda_.1} parent=0 // pred_check
    _
  $region75: #{_lambda_.1} parent=0 // pred_check_branch
    %8365 = sbr.rel (0) target = $region77
  $region76: #{_lambda_.1} parent=0 // pred_region
    _
  $region77: #{_lambda_.1} parent=0 // pred_fallthru
    _
  // Predicated region
  $region78: #{_lambda_.1} parent=0 // pred_check
    _
  $region79: #{_lambda_.1} parent=0 // pred_check_branch
    %8367 = sbr.rel (0) target = $region81
  $region80: #{_lambda_.1} parent=0 // pred_region
    _
  $region81: #{_lambda_.1} parent=0 // pred_fallthru
    _

</llo_original>
